<compile_context>
chip_gen: v6e
topology: v6e:2x2x1
jax: 0.10.0
libtpu: 0.0.40
codegen_flags: <defaults>
</compile_context>

<pallas_src>
import jax
import jax.numpy as jnp
from jax.experimental import pallas as pl
from jax.experimental.pallas import tpu as pltpu

LANE = 128


def _round_up(x, m):
    return (x + m - 1) // m * m


def _vmem_limit_bytes():
    """Per-generation VMEM budget (~3/4 of physical per-core VMEM)."""
    try:
        cap = int(pltpu.get_tpu_info().vmem_capacity_bytes)
    except Exception:
        cap = 64 * 1024 * 1024          # conservative fallback (v7x-sized)
    return min(cap * 3 // 4, 100 * 1024 * 1024)


def _zero_halo(ref):
    """Zero only the 1-pixel spatial halo ring of a (H+2, W+2, C) buffer."""
    hp, wp, c = ref.shape
    z_row = jnp.zeros((1, wp, c), ref.dtype)
    z_col = jnp.zeros((hp, 1, c), ref.dtype)
    ref[0:1, :, :] = z_row
    ref[hp - 1:hp, :, :] = z_row
    ref[:, 0:1, :] = z_col
    ref[:, wp - 1:wp, :] = z_col


def _conv3x3(src_ref, w_ref, scale, bias, h, w):
    """3x3 'SAME' conv from a zero-halo'd VMEM buffer + folded BN + ReLU.

    Per-dy partial im2col: 3 MXU matmuls with K = 3*C accumulated in f32
    (3x smaller patch staging than a full 9-tap im2col).

    src_ref: (h+2, w+2, C)   zero-halo'd activations (compute dtype)
    w_ref:   (9*C, N)        taps flattened as (dy, dx, c) along K
    scale:   (1, N) f32      folded BN scale
    bias:    (1, N) f32      folded BN bias
    returns: (h*w, N) f32
    """
    c = src_ref.shape[-1]
    acc = None
    for dy in range(3):
        patches = jnp.concatenate(
            [src_ref[dy:dy + h, dx:dx + w, :].reshape(h * w, c)
             for dx in range(3)], axis=-1)                     # (h*w, 3C)
        w_dy = w_ref[dy * 3 * c:(dy + 1) * 3 * c, :]           # (3C, N)
        part = jnp.dot(patches, w_dy, preferred_element_type=jnp.float32)
        acc = part if acc is None else acc + part
    return jnp.maximum(acc * scale + bias, 0.0)


def fused_double_conv_kernel(x_ref, w1_ref, s1_ref, b1_ref,
                             w2_ref, s2_ref, b2_ref, o_ref,
                             xpad_ref, midpad_ref):
    """One batch element: (conv3x3 => BN => ReLU) twice, fused in VMEM.

    x_ref:      (1, H, W, Cin)      un-padded input tile (compute dtype)
    w1_ref:     (9*C1p, Cmp)        conv1 weights (K and N lane-padded)
    s1/b1_ref:  (1, Cmp)            f32 folded BN (zero in padded channels)
    w2_ref:     (9*Cmp, Cout)       conv2 weights (K lane-padded, N real)
    s2/b2_ref:  (1, Cout)           f32 folded BN
    o_ref:      (1, H*W, Cout)      bf16 output block (un-padded channels)
    xpad_ref:   (H+2, W+2, C1p)     VMEM scratch (halo'd, lane-padded input)
    midpad_ref: (H+2, W+2, Cmp)     VMEM scratch (halo'd conv1 output)
    """
    _, h, w, cin = x_ref.shape
    c1p = xpad_ref.shape[-1]
    cmp_ = midpad_ref.shape[-1]
    cdtype = xpad_ref.dtype

    # Zero only the halo rings (interior is fully overwritten below).  Done
    # every step: with a "parallel" batch axis each TensorCore owns its own
    # scratch and may never run step 0, so a one-time init is not safe.
    _zero_halo(xpad_ref)
    _zero_halo(midpad_ref)

    # Stage the un-padded HBM input inside the halo; lane-pad in VMEM only.
    xpad_ref[1:h + 1, 1:w + 1, :cin] = x_ref[0]
    if cin < c1p:   # pad channels hit zero weight rows, but must be finite
        xpad_ref[1:h + 1, 1:w + 1, cin:] = jnp.zeros((h, w, c1p - cin), cdtype)

    # conv1 => BN => ReLU ; result stays in VMEM (never touches HBM).  Padded
    # output channels come out exactly 0 (zero weight cols / scale / bias).
    mid = _conv3x3(xpad_ref, w1_ref, s1_ref[...], b1_ref[...], h, w)
    midpad_ref[1:h + 1, 1:w + 1, :] = mid.reshape(h, w, cmp_).astype(cdtype)

    # conv2 => BN => ReLU ; bf16, un-padded channel writeback.
    out = _conv3x3(midpad_ref, w2_ref, s2_ref[...], b2_ref[...], h, w)
    o_ref[0] = out.astype(o_ref.dtype)


def fold_bn(conv_bias, gamma, beta, running_mean, running_var, eps=1e-5):
    """Fold conv bias + BatchNorm(eval) into per-channel (scale, bias)."""
    scale = gamma / jnp.sqrt(running_var + eps)
    bias = (conv_bias - running_mean) * scale + beta
    return scale, bias


def _prep_conv(w, conv_b, gamma, beta, mean, var, k_pad, n_pad, dtype):
    """Channel-pad + flatten one conv's weights, fold its BN into scale/bias."""
    cin, cout = w.shape[2], w.shape[3]
    scale, bias = fold_bn(conv_b, gamma, beta, mean, var)
    wp = jnp.pad(w, ((0, 0), (0, 0), (0, k_pad - cin), (0, n_pad - cout)))
    wp = wp.reshape(9 * k_pad, n_pad).astype(dtype)
    sp = jnp.pad(scale, (0, n_pad - cout)).reshape(1, n_pad).astype(jnp.float32)
    bp = jnp.pad(bias, (0, n_pad - cout)).reshape(1, n_pad).astype(jnp.float32)
    return wp, sp, bp


def double_conv_pallas(x_nchw, params, compute_dtype=jnp.bfloat16):
    """Forward pass of double_conv.  NCHW in (like PyTorch), NCHW f32 out."""
    (w1, b1, g1, be1, m1, v1), (w2, b2, g2, be2, m2, v2) = params
    n, cin, h, w = x_nchw.shape
    cmid = w1.shape[-1]
    cout = w2.shape[-1]

    c1p = _round_up(cin, LANE)     # lane-padded widths used only inside VMEM
    cmp_ = _round_up(cmid, LANE)

    # NCHW -> NHWC (channel = lane dim); NO channel padding in HBM; bf16 MXU
    # inputs (accumulation stays f32 in-kernel).
    x = jnp.transpose(x_nchw, (0, 2, 3, 1)).astype(compute_dtype)

    w1p, s1, bb1 = _prep_conv(w1, b1, g1, be1, m1, v1, c1p, cmp_, compute_dtype)
    w2p, s2, bb2 = _prep_conv(w2, b2, g2, be2, m2, v2, cmp_, cout, compute_dtype)

    single = pl.Buffered(1)        # constant operands: no double buffering

    out = pl.pallas_call(
        fused_double_conv_kernel,
        out_shape=jax.ShapeDtypeStruct((n, h * w, cout), compute_dtype),
        grid=(n,),
        in_specs=[
            pl.BlockSpec((1, h, w, cin), lambda i: (i, 0, 0, 0)),
            pl.BlockSpec((9 * c1p, cmp_), lambda i: (0, 0), pipeline_mode=single),
            pl.BlockSpec((1, cmp_), lambda i: (0, 0), pipeline_mode=single),
            pl.BlockSpec((1, cmp_), lambda i: (0, 0), pipeline_mode=single),
            pl.BlockSpec((9 * cmp_, cout), lambda i: (0, 0), pipeline_mode=single),
            pl.BlockSpec((1, cout), lambda i: (0, 0), pipeline_mode=single),
            pl.BlockSpec((1, cout), lambda i: (0, 0), pipeline_mode=single),
        ],
        out_specs=pl.BlockSpec((1, h * w, cout), lambda i: (i, 0, 0)),
        scratch_shapes=[
            pltpu.VMEM((h + 2, w + 2, c1p), compute_dtype),   # halo'd input
            pltpu.VMEM((h + 2, w + 2, cmp_), compute_dtype),  # halo'd conv1 out
        ],
        compiler_params=pltpu.CompilerParams(
            dimension_semantics=("parallel",),       # batch across TCs on v7x
            vmem_limit_bytes=_vmem_limit_bytes(),    # per-generation budget
        ),
    )(x, w1p, s1, bb1, w2p, s2, bb2)

    # (N, H*W, Cout) bf16 -> NCHW f32 (cheap: real Cout only, fused by XLA).
    out = out.reshape(n, h, w, cout)
    return jnp.transpose(out, (0, 3, 1, 2)).astype(jnp.float32)


# ---------------- pure-JAX reference for validation ----------------
def ref_conv_bn_relu(x_nhwc, w_hwio, conv_b, gamma, beta, mean, var, eps=1e-5):
    y = jax.lax.conv_general_dilated(
        x_nhwc, w_hwio, window_strides=(1, 1), padding="SAME",
        dimension_numbers=("NHWC", "HWIO", "NHWC"))
    y = y + conv_b
    y = (y - mean) / jnp.sqrt(var + eps) * gamma + beta
    return jnp.maximum(y, 0.0)


def ref_double_conv(x_nchw, params):
    x = jnp.transpose(x_nchw, (0, 2, 3, 1))
    (w1, b1, g1, be1, m1, v1), (w2, b2, g2, be2, m2, v2) = params
    y = ref_conv_bn_relu(x, w1, b1, g1, be1, m1, v1)
    y = ref_conv_bn_relu(y, w2, b2, g2, be2, m2, v2)
    return jnp.transpose(y, (0, 3, 1, 2))


def make_params(key, in_ch, out_ch):
    """Deterministic synthetic parameters, shapes mirror the PyTorch module."""
    ks = jax.random.split(key, 8)

    def conv_bn(kw, kb, kg, km, cin, cout):
        w = 0.1 * jax.random.normal(kw, (3, 3, cin, cout), jnp.float32)
        b = 0.05 * jax.random.normal(kb, (cout,), jnp.float32)
        gamma = 1.0 + 0.1 * jax.random.normal(kg, (cout,), jnp.float32)
        beta = 0.05 * jax.random.normal(km, (cout,), jnp.float32)
        running_mean = 0.01 * jnp.arange(cout, dtype=jnp.float32)
        running_var = 1.0 + 0.02 * jnp.arange(cout, dtype=jnp.float32)
        return (w, b, gamma, beta, running_mean, running_var)

    p1 = conv_bn(ks[0], ks[1], ks[2], ks[3], in_ch, out_ch)
    p2 = conv_bn(ks[4], ks[5], ks[6], ks[7], out_ch, out_ch)
    return (p1, p2)


if __name__ == "__main__":
    key = jax.random.PRNGKey(0)
    in_ch, out_ch = 4, 8
    N, H, W = 2, 16, 16

    kx, kp = jax.random.split(key)
    x = jax.random.normal(kx, (N, in_ch, H, W), jnp.float32)   # NCHW, like PyTorch
    params = make_params(kp, in_ch, out_ch)

    out = double_conv_pallas(x, params)
    out = jax.block_until_ready(out)

    ref = ref_double_conv(x, params)
    assert out.shape == (N, out_ch, H, W), out.shape
    # bf16 MXU inputs / bf16 writeback with f32 accumulation -> loose tolerance.
    max_err = float(jnp.max(jnp.abs(out - ref)))
    assert jnp.allclose(out, ref, atol=2e-2, rtol=2e-2), max_err

    print("KERNEL_OK")
</pallas_src>

<mosaic_0001>
module attributes {stable_mosaic.version = 11 : i64} {
  func.func @fused_double_conv_kernel(%arg0: i32, %arg1: memref<1x16x16x4xbf16, #tpu.memory_space<vmem>>, %arg2: memref<1152x128xbf16, #tpu.memory_space<vmem>>, %arg3: memref<1x128xf32, #tpu.memory_space<vmem>>, %arg4: memref<1x128xf32, #tpu.memory_space<vmem>>, %arg5: memref<1152x8xbf16, #tpu.memory_space<vmem>>, %arg6: memref<1x8xf32, #tpu.memory_space<vmem>>, %arg7: memref<1x8xf32, #tpu.memory_space<vmem>>, %arg8: memref<1x256x8xbf16, #tpu.memory_space<vmem>>, %arg9: memref<18x18x128xbf16, #tpu.memory_space<vmem>>, %arg10: memref<18x18x128xbf16, #tpu.memory_space<vmem>>) attributes {dimension_semantics = [#tpu.dimension_semantics<parallel>], iteration_bounds = array<i64: 2>, scalar_prefetch = 0 : i64, scratch_operands = 2 : i64, tpu.core_type = #tpu.core_type<tc>, window_params = [{transform_indices = @transform_0, window_bounds = array<i64: 1, 16, 16, 4>}, {pipeline_mode = #tpu.pipeline_mode<synchronous>, transform_indices = @transform_1, window_bounds = array<i64: 1152, 128>}, {pipeline_mode = #tpu.pipeline_mode<synchronous>, transform_indices = @transform_2, window_bounds = array<i64: 1, 128>}, {pipeline_mode = #tpu.pipeline_mode<synchronous>, transform_indices = @transform_3, window_bounds = array<i64: 1, 128>}, {pipeline_mode = #tpu.pipeline_mode<synchronous>, transform_indices = @transform_4, window_bounds = array<i64: 1152, 8>}, {pipeline_mode = #tpu.pipeline_mode<synchronous>, transform_indices = @transform_5, window_bounds = array<i64: 1, 8>}, {pipeline_mode = #tpu.pipeline_mode<synchronous>, transform_indices = @transform_6, window_bounds = array<i64: 1, 8>}, {transform_indices = @transform_7, window_bounds = array<i64: 1, 256, 8>}]} {
    %cst = arith.constant 0.000000e+00 : bf16
    %0 = vector.broadcast %cst : bf16 to vector<1x18x128xbf16>
    %cst_0 = arith.constant 0.000000e+00 : bf16
    %1 = vector.broadcast %cst_0 : bf16 to vector<18x1x128xbf16>
    %c0 = arith.constant 0 : index
    %c0_1 = arith.constant 0 : index
    %c0_2 = arith.constant 0 : index
    %2 = vector.load %arg9[%c0, %c0_1, %c0_2] : memref<18x18x128xbf16, #tpu.memory_space<vmem>>, vector<1x18x128xbf16>
    tpu.vector_store %arg9[%c0, %c0_1, %c0_2], %0 {strides = array<i32>} : memref<18x18x128xbf16, #tpu.memory_space<vmem>>, vector<1x18x128xbf16>,
    %c17 = arith.constant 17 : index
    %c0_3 = arith.constant 0 : index
    %c0_4 = arith.constant 0 : index
    %3 = vector.load %arg9[%c17, %c0_3, %c0_4] : memref<18x18x128xbf16, #tpu.memory_space<vmem>>, vector<1x18x128xbf16>
    tpu.vector_store %arg9[%c17, %c0_3, %c0_4], %0 {strides = array<i32>} : memref<18x18x128xbf16, #tpu.memory_space<vmem>>, vector<1x18x128xbf16>,
    %c0_5 = arith.constant 0 : index
    %c0_6 = arith.constant 0 : index
    %c0_7 = arith.constant 0 : index
    %4 = vector.load %arg9[%c0_5, %c0_6, %c0_7] : memref<18x18x128xbf16, #tpu.memory_space<vmem>>, vector<18x1x128xbf16>
    tpu.vector_store %arg9[%c0_5, %c0_6, %c0_7], %1 {strides = array<i32>} : memref<18x18x128xbf16, #tpu.memory_space<vmem>>, vector<18x1x128xbf16>,
    %c0_8 = arith.constant 0 : index
    %c17_9 = arith.constant 17 : index
    %c0_10 = arith.constant 0 : index
    %5 = vector.load %arg9[%c0_8, %c17_9, %c0_10] : memref<18x18x128xbf16, #tpu.memory_space<vmem>>, vector<18x1x128xbf16>
    tpu.vector_store %arg9[%c0_8, %c17_9, %c0_10], %1 {strides = array<i32>} : memref<18x18x128xbf16, #tpu.memory_space<vmem>>, vector<18x1x128xbf16>,
    %cst_11 = arith.constant 0.000000e+00 : bf16
    %6 = vector.broadcast %cst_11 : bf16 to vector<1x18x128xbf16>
    %cst_12 = arith.constant 0.000000e+00 : bf16
    %7 = vector.broadcast %cst_12 : bf16 to vector<18x1x128xbf16>
    %c0_13 = arith.constant 0 : index
    %c0_14 = arith.constant 0 : index
    %c0_15 = arith.constant 0 : index
    %8 = vector.load %arg10[%c0_13, %c0_14, %c0_15] : memref<18x18x128xbf16, #tpu.memory_space<vmem>>, vector<1x18x128xbf16>
    tpu.vector_store %arg10[%c0_13, %c0_14, %c0_15], %6 {strides = array<i32>} : memref<18x18x128xbf16, #tpu.memory_space<vmem>>, vector<1x18x128xbf16>,
    %c17_16 = arith.constant 17 : index
    %c0_17 = arith.constant 0 : index
    %c0_18 = arith.constant 0 : index
    %9 = vector.load %arg10[%c17_16, %c0_17, %c0_18] : memref<18x18x128xbf16, #tpu.memory_space<vmem>>, vector<1x18x128xbf16>
    tpu.vector_store %arg10[%c17_16, %c0_17, %c0_18], %6 {strides = array<i32>} : memref<18x18x128xbf16, #tpu.memory_space<vmem>>, vector<1x18x128xbf16>,
    %c0_19 = arith.constant 0 : index
    %c0_20 = arith.constant 0 : index
    %c0_21 = arith.constant 0 : index
    %10 = vector.load %arg10[%c0_19, %c0_20, %c0_21] : memref<18x18x128xbf16, #tpu.memory_space<vmem>>, vector<18x1x128xbf16>
    tpu.vector_store %arg10[%c0_19, %c0_20, %c0_21], %7 {strides = array<i32>} : memref<18x18x128xbf16, #tpu.memory_space<vmem>>, vector<18x1x128xbf16>,
    %c0_22 = arith.constant 0 : index
    %c17_23 = arith.constant 17 : index
    %c0_24 = arith.constant 0 : index
    %11 = vector.load %arg10[%c0_22, %c17_23, %c0_24] : memref<18x18x128xbf16, #tpu.memory_space<vmem>>, vector<18x1x128xbf16>
    tpu.vector_store %arg10[%c0_22, %c17_23, %c0_24], %7 {strides = array<i32>} : memref<18x18x128xbf16, #tpu.memory_space<vmem>>, vector<18x1x128xbf16>,
    %c0_25 = arith.constant 0 : index
    %c0_26 = arith.constant 0 : index
    %c0_27 = arith.constant 0 : index
    %c0_28 = arith.constant 0 : index
    %12 = vector.load %arg1[%c0_25, %c0_26, %c0_27, %c0_28] : memref<1x16x16x4xbf16, #tpu.memory_space<vmem>>, vector<1x16x16x4xbf16>
    %13 = vector.shape_cast %12 : vector<1x16x16x4xbf16> to vector<16x16x4xbf16>
    %c1 = arith.constant 1 : index
    %c1_29 = arith.constant 1 : index
    %c0_30 = arith.constant 0 : index
    %14 = vector.load %arg9[%c1, %c1_29, %c0_30] : memref<18x18x128xbf16, #tpu.memory_space<vmem>>, vector<16x16x4xbf16>
    tpu.vector_store %arg9[%c1, %c1_29, %c0_30], %13 {strides = array<i32>} : memref<18x18x128xbf16, #tpu.memory_space<vmem>>, vector<16x16x4xbf16>,
    %cst_31 = arith.constant 0.000000e+00 : bf16
    %15 = vector.broadcast %cst_31 : bf16 to vector<16x16x124xbf16>
    %c1_32 = arith.constant 1 : index
    %c1_33 = arith.constant 1 : index
    %c4 = arith.constant 4 : index
    %16 = vector.load %arg9[%c1_32, %c1_33, %c4] : memref<18x18x128xbf16, #tpu.memory_space<vmem>>, vector<16x16x124xbf16>
    tpu.vector_store %arg9[%c1_32, %c1_33, %c4], %15 {strides = array<i32>} : memref<18x18x128xbf16, #tpu.memory_space<vmem>>, vector<16x16x124xbf16>,
    %c0_34 = arith.constant 0 : index
    %c0_35 = arith.constant 0 : index
    %17 = vector.load %arg3[%c0_34, %c0_35] : memref<1x128xf32, #tpu.memory_space<vmem>>, vector<1x128xf32>
    %c0_36 = arith.constant 0 : index
    %c0_37 = arith.constant 0 : index
    %18 = vector.load %arg4[%c0_36, %c0_37] : memref<1x128xf32, #tpu.memory_space<vmem>>, vector<1x128xf32>
    %c0_38 = arith.constant 0 : index
    %c0_39 = arith.constant 0 : index
    %c0_40 = arith.constant 0 : index
    %19 = vector.load %arg9[%c0_38, %c0_39, %c0_40] : memref<18x18x128xbf16, #tpu.memory_space<vmem>>, vector<16x16x128xbf16>
    %20 = vector.shape_cast %19 : vector<16x16x128xbf16> to vector<256x128xbf16>
    %c0_41 = arith.constant 0 : index
    %c1_42 = arith.constant 1 : index
    %c0_43 = arith.constant 0 : index
    %21 = vector.load %arg9[%c0_41, %c1_42, %c0_43] : memref<18x18x128xbf16, #tpu.memory_space<vmem>>, vector<16x16x128xbf16>
    %22 = vector.shape_cast %21 : vector<16x16x128xbf16> to vector<256x128xbf16>
    %c0_44 = arith.constant 0 : index
    %c2 = arith.constant 2 : index
    %c0_45 = arith.constant 0 : index
    %23 = vector.load %arg9[%c0_44, %c2, %c0_45] : memref<18x18x128xbf16, #tpu.memory_space<vmem>>, vector<16x16x128xbf16>
    %24 = vector.shape_cast %23 : vector<16x16x128xbf16> to vector<256x128xbf16>
    %25 = tpu.concatenate %20, %22, %24 in 1 : vector<256x128xbf16>, vector<256x128xbf16>, vector<256x128xbf16> -> vector<256x384xbf16>
    %c0_46 = arith.constant 0 : index
    %c0_47 = arith.constant 0 : index
    %26 = vector.load %arg2[%c0_46, %c0_47] : memref<1152x128xbf16, #tpu.memory_space<vmem>>, vector<384x128xbf16>
    %cst_48 = arith.constant dense<0.000000e+00> : vector<256x128xf32>
    %27 = tpu.matmul %25, %26, %cst_48 {dimension_numbers = #tpu.dot_dimension_numbers<[1], [0], [0], [1], [0, 0, 1, 1], [], []>} : vector<256x384xbf16>, vector<384x128xbf16>, vector<256x128xf32> -> vector<256x128xf32>
    %c1_49 = arith.constant 1 : index
    %c0_50 = arith.constant 0 : index
    %c0_51 = arith.constant 0 : index
    %28 = vector.load %arg9[%c1_49, %c0_50, %c0_51] : memref<18x18x128xbf16, #tpu.memory_space<vmem>>, vector<16x16x128xbf16>
    %29 = vector.shape_cast %28 : vector<16x16x128xbf16> to vector<256x128xbf16>
    %c1_52 = arith.constant 1 : index
    %c1_53 = arith.constant 1 : index
    %c0_54 = arith.constant 0 : index
    %30 = vector.load %arg9[%c1_52, %c1_53, %c0_54] : memref<18x18x128xbf16, #tpu.memory_space<vmem>>, vector<16x16x128xbf16>
    %31 = vector.shape_cast %30 : vector<16x16x128xbf16> to vector<256x128xbf16>
    %c1_55 = arith.constant 1 : index
    %c2_56 = arith.constant 2 : index
    %c0_57 = arith.constant 0 : index
    %32 = vector.load %arg9[%c1_55, %c2_56, %c0_57] : memref<18x18x128xbf16, #tpu.memory_space<vmem>>, vector<16x16x128xbf16>
    %33 = vector.shape_cast %32 : vector<16x16x128xbf16> to vector<256x128xbf16>
    %34 = tpu.concatenate %29, %31, %33 in 1 : vector<256x128xbf16>, vector<256x128xbf16>, vector<256x128xbf16> -> vector<256x384xbf16>
    %c384 = arith.constant 384 : index
    %c0_58 = arith.constant 0 : index
    %35 = vector.load %arg2[%c384, %c0_58] : memref<1152x128xbf16, #tpu.memory_space<vmem>>, vector<384x128xbf16>
    %cst_59 = arith.constant dense<0.000000e+00> : vector<256x128xf32>
    %36 = tpu.matmul %34, %35, %cst_59 {dimension_numbers = #tpu.dot_dimension_numbers<[1], [0], [0], [1], [0, 0, 1, 1], [], []>} : vector<256x384xbf16>, vector<384x128xbf16>, vector<256x128xf32> -> vector<256x128xf32>
    %37 = arith.addf %27, %36 : vector<256x128xf32>
    %c2_60 = arith.constant 2 : index
    %c0_61 = arith.constant 0 : index
    %c0_62 = arith.constant 0 : index
    %38 = vector.load %arg9[%c2_60, %c0_61, %c0_62] : memref<18x18x128xbf16, #tpu.memory_space<vmem>>, vector<16x16x128xbf16>
    %39 = vector.shape_cast %38 : vector<16x16x128xbf16> to vector<256x128xbf16>
    %c2_63 = arith.constant 2 : index
    %c1_64 = arith.constant 1 : index
    %c0_65 = arith.constant 0 : index
    %40 = vector.load %arg9[%c2_63, %c1_64, %c0_65] : memref<18x18x128xbf16, #tpu.memory_space<vmem>>, vector<16x16x128xbf16>
    %41 = vector.shape_cast %40 : vector<16x16x128xbf16> to vector<256x128xbf16>
    %c2_66 = arith.constant 2 : index
    %c2_67 = arith.constant 2 : index
    %c0_68 = arith.constant 0 : index
    %42 = vector.load %arg9[%c2_66, %c2_67, %c0_68] : memref<18x18x128xbf16, #tpu.memory_space<vmem>>, vector<16x16x128xbf16>
    %43 = vector.shape_cast %42 : vector<16x16x128xbf16> to vector<256x128xbf16>
    %44 = tpu.concatenate %39, %41, %43 in 1 : vector<256x128xbf16>, vector<256x128xbf16>, vector<256x128xbf16> -> vector<256x384xbf16>
    %c768 = arith.constant 768 : index
    %c0_69 = arith.constant 0 : index
    %45 = vector.load %arg2[%c768, %c0_69] : memref<1152x128xbf16, #tpu.memory_space<vmem>>, vector<384x128xbf16>
    %cst_70 = arith.constant dense<0.000000e+00> : vector<256x128xf32>
    %46 = tpu.matmul %44, %45, %cst_70 {dimension_numbers = #tpu.dot_dimension_numbers<[1], [0], [0], [1], [0, 0, 1, 1], [], []>} : vector<256x384xbf16>, vector<384x128xbf16>, vector<256x128xf32> -> vector<256x128xf32>
    %47 = arith.addf %37, %46 : vector<256x128xf32>
    %48 = vector.broadcast %17 : vector<1x128xf32> to vector<256x128xf32>
    %49 = arith.mulf %47, %48 : vector<256x128xf32>
    %50 = vector.broadcast %18 : vector<1x128xf32> to vector<256x128xf32>
    %51 = arith.addf %49, %50 : vector<256x128xf32>
    %cst_71 = arith.constant 0.000000e+00 : f32
    %52 = vector.broadcast %cst_71 : f32 to vector<256x128xf32>
    %53 = arith.maximumf %51, %52 : vector<256x128xf32>
    %54 = vector.shape_cast %53 : vector<256x128xf32> to vector<16x16x128xf32>
    %55 = arith.truncf %54 : vector<16x16x128xf32> to vector<16x16x128xbf16>
    %c1_72 = arith.constant 1 : index
    %c1_73 = arith.constant 1 : index
    %c0_74 = arith.constant 0 : index
    %56 = vector.load %arg10[%c1_72, %c1_73, %c0_74] : memref<18x18x128xbf16, #tpu.memory_space<vmem>>, vector<16x16x128xbf16>
    tpu.vector_store %arg10[%c1_72, %c1_73, %c0_74], %55 {strides = array<i32>} : memref<18x18x128xbf16, #tpu.memory_space<vmem>>, vector<16x16x128xbf16>,
    %c0_75 = arith.constant 0 : index
    %c0_76 = arith.constant 0 : index
    %57 = vector.load %arg6[%c0_75, %c0_76] : memref<1x8xf32, #tpu.memory_space<vmem>>, vector<1x8xf32>
    %c0_77 = arith.constant 0 : index
    %c0_78 = arith.constant 0 : index
    %58 = vector.load %arg7[%c0_77, %c0_78] : memref<1x8xf32, #tpu.memory_space<vmem>>, vector<1x8xf32>
    %c0_79 = arith.constant 0 : index
    %c0_80 = arith.constant 0 : index
    %c0_81 = arith.constant 0 : index
    %59 = vector.load %arg10[%c0_79, %c0_80, %c0_81] : memref<18x18x128xbf16, #tpu.memory_space<vmem>>, vector<16x16x128xbf16>
    %60 = vector.shape_cast %59 : vector<16x16x128xbf16> to vector<256x128xbf16>
    %c0_82 = arith.constant 0 : index
    %c1_83 = arith.constant 1 : index
    %c0_84 = arith.constant 0 : index
    %61 = vector.load %arg10[%c0_82, %c1_83, %c0_84] : memref<18x18x128xbf16, #tpu.memory_space<vmem>>, vector<16x16x128xbf16>
    %62 = vector.shape_cast %61 : vector<16x16x128xbf16> to vector<256x128xbf16>
    %c0_85 = arith.constant 0 : index
    %c2_86 = arith.constant 2 : index
    %c0_87 = arith.constant 0 : index
    %63 = vector.load %arg10[%c0_85, %c2_86, %c0_87] : memref<18x18x128xbf16, #tpu.memory_space<vmem>>, vector<16x16x128xbf16>
    %64 = vector.shape_cast %63 : vector<16x16x128xbf16> to vector<256x128xbf16>
    %65 = tpu.concatenate %60, %62, %64 in 1 : vector<256x128xbf16>, vector<256x128xbf16>, vector<256x128xbf16> -> vector<256x384xbf16>
    %c0_88 = arith.constant 0 : index
    %c0_89 = arith.constant 0 : index
    %66 = vector.load %arg5[%c0_88, %c0_89] : memref<1152x8xbf16, #tpu.memory_space<vmem>>, vector<384x8xbf16>
    %cst_90 = arith.constant dense<0.000000e+00> : vector<256x8xf32>
    %67 = tpu.matmul %65, %66, %cst_90 {dimension_numbers = #tpu.dot_dimension_numbers<[1], [0], [0], [1], [0, 0, 1, 1], [], []>} : vector<256x384xbf16>, vector<384x8xbf16>, vector<256x8xf32> -> vector<256x8xf32>
    %c1_91 = arith.constant 1 : index
    %c0_92 = arith.constant 0 : index
    %c0_93 = arith.constant 0 : index
    %68 = vector.load %arg10[%c1_91, %c0_92, %c0_93] : memref<18x18x128xbf16, #tpu.memory_space<vmem>>, vector<16x16x128xbf16>
    %69 = vector.shape_cast %68 : vector<16x16x128xbf16> to vector<256x128xbf16>
    %c1_94 = arith.constant 1 : index
    %c1_95 = arith.constant 1 : index
    %c0_96 = arith.constant 0 : index
    %70 = vector.load %arg10[%c1_94, %c1_95, %c0_96] : memref<18x18x128xbf16, #tpu.memory_space<vmem>>, vector<16x16x128xbf16>
    %71 = vector.shape_cast %70 : vector<16x16x128xbf16> to vector<256x128xbf16>
    %c1_97 = arith.constant 1 : index
    %c2_98 = arith.constant 2 : index
    %c0_99 = arith.constant 0 : index
    %72 = vector.load %arg10[%c1_97, %c2_98, %c0_99] : memref<18x18x128xbf16, #tpu.memory_space<vmem>>, vector<16x16x128xbf16>
    %73 = vector.shape_cast %72 : vector<16x16x128xbf16> to vector<256x128xbf16>
    %74 = tpu.concatenate %69, %71, %73 in 1 : vector<256x128xbf16>, vector<256x128xbf16>, vector<256x128xbf16> -> vector<256x384xbf16>
    %c384_100 = arith.constant 384 : index
    %c0_101 = arith.constant 0 : index
    %75 = vector.load %arg5[%c384_100, %c0_101] : memref<1152x8xbf16, #tpu.memory_space<vmem>>, vector<384x8xbf16>
    %cst_102 = arith.constant dense<0.000000e+00> : vector<256x8xf32>
    %76 = tpu.matmul %74, %75, %cst_102 {dimension_numbers = #tpu.dot_dimension_numbers<[1], [0], [0], [1], [0, 0, 1, 1], [], []>} : vector<256x384xbf16>, vector<384x8xbf16>, vector<256x8xf32> -> vector<256x8xf32>
    %77 = arith.addf %67, %76 : vector<256x8xf32>
    %c2_103 = arith.constant 2 : index
    %c0_104 = arith.constant 0 : index
    %c0_105 = arith.constant 0 : index
    %78 = vector.load %arg10[%c2_103, %c0_104, %c0_105] : memref<18x18x128xbf16, #tpu.memory_space<vmem>>, vector<16x16x128xbf16>
    %79 = vector.shape_cast %78 : vector<16x16x128xbf16> to vector<256x128xbf16>
    %c2_106 = arith.constant 2 : index
    %c1_107 = arith.constant 1 : index
    %c0_108 = arith.constant 0 : index
    %80 = vector.load %arg10[%c2_106, %c1_107, %c0_108] : memref<18x18x128xbf16, #tpu.memory_space<vmem>>, vector<16x16x128xbf16>
    %81 = vector.shape_cast %80 : vector<16x16x128xbf16> to vector<256x128xbf16>
    %c2_109 = arith.constant 2 : index
    %c2_110 = arith.constant 2 : index
    %c0_111 = arith.constant 0 : index
    %82 = vector.load %arg10[%c2_109, %c2_110, %c0_111] : memref<18x18x128xbf16, #tpu.memory_space<vmem>>, vector<16x16x128xbf16>
    %83 = vector.shape_cast %82 : vector<16x16x128xbf16> to vector<256x128xbf16>
    %84 = tpu.concatenate %79, %81, %83 in 1 : vector<256x128xbf16>, vector<256x128xbf16>, vector<256x128xbf16> -> vector<256x384xbf16>
    %c768_112 = arith.constant 768 : index
    %c0_113 = arith.constant 0 : index
    %85 = vector.load %arg5[%c768_112, %c0_113] : memref<1152x8xbf16, #tpu.memory_space<vmem>>, vector<384x8xbf16>
    %cst_114 = arith.constant dense<0.000000e+00> : vector<256x8xf32>
    %86 = tpu.matmul %84, %85, %cst_114 {dimension_numbers = #tpu.dot_dimension_numbers<[1], [0], [0], [1], [0, 0, 1, 1], [], []>} : vector<256x384xbf16>, vector<384x8xbf16>, vector<256x8xf32> -> vector<256x8xf32>
    %87 = arith.addf %77, %86 : vector<256x8xf32>
    %88 = vector.broadcast %57 : vector<1x8xf32> to vector<256x8xf32>
    %89 = arith.mulf %87, %88 : vector<256x8xf32>
    %90 = vector.broadcast %58 : vector<1x8xf32> to vector<256x8xf32>
    %91 = arith.addf %89, %90 : vector<256x8xf32>
    %cst_115 = arith.constant 0.000000e+00 : f32
    %92 = vector.broadcast %cst_115 : f32 to vector<256x8xf32>
    %93 = arith.maximumf %91, %92 : vector<256x8xf32>
    %94 = arith.truncf %93 : vector<256x8xf32> to vector<256x8xbf16>
    %c0_116 = arith.constant 0 : index
    %c0_117 = arith.constant 0 : index
    %c0_118 = arith.constant 0 : index
    %95 = vector.load %arg8[%c0_116, %c0_117, %c0_118] : memref<1x256x8xbf16, #tpu.memory_space<vmem>>, vector<1x256x8xbf16>
    %96 = vector.shape_cast %95 : vector<1x256x8xbf16> to vector<256x8xbf16>
    %97 = vector.shape_cast %94 : vector<256x8xbf16> to vector<1x256x8xbf16>
    tpu.vector_store %arg8[%c0_116, %c0_117, %c0_118], %97 {strides = array<i32>} : memref<1x256x8xbf16, #tpu.memory_space<vmem>>, vector<1x256x8xbf16>,
    return
  }
  func.func @transform_0(%arg0: i32) -> (i32, i32, i32, i32) {
    %c0_i32 = arith.constant 0 : i32
    %c0_i32_0 = arith.constant 0 : i32
    %c0_i32_1 = arith.constant 0 : i32
    %c0_i32_2 = arith.constant 0 : i32
    return %arg0, %c0_i32, %c0_i32_0, %c0_i32_1 : i32, i32, i32, i32
  }
  func.func @transform_1(%arg0: i32) -> (i32, i32) {
    %c0_i32 = arith.constant 0 : i32
    %c0_i32_0 = arith.constant 0 : i32
    %c0_i32_1 = arith.constant 0 : i32
    return %c0_i32, %c0_i32_0 : i32, i32
  }
  func.func @transform_2(%arg0: i32) -> (i32, i32) {
    %c0_i32 = arith.constant 0 : i32
    %c0_i32_0 = arith.constant 0 : i32
    %c0_i32_1 = arith.constant 0 : i32
    return %c0_i32, %c0_i32_0 : i32, i32
  }
  func.func @transform_3(%arg0: i32) -> (i32, i32) {
    %c0_i32 = arith.constant 0 : i32
    %c0_i32_0 = arith.constant 0 : i32
    %c0_i32_1 = arith.constant 0 : i32
    return %c0_i32, %c0_i32_0 : i32, i32
  }
  func.func @transform_4(%arg0: i32) -> (i32, i32) {
    %c0_i32 = arith.constant 0 : i32
    %c0_i32_0 = arith.constant 0 : i32
    %c0_i32_1 = arith.constant 0 : i32
    return %c0_i32, %c0_i32_0 : i32, i32
  }
  func.func @transform_5(%arg0: i32) -> (i32, i32) {
    %c0_i32 = arith.constant 0 : i32
    %c0_i32_0 = arith.constant 0 : i32
    %c0_i32_1 = arith.constant 0 : i32
    return %c0_i32, %c0_i32_0 : i32, i32
  }
  func.func @transform_6(%arg0: i32) -> (i32, i32) {
    %c0_i32 = arith.constant 0 : i32
    %c0_i32_0 = arith.constant 0 : i32
    %c0_i32_1 = arith.constant 0 : i32
    return %c0_i32, %c0_i32_0 : i32, i32
  }
  func.func @transform_7(%arg0: i32) -> (i32, i32, i32) {
    %c0_i32 = arith.constant 0 : i32
    %c0_i32_0 = arith.constant 0 : i32
    %c0_i32_1 = arith.constant 0 : i32
    return %arg0, %c0_i32, %c0_i32_0 : i32, i32, i32
  }
}

</mosaic_0001>

<llo_original>
// kernel: tpu_custom_call.1
$region0: #{tpu_custom_call.1}
  #allocation0 [shape = 'u32[]', space=smem, size = 0x4, offset = 0x4, fixed_abs, tag = 'smem constant byte address 0x4 - core index']
  #allocation1 [shape = 'u32[144,128]{1,0:T(1,128)}', space=vmem, size = 0x12000, scoped, tag = 'internal scratch']
  #allocation2 [shape = 'bf16[18,18,128]{2,1,0:T(8,128)(2,1)}', space=vmem, size = 0x1b000, scoped, tag = 'scratch operand']
  #allocation3 [shape = 'bf16[18,18,128]{2,1,0:T(8,128)(2,1)}', space=vmem, size = 0x1b000, scoped, tag = 'scratch operand']
  %s0 = inlined_call_operand.vmem [shape: bf16[2,16,16,4], index: 0, kind: input, shape index: {}]
  %s1 = inlined_call_operand.vmem [shape: bf16[1152,128], index: 1, kind: input, shape index: {}]
  %s2 = inlined_call_operand.vmem [shape: f32[1,128], index: 2, kind: input, shape index: {}]
  %s3 = inlined_call_operand.vmem [shape: f32[1,128], index: 3, kind: input, shape index: {}]
  %s4 = inlined_call_operand.vmem [shape: bf16[1152,8], index: 4, kind: input, shape index: {}]
  %s5 = inlined_call_operand.vmem [shape: f32[1,8], index: 5, kind: input, shape index: {}]
  %s6 = inlined_call_operand.vmem [shape: f32[1,8], index: 6, kind: input, shape index: {}]
  %s7 = inlined_call_operand.vmem [shape: bf16[2,256,8], index: 7, kind: output, shape index: {}]
  %s8 = sld [smem:[#allocation0]]
  $region61: #{tpu_custom_call.1} parent=0
    _
  %s10 = ssub.s32 1, %s8
  %s11 = scalar_select 0, %s10, %s8
  loop: start=0, step=1, limit=4
  $region2: #{tpu_custom_call.1} parent=0 // loop_pre_header
    _
  $region3: #{tpu_custom_call.1} parent=0 // loop_header
    %s13 = sphi 0, %s17
    %p14 = scmp.ge.s32.totalorder %s13, 4
    %s23 = sphi 0, %s25
    %s26 = sphi 0, %s23
    %s27 = sphi 0, %s26
    %s43 = sphi 0, %s27
    %s47 = sphi 0, %s47
    %s49 = sphi 0, %s47
    %s50 = sphi 0, %s49
    %s64 = sphi 0, %s50
    %s68 = sphi 0, %s68
    %s70 = sphi 0, %s68
    %s71 = sphi 0, %s70
    %s85 = sphi 0, %s71
    %s89 = sphi 0, %s89
    %s91 = sphi 0, %s89
    %s92 = sphi 0, %s91
    %s106 = sphi 0, %s92
    %s110 = sphi 0, %s110
    %s112 = sphi 0, %s110
    %s113 = sphi 0, %s112
    %s127 = sphi 0, %s113
    %s131 = sphi 0, %s131
    %s133 = sphi 0, %s131
    %s134 = sphi 0, %s133
    %s148 = sphi 0, %s134
    %s152 = sphi 0, %s152
    %s154 = sphi 0, %s152
    %s155 = sphi 0, %s154
    %s169 = sphi 0, %s155
    %s175 = sphi 0, %s177
    %s178 = sphi 0, %s175
    %s179 = sphi 0, %s178
    %s195 = sphi 0, %s179
  $region4: #{tpu_custom_call.1} parent=0 // loop_header_branch
    %16 = sbr.rel (%p14) target = $region8
  $region5: #{tpu_custom_call.1} parent=0 // loop_body
    %s18 = ssub.s32 %s13, 1
    %s19 = ssub.s32 %s13, 2
    %s20 = sadd.s32 %s13, 1
    %s21 = ssub.s32 %s13, %s20
    %p22 = scmp.eq.s32.totalorder %s21, 0
    %s24 = sadd.s32 %s23, 1
    %s25 = scalar_select %p22, %s23, %s24
    %p28 = pneg %p22
    %p29 = scmp.eq.s32.totalorder %s13, 1
    %p30 = por %p28, %p29
    %p31 = scmp.ne.s32.totalorder %s23, %s26
    %p32 = scmp.eq.s32.totalorder %s13, 0
    %p33 = por %p31, %p32
    %p34 = scmp.ne.s32.totalorder %s23, %s26
    %p35 = scmp.eq.s32.totalorder %s18, 1
    %p36 = por %p34, %p35
    %p37 = scmp.ne.s32.totalorder %s26, %s27
    %p38 = scmp.eq.s32.totalorder %s18, 0
    %p39 = por %p37, %p38
    %p40 = scmp.ne.s32.totalorder %s26, %s27
    %p41 = scmp.eq.s32.totalorder %s19, 1
    %p42 = por %p40, %p41
    %p44 = scmp.ne.s32.totalorder %s27, %s43
    %p45 = scmp.eq.s32.totalorder %s19, 0
    %p46 = por %p44, %p45
    %s48 = sadd.s32 %s47, 1
    %p51 = scmp.eq.s32.totalorder %s13, 1
    %p52 = scmp.ne.s32.totalorder %s47, %s49
    %p53 = scmp.eq.s32.totalorder %s13, 0
    %p54 = por %p52, %p53
    %p55 = scmp.ne.s32.totalorder %s47, %s49
    %p56 = scmp.eq.s32.totalorder %s18, 1
    %p57 = por %p55, %p56
    %p58 = scmp.ne.s32.totalorder %s49, %s50
    %p59 = scmp.eq.s32.totalorder %s18, 0
    %p60 = por %p58, %p59
    %p61 = scmp.ne.s32.totalorder %s49, %s50
    %p62 = scmp.eq.s32.totalorder %s19, 1
    %p63 = por %p61, %p62
    %p65 = scmp.ne.s32.totalorder %s50, %s64
    %p66 = scmp.eq.s32.totalorder %s19, 0
    %p67 = por %p65, %p66
    %s69 = sadd.s32 %s68, 1
    %p72 = scmp.eq.s32.totalorder %s13, 1
    %p73 = scmp.ne.s32.totalorder %s68, %s70
    %p74 = scmp.eq.s32.totalorder %s13, 0
    %p75 = por %p73, %p74
    %p76 = scmp.ne.s32.totalorder %s68, %s70
    %p77 = scmp.eq.s32.totalorder %s18, 1
    %p78 = por %p76, %p77
    %p79 = scmp.ne.s32.totalorder %s70, %s71
    %p80 = scmp.eq.s32.totalorder %s18, 0
    %p81 = por %p79, %p80
    %p82 = scmp.ne.s32.totalorder %s70, %s71
    %p83 = scmp.eq.s32.totalorder %s19, 1
    %p84 = por %p82, %p83
    %p86 = scmp.ne.s32.totalorder %s71, %s85
    %p87 = scmp.eq.s32.totalorder %s19, 0
    %p88 = por %p86, %p87
    %s90 = sadd.s32 %s89, 1
    %p93 = scmp.eq.s32.totalorder %s13, 1
    %p94 = scmp.ne.s32.totalorder %s89, %s91
    %p95 = scmp.eq.s32.totalorder %s13, 0
    %p96 = por %p94, %p95
    %p97 = scmp.ne.s32.totalorder %s89, %s91
    %p98 = scmp.eq.s32.totalorder %s18, 1
    %p99 = por %p97, %p98
    %p100 = scmp.ne.s32.totalorder %s91, %s92
    %p101 = scmp.eq.s32.totalorder %s18, 0
    %p102 = por %p100, %p101
    %p103 = scmp.ne.s32.totalorder %s91, %s92
    %p104 = scmp.eq.s32.totalorder %s19, 1
    %p105 = por %p103, %p104
    %p107 = scmp.ne.s32.totalorder %s92, %s106
    %p108 = scmp.eq.s32.totalorder %s19, 0
    %p109 = por %p107, %p108
    %s111 = sadd.s32 %s110, 1
    %p114 = scmp.eq.s32.totalorder %s13, 1
    %p115 = scmp.ne.s32.totalorder %s110, %s112
    %p116 = scmp.eq.s32.totalorder %s13, 0
    %p117 = por %p115, %p116
    %p118 = scmp.ne.s32.totalorder %s110, %s112
    %p119 = scmp.eq.s32.totalorder %s18, 1
    %p120 = por %p118, %p119
    %p121 = scmp.ne.s32.totalorder %s112, %s113
    %p122 = scmp.eq.s32.totalorder %s18, 0
    %p123 = por %p121, %p122
    %p124 = scmp.ne.s32.totalorder %s112, %s113
    %p125 = scmp.eq.s32.totalorder %s19, 1
    %p126 = por %p124, %p125
    %p128 = scmp.ne.s32.totalorder %s113, %s127
    %p129 = scmp.eq.s32.totalorder %s19, 0
    %p130 = por %p128, %p129
    %s132 = sadd.s32 %s131, 1
    %p135 = scmp.eq.s32.totalorder %s13, 1
    %p136 = scmp.ne.s32.totalorder %s131, %s133
    %p137 = scmp.eq.s32.totalorder %s13, 0
    %p138 = por %p136, %p137
    %p139 = scmp.ne.s32.totalorder %s131, %s133
    %p140 = scmp.eq.s32.totalorder %s18, 1
    %p141 = por %p139, %p140
    %p142 = scmp.ne.s32.totalorder %s133, %s134
    %p143 = scmp.eq.s32.totalorder %s18, 0
    %p144 = por %p142, %p143
    %p145 = scmp.ne.s32.totalorder %s133, %s134
    %p146 = scmp.eq.s32.totalorder %s19, 1
    %p147 = por %p145, %p146
    %p149 = scmp.ne.s32.totalorder %s134, %s148
    %p150 = scmp.eq.s32.totalorder %s19, 0
    %p151 = por %p149, %p150
    %s153 = sadd.s32 %s152, 1
    %p156 = scmp.eq.s32.totalorder %s13, 1
    %p157 = scmp.ne.s32.totalorder %s152, %s154
    %p158 = scmp.eq.s32.totalorder %s13, 0
    %p159 = por %p157, %p158
    %p160 = scmp.ne.s32.totalorder %s152, %s154
    %p161 = scmp.eq.s32.totalorder %s18, 1
    %p162 = por %p160, %p161
    %p163 = scmp.ne.s32.totalorder %s154, %s155
    %p164 = scmp.eq.s32.totalorder %s18, 0
    %p165 = por %p163, %p164
    %p166 = scmp.ne.s32.totalorder %s154, %s155
    %p167 = scmp.eq.s32.totalorder %s19, 1
    %p168 = por %p166, %p167
    %p170 = scmp.ne.s32.totalorder %s155, %s169
    %p171 = scmp.eq.s32.totalorder %s19, 0
    %p172 = por %p170, %p171
    %s173 = ssub.s32 %s13, %s20
    %p174 = scmp.eq.s32.totalorder %s173, 0
    %s176 = sadd.s32 %s175, 1
    %s177 = scalar_select %p174, %s175, %s176
    %p180 = pneg %p174
    %p181 = scmp.eq.s32.totalorder %s13, 1
    %p182 = por %p180, %p181
    %p183 = scmp.ne.s32.totalorder %s175, %s178
    %p184 = scmp.eq.s32.totalorder %s13, 0
    %p185 = por %p183, %p184
    %p186 = scmp.ne.s32.totalorder %s175, %s178
    %p187 = scmp.eq.s32.totalorder %s18, 1
    %p188 = por %p186, %p187
    %p189 = scmp.ne.s32.totalorder %s178, %s179
    %p190 = scmp.eq.s32.totalorder %s18, 0
    %p191 = por %p189, %p190
    %p192 = scmp.ne.s32.totalorder %s178, %s179
    %p193 = scmp.eq.s32.totalorder %s19, 1
    %p194 = por %p192, %p193
    %p196 = scmp.ne.s32.totalorder %s179, %s195
    %p197 = scmp.eq.s32.totalorder %s19, 0
    %p198 = por %p196, %p197
    %p199 = scmp.le.s32.totalorder 1, %s13
    %p200 = scmp.lt.s32.totalorder %s13, 3
    %p201 = pnand %p199, %p200
    %p202 = pneg %p201
    // Predicated region
    $region9: #{tpu_custom_call.1} parent=5 // pred_check
      _
    $region10: #{tpu_custom_call.1} parent=5 // pred_check_branch
      %204 = sbr.rel (%p201) target = $region12
    $region11: #{tpu_custom_call.1} parent=5 // pred_region
      %s205 = ssub.s32 %s13, 1
      // Predicated region
      $region13: #{tpu_custom_call.1} parent=11 // pred_check
        %p206 = pneg %p60
      $region14: #{tpu_custom_call.1} parent=11 // pred_check_branch
        %208 = sbr.rel (%p206) target = $region16
      $region15: #{tpu_custom_call.1} parent=11 // pred_region
        _
      $region16: #{tpu_custom_call.1} parent=11 // pred_fallthru
        _
      // Predicated region
      $region17: #{tpu_custom_call.1} parent=11 // pred_check
        %p209 = pneg %p81
      $region18: #{tpu_custom_call.1} parent=11 // pred_check_branch
        %211 = sbr.rel (%p209) target = $region20
      $region19: #{tpu_custom_call.1} parent=11 // pred_region
        _
      $region20: #{tpu_custom_call.1} parent=11 // pred_fallthru
        _
      // Predicated region
      $region21: #{tpu_custom_call.1} parent=11 // pred_check
        %p212 = pneg %p102
      $region22: #{tpu_custom_call.1} parent=11 // pred_check_branch
        %214 = sbr.rel (%p212) target = $region24
      $region23: #{tpu_custom_call.1} parent=11 // pred_region
        _
      $region24: #{tpu_custom_call.1} parent=11 // pred_fallthru
        _
      // Predicated region
      $region25: #{tpu_custom_call.1} parent=11 // pred_check
        %p215 = pneg %p123
      $region26: #{tpu_custom_call.1} parent=11 // pred_check_branch
        %217 = sbr.rel (%p215) target = $region28
      $region27: #{tpu_custom_call.1} parent=11 // pred_region
        _
      $region28: #{tpu_custom_call.1} parent=11 // pred_fallthru
        _
      // Predicated region
      $region29: #{tpu_custom_call.1} parent=11 // pred_check
        %p218 = pneg %p144
      $region30: #{tpu_custom_call.1} parent=11 // pred_check_branch
        %220 = sbr.rel (%p218) target = $region32
      $region31: #{tpu_custom_call.1} parent=11 // pred_region
        _
      $region32: #{tpu_custom_call.1} parent=11 // pred_fallthru
        _
      // Predicated region
      $region33: #{tpu_custom_call.1} parent=11 // pred_check
        %p221 = pneg %p165
      $region34: #{tpu_custom_call.1} parent=11 // pred_check_branch
        %223 = sbr.rel (%p221) target = $region36
      $region35: #{tpu_custom_call.1} parent=11 // pred_region
        _
      $region36: #{tpu_custom_call.1} parent=11 // pred_fallthru
        _
    $region12: #{tpu_custom_call.1} parent=5 // pred_fallthru
      _
    %p224 = scmp.lt.s32.totalorder %s13, 2
    // Predicated region
    $region37: #{tpu_custom_call.1} parent=5 // pred_check
      %p225 = pneg %p224
    $region38: #{tpu_custom_call.1} parent=5 // pred_check_branch
      %227 = sbr.rel (%p225) target = $region40
    $region39: #{tpu_custom_call.1} parent=5 // pred_region
      // Predicated region
      $region41: #{tpu_custom_call.1} parent=39 // pred_check
        %p228 = pneg %p33
      $region42: #{tpu_custom_call.1} parent=39 // pred_check_branch
        %230 = sbr.rel (%p228) target = $region44
      $region43: #{tpu_custom_call.1} parent=39 // pred_region
        %p231 = scmp.lt.s32.totalorder %s13, 1
        %s232 = scalar_select %p231, %s13, 1
        %s233 = smul.addr %s232, 32
        %s234 = smul.addr %s233, 4
        %s235 = scalar_lea.vmem %s0, %s234
      $region44: #{tpu_custom_call.1} parent=39 // pred_fallthru
        _
    $region40: #{tpu_custom_call.1} parent=5 // pred_fallthru
      _
    %p236 = scmp.le.s32.totalorder 1, %s13
    %p237 = scmp.lt.s32.totalorder %s13, 3
    %p238 = pnand %p236, %p237
    %p239 = pneg %p238
    // Predicated region
    $region45: #{tpu_custom_call.1} parent=5 // pred_check
      _
    $region46: #{tpu_custom_call.1} parent=5 // pred_check_branch
      %241 = sbr.rel (%p238) target = $region48
    $region47: #{tpu_custom_call.1} parent=5 // pred_region
      %s242 = ssub.s32 %s13, 1
      %p243 = scmp.lt.s32.totalorder %s18, 1
      %s244 = scalar_select %p243, %s18, 1
      %s245 = smul.addr %s244, 32
      %s246 = smul.addr %s245, 4
      %s247 = scalar_lea.vmem %s0, %s246
      %p248 = pneg %p39
      %p249 = pneg %p36
      %p250 = pneg %p60
      %p251 = pneg %p57
      %p252 = pneg %p81
      %p253 = pneg %p78
      %p254 = pneg %p102
      %p255 = pneg %p99
      %p256 = pneg %p123
      %p257 = pneg %p120
      %p258 = pneg %p144
      %p259 = pneg %p141
      %p260 = pneg %p165
      %p261 = pneg %p162
      %p262 = pneg %p191
      %p263 = pneg %p188
      %p264 = scmp.lt.s32.totalorder %s18, 1
      %s265 = scalar_select %p264, %s18, 1
      %s266 = smul.addr %s265, 32
      %s267 = smul.addr %s266, 4
      %s268 = scalar_lea.vmem %s7, %s267
      %p269 = scmp.lt.s32.totalorder %s18, 1
      %s270 = scalar_select %p269, %s18, 1
      %s271 = smul.addr %s270, 32
      %s272 = smul.addr %s271, 4
      %s273 = scalar_lea.vmem %s0, %s272
      %p274 = scmp.lt.s32.totalorder %s18, 1
      %s275 = scalar_select %p274, %s18, 1
      %s276 = smul.addr %s275, 32
      %s277 = smul.addr %s276, 4
      %s278 = scalar_lea.vmem %s7, %s277
      %280 = vst [vmem:[#allocation2] sm:$0xf] 0
      %281 = vst [vmem:[#allocation2 + $0x4] sm:$0xf] 0
      %282 = vst [vmem:[#allocation2 + $0x8] sm:$0x1] 0
      %s283 = scalar_lea.vmem [#allocation2], 204
      %284 = vst [vmem:[%s283] sm:$0xf] 0
      %285 = vst [vmem:[%s283 + $0x4] sm:$0xf] 0
      %286 = vst [vmem:[%s283 + $0x8] sm:$0x1] 0
      %vm287 = vcmask 1040384
      %vm288 = vsmask.f32 256
      %vm289 = vmand %vm287, %vm288
      %v290 = vld [vmem:[#allocation2] sm:$0x1]
      %v291 = vsel %vm289, 0, %v290
      %292 = vst [vmem:[#allocation2] sm:$0x1] %v291
      %v293 = vld [vmem:[#allocation2 + $0xc] sm:$0x1]
      %v294 = vsel %vm289, 0, %v293
      %295 = vst [vmem:[#allocation2 + $0xc] sm:$0x1] %v294
      %v296 = vld [vmem:[#allocation2 + $0x18] sm:$0x1]
      %v297 = vsel %vm289, 0, %v296
      %298 = vst [vmem:[#allocation2 + $0x18] sm:$0x1] %v297
      %v299 = vld [vmem:[#allocation2 + $0x24] sm:$0x1]
      %v300 = vsel %vm289, 0, %v299
      %301 = vst [vmem:[#allocation2 + $0x24] sm:$0x1] %v300
      %v302 = vld [vmem:[#allocation2 + $0x30] sm:$0x1]
      %v303 = vsel %vm289, 0, %v302
      %304 = vst [vmem:[#allocation2 + $0x30] sm:$0x1] %v303
      %v305 = vld [vmem:[#allocation2 + $0x3c] sm:$0x1]
      %v306 = vsel %vm289, 0, %v305
      %307 = vst [vmem:[#allocation2 + $0x3c] sm:$0x1] %v306
      %v308 = vld [vmem:[#allocation2 + $0x48] sm:$0x1]
      %v309 = vsel %vm289, 0, %v308
      %310 = vst [vmem:[#allocation2 + $0x48] sm:$0x1] %v309
      %v311 = vld [vmem:[#allocation2 + $0x54] sm:$0x1]
      %v312 = vsel %vm289, 0, %v311
      %313 = vst [vmem:[#allocation2 + $0x54] sm:$0x1] %v312
      %v314 = vld [vmem:[#allocation2 + $0x60] sm:$0x1]
      %v315 = vsel %vm289, 0, %v314
      %316 = vst [vmem:[#allocation2 + $0x60] sm:$0x1] %v315
      %v317 = vld [vmem:[#allocation2 + $0x6c] sm:$0x1]
      %v318 = vsel %vm289, 0, %v317
      %319 = vst [vmem:[#allocation2 + $0x6c] sm:$0x1] %v318
      %v320 = vld [vmem:[#allocation2 + $0x78] sm:$0x1]
      %v321 = vsel %vm289, 0, %v320
      %322 = vst [vmem:[#allocation2 + $0x78] sm:$0x1] %v321
      %v323 = vld [vmem:[#allocation2 + $0x84] sm:$0x1]
      %v324 = vsel %vm289, 0, %v323
      %325 = vst [vmem:[#allocation2 + $0x84] sm:$0x1] %v324
      %v326 = vld [vmem:[#allocation2 + $0x90] sm:$0x1]
      %v327 = vsel %vm289, 0, %v326
      %328 = vst [vmem:[#allocation2 + $0x90] sm:$0x1] %v327
      %v329 = vld [vmem:[#allocation2 + $0x9c] sm:$0x1]
      %v330 = vsel %vm289, 0, %v329
      %331 = vst [vmem:[#allocation2 + $0x9c] sm:$0x1] %v330
      %v332 = vld [vmem:[#allocation2 + $0xa8] sm:$0x1]
      %v333 = vsel %vm289, 0, %v332
      %334 = vst [vmem:[#allocation2 + $0xa8] sm:$0x1] %v333
      %v335 = vld [vmem:[#allocation2 + $0xb4] sm:$0x1]
      %v336 = vsel %vm289, 0, %v335
      %337 = vst [vmem:[#allocation2 + $0xb4] sm:$0x1] %v336
      %v338 = vld [vmem:[#allocation2 + $0xc0] sm:$0x1]
      %v339 = vsel %vm289, 0, %v338
      %340 = vst [vmem:[#allocation2 + $0xc0] sm:$0x1] %v339
      %v341 = vld [vmem:[#allocation2 + $0xcc] sm:$0x1]
      %v342 = vsel %vm289, 0, %v341
      %343 = vst [vmem:[#allocation2 + $0xcc] sm:$0x1] %v342
      %vm344 = vsmask.f32 7938
      %vm345 = vmand %vm287, %vm344
      %v346 = vld [vmem:[#allocation2 + $0x8] sm:$0x1]
      %v347 = vsel %vm345, 0, %v346
      %348 = vst [vmem:[#allocation2 + $0x8] sm:$0x1] %v347
      %v349 = vld [vmem:[#allocation2 + $0x14] sm:$0x1]
      %v350 = vsel %vm345, 0, %v349
      %351 = vst [vmem:[#allocation2 + $0x14] sm:$0x1] %v350
      %v352 = vld [vmem:[#allocation2 + $0x20] sm:$0x1]
      %v353 = vsel %vm345, 0, %v352
      %354 = vst [vmem:[#allocation2 + $0x20] sm:$0x1] %v353
      %v355 = vld [vmem:[#allocation2 + $0x2c] sm:$0x1]
      %v356 = vsel %vm345, 0, %v355
      %357 = vst [vmem:[#allocation2 + $0x2c] sm:$0x1] %v356
      %v358 = vld [vmem:[#allocation2 + $0x38] sm:$0x1]
      %v359 = vsel %vm345, 0, %v358
      %360 = vst [vmem:[#allocation2 + $0x38] sm:$0x1] %v359
      %v361 = vld [vmem:[#allocation2 + $0x44] sm:$0x1]
      %v362 = vsel %vm345, 0, %v361
      %363 = vst [vmem:[#allocation2 + $0x44] sm:$0x1] %v362
      %v364 = vld [vmem:[#allocation2 + $0x50] sm:$0x1]
      %v365 = vsel %vm345, 0, %v364
      %366 = vst [vmem:[#allocation2 + $0x50] sm:$0x1] %v365
      %v367 = vld [vmem:[#allocation2 + $0x5c] sm:$0x1]
      %v368 = vsel %vm345, 0, %v367
      %369 = vst [vmem:[#allocation2 + $0x5c] sm:$0x1] %v368
      %v370 = vld [vmem:[#allocation2 + $0x68] sm:$0x1]
      %v371 = vsel %vm345, 0, %v370
      %372 = vst [vmem:[#allocation2 + $0x68] sm:$0x1] %v371
      %v373 = vld [vmem:[#allocation2 + $0x74] sm:$0x1]
      %v374 = vsel %vm345, 0, %v373
      %375 = vst [vmem:[#allocation2 + $0x74] sm:$0x1] %v374
      %v376 = vld [vmem:[#allocation2 + $0x80] sm:$0x1]
      %v377 = vsel %vm345, 0, %v376
      %378 = vst [vmem:[#allocation2 + $0x80] sm:$0x1] %v377
      %v379 = vld [vmem:[#allocation2 + $0x8c] sm:$0x1]
      %v380 = vsel %vm345, 0, %v379
      %381 = vst [vmem:[#allocation2 + $0x8c] sm:$0x1] %v380
      %v382 = vld [vmem:[#allocation2 + $0x98] sm:$0x1]
      %v383 = vsel %vm345, 0, %v382
      %384 = vst [vmem:[#allocation2 + $0x98] sm:$0x1] %v383
      %v385 = vld [vmem:[#allocation2 + $0xa4] sm:$0x1]
      %v386 = vsel %vm345, 0, %v385
      %387 = vst [vmem:[#allocation2 + $0xa4] sm:$0x1] %v386
      %v388 = vld [vmem:[#allocation2 + $0xb0] sm:$0x1]
      %v389 = vsel %vm345, 0, %v388
      %390 = vst [vmem:[#allocation2 + $0xb0] sm:$0x1] %v389
      %v391 = vld [vmem:[#allocation2 + $0xbc] sm:$0x1]
      %v392 = vsel %vm345, 0, %v391
      %393 = vst [vmem:[#allocation2 + $0xbc] sm:$0x1] %v392
      %v394 = vld [vmem:[#allocation2 + $0xc8] sm:$0x1]
      %v395 = vsel %vm345, 0, %v394
      %396 = vst [vmem:[#allocation2 + $0xc8] sm:$0x1] %v395
      %v397 = vld [vmem:[#allocation2 + $0xd4] sm:$0x1]
      %v398 = vsel %vm345, 0, %v397
      %399 = vst [vmem:[#allocation2 + $0xd4] sm:$0x1] %v398
      %400 = vst [vmem:[#allocation3] sm:$0xf] 0
      %401 = vst [vmem:[#allocation3 + $0x4] sm:$0xf] 0
      %402 = vst [vmem:[#allocation3 + $0x8] sm:$0x1] 0
      %s403 = scalar_lea.vmem [#allocation3], 204
      %404 = vst [vmem:[%s403] sm:$0xf] 0
      %405 = vst [vmem:[%s403 + $0x4] sm:$0xf] 0
      %406 = vst [vmem:[%s403 + $0x8] sm:$0x1] 0
      %v407 = vld [vmem:[#allocation3] sm:$0x1]
      %v408 = vsel %vm289, 0, %v407
      %409 = vst [vmem:[#allocation3] sm:$0x1] %v408
      %v410 = vld [vmem:[#allocation3 + $0xc] sm:$0x1]
      %v411 = vsel %vm289, 0, %v410
      %412 = vst [vmem:[#allocation3 + $0xc] sm:$0x1] %v411
      %v413 = vld [vmem:[#allocation3 + $0x18] sm:$0x1]
      %v414 = vsel %vm289, 0, %v413
      %415 = vst [vmem:[#allocation3 + $0x18] sm:$0x1] %v414
      %v416 = vld [vmem:[#allocation3 + $0x24] sm:$0x1]
      %v417 = vsel %vm289, 0, %v416
      %418 = vst [vmem:[#allocation3 + $0x24] sm:$0x1] %v417
      %v419 = vld [vmem:[#allocation3 + $0x30] sm:$0x1]
      %v420 = vsel %vm289, 0, %v419
      %421 = vst [vmem:[#allocation3 + $0x30] sm:$0x1] %v420
      %v422 = vld [vmem:[#allocation3 + $0x3c] sm:$0x1]
      %v423 = vsel %vm289, 0, %v422
      %424 = vst [vmem:[#allocation3 + $0x3c] sm:$0x1] %v423
      %v425 = vld [vmem:[#allocation3 + $0x48] sm:$0x1]
      %v426 = vsel %vm289, 0, %v425
      %427 = vst [vmem:[#allocation3 + $0x48] sm:$0x1] %v426
      %v428 = vld [vmem:[#allocation3 + $0x54] sm:$0x1]
      %v429 = vsel %vm289, 0, %v428
      %430 = vst [vmem:[#allocation3 + $0x54] sm:$0x1] %v429
      %v431 = vld [vmem:[#allocation3 + $0x60] sm:$0x1]
      %v432 = vsel %vm289, 0, %v431
      %433 = vst [vmem:[#allocation3 + $0x60] sm:$0x1] %v432
      %v434 = vld [vmem:[#allocation3 + $0x6c] sm:$0x1]
      %v435 = vsel %vm289, 0, %v434
      %436 = vst [vmem:[#allocation3 + $0x6c] sm:$0x1] %v435
      %v437 = vld [vmem:[#allocation3 + $0x78] sm:$0x1]
      %v438 = vsel %vm289, 0, %v437
      %439 = vst [vmem:[#allocation3 + $0x78] sm:$0x1] %v438
      %v440 = vld [vmem:[#allocation3 + $0x84] sm:$0x1]
      %v441 = vsel %vm289, 0, %v440
      %442 = vst [vmem:[#allocation3 + $0x84] sm:$0x1] %v441
      %v443 = vld [vmem:[#allocation3 + $0x90] sm:$0x1]
      %v444 = vsel %vm289, 0, %v443
      %445 = vst [vmem:[#allocation3 + $0x90] sm:$0x1] %v444
      %v446 = vld [vmem:[#allocation3 + $0x9c] sm:$0x1]
      %v447 = vsel %vm289, 0, %v446
      %448 = vst [vmem:[#allocation3 + $0x9c] sm:$0x1] %v447
      %v449 = vld [vmem:[#allocation3 + $0xa8] sm:$0x1]
      %v450 = vsel %vm289, 0, %v449
      %451 = vst [vmem:[#allocation3 + $0xa8] sm:$0x1] %v450
      %v452 = vld [vmem:[#allocation3 + $0xb4] sm:$0x1]
      %v453 = vsel %vm289, 0, %v452
      %454 = vst [vmem:[#allocation3 + $0xb4] sm:$0x1] %v453
      %v455 = vld [vmem:[#allocation3 + $0xc0] sm:$0x1]
      %v456 = vsel %vm289, 0, %v455
      %457 = vst [vmem:[#allocation3 + $0xc0] sm:$0x1] %v456
      %v458 = vld [vmem:[#allocation3 + $0xcc] sm:$0x1]
      %v459 = vsel %vm289, 0, %v458
      %460 = vst [vmem:[#allocation3 + $0xcc] sm:$0x1] %v459
      %v461 = vld [vmem:[#allocation3 + $0x8] sm:$0x1]
      %v462 = vsel %vm345, 0, %v461
      %463 = vst [vmem:[#allocation3 + $0x8] sm:$0x1] %v462
      %v464 = vld [vmem:[#allocation3 + $0x14] sm:$0x1]
      %v465 = vsel %vm345, 0, %v464
      %466 = vst [vmem:[#allocation3 + $0x14] sm:$0x1] %v465
      %v467 = vld [vmem:[#allocation3 + $0x20] sm:$0x1]
      %v468 = vsel %vm345, 0, %v467
      %469 = vst [vmem:[#allocation3 + $0x20] sm:$0x1] %v468
      %v470 = vld [vmem:[#allocation3 + $0x2c] sm:$0x1]
      %v471 = vsel %vm345, 0, %v470
      %472 = vst [vmem:[#allocation3 + $0x2c] sm:$0x1] %v471
      %v473 = vld [vmem:[#allocation3 + $0x38] sm:$0x1]
      %v474 = vsel %vm345, 0, %v473
      %475 = vst [vmem:[#allocation3 + $0x38] sm:$0x1] %v474
      %v476 = vld [vmem:[#allocation3 + $0x44] sm:$0x1]
      %v477 = vsel %vm345, 0, %v476
      %478 = vst [vmem:[#allocation3 + $0x44] sm:$0x1] %v477
      %v479 = vld [vmem:[#allocation3 + $0x50] sm:$0x1]
      %v480 = vsel %vm345, 0, %v479
      %481 = vst [vmem:[#allocation3 + $0x50] sm:$0x1] %v480
      %v482 = vld [vmem:[#allocation3 + $0x5c] sm:$0x1]
      %v483 = vsel %vm345, 0, %v482
      %484 = vst [vmem:[#allocation3 + $0x5c] sm:$0x1] %v483
      %v485 = vld [vmem:[#allocation3 + $0x68] sm:$0x1]
      %v486 = vsel %vm345, 0, %v485
      %487 = vst [vmem:[#allocation3 + $0x68] sm:$0x1] %v486
      %v488 = vld [vmem:[#allocation3 + $0x74] sm:$0x1]
      %v489 = vsel %vm345, 0, %v488
      %490 = vst [vmem:[#allocation3 + $0x74] sm:$0x1] %v489
      %v491 = vld [vmem:[#allocation3 + $0x80] sm:$0x1]
      %v492 = vsel %vm345, 0, %v491
      %493 = vst [vmem:[#allocation3 + $0x80] sm:$0x1] %v492
      %v494 = vld [vmem:[#allocation3 + $0x8c] sm:$0x1]
      %v495 = vsel %vm345, 0, %v494
      %496 = vst [vmem:[#allocation3 + $0x8c] sm:$0x1] %v495
      %v497 = vld [vmem:[#allocation3 + $0x98] sm:$0x1]
      %v498 = vsel %vm345, 0, %v497
      %499 = vst [vmem:[#allocation3 + $0x98] sm:$0x1] %v498
      %v500 = vld [vmem:[#allocation3 + $0xa4] sm:$0x1]
      %v501 = vsel %vm345, 0, %v500
      %502 = vst [vmem:[#allocation3 + $0xa4] sm:$0x1] %v501
      %v503 = vld [vmem:[#allocation3 + $0xb0] sm:$0x1]
      %v504 = vsel %vm345, 0, %v503
      %505 = vst [vmem:[#allocation3 + $0xb0] sm:$0x1] %v504
      %v506 = vld [vmem:[#allocation3 + $0xbc] sm:$0x1]
      %v507 = vsel %vm345, 0, %v506
      %508 = vst [vmem:[#allocation3 + $0xbc] sm:$0x1] %v507
      %v509 = vld [vmem:[#allocation3 + $0xc8] sm:$0x1]
      %v510 = vsel %vm345, 0, %v509
      %511 = vst [vmem:[#allocation3 + $0xc8] sm:$0x1] %v510
      %v512 = vld [vmem:[#allocation3 + $0xd4] sm:$0x1]
      %v513 = vsel %vm345, 0, %v512
      %514 = vst [vmem:[#allocation3 + $0xd4] sm:$0x1] %v513
      %v515 = vld [vmem:[%s273] sm:$0xf]
      %v516 = vld [vmem:[%s273 + $0x4] sm:$0xf]
      %v517 = vld [vmem:[%s273 + $0x8] sm:$0xf]
      %v518 = vld [vmem:[%s273 + $0xc] sm:$0xf]
      %v519 = vld [vmem:[%s273 + $0x10] sm:$0xf]
      %v520 = vld [vmem:[%s273 + $0x14] sm:$0xf]
      %v521 = vld [vmem:[%s273 + $0x18] sm:$0xf]
      %v522 = vld [vmem:[%s273 + $0x1c] sm:$0xf]
      %v523 = vld [vmem:[%s273 + $0x20] sm:$0xf]
      %v524 = vld [vmem:[%s273 + $0x24] sm:$0xf]
      %v525 = vld [vmem:[%s273 + $0x28] sm:$0xf]
      %v526 = vld [vmem:[%s273 + $0x2c] sm:$0xf]
      %v527 = vld [vmem:[%s273 + $0x30] sm:$0xf]
      %v528 = vld [vmem:[%s273 + $0x34] sm:$0xf]
      %v529 = vld [vmem:[%s273 + $0x38] sm:$0xf]
      %v530 = vld [vmem:[%s273 + $0x3c] sm:$0xf]
      %v531 = vld [vmem:[%s273 + $0x40] sm:$0xf]
      %v532 = vld [vmem:[%s273 + $0x44] sm:$0xf]
      %v533 = vld [vmem:[%s273 + $0x48] sm:$0xf]
      %v534 = vld [vmem:[%s273 + $0x4c] sm:$0xf]
      %v535 = vld [vmem:[%s273 + $0x50] sm:$0xf]
      %v536 = vld [vmem:[%s273 + $0x54] sm:$0xf]
      %v537 = vld [vmem:[%s273 + $0x58] sm:$0xf]
      %v538 = vld [vmem:[%s273 + $0x5c] sm:$0xf]
      %v539 = vld [vmem:[%s273 + $0x60] sm:$0xf]
      %v540 = vld [vmem:[%s273 + $0x64] sm:$0xf]
      %v541 = vld [vmem:[%s273 + $0x68] sm:$0xf]
      %v542 = vld [vmem:[%s273 + $0x6c] sm:$0xf]
      %v543 = vld [vmem:[%s273 + $0x70] sm:$0xf]
      %v544 = vld [vmem:[%s273 + $0x74] sm:$0xf]
      %v545 = vld [vmem:[%s273 + $0x78] sm:$0xf]
      %v546 = vld [vmem:[%s273 + $0x7c] sm:$0xf]
      %vm547 = vsmask.f32 4368
      %vm548 = vmor %vm288, %vm547
      %v550 = vshrl.u32 %v515, 16
      %v552 = vrot.slane %v550, 7
      %v553 = vshll.u32 %v515, 16
      %v555 = vor.u32 %v552, %v553
      %v556 = vrot.slane %v552, 4
      %v558 = vshrl.u32 %v516, 16
      %v560 = vrot.slane %v558, 7
      %v561 = vshll.u32 %v516, 16
      %v563 = vor.u32 %v560, %v561
      %v564 = vsel %vm548, %v556, %v563
      %v565 = vrot.slane %v560, 4
      %v567 = vshrl.u32 %v517, 16
      %v569 = vrot.slane %v567, 7
      %v570 = vshll.u32 %v517, 16
      %v572 = vor.u32 %v569, %v570
      %v573 = vrot.slane %v569, 4
      %v575 = vshrl.u32 %v518, 16
      %v577 = vrot.slane %v575, 7
      %v578 = vshll.u32 %v518, 16
      %v580 = vor.u32 %v577, %v578
      %v581 = vsel %vm548, %v573, %v580
      %v582 = vrot.slane %v577, 4
      %v584 = vshrl.u32 %v519, 16
      %v586 = vrot.slane %v584, 7
      %v587 = vshll.u32 %v519, 16
      %v589 = vor.u32 %v586, %v587
      %v590 = vrot.slane %v586, 4
      %v592 = vshrl.u32 %v520, 16
      %v594 = vrot.slane %v592, 7
      %v595 = vshll.u32 %v520, 16
      %v597 = vor.u32 %v594, %v595
      %v598 = vsel %vm548, %v590, %v597
      %v599 = vrot.slane %v594, 4
      %v601 = vshrl.u32 %v521, 16
      %v603 = vrot.slane %v601, 7
      %v604 = vshll.u32 %v521, 16
      %v606 = vor.u32 %v603, %v604
      %v607 = vrot.slane %v603, 4
      %v609 = vshrl.u32 %v522, 16
      %v611 = vrot.slane %v609, 7
      %v612 = vshll.u32 %v522, 16
      %v614 = vor.u32 %v611, %v612
      %v615 = vsel %vm548, %v607, %v614
      %v616 = vrot.slane %v611, 4
      %v618 = vshrl.u32 %v523, 16
      %v620 = vrot.slane %v618, 7
      %v621 = vshll.u32 %v523, 16
      %v623 = vor.u32 %v620, %v621
      %v624 = vrot.slane %v620, 4
      %v626 = vshrl.u32 %v524, 16
      %v628 = vrot.slane %v626, 7
      %v629 = vshll.u32 %v524, 16
      %v631 = vor.u32 %v628, %v629
      %v632 = vsel %vm548, %v624, %v631
      %v633 = vrot.slane %v628, 4
      %v635 = vshrl.u32 %v525, 16
      %v637 = vrot.slane %v635, 7
      %v638 = vshll.u32 %v525, 16
      %v640 = vor.u32 %v637, %v638
      %v641 = vrot.slane %v637, 4
      %v643 = vshrl.u32 %v526, 16
      %v645 = vrot.slane %v643, 7
      %v646 = vshll.u32 %v526, 16
      %v648 = vor.u32 %v645, %v646
      %v649 = vsel %vm548, %v641, %v648
      %v650 = vrot.slane %v645, 4
      %v652 = vshrl.u32 %v527, 16
      %v654 = vrot.slane %v652, 7
      %v655 = vshll.u32 %v527, 16
      %v657 = vor.u32 %v654, %v655
      %v658 = vrot.slane %v654, 4
      %v660 = vshrl.u32 %v528, 16
      %v662 = vrot.slane %v660, 7
      %v663 = vshll.u32 %v528, 16
      %v665 = vor.u32 %v662, %v663
      %v666 = vsel %vm548, %v658, %v665
      %v667 = vrot.slane %v662, 4
      %v669 = vshrl.u32 %v529, 16
      %v671 = vrot.slane %v669, 7
      %v672 = vshll.u32 %v529, 16
      %v674 = vor.u32 %v671, %v672
      %v675 = vrot.slane %v671, 4
      %v677 = vshrl.u32 %v530, 16
      %v679 = vrot.slane %v677, 7
      %v680 = vshll.u32 %v530, 16
      %v682 = vor.u32 %v679, %v680
      %v683 = vsel %vm548, %v675, %v682
      %v684 = vrot.slane %v679, 4
      %v686 = vshrl.u32 %v531, 16
      %v688 = vrot.slane %v686, 7
      %v689 = vshll.u32 %v531, 16
      %v691 = vor.u32 %v688, %v689
      %v692 = vrot.slane %v688, 4
      %v694 = vshrl.u32 %v532, 16
      %v696 = vrot.slane %v694, 7
      %v697 = vshll.u32 %v532, 16
      %v699 = vor.u32 %v696, %v697
      %v700 = vsel %vm548, %v692, %v699
      %v701 = vrot.slane %v696, 4
      %v703 = vshrl.u32 %v533, 16
      %v705 = vrot.slane %v703, 7
      %v706 = vshll.u32 %v533, 16
      %v708 = vor.u32 %v705, %v706
      %v709 = vrot.slane %v705, 4
      %v711 = vshrl.u32 %v534, 16
      %v713 = vrot.slane %v711, 7
      %v714 = vshll.u32 %v534, 16
      %v716 = vor.u32 %v713, %v714
      %v717 = vsel %vm548, %v709, %v716
      %v718 = vrot.slane %v713, 4
      %v720 = vshrl.u32 %v535, 16
      %v722 = vrot.slane %v720, 7
      %v723 = vshll.u32 %v535, 16
      %v725 = vor.u32 %v722, %v723
      %v726 = vrot.slane %v722, 4
      %v728 = vshrl.u32 %v536, 16
      %v730 = vrot.slane %v728, 7
      %v731 = vshll.u32 %v536, 16
      %v733 = vor.u32 %v730, %v731
      %v734 = vsel %vm548, %v726, %v733
      %v735 = vrot.slane %v730, 4
      %v737 = vshrl.u32 %v537, 16
      %v739 = vrot.slane %v737, 7
      %v740 = vshll.u32 %v537, 16
      %v742 = vor.u32 %v739, %v740
      %v743 = vrot.slane %v739, 4
      %v745 = vshrl.u32 %v538, 16
      %v747 = vrot.slane %v745, 7
      %v748 = vshll.u32 %v538, 16
      %v750 = vor.u32 %v747, %v748
      %v751 = vsel %vm548, %v743, %v750
      %v752 = vrot.slane %v747, 4
      %v754 = vshrl.u32 %v539, 16
      %v756 = vrot.slane %v754, 7
      %v757 = vshll.u32 %v539, 16
      %v759 = vor.u32 %v756, %v757
      %v760 = vrot.slane %v756, 4
      %v762 = vshrl.u32 %v540, 16
      %v764 = vrot.slane %v762, 7
      %v765 = vshll.u32 %v540, 16
      %v767 = vor.u32 %v764, %v765
      %v768 = vsel %vm548, %v760, %v767
      %v769 = vrot.slane %v764, 4
      %v771 = vshrl.u32 %v541, 16
      %v773 = vrot.slane %v771, 7
      %v774 = vshll.u32 %v541, 16
      %v776 = vor.u32 %v773, %v774
      %v777 = vrot.slane %v773, 4
      %v779 = vshrl.u32 %v542, 16
      %v781 = vrot.slane %v779, 7
      %v782 = vshll.u32 %v542, 16
      %v784 = vor.u32 %v781, %v782
      %v785 = vsel %vm548, %v777, %v784
      %v786 = vrot.slane %v781, 4
      %v788 = vshrl.u32 %v543, 16
      %v790 = vrot.slane %v788, 7
      %v791 = vshll.u32 %v543, 16
      %v793 = vor.u32 %v790, %v791
      %v794 = vrot.slane %v790, 4
      %v796 = vshrl.u32 %v544, 16
      %v798 = vrot.slane %v796, 7
      %v799 = vshll.u32 %v544, 16
      %v801 = vor.u32 %v798, %v799
      %v802 = vsel %vm548, %v794, %v801
      %v803 = vrot.slane %v798, 4
      %v805 = vshrl.u32 %v545, 16
      %v807 = vrot.slane %v805, 7
      %v808 = vshll.u32 %v545, 16
      %v810 = vor.u32 %v807, %v808
      %v811 = vrot.slane %v807, 4
      %v813 = vshrl.u32 %v546, 16
      %v815 = vrot.slane %v813, 7
      %v816 = vshll.u32 %v546, 16
      %v818 = vor.u32 %v815, %v816
      %v819 = vsel %vm548, %v811, %v818
      %v820 = vrot.slane %v815, 4
      %s869 = scalar_lea.vmem [#allocation2], 12
      %vm870 = vcmask 27648
      %vm871 = vmand %vm870, %vm344
      %v872 = vld [vmem:[%s869] sm:$0xf]
      %v873 = vsel %vm871, %v555, %v872
      %874 = vst [vmem:[%s869] sm:$0xf] %v873
      %vm875 = vcmask 27648
      %876 = vst.msk [vmem:[%s869 + $0x4] sm:$0xf] %vm875, %v564
      %vm877 = vcmask 24576
      %vm878 = vmand %vm877, %vm288
      %v879 = vld [vmem:[%s869 + $0x8] sm:$0x1]
      %v880 = vsel %vm878, %v565, %v879
      %881 = vst [vmem:[%s869 + $0x8] sm:$0x1] %v880
      %v882 = vld [vmem:[%s869 + $0xc] sm:$0xf]
      %v883 = vsel %vm871, %v572, %v882
      %884 = vst [vmem:[%s869 + $0xc] sm:$0xf] %v883
      %885 = vst.msk [vmem:[%s869 + $0x10] sm:$0xf] %vm875, %v581
      %v886 = vld [vmem:[%s869 + $0x14] sm:$0x1]
      %v887 = vsel %vm878, %v582, %v886
      %888 = vst [vmem:[%s869 + $0x14] sm:$0x1] %v887
      %v889 = vld [vmem:[%s869 + $0x18] sm:$0xf]
      %v890 = vsel %vm871, %v589, %v889
      %891 = vst [vmem:[%s869 + $0x18] sm:$0xf] %v890
      %892 = vst.msk [vmem:[%s869 + $0x1c] sm:$0xf] %vm875, %v598
      %v893 = vld [vmem:[%s869 + $0x20] sm:$0x1]
      %v894 = vsel %vm878, %v599, %v893
      %895 = vst [vmem:[%s869 + $0x20] sm:$0x1] %v894
      %v896 = vld [vmem:[%s869 + $0x24] sm:$0xf]
      %v897 = vsel %vm871, %v606, %v896
      %898 = vst [vmem:[%s869 + $0x24] sm:$0xf] %v897
      %899 = vst.msk [vmem:[%s869 + $0x28] sm:$0xf] %vm875, %v615
      %v900 = vld [vmem:[%s869 + $0x2c] sm:$0x1]
      %v901 = vsel %vm878, %v616, %v900
      %902 = vst [vmem:[%s869 + $0x2c] sm:$0x1] %v901
      %v903 = vld [vmem:[%s869 + $0x30] sm:$0xf]
      %v904 = vsel %vm871, %v623, %v903
      %905 = vst [vmem:[%s869 + $0x30] sm:$0xf] %v904
      %906 = vst.msk [vmem:[%s869 + $0x34] sm:$0xf] %vm875, %v632
      %v907 = vld [vmem:[%s869 + $0x38] sm:$0x1]
      %v908 = vsel %vm878, %v633, %v907
      %909 = vst [vmem:[%s869 + $0x38] sm:$0x1] %v908
      %v910 = vld [vmem:[%s869 + $0x3c] sm:$0xf]
      %v911 = vsel %vm871, %v640, %v910
      %912 = vst [vmem:[%s869 + $0x3c] sm:$0xf] %v911
      %913 = vst.msk [vmem:[%s869 + $0x40] sm:$0xf] %vm875, %v649
      %v914 = vld [vmem:[%s869 + $0x44] sm:$0x1]
      %v915 = vsel %vm878, %v650, %v914
      %916 = vst [vmem:[%s869 + $0x44] sm:$0x1] %v915
      %v917 = vld [vmem:[%s869 + $0x48] sm:$0xf]
      %v918 = vsel %vm871, %v657, %v917
      %919 = vst [vmem:[%s869 + $0x48] sm:$0xf] %v918
      %920 = vst.msk [vmem:[%s869 + $0x4c] sm:$0xf] %vm875, %v666
      %v921 = vld [vmem:[%s869 + $0x50] sm:$0x1]
      %v922 = vsel %vm878, %v667, %v921
      %923 = vst [vmem:[%s869 + $0x50] sm:$0x1] %v922
      %v924 = vld [vmem:[%s869 + $0x54] sm:$0xf]
      %v925 = vsel %vm871, %v674, %v924
      %926 = vst [vmem:[%s869 + $0x54] sm:$0xf] %v925
      %927 = vst.msk [vmem:[%s869 + $0x58] sm:$0xf] %vm875, %v683
      %v928 = vld [vmem:[%s869 + $0x5c] sm:$0x1]
      %v929 = vsel %vm878, %v684, %v928
      %930 = vst [vmem:[%s869 + $0x5c] sm:$0x1] %v929
      %v931 = vld [vmem:[%s869 + $0x60] sm:$0xf]
      %v932 = vsel %vm871, %v691, %v931
      %933 = vst [vmem:[%s869 + $0x60] sm:$0xf] %v932
      %934 = vst.msk [vmem:[%s869 + $0x64] sm:$0xf] %vm875, %v700
      %v935 = vld [vmem:[%s869 + $0x68] sm:$0x1]
      %v936 = vsel %vm878, %v701, %v935
      %937 = vst [vmem:[%s869 + $0x68] sm:$0x1] %v936
      %v938 = vld [vmem:[%s869 + $0x6c] sm:$0xf]
      %v939 = vsel %vm871, %v708, %v938
      %940 = vst [vmem:[%s869 + $0x6c] sm:$0xf] %v939
      %941 = vst.msk [vmem:[%s869 + $0x70] sm:$0xf] %vm875, %v717
      %v942 = vld [vmem:[%s869 + $0x74] sm:$0x1]
      %v943 = vsel %vm878, %v718, %v942
      %944 = vst [vmem:[%s869 + $0x74] sm:$0x1] %v943
      %v945 = vld [vmem:[%s869 + $0x78] sm:$0xf]
      %v946 = vsel %vm871, %v725, %v945
      %947 = vst [vmem:[%s869 + $0x78] sm:$0xf] %v946
      %948 = vst.msk [vmem:[%s869 + $0x7c] sm:$0xf] %vm875, %v734
      %v949 = vld [vmem:[%s869 + $0x80] sm:$0x1]
      %v950 = vsel %vm878, %v735, %v949
      %951 = vst [vmem:[%s869 + $0x80] sm:$0x1] %v950
      %v952 = vld [vmem:[%s869 + $0x84] sm:$0xf]
      %v953 = vsel %vm871, %v742, %v952
      %954 = vst [vmem:[%s869 + $0x84] sm:$0xf] %v953
      %955 = vst.msk [vmem:[%s869 + $0x88] sm:$0xf] %vm875, %v751
      %v956 = vld [vmem:[%s869 + $0x8c] sm:$0x1]
      %v957 = vsel %vm878, %v752, %v956
      %958 = vst [vmem:[%s869 + $0x8c] sm:$0x1] %v957
      %v959 = vld [vmem:[%s869 + $0x90] sm:$0xf]
      %v960 = vsel %vm871, %v759, %v959
      %961 = vst [vmem:[%s869 + $0x90] sm:$0xf] %v960
      %962 = vst.msk [vmem:[%s869 + $0x94] sm:$0xf] %vm875, %v768
      %v963 = vld [vmem:[%s869 + $0x98] sm:$0x1]
      %v964 = vsel %vm878, %v769, %v963
      %965 = vst [vmem:[%s869 + $0x98] sm:$0x1] %v964
      %v966 = vld [vmem:[%s869 + $0x9c] sm:$0xf]
      %v967 = vsel %vm871, %v776, %v966
      %968 = vst [vmem:[%s869 + $0x9c] sm:$0xf] %v967
      %969 = vst.msk [vmem:[%s869 + $0xa0] sm:$0xf] %vm875, %v785
      %v970 = vld [vmem:[%s869 + $0xa4] sm:$0x1]
      %v971 = vsel %vm878, %v786, %v970
      %972 = vst [vmem:[%s869 + $0xa4] sm:$0x1] %v971
      %v973 = vld [vmem:[%s869 + $0xa8] sm:$0xf]
      %v974 = vsel %vm871, %v793, %v973
      %975 = vst [vmem:[%s869 + $0xa8] sm:$0xf] %v974
      %976 = vst.msk [vmem:[%s869 + $0xac] sm:$0xf] %vm875, %v802
      %v977 = vld [vmem:[%s869 + $0xb0] sm:$0x1]
      %v978 = vsel %vm878, %v803, %v977
      %979 = vst [vmem:[%s869 + $0xb0] sm:$0x1] %v978
      %v980 = vld [vmem:[%s869 + $0xb4] sm:$0xf]
      %v981 = vsel %vm871, %v810, %v980
      %982 = vst [vmem:[%s869 + $0xb4] sm:$0xf] %v981
      %983 = vst.msk [vmem:[%s869 + $0xb8] sm:$0xf] %vm875, %v819
      %v984 = vld [vmem:[%s869 + $0xbc] sm:$0x1]
      %v985 = vsel %vm878, %v820, %v984
      %986 = vst [vmem:[%s869 + $0xbc] sm:$0x1] %v985
      %vm987 = vcmask 1043488
      %vm988 = vmand %vm987, %vm344
      %v989 = vld [vmem:[%s869] sm:$0xf]
      %v990 = vsel %vm988, 0, %v989
      %991 = vst [vmem:[%s869] sm:$0xf] %v990
      %vm992 = vcmask 1043488
      %993 = vst.msk [vmem:[%s869 + $0x4] sm:$0xf] %vm992, 0
      %vm994 = vcmask 1040416
      %vm995 = vmand %vm994, %vm288
      %v996 = vld [vmem:[%s869 + $0x8] sm:$0x1]
      %v997 = vsel %vm995, 0, %v996
      %998 = vst [vmem:[%s869 + $0x8] sm:$0x1] %v997
      %v999 = vld [vmem:[%s869 + $0xc] sm:$0xf]
      %v1000 = vsel %vm988, 0, %v999
      %1001 = vst [vmem:[%s869 + $0xc] sm:$0xf] %v1000
      %1002 = vst.msk [vmem:[%s869 + $0x10] sm:$0xf] %vm992, 0
      %v1003 = vld [vmem:[%s869 + $0x14] sm:$0x1]
      %v1004 = vsel %vm995, 0, %v1003
      %1005 = vst [vmem:[%s869 + $0x14] sm:$0x1] %v1004
      %v1006 = vld [vmem:[%s869 + $0x18] sm:$0xf]
      %v1007 = vsel %vm988, 0, %v1006
      %1008 = vst [vmem:[%s869 + $0x18] sm:$0xf] %v1007
      %1009 = vst.msk [vmem:[%s869 + $0x1c] sm:$0xf] %vm992, 0
      %v1010 = vld [vmem:[%s869 + $0x20] sm:$0x1]
      %v1011 = vsel %vm995, 0, %v1010
      %1012 = vst [vmem:[%s869 + $0x20] sm:$0x1] %v1011
      %v1013 = vld [vmem:[%s869 + $0x24] sm:$0xf]
      %v1014 = vsel %vm988, 0, %v1013
      %1015 = vst [vmem:[%s869 + $0x24] sm:$0xf] %v1014
      %1016 = vst.msk [vmem:[%s869 + $0x28] sm:$0xf] %vm992, 0
      %v1017 = vld [vmem:[%s869 + $0x2c] sm:$0x1]
      %v1018 = vsel %vm995, 0, %v1017
      %1019 = vst [vmem:[%s869 + $0x2c] sm:$0x1] %v1018
      %v1020 = vld [vmem:[%s869 + $0x30] sm:$0xf]
      %v1021 = vsel %vm988, 0, %v1020
      %1022 = vst [vmem:[%s869 + $0x30] sm:$0xf] %v1021
      %1023 = vst.msk [vmem:[%s869 + $0x34] sm:$0xf] %vm992, 0
      %v1024 = vld [vmem:[%s869 + $0x38] sm:$0x1]
      %v1025 = vsel %vm995, 0, %v1024
      %1026 = vst [vmem:[%s869 + $0x38] sm:$0x1] %v1025
      %v1027 = vld [vmem:[%s869 + $0x3c] sm:$0xf]
      %v1028 = vsel %vm988, 0, %v1027
      %1029 = vst [vmem:[%s869 + $0x3c] sm:$0xf] %v1028
      %1030 = vst.msk [vmem:[%s869 + $0x40] sm:$0xf] %vm992, 0
      %v1031 = vld [vmem:[%s869 + $0x44] sm:$0x1]
      %v1032 = vsel %vm995, 0, %v1031
      %1033 = vst [vmem:[%s869 + $0x44] sm:$0x1] %v1032
      %v1034 = vld [vmem:[%s869 + $0x48] sm:$0xf]
      %v1035 = vsel %vm988, 0, %v1034
      %1036 = vst [vmem:[%s869 + $0x48] sm:$0xf] %v1035
      %1037 = vst.msk [vmem:[%s869 + $0x4c] sm:$0xf] %vm992, 0
      %v1038 = vld [vmem:[%s869 + $0x50] sm:$0x1]
      %v1039 = vsel %vm995, 0, %v1038
      %1040 = vst [vmem:[%s869 + $0x50] sm:$0x1] %v1039
      %v1041 = vld [vmem:[%s869 + $0x54] sm:$0xf]
      %v1042 = vsel %vm988, 0, %v1041
      %1043 = vst [vmem:[%s869 + $0x54] sm:$0xf] %v1042
      %1044 = vst.msk [vmem:[%s869 + $0x58] sm:$0xf] %vm992, 0
      %v1045 = vld [vmem:[%s869 + $0x5c] sm:$0x1]
      %v1046 = vsel %vm995, 0, %v1045
      %1047 = vst [vmem:[%s869 + $0x5c] sm:$0x1] %v1046
      %v1048 = vld [vmem:[%s869 + $0x60] sm:$0xf]
      %v1049 = vsel %vm988, 0, %v1048
      %1050 = vst [vmem:[%s869 + $0x60] sm:$0xf] %v1049
      %1051 = vst.msk [vmem:[%s869 + $0x64] sm:$0xf] %vm992, 0
      %v1052 = vld [vmem:[%s869 + $0x68] sm:$0x1]
      %v1053 = vsel %vm995, 0, %v1052
      %1054 = vst [vmem:[%s869 + $0x68] sm:$0x1] %v1053
      %v1055 = vld [vmem:[%s869 + $0x6c] sm:$0xf]
      %v1056 = vsel %vm988, 0, %v1055
      %1057 = vst [vmem:[%s869 + $0x6c] sm:$0xf] %v1056
      %1058 = vst.msk [vmem:[%s869 + $0x70] sm:$0xf] %vm992, 0
      %v1059 = vld [vmem:[%s869 + $0x74] sm:$0x1]
      %v1060 = vsel %vm995, 0, %v1059
      %1061 = vst [vmem:[%s869 + $0x74] sm:$0x1] %v1060
      %v1062 = vld [vmem:[%s869 + $0x78] sm:$0xf]
      %v1063 = vsel %vm988, 0, %v1062
      %1064 = vst [vmem:[%s869 + $0x78] sm:$0xf] %v1063
      %1065 = vst.msk [vmem:[%s869 + $0x7c] sm:$0xf] %vm992, 0
      %v1066 = vld [vmem:[%s869 + $0x80] sm:$0x1]
      %v1067 = vsel %vm995, 0, %v1066
      %1068 = vst [vmem:[%s869 + $0x80] sm:$0x1] %v1067
      %v1069 = vld [vmem:[%s869 + $0x84] sm:$0xf]
      %v1070 = vsel %vm988, 0, %v1069
      %1071 = vst [vmem:[%s869 + $0x84] sm:$0xf] %v1070
      %1072 = vst.msk [vmem:[%s869 + $0x88] sm:$0xf] %vm992, 0
      %v1073 = vld [vmem:[%s869 + $0x8c] sm:$0x1]
      %v1074 = vsel %vm995, 0, %v1073
      %1075 = vst [vmem:[%s869 + $0x8c] sm:$0x1] %v1074
      %v1076 = vld [vmem:[%s869 + $0x90] sm:$0xf]
      %v1077 = vsel %vm988, 0, %v1076
      %1078 = vst [vmem:[%s869 + $0x90] sm:$0xf] %v1077
      %1079 = vst.msk [vmem:[%s869 + $0x94] sm:$0xf] %vm992, 0
      %v1080 = vld [vmem:[%s869 + $0x98] sm:$0x1]
      %v1081 = vsel %vm995, 0, %v1080
      %1082 = vst [vmem:[%s869 + $0x98] sm:$0x1] %v1081
      %v1083 = vld [vmem:[%s869 + $0x9c] sm:$0xf]
      %v1084 = vsel %vm988, 0, %v1083
      %1085 = vst [vmem:[%s869 + $0x9c] sm:$0xf] %v1084
      %1086 = vst.msk [vmem:[%s869 + $0xa0] sm:$0xf] %vm992, 0
      %v1087 = vld [vmem:[%s869 + $0xa4] sm:$0x1]
      %v1088 = vsel %vm995, 0, %v1087
      %1089 = vst [vmem:[%s869 + $0xa4] sm:$0x1] %v1088
      %v1090 = vld [vmem:[%s869 + $0xa8] sm:$0xf]
      %v1091 = vsel %vm988, 0, %v1090
      %1092 = vst [vmem:[%s869 + $0xa8] sm:$0xf] %v1091
      %1093 = vst.msk [vmem:[%s869 + $0xac] sm:$0xf] %vm992, 0
      %v1094 = vld [vmem:[%s869 + $0xb0] sm:$0x1]
      %v1095 = vsel %vm995, 0, %v1094
      %1096 = vst [vmem:[%s869 + $0xb0] sm:$0x1] %v1095
      %v1097 = vld [vmem:[%s869 + $0xb4] sm:$0xf]
      %v1098 = vsel %vm988, 0, %v1097
      %1099 = vst [vmem:[%s869 + $0xb4] sm:$0xf] %v1098
      %1100 = vst.msk [vmem:[%s869 + $0xb8] sm:$0xf] %vm992, 0
      %v1101 = vld [vmem:[%s869 + $0xbc] sm:$0x1]
      %v1102 = vsel %vm995, 0, %v1101
      %1103 = vst [vmem:[%s869 + $0xbc] sm:$0x1] %v1102
      %v1104 = vld [vmem:[%s2] sm:$0x1]
      %v1105 = vld [vmem:[%s3] sm:$0x1]
      %v1106 = vld [vmem:[#allocation2] sm:$0xf]
      %v1107 = vld [vmem:[#allocation2 + $0x4] sm:$0xf]
      %v1108 = vld [vmem:[#allocation2 + $0xc] sm:$0xf]
      %v1109 = vld [vmem:[#allocation2 + $0x10] sm:$0xf]
      %v1110 = vld [vmem:[#allocation2 + $0x18] sm:$0xf]
      %v1111 = vld [vmem:[#allocation2 + $0x1c] sm:$0xf]
      %v1112 = vld [vmem:[#allocation2 + $0x24] sm:$0xf]
      %v1113 = vld [vmem:[#allocation2 + $0x28] sm:$0xf]
      %v1114 = vld [vmem:[#allocation2 + $0x30] sm:$0xf]
      %v1115 = vld [vmem:[#allocation2 + $0x34] sm:$0xf]
      %v1116 = vld [vmem:[#allocation2 + $0x3c] sm:$0xf]
      %v1117 = vld [vmem:[#allocation2 + $0x40] sm:$0xf]
      %v1118 = vld [vmem:[#allocation2 + $0x48] sm:$0xf]
      %v1119 = vld [vmem:[#allocation2 + $0x4c] sm:$0xf]
      %v1120 = vld [vmem:[#allocation2 + $0x54] sm:$0xf]
      %v1121 = vld [vmem:[#allocation2 + $0x58] sm:$0xf]
      %v1122 = vld [vmem:[#allocation2 + $0x60] sm:$0xf]
      %v1123 = vld [vmem:[#allocation2 + $0x64] sm:$0xf]
      %v1124 = vld [vmem:[#allocation2 + $0x6c] sm:$0xf]
      %v1125 = vld [vmem:[#allocation2 + $0x70] sm:$0xf]
      %v1126 = vld [vmem:[#allocation2 + $0x78] sm:$0xf]
      %v1127 = vld [vmem:[#allocation2 + $0x7c] sm:$0xf]
      %v1128 = vld [vmem:[#allocation2 + $0x84] sm:$0xf]
      %v1129 = vld [vmem:[#allocation2 + $0x88] sm:$0xf]
      %v1130 = vld [vmem:[#allocation2 + $0x90] sm:$0xf]
      %v1131 = vld [vmem:[#allocation2 + $0x94] sm:$0xf]
      %v1132 = vld [vmem:[#allocation2 + $0x9c] sm:$0xf]
      %v1133 = vld [vmem:[#allocation2 + $0xa0] sm:$0xf]
      %v1134 = vld [vmem:[#allocation2 + $0xa8] sm:$0xf]
      %v1135 = vld [vmem:[#allocation2 + $0xac] sm:$0xf]
      %v1136 = vld [vmem:[#allocation2 + $0xb4] sm:$0xf]
      %v1137 = vld [vmem:[#allocation2 + $0xb8] sm:$0xf]
      %v1138 = vld [vmem:[#allocation2 + $0x8] sm:$0x1]
      %v1139 = vld [vmem:[#allocation2 + $0x14] sm:$0x1]
      %v1140 = vld [vmem:[#allocation2 + $0x20] sm:$0x1]
      %v1141 = vld [vmem:[#allocation2 + $0x2c] sm:$0x1]
      %v1142 = vld [vmem:[#allocation2 + $0x38] sm:$0x1]
      %v1143 = vld [vmem:[#allocation2 + $0x44] sm:$0x1]
      %v1144 = vld [vmem:[#allocation2 + $0x50] sm:$0x1]
      %v1145 = vld [vmem:[#allocation2 + $0x5c] sm:$0x1]
      %v1146 = vld [vmem:[#allocation2 + $0x68] sm:$0x1]
      %v1147 = vld [vmem:[#allocation2 + $0x74] sm:$0x1]
      %v1148 = vld [vmem:[#allocation2 + $0x80] sm:$0x1]
      %v1149 = vld [vmem:[#allocation2 + $0x8c] sm:$0x1]
      %v1150 = vld [vmem:[#allocation2 + $0x98] sm:$0x1]
      %v1151 = vld [vmem:[#allocation2 + $0xa4] sm:$0x1]
      %v1152 = vld [vmem:[#allocation2 + $0xb0] sm:$0x1]
      %v1153 = vld [vmem:[#allocation2 + $0xbc] sm:$0x1]
      %vm1154 = vsmask.f32 3328
      %vm1155 = vsmask.f32 7440
      %vm1156 = vmor %vm1154, %vm1155
      %v1158 = vshrl.u32 %v1106, 16
      %v1160 = vrot.slane %v1158, 4
      %v1161 = vshll.u32 %v1106, 16
      %v1163 = vrot.slane %v1161, 5
      %v1164 = vor.u32 %v1160, %v1163
      %v1165 = vrot.slane %v1164, 4
      %v1167 = vshll.u32 %v1107, 16
      %v1169 = vrot.slane %v1167, 5
      %v1170 = vsel %vm1156, %v1165, %v1169
      %v1171 = vshrl.u32 %v1107, 16
      %v1173 = vrot.slane %v1171, 4
      %v1174 = vor.u32 %v1173, %v1169
      %v1175 = vrot.slane %v1174, 4
      %v1177 = vshll.u32 %v1138, 16
      %v1179 = vrot.slane %v1177, 5
      %v1180 = vsel %vm1156, %v1175, %v1179
      %v1182 = vshrl.u32 %v1108, 16
      %v1184 = vrot.slane %v1182, 4
      %v1185 = vshll.u32 %v1108, 16
      %v1187 = vrot.slane %v1185, 5
      %v1188 = vor.u32 %v1184, %v1187
      %v1189 = vrot.slane %v1188, 4
      %v1191 = vshll.u32 %v1109, 16
      %v1193 = vrot.slane %v1191, 5
      %v1194 = vsel %vm1156, %v1189, %v1193
      %v1195 = vshrl.u32 %v1109, 16
      %v1197 = vrot.slane %v1195, 4
      %v1198 = vor.u32 %v1197, %v1193
      %v1199 = vrot.slane %v1198, 4
      %v1201 = vshll.u32 %v1139, 16
      %v1203 = vrot.slane %v1201, 5
      %v1204 = vsel %vm1156, %v1199, %v1203
      %v1206 = vshrl.u32 %v1110, 16
      %v1208 = vrot.slane %v1206, 4
      %v1209 = vshll.u32 %v1110, 16
      %v1211 = vrot.slane %v1209, 5
      %v1212 = vor.u32 %v1208, %v1211
      %v1213 = vrot.slane %v1212, 4
      %v1215 = vshll.u32 %v1111, 16
      %v1217 = vrot.slane %v1215, 5
      %v1218 = vsel %vm1156, %v1213, %v1217
      %v1219 = vshrl.u32 %v1111, 16
      %v1221 = vrot.slane %v1219, 4
      %v1222 = vor.u32 %v1221, %v1217
      %v1223 = vrot.slane %v1222, 4
      %v1225 = vshll.u32 %v1140, 16
      %v1227 = vrot.slane %v1225, 5
      %v1228 = vsel %vm1156, %v1223, %v1227
      %v1230 = vshrl.u32 %v1112, 16
      %v1232 = vrot.slane %v1230, 4
      %v1233 = vshll.u32 %v1112, 16
      %v1235 = vrot.slane %v1233, 5
      %v1236 = vor.u32 %v1232, %v1235
      %v1237 = vrot.slane %v1236, 4
      %v1239 = vshll.u32 %v1113, 16
      %v1241 = vrot.slane %v1239, 5
      %v1242 = vsel %vm1156, %v1237, %v1241
      %v1243 = vshrl.u32 %v1113, 16
      %v1245 = vrot.slane %v1243, 4
      %v1246 = vor.u32 %v1245, %v1241
      %v1247 = vrot.slane %v1246, 4
      %v1249 = vshll.u32 %v1141, 16
      %v1251 = vrot.slane %v1249, 5
      %v1252 = vsel %vm1156, %v1247, %v1251
      %v1254 = vshrl.u32 %v1114, 16
      %v1256 = vrot.slane %v1254, 4
      %v1257 = vshll.u32 %v1114, 16
      %v1259 = vrot.slane %v1257, 5
      %v1260 = vor.u32 %v1256, %v1259
      %v1261 = vrot.slane %v1260, 4
      %v1263 = vshll.u32 %v1115, 16
      %v1265 = vrot.slane %v1263, 5
      %v1266 = vsel %vm1156, %v1261, %v1265
      %v1267 = vshrl.u32 %v1115, 16
      %v1269 = vrot.slane %v1267, 4
      %v1270 = vor.u32 %v1269, %v1265
      %v1271 = vrot.slane %v1270, 4
      %v1273 = vshll.u32 %v1142, 16
      %v1275 = vrot.slane %v1273, 5
      %v1276 = vsel %vm1156, %v1271, %v1275
      %v1278 = vshrl.u32 %v1116, 16
      %v1280 = vrot.slane %v1278, 4
      %v1281 = vshll.u32 %v1116, 16
      %v1283 = vrot.slane %v1281, 5
      %v1284 = vor.u32 %v1280, %v1283
      %v1285 = vrot.slane %v1284, 4
      %v1287 = vshll.u32 %v1117, 16
      %v1289 = vrot.slane %v1287, 5
      %v1290 = vsel %vm1156, %v1285, %v1289
      %v1291 = vshrl.u32 %v1117, 16
      %v1293 = vrot.slane %v1291, 4
      %v1294 = vor.u32 %v1293, %v1289
      %v1295 = vrot.slane %v1294, 4
      %v1297 = vshll.u32 %v1143, 16
      %v1299 = vrot.slane %v1297, 5
      %v1300 = vsel %vm1156, %v1295, %v1299
      %v1302 = vshrl.u32 %v1118, 16
      %v1304 = vrot.slane %v1302, 4
      %v1305 = vshll.u32 %v1118, 16
      %v1307 = vrot.slane %v1305, 5
      %v1308 = vor.u32 %v1304, %v1307
      %v1309 = vrot.slane %v1308, 4
      %v1311 = vshll.u32 %v1119, 16
      %v1313 = vrot.slane %v1311, 5
      %v1314 = vsel %vm1156, %v1309, %v1313
      %v1315 = vshrl.u32 %v1119, 16
      %v1317 = vrot.slane %v1315, 4
      %v1318 = vor.u32 %v1317, %v1313
      %v1319 = vrot.slane %v1318, 4
      %v1321 = vshll.u32 %v1144, 16
      %v1323 = vrot.slane %v1321, 5
      %v1324 = vsel %vm1156, %v1319, %v1323
      %v1326 = vshrl.u32 %v1120, 16
      %v1328 = vrot.slane %v1326, 4
      %v1329 = vshll.u32 %v1120, 16
      %v1331 = vrot.slane %v1329, 5
      %v1332 = vor.u32 %v1328, %v1331
      %v1333 = vrot.slane %v1332, 4
      %v1335 = vshll.u32 %v1121, 16
      %v1337 = vrot.slane %v1335, 5
      %v1338 = vsel %vm1156, %v1333, %v1337
      %v1339 = vshrl.u32 %v1121, 16
      %v1341 = vrot.slane %v1339, 4
      %v1342 = vor.u32 %v1341, %v1337
      %v1343 = vrot.slane %v1342, 4
      %v1345 = vshll.u32 %v1145, 16
      %v1347 = vrot.slane %v1345, 5
      %v1348 = vsel %vm1156, %v1343, %v1347
      %v1350 = vshrl.u32 %v1122, 16
      %v1352 = vrot.slane %v1350, 4
      %v1353 = vshll.u32 %v1122, 16
      %v1355 = vrot.slane %v1353, 5
      %v1356 = vor.u32 %v1352, %v1355
      %v1357 = vrot.slane %v1356, 4
      %v1359 = vshll.u32 %v1123, 16
      %v1361 = vrot.slane %v1359, 5
      %v1362 = vsel %vm1156, %v1357, %v1361
      %v1363 = vshrl.u32 %v1123, 16
      %v1365 = vrot.slane %v1363, 4
      %v1366 = vor.u32 %v1365, %v1361
      %v1367 = vrot.slane %v1366, 4
      %v1369 = vshll.u32 %v1146, 16
      %v1371 = vrot.slane %v1369, 5
      %v1372 = vsel %vm1156, %v1367, %v1371
      %v1374 = vshrl.u32 %v1124, 16
      %v1376 = vrot.slane %v1374, 4
      %v1377 = vshll.u32 %v1124, 16
      %v1379 = vrot.slane %v1377, 5
      %v1380 = vor.u32 %v1376, %v1379
      %v1381 = vrot.slane %v1380, 4
      %v1383 = vshll.u32 %v1125, 16
      %v1385 = vrot.slane %v1383, 5
      %v1386 = vsel %vm1156, %v1381, %v1385
      %v1387 = vshrl.u32 %v1125, 16
      %v1389 = vrot.slane %v1387, 4
      %v1390 = vor.u32 %v1389, %v1385
      %v1391 = vrot.slane %v1390, 4
      %v1393 = vshll.u32 %v1147, 16
      %v1395 = vrot.slane %v1393, 5
      %v1396 = vsel %vm1156, %v1391, %v1395
      %v1398 = vshrl.u32 %v1126, 16
      %v1400 = vrot.slane %v1398, 4
      %v1401 = vshll.u32 %v1126, 16
      %v1403 = vrot.slane %v1401, 5
      %v1404 = vor.u32 %v1400, %v1403
      %v1405 = vrot.slane %v1404, 4
      %v1407 = vshll.u32 %v1127, 16
      %v1409 = vrot.slane %v1407, 5
      %v1410 = vsel %vm1156, %v1405, %v1409
      %v1411 = vshrl.u32 %v1127, 16
      %v1413 = vrot.slane %v1411, 4
      %v1414 = vor.u32 %v1413, %v1409
      %v1415 = vrot.slane %v1414, 4
      %v1417 = vshll.u32 %v1148, 16
      %v1419 = vrot.slane %v1417, 5
      %v1420 = vsel %vm1156, %v1415, %v1419
      %v1422 = vshrl.u32 %v1128, 16
      %v1424 = vrot.slane %v1422, 4
      %v1425 = vshll.u32 %v1128, 16
      %v1427 = vrot.slane %v1425, 5
      %v1428 = vor.u32 %v1424, %v1427
      %v1429 = vrot.slane %v1428, 4
      %v1431 = vshll.u32 %v1129, 16
      %v1433 = vrot.slane %v1431, 5
      %v1434 = vsel %vm1156, %v1429, %v1433
      %v1435 = vshrl.u32 %v1129, 16
      %v1437 = vrot.slane %v1435, 4
      %v1438 = vor.u32 %v1437, %v1433
      %v1439 = vrot.slane %v1438, 4
      %v1441 = vshll.u32 %v1149, 16
      %v1443 = vrot.slane %v1441, 5
      %v1444 = vsel %vm1156, %v1439, %v1443
      %v1446 = vshrl.u32 %v1130, 16
      %v1448 = vrot.slane %v1446, 4
      %v1449 = vshll.u32 %v1130, 16
      %v1451 = vrot.slane %v1449, 5
      %v1452 = vor.u32 %v1448, %v1451
      %v1453 = vrot.slane %v1452, 4
      %v1455 = vshll.u32 %v1131, 16
      %v1457 = vrot.slane %v1455, 5
      %v1458 = vsel %vm1156, %v1453, %v1457
      %v1459 = vshrl.u32 %v1131, 16
      %v1461 = vrot.slane %v1459, 4
      %v1462 = vor.u32 %v1461, %v1457
      %v1463 = vrot.slane %v1462, 4
      %v1465 = vshll.u32 %v1150, 16
      %v1467 = vrot.slane %v1465, 5
      %v1468 = vsel %vm1156, %v1463, %v1467
      %v1470 = vshrl.u32 %v1132, 16
      %v1472 = vrot.slane %v1470, 4
      %v1473 = vshll.u32 %v1132, 16
      %v1475 = vrot.slane %v1473, 5
      %v1476 = vor.u32 %v1472, %v1475
      %v1477 = vrot.slane %v1476, 4
      %v1479 = vshll.u32 %v1133, 16
      %v1481 = vrot.slane %v1479, 5
      %v1482 = vsel %vm1156, %v1477, %v1481
      %v1483 = vshrl.u32 %v1133, 16
      %v1485 = vrot.slane %v1483, 4
      %v1486 = vor.u32 %v1485, %v1481
      %v1487 = vrot.slane %v1486, 4
      %v1489 = vshll.u32 %v1151, 16
      %v1491 = vrot.slane %v1489, 5
      %v1492 = vsel %vm1156, %v1487, %v1491
      %v1494 = vshrl.u32 %v1134, 16
      %v1496 = vrot.slane %v1494, 4
      %v1497 = vshll.u32 %v1134, 16
      %v1499 = vrot.slane %v1497, 5
      %v1500 = vor.u32 %v1496, %v1499
      %v1501 = vrot.slane %v1500, 4
      %v1503 = vshll.u32 %v1135, 16
      %v1505 = vrot.slane %v1503, 5
      %v1506 = vsel %vm1156, %v1501, %v1505
      %v1507 = vshrl.u32 %v1135, 16
      %v1509 = vrot.slane %v1507, 4
      %v1510 = vor.u32 %v1509, %v1505
      %v1511 = vrot.slane %v1510, 4
      %v1513 = vshll.u32 %v1152, 16
      %v1515 = vrot.slane %v1513, 5
      %v1516 = vsel %vm1156, %v1511, %v1515
      %v1518 = vshrl.u32 %v1136, 16
      %v1520 = vrot.slane %v1518, 4
      %v1521 = vshll.u32 %v1136, 16
      %v1523 = vrot.slane %v1521, 5
      %v1524 = vor.u32 %v1520, %v1523
      %v1525 = vrot.slane %v1524, 4
      %v1527 = vshll.u32 %v1137, 16
      %v1529 = vrot.slane %v1527, 5
      %v1530 = vsel %vm1156, %v1525, %v1529
      %v1531 = vshrl.u32 %v1137, 16
      %v1533 = vrot.slane %v1531, 4
      %v1534 = vor.u32 %v1533, %v1529
      %v1535 = vrot.slane %v1534, 4
      %v1537 = vshll.u32 %v1153, 16
      %v1539 = vrot.slane %v1537, 5
      %v1540 = vsel %vm1156, %v1535, %v1539
      %v1541 = vld [vmem:[#allocation2] sm:$0xe]
      %v1542 = vld [vmem:[#allocation2 + $0xc] sm:$0xe]
      %v1543 = vld [vmem:[#allocation2 + $0x18] sm:$0xe]
      %v1544 = vld [vmem:[#allocation2 + $0x24] sm:$0xe]
      %v1545 = vld [vmem:[#allocation2 + $0x30] sm:$0xe]
      %v1546 = vld [vmem:[#allocation2 + $0x3c] sm:$0xe]
      %v1547 = vld [vmem:[#allocation2 + $0x48] sm:$0xe]
      %v1548 = vld [vmem:[#allocation2 + $0x54] sm:$0xe]
      %v1549 = vld [vmem:[#allocation2 + $0x60] sm:$0xe]
      %v1550 = vld [vmem:[#allocation2 + $0x6c] sm:$0xe]
      %v1551 = vld [vmem:[#allocation2 + $0x78] sm:$0xe]
      %v1552 = vld [vmem:[#allocation2 + $0x84] sm:$0xe]
      %v1553 = vld [vmem:[#allocation2 + $0x90] sm:$0xe]
      %v1554 = vld [vmem:[#allocation2 + $0x9c] sm:$0xe]
      %v1555 = vld [vmem:[#allocation2 + $0xa8] sm:$0xe]
      %v1556 = vld [vmem:[#allocation2 + $0xb4] sm:$0xe]
      %vm1605 = vcmask 1042432
      %vm1606 = vcmask 1046532
      %vm1607 = vmor %vm1605, %vm1606
      %v1608 = vrot.slane %v1541, 5
      %v1609 = vrot.slane %v1608, 4
      %v1610 = vrot.slane %v1107, 5
      %v1611 = vsel %vm1607, %v1609, %v1610
      %v1612 = vrot.slane %v1610, 4
      %v1613 = vrot.slane %v1138, 5
      %v1614 = vsel %vm1607, %v1612, %v1613
      %v1615 = vrot.slane %v1542, 5
      %v1616 = vrot.slane %v1615, 4
      %v1617 = vrot.slane %v1109, 5
      %v1618 = vsel %vm1607, %v1616, %v1617
      %v1619 = vrot.slane %v1617, 4
      %v1620 = vrot.slane %v1139, 5
      %v1621 = vsel %vm1607, %v1619, %v1620
      %v1622 = vrot.slane %v1543, 5
      %v1623 = vrot.slane %v1622, 4
      %v1624 = vrot.slane %v1111, 5
      %v1625 = vsel %vm1607, %v1623, %v1624
      %v1626 = vrot.slane %v1624, 4
      %v1627 = vrot.slane %v1140, 5
      %v1628 = vsel %vm1607, %v1626, %v1627
      %v1629 = vrot.slane %v1544, 5
      %v1630 = vrot.slane %v1629, 4
      %v1631 = vrot.slane %v1113, 5
      %v1632 = vsel %vm1607, %v1630, %v1631
      %v1633 = vrot.slane %v1631, 4
      %v1634 = vrot.slane %v1141, 5
      %v1635 = vsel %vm1607, %v1633, %v1634
      %v1636 = vrot.slane %v1545, 5
      %v1637 = vrot.slane %v1636, 4
      %v1638 = vrot.slane %v1115, 5
      %v1639 = vsel %vm1607, %v1637, %v1638
      %v1640 = vrot.slane %v1638, 4
      %v1641 = vrot.slane %v1142, 5
      %v1642 = vsel %vm1607, %v1640, %v1641
      %v1643 = vrot.slane %v1546, 5
      %v1644 = vrot.slane %v1643, 4
      %v1645 = vrot.slane %v1117, 5
      %v1646 = vsel %vm1607, %v1644, %v1645
      %v1647 = vrot.slane %v1645, 4
      %v1648 = vrot.slane %v1143, 5
      %v1649 = vsel %vm1607, %v1647, %v1648
      %v1650 = vrot.slane %v1547, 5
      %v1651 = vrot.slane %v1650, 4
      %v1652 = vrot.slane %v1119, 5
      %v1653 = vsel %vm1607, %v1651, %v1652
      %v1654 = vrot.slane %v1652, 4
      %v1655 = vrot.slane %v1144, 5
      %v1656 = vsel %vm1607, %v1654, %v1655
      %v1657 = vrot.slane %v1548, 5
      %v1658 = vrot.slane %v1657, 4
      %v1659 = vrot.slane %v1121, 5
      %v1660 = vsel %vm1607, %v1658, %v1659
      %v1661 = vrot.slane %v1659, 4
      %v1662 = vrot.slane %v1145, 5
      %v1663 = vsel %vm1607, %v1661, %v1662
      %v1664 = vrot.slane %v1549, 5
      %v1665 = vrot.slane %v1664, 4
      %v1666 = vrot.slane %v1123, 5
      %v1667 = vsel %vm1607, %v1665, %v1666
      %v1668 = vrot.slane %v1666, 4
      %v1669 = vrot.slane %v1146, 5
      %v1670 = vsel %vm1607, %v1668, %v1669
      %v1671 = vrot.slane %v1550, 5
      %v1672 = vrot.slane %v1671, 4
      %v1673 = vrot.slane %v1125, 5
      %v1674 = vsel %vm1607, %v1672, %v1673
      %v1675 = vrot.slane %v1673, 4
      %v1676 = vrot.slane %v1147, 5
      %v1677 = vsel %vm1607, %v1675, %v1676
      %v1678 = vrot.slane %v1551, 5
      %v1679 = vrot.slane %v1678, 4
      %v1680 = vrot.slane %v1127, 5
      %v1681 = vsel %vm1607, %v1679, %v1680
      %v1682 = vrot.slane %v1680, 4
      %v1683 = vrot.slane %v1148, 5
      %v1684 = vsel %vm1607, %v1682, %v1683
      %v1685 = vrot.slane %v1552, 5
      %v1686 = vrot.slane %v1685, 4
      %v1687 = vrot.slane %v1129, 5
      %v1688 = vsel %vm1607, %v1686, %v1687
      %v1689 = vrot.slane %v1687, 4
      %v1690 = vrot.slane %v1149, 5
      %v1691 = vsel %vm1607, %v1689, %v1690
      %v1692 = vrot.slane %v1553, 5
      %v1693 = vrot.slane %v1692, 4
      %v1694 = vrot.slane %v1131, 5
      %v1695 = vsel %vm1607, %v1693, %v1694
      %v1696 = vrot.slane %v1694, 4
      %v1697 = vrot.slane %v1150, 5
      %v1698 = vsel %vm1607, %v1696, %v1697
      %v1699 = vrot.slane %v1554, 5
      %v1700 = vrot.slane %v1699, 4
      %v1701 = vrot.slane %v1133, 5
      %v1702 = vsel %vm1607, %v1700, %v1701
      %v1703 = vrot.slane %v1701, 4
      %v1704 = vrot.slane %v1151, 5
      %v1705 = vsel %vm1607, %v1703, %v1704
      %v1706 = vrot.slane %v1555, 5
      %v1707 = vrot.slane %v1706, 4
      %v1708 = vrot.slane %v1135, 5
      %v1709 = vsel %vm1607, %v1707, %v1708
      %v1710 = vrot.slane %v1708, 4
      %v1711 = vrot.slane %v1152, 5
      %v1712 = vsel %vm1607, %v1710, %v1711
      %v1713 = vrot.slane %v1556, 5
      %v1714 = vrot.slane %v1713, 4
      %v1715 = vrot.slane %v1137, 5
      %v1716 = vsel %vm1607, %v1714, %v1715
      %v1717 = vrot.slane %v1715, 4
      %v1718 = vrot.slane %v1153, 5
      %v1719 = vsel %vm1607, %v1717, %v1718
      %v1736 = vunpack.c.l.b16 %v1106
      %v1737 = vunpack.c.l.b16 %v1107
      %v1738 = vunpack.c.l.b16 %v1108
      %v1739 = vunpack.c.l.b16 %v1109
      %v1740 = vunpack.c.l.b16 %v1110
      %v1741 = vunpack.c.l.b16 %v1111
      %v1742 = vunpack.c.l.b16 %v1112
      %v1743 = vunpack.c.l.b16 %v1113
      %v1744 = vunpack.c.l.b16 %v1114
      %v1745 = vunpack.c.l.b16 %v1115
      %v1746 = vunpack.c.l.b16 %v1116
      %v1747 = vunpack.c.l.b16 %v1117
      %v1748 = vunpack.c.l.b16 %v1118
      %v1749 = vunpack.c.l.b16 %v1119
      %v1750 = vunpack.c.l.b16 %v1120
      %v1751 = vunpack.c.l.b16 %v1121
      %v1752 = vunpack.c.l.b16 %v1122
      %v1753 = vunpack.c.l.b16 %v1123
      %v1754 = vunpack.c.l.b16 %v1124
      %v1755 = vunpack.c.l.b16 %v1125
      %v1756 = vunpack.c.l.b16 %v1126
      %v1757 = vunpack.c.l.b16 %v1127
      %v1758 = vunpack.c.l.b16 %v1128
      %v1759 = vunpack.c.l.b16 %v1129
      %v1760 = vunpack.c.l.b16 %v1130
      %v1761 = vunpack.c.l.b16 %v1131
      %v1762 = vunpack.c.l.b16 %v1132
      %v1763 = vunpack.c.l.b16 %v1133
      %v1764 = vunpack.c.l.b16 %v1134
      %v1765 = vunpack.c.l.b16 %v1135
      %v1766 = vunpack.c.l.b16 %v1136
      %v1767 = vunpack.c.l.b16 %v1137
      %v1768 = vpack.c.b16 %v1737, %v1736
      %v1769 = vpack.c.b16 %v1739, %v1738
      %v1770 = vpack.c.b16 %v1741, %v1740
      %v1771 = vpack.c.b16 %v1743, %v1742
      %v1772 = vpack.c.b16 %v1745, %v1744
      %v1773 = vpack.c.b16 %v1747, %v1746
      %v1774 = vpack.c.b16 %v1749, %v1748
      %v1775 = vpack.c.b16 %v1751, %v1750
      %v1776 = vpack.c.b16 %v1753, %v1752
      %v1777 = vpack.c.b16 %v1755, %v1754
      %v1778 = vpack.c.b16 %v1757, %v1756
      %v1779 = vpack.c.b16 %v1759, %v1758
      %v1780 = vpack.c.b16 %v1761, %v1760
      %v1781 = vpack.c.b16 %v1763, %v1762
      %v1782 = vpack.c.b16 %v1765, %v1764
      %v1783 = vpack.c.b16 %v1767, %v1766
      %v1800 = vunpack.c.l.b16 %v1170
      %v1801 = vunpack.c.l.b16 %v1180
      %v1802 = vunpack.c.l.b16 %v1194
      %v1803 = vunpack.c.l.b16 %v1204
      %v1804 = vunpack.c.l.b16 %v1218
      %v1805 = vunpack.c.l.b16 %v1228
      %v1806 = vunpack.c.l.b16 %v1242
      %v1807 = vunpack.c.l.b16 %v1252
      %v1808 = vunpack.c.l.b16 %v1266
      %v1809 = vunpack.c.l.b16 %v1276
      %v1810 = vunpack.c.l.b16 %v1290
      %v1811 = vunpack.c.l.b16 %v1300
      %v1812 = vunpack.c.l.b16 %v1314
      %v1813 = vunpack.c.l.b16 %v1324
      %v1814 = vunpack.c.l.b16 %v1338
      %v1815 = vunpack.c.l.b16 %v1348
      %v1816 = vunpack.c.l.b16 %v1362
      %v1817 = vunpack.c.l.b16 %v1372
      %v1818 = vunpack.c.l.b16 %v1386
      %v1819 = vunpack.c.l.b16 %v1396
      %v1820 = vunpack.c.l.b16 %v1410
      %v1821 = vunpack.c.l.b16 %v1420
      %v1822 = vunpack.c.l.b16 %v1434
      %v1823 = vunpack.c.l.b16 %v1444
      %v1824 = vunpack.c.l.b16 %v1458
      %v1825 = vunpack.c.l.b16 %v1468
      %v1826 = vunpack.c.l.b16 %v1482
      %v1827 = vunpack.c.l.b16 %v1492
      %v1828 = vunpack.c.l.b16 %v1506
      %v1829 = vunpack.c.l.b16 %v1516
      %v1830 = vunpack.c.l.b16 %v1530
      %v1831 = vunpack.c.l.b16 %v1540
      %v1832 = vpack.c.b16 %v1801, %v1800
      %v1833 = vpack.c.b16 %v1803, %v1802
      %v1834 = vpack.c.b16 %v1805, %v1804
      %v1835 = vpack.c.b16 %v1807, %v1806
      %v1836 = vpack.c.b16 %v1809, %v1808
      %v1837 = vpack.c.b16 %v1811, %v1810
      %v1838 = vpack.c.b16 %v1813, %v1812
      %v1839 = vpack.c.b16 %v1815, %v1814
      %v1840 = vpack.c.b16 %v1817, %v1816
      %v1841 = vpack.c.b16 %v1819, %v1818
      %v1842 = vpack.c.b16 %v1821, %v1820
      %v1843 = vpack.c.b16 %v1823, %v1822
      %v1844 = vpack.c.b16 %v1825, %v1824
      %v1845 = vpack.c.b16 %v1827, %v1826
      %v1846 = vpack.c.b16 %v1829, %v1828
      %v1847 = vpack.c.b16 %v1831, %v1830
      %v1864 = vunpack.c.l.b16 %v1611
      %v1865 = vunpack.c.l.b16 %v1614
      %v1866 = vunpack.c.l.b16 %v1618
      %v1867 = vunpack.c.l.b16 %v1621
      %v1868 = vunpack.c.l.b16 %v1625
      %v1869 = vunpack.c.l.b16 %v1628
      %v1870 = vunpack.c.l.b16 %v1632
      %v1871 = vunpack.c.l.b16 %v1635
      %v1872 = vunpack.c.l.b16 %v1639
      %v1873 = vunpack.c.l.b16 %v1642
      %v1874 = vunpack.c.l.b16 %v1646
      %v1875 = vunpack.c.l.b16 %v1649
      %v1876 = vunpack.c.l.b16 %v1653
      %v1877 = vunpack.c.l.b16 %v1656
      %v1878 = vunpack.c.l.b16 %v1660
      %v1879 = vunpack.c.l.b16 %v1663
      %v1880 = vunpack.c.l.b16 %v1667
      %v1881 = vunpack.c.l.b16 %v1670
      %v1882 = vunpack.c.l.b16 %v1674
      %v1883 = vunpack.c.l.b16 %v1677
      %v1884 = vunpack.c.l.b16 %v1681
      %v1885 = vunpack.c.l.b16 %v1684
      %v1886 = vunpack.c.l.b16 %v1688
      %v1887 = vunpack.c.l.b16 %v1691
      %v1888 = vunpack.c.l.b16 %v1695
      %v1889 = vunpack.c.l.b16 %v1698
      %v1890 = vunpack.c.l.b16 %v1702
      %v1891 = vunpack.c.l.b16 %v1705
      %v1892 = vunpack.c.l.b16 %v1709
      %v1893 = vunpack.c.l.b16 %v1712
      %v1894 = vunpack.c.l.b16 %v1716
      %v1895 = vunpack.c.l.b16 %v1719
      %v1896 = vpack.c.b16 %v1865, %v1864
      %v1897 = vpack.c.b16 %v1867, %v1866
      %v1898 = vpack.c.b16 %v1869, %v1868
      %v1899 = vpack.c.b16 %v1871, %v1870
      %v1900 = vpack.c.b16 %v1873, %v1872
      %v1901 = vpack.c.b16 %v1875, %v1874
      %v1902 = vpack.c.b16 %v1877, %v1876
      %v1903 = vpack.c.b16 %v1879, %v1878
      %v1904 = vpack.c.b16 %v1881, %v1880
      %v1905 = vpack.c.b16 %v1883, %v1882
      %v1906 = vpack.c.b16 %v1885, %v1884
      %v1907 = vpack.c.b16 %v1887, %v1886
      %v1908 = vpack.c.b16 %v1889, %v1888
      %v1909 = vpack.c.b16 %v1891, %v1890
      %v1910 = vpack.c.b16 %v1893, %v1892
      %v1911 = vpack.c.b16 %v1895, %v1894
      %v1928 = vld [vmem:[%s1] sm:$0xf]
      %v1929 = vld [vmem:[%s1 + $0x4] sm:$0xf]
      %v1930 = vld [vmem:[%s1 + $0x8] sm:$0xf]
      %v1931 = vld [vmem:[%s1 + $0xc] sm:$0xf]
      %v1932 = vld [vmem:[%s1 + $0x10] sm:$0xf]
      %v1933 = vld [vmem:[%s1 + $0x14] sm:$0xf]
      %v1934 = vld [vmem:[%s1 + $0x18] sm:$0xf]
      %v1935 = vld [vmem:[%s1 + $0x1c] sm:$0xf]
      %v1936 = vld [vmem:[%s1 + $0x20] sm:$0xf]
      %v1937 = vld [vmem:[%s1 + $0x24] sm:$0xf]
      %v1938 = vld [vmem:[%s1 + $0x28] sm:$0xf]
      %v1939 = vld [vmem:[%s1 + $0x2c] sm:$0xf]
      %v1940 = vld [vmem:[%s1 + $0x30] sm:$0xf]
      %v1941 = vld [vmem:[%s1 + $0x34] sm:$0xf]
      %v1942 = vld [vmem:[%s1 + $0x38] sm:$0xf]
      %v1943 = vld [vmem:[%s1 + $0x3c] sm:$0xf]
      %v1944 = vld [vmem:[%s1 + $0x40] sm:$0xf]
      %v1945 = vld [vmem:[%s1 + $0x44] sm:$0xf]
      %v1946 = vld [vmem:[%s1 + $0x48] sm:$0xf]
      %v1947 = vld [vmem:[%s1 + $0x4c] sm:$0xf]
      %v1948 = vld [vmem:[%s1 + $0x50] sm:$0xf]
      %v1949 = vld [vmem:[%s1 + $0x54] sm:$0xf]
      %v1950 = vld [vmem:[%s1 + $0x58] sm:$0xf]
      %v1951 = vld [vmem:[%s1 + $0x5c] sm:$0xf]
      %v1952 = vld [vmem:[%s1 + $0x60] sm:$0xf]
      %v1953 = vld [vmem:[%s1 + $0x64] sm:$0xf]
      %v1954 = vld [vmem:[%s1 + $0x68] sm:$0xf]
      %v1955 = vld [vmem:[%s1 + $0x6c] sm:$0xf]
      %v1956 = vld [vmem:[%s1 + $0x70] sm:$0xf]
      %v1957 = vld [vmem:[%s1 + $0x74] sm:$0xf]
      %v1958 = vld [vmem:[%s1 + $0x78] sm:$0xf]
      %v1959 = vld [vmem:[%s1 + $0x7c] sm:$0xf]
      %v1960 = vld [vmem:[%s1 + $0x80] sm:$0xf]
      %v1961 = vld [vmem:[%s1 + $0x84] sm:$0xf]
      %v1962 = vld [vmem:[%s1 + $0x88] sm:$0xf]
      %v1963 = vld [vmem:[%s1 + $0x8c] sm:$0xf]
      %v1964 = vld [vmem:[%s1 + $0x90] sm:$0xf]
      %v1965 = vld [vmem:[%s1 + $0x94] sm:$0xf]
      %v1966 = vld [vmem:[%s1 + $0x98] sm:$0xf]
      %v1967 = vld [vmem:[%s1 + $0x9c] sm:$0xf]
      %v1968 = vld [vmem:[%s1 + $0xa0] sm:$0xf]
      %v1969 = vld [vmem:[%s1 + $0xa4] sm:$0xf]
      %v1970 = vld [vmem:[%s1 + $0xa8] sm:$0xf]
      %v1971 = vld [vmem:[%s1 + $0xac] sm:$0xf]
      %v1972 = vld [vmem:[%s1 + $0xb0] sm:$0xf]
      %v1973 = vld [vmem:[%s1 + $0xb4] sm:$0xf]
      %v1974 = vld [vmem:[%s1 + $0xb8] sm:$0xf]
      %v1975 = vld [vmem:[%s1 + $0xbc] sm:$0xf]
      %v1976 = vld [vmem:[%s869] sm:$0xf]
      %v1977 = vld [vmem:[%s869 + $0x4] sm:$0xf]
      %v1978 = vld [vmem:[%s869 + $0xc] sm:$0xf]
      %v1979 = vld [vmem:[%s869 + $0x10] sm:$0xf]
      %v1980 = vld [vmem:[%s869 + $0x18] sm:$0xf]
      %v1981 = vld [vmem:[%s869 + $0x1c] sm:$0xf]
      %v1982 = vld [vmem:[%s869 + $0x24] sm:$0xf]
      %v1983 = vld [vmem:[%s869 + $0x28] sm:$0xf]
      %v1984 = vld [vmem:[%s869 + $0x30] sm:$0xf]
      %v1985 = vld [vmem:[%s869 + $0x34] sm:$0xf]
      %v1986 = vld [vmem:[%s869 + $0x3c] sm:$0xf]
      %v1987 = vld [vmem:[%s869 + $0x40] sm:$0xf]
      %v1988 = vld [vmem:[%s869 + $0x48] sm:$0xf]
      %v1989 = vld [vmem:[%s869 + $0x4c] sm:$0xf]
      %v1990 = vld [vmem:[%s869 + $0x54] sm:$0xf]
      %v1991 = vld [vmem:[%s869 + $0x58] sm:$0xf]
      %v1992 = vld [vmem:[%s869 + $0x60] sm:$0xf]
      %v1993 = vld [vmem:[%s869 + $0x64] sm:$0xf]
      %v1994 = vld [vmem:[%s869 + $0x6c] sm:$0xf]
      %v1995 = vld [vmem:[%s869 + $0x70] sm:$0xf]
      %v1996 = vld [vmem:[%s869 + $0x78] sm:$0xf]
      %v1997 = vld [vmem:[%s869 + $0x7c] sm:$0xf]
      %v1998 = vld [vmem:[%s869 + $0x84] sm:$0xf]
      %v1999 = vld [vmem:[%s869 + $0x88] sm:$0xf]
      %v2000 = vld [vmem:[%s869 + $0x90] sm:$0xf]
      %v2001 = vld [vmem:[%s869 + $0x94] sm:$0xf]
      %v2002 = vld [vmem:[%s869 + $0x9c] sm:$0xf]
      %v2003 = vld [vmem:[%s869 + $0xa0] sm:$0xf]
      %v2004 = vld [vmem:[%s869 + $0xa8] sm:$0xf]
      %v2005 = vld [vmem:[%s869 + $0xac] sm:$0xf]
      %v2006 = vld [vmem:[%s869 + $0xb4] sm:$0xf]
      %v2007 = vld [vmem:[%s869 + $0xb8] sm:$0xf]
      %v2008 = vld [vmem:[%s869 + $0x8] sm:$0x1]
      %v2009 = vld [vmem:[%s869 + $0x14] sm:$0x1]
      %v2010 = vld [vmem:[%s869 + $0x20] sm:$0x1]
      %v2011 = vld [vmem:[%s869 + $0x2c] sm:$0x1]
      %v2012 = vld [vmem:[%s869 + $0x38] sm:$0x1]
      %v2013 = vld [vmem:[%s869 + $0x44] sm:$0x1]
      %v2014 = vld [vmem:[%s869 + $0x50] sm:$0x1]
      %v2015 = vld [vmem:[%s869 + $0x5c] sm:$0x1]
      %v2016 = vld [vmem:[%s869 + $0x68] sm:$0x1]
      %v2017 = vld [vmem:[%s869 + $0x74] sm:$0x1]
      %v2018 = vld [vmem:[%s869 + $0x80] sm:$0x1]
      %v2019 = vld [vmem:[%s869 + $0x8c] sm:$0x1]
      %v2020 = vld [vmem:[%s869 + $0x98] sm:$0x1]
      %v2021 = vld [vmem:[%s869 + $0xa4] sm:$0x1]
      %v2022 = vld [vmem:[%s869 + $0xb0] sm:$0x1]
      %v2023 = vld [vmem:[%s869 + $0xbc] sm:$0x1]
      %v2025 = vshrl.u32 %v1976, 16
      %v2027 = vrot.slane %v2025, 4
      %v2028 = vshll.u32 %v1976, 16
      %v2030 = vrot.slane %v2028, 5
      %v2031 = vor.u32 %v2027, %v2030
      %v2032 = vrot.slane %v2031, 4
      %v2034 = vshll.u32 %v1977, 16
      %v2036 = vrot.slane %v2034, 5
      %v2037 = vsel %vm1156, %v2032, %v2036
      %v2038 = vshrl.u32 %v1977, 16
      %v2040 = vrot.slane %v2038, 4
      %v2041 = vor.u32 %v2040, %v2036
      %v2042 = vrot.slane %v2041, 4
      %v2044 = vshll.u32 %v2008, 16
      %v2046 = vrot.slane %v2044, 5
      %v2047 = vsel %vm1156, %v2042, %v2046
      %v2049 = vshrl.u32 %v1978, 16
      %v2051 = vrot.slane %v2049, 4
      %v2052 = vshll.u32 %v1978, 16
      %v2054 = vrot.slane %v2052, 5
      %v2055 = vor.u32 %v2051, %v2054
      %v2056 = vrot.slane %v2055, 4
      %v2058 = vshll.u32 %v1979, 16
      %v2060 = vrot.slane %v2058, 5
      %v2061 = vsel %vm1156, %v2056, %v2060
      %v2062 = vshrl.u32 %v1979, 16
      %v2064 = vrot.slane %v2062, 4
      %v2065 = vor.u32 %v2064, %v2060
      %v2066 = vrot.slane %v2065, 4
      %v2068 = vshll.u32 %v2009, 16
      %v2070 = vrot.slane %v2068, 5
      %v2071 = vsel %vm1156, %v2066, %v2070
      %v2073 = vshrl.u32 %v1980, 16
      %v2075 = vrot.slane %v2073, 4
      %v2076 = vshll.u32 %v1980, 16
      %v2078 = vrot.slane %v2076, 5
      %v2079 = vor.u32 %v2075, %v2078
      %v2080 = vrot.slane %v2079, 4
      %v2082 = vshll.u32 %v1981, 16
      %v2084 = vrot.slane %v2082, 5
      %v2085 = vsel %vm1156, %v2080, %v2084
      %v2086 = vshrl.u32 %v1981, 16
      %v2088 = vrot.slane %v2086, 4
      %v2089 = vor.u32 %v2088, %v2084
      %v2090 = vrot.slane %v2089, 4
      %v2092 = vshll.u32 %v2010, 16
      %v2094 = vrot.slane %v2092, 5
      %v2095 = vsel %vm1156, %v2090, %v2094
      %v2097 = vshrl.u32 %v1982, 16
      %v2099 = vrot.slane %v2097, 4
      %v2100 = vshll.u32 %v1982, 16
      %v2102 = vrot.slane %v2100, 5
      %v2103 = vor.u32 %v2099, %v2102
      %v2104 = vrot.slane %v2103, 4
      %v2106 = vshll.u32 %v1983, 16
      %v2108 = vrot.slane %v2106, 5
      %v2109 = vsel %vm1156, %v2104, %v2108
      %v2110 = vshrl.u32 %v1983, 16
      %v2112 = vrot.slane %v2110, 4
      %v2113 = vor.u32 %v2112, %v2108
      %v2114 = vrot.slane %v2113, 4
      %v2116 = vshll.u32 %v2011, 16
      %v2118 = vrot.slane %v2116, 5
      %v2119 = vsel %vm1156, %v2114, %v2118
      %v2121 = vshrl.u32 %v1984, 16
      %v2123 = vrot.slane %v2121, 4
      %v2124 = vshll.u32 %v1984, 16
      %v2126 = vrot.slane %v2124, 5
      %v2127 = vor.u32 %v2123, %v2126
      %v2128 = vrot.slane %v2127, 4
      %v2130 = vshll.u32 %v1985, 16
      %v2132 = vrot.slane %v2130, 5
      %v2133 = vsel %vm1156, %v2128, %v2132
      %v2134 = vshrl.u32 %v1985, 16
      %v2136 = vrot.slane %v2134, 4
      %v2137 = vor.u32 %v2136, %v2132
      %v2138 = vrot.slane %v2137, 4
      %v2140 = vshll.u32 %v2012, 16
      %v2142 = vrot.slane %v2140, 5
      %v2143 = vsel %vm1156, %v2138, %v2142
      %v2145 = vshrl.u32 %v1986, 16
      %v2147 = vrot.slane %v2145, 4
      %v2148 = vshll.u32 %v1986, 16
      %v2150 = vrot.slane %v2148, 5
      %v2151 = vor.u32 %v2147, %v2150
      %v2152 = vrot.slane %v2151, 4
      %v2154 = vshll.u32 %v1987, 16
      %v2156 = vrot.slane %v2154, 5
      %v2157 = vsel %vm1156, %v2152, %v2156
      %v2158 = vshrl.u32 %v1987, 16
      %v2160 = vrot.slane %v2158, 4
      %v2161 = vor.u32 %v2160, %v2156
      %v2162 = vrot.slane %v2161, 4
      %v2164 = vshll.u32 %v2013, 16
      %v2166 = vrot.slane %v2164, 5
      %v2167 = vsel %vm1156, %v2162, %v2166
      %v2169 = vshrl.u32 %v1988, 16
      %v2171 = vrot.slane %v2169, 4
      %v2172 = vshll.u32 %v1988, 16
      %v2174 = vrot.slane %v2172, 5
      %v2175 = vor.u32 %v2171, %v2174
      %v2176 = vrot.slane %v2175, 4
      %v2178 = vshll.u32 %v1989, 16
      %v2180 = vrot.slane %v2178, 5
      %v2181 = vsel %vm1156, %v2176, %v2180
      %v2182 = vshrl.u32 %v1989, 16
      %v2184 = vrot.slane %v2182, 4
      %v2185 = vor.u32 %v2184, %v2180
      %v2186 = vrot.slane %v2185, 4
      %v2188 = vshll.u32 %v2014, 16
      %v2190 = vrot.slane %v2188, 5
      %v2191 = vsel %vm1156, %v2186, %v2190
      %v2193 = vshrl.u32 %v1990, 16
      %v2195 = vrot.slane %v2193, 4
      %v2196 = vshll.u32 %v1990, 16
      %v2198 = vrot.slane %v2196, 5
      %v2199 = vor.u32 %v2195, %v2198
      %v2200 = vrot.slane %v2199, 4
      %v2202 = vshll.u32 %v1991, 16
      %v2204 = vrot.slane %v2202, 5
      %v2205 = vsel %vm1156, %v2200, %v2204
      %v2206 = vshrl.u32 %v1991, 16
      %v2208 = vrot.slane %v2206, 4
      %v2209 = vor.u32 %v2208, %v2204
      %v2210 = vrot.slane %v2209, 4
      %v2212 = vshll.u32 %v2015, 16
      %v2214 = vrot.slane %v2212, 5
      %v2215 = vsel %vm1156, %v2210, %v2214
      %v2217 = vshrl.u32 %v1992, 16
      %v2219 = vrot.slane %v2217, 4
      %v2220 = vshll.u32 %v1992, 16
      %v2222 = vrot.slane %v2220, 5
      %v2223 = vor.u32 %v2219, %v2222
      %v2224 = vrot.slane %v2223, 4
      %v2226 = vshll.u32 %v1993, 16
      %v2228 = vrot.slane %v2226, 5
      %v2229 = vsel %vm1156, %v2224, %v2228
      %v2230 = vshrl.u32 %v1993, 16
      %v2232 = vrot.slane %v2230, 4
      %v2233 = vor.u32 %v2232, %v2228
      %v2234 = vrot.slane %v2233, 4
      %v2236 = vshll.u32 %v2016, 16
      %v2238 = vrot.slane %v2236, 5
      %v2239 = vsel %vm1156, %v2234, %v2238
      %v2241 = vshrl.u32 %v1994, 16
      %v2243 = vrot.slane %v2241, 4
      %v2244 = vshll.u32 %v1994, 16
      %v2246 = vrot.slane %v2244, 5
      %v2247 = vor.u32 %v2243, %v2246
      %v2248 = vrot.slane %v2247, 4
      %v2250 = vshll.u32 %v1995, 16
      %v2252 = vrot.slane %v2250, 5
      %v2253 = vsel %vm1156, %v2248, %v2252
      %v2254 = vshrl.u32 %v1995, 16
      %v2256 = vrot.slane %v2254, 4
      %v2257 = vor.u32 %v2256, %v2252
      %v2258 = vrot.slane %v2257, 4
      %v2260 = vshll.u32 %v2017, 16
      %v2262 = vrot.slane %v2260, 5
      %v2263 = vsel %vm1156, %v2258, %v2262
      %v2265 = vshrl.u32 %v1996, 16
      %v2267 = vrot.slane %v2265, 4
      %v2268 = vshll.u32 %v1996, 16
      %v2270 = vrot.slane %v2268, 5
      %v2271 = vor.u32 %v2267, %v2270
      %v2272 = vrot.slane %v2271, 4
      %v2274 = vshll.u32 %v1997, 16
      %v2276 = vrot.slane %v2274, 5
      %v2277 = vsel %vm1156, %v2272, %v2276
      %v2278 = vshrl.u32 %v1997, 16
      %v2280 = vrot.slane %v2278, 4
      %v2281 = vor.u32 %v2280, %v2276
      %v2282 = vrot.slane %v2281, 4
      %v2284 = vshll.u32 %v2018, 16
      %v2286 = vrot.slane %v2284, 5
      %v2287 = vsel %vm1156, %v2282, %v2286
      %v2289 = vshrl.u32 %v1998, 16
      %v2291 = vrot.slane %v2289, 4
      %v2292 = vshll.u32 %v1998, 16
      %v2294 = vrot.slane %v2292, 5
      %v2295 = vor.u32 %v2291, %v2294
      %v2296 = vrot.slane %v2295, 4
      %v2298 = vshll.u32 %v1999, 16
      %v2300 = vrot.slane %v2298, 5
      %v2301 = vsel %vm1156, %v2296, %v2300
      %v2302 = vshrl.u32 %v1999, 16
      %v2304 = vrot.slane %v2302, 4
      %v2305 = vor.u32 %v2304, %v2300
      %v2306 = vrot.slane %v2305, 4
      %v2308 = vshll.u32 %v2019, 16
      %v2310 = vrot.slane %v2308, 5
      %v2311 = vsel %vm1156, %v2306, %v2310
      %v2313 = vshrl.u32 %v2000, 16
      %v2315 = vrot.slane %v2313, 4
      %v2316 = vshll.u32 %v2000, 16
      %v2318 = vrot.slane %v2316, 5
      %v2319 = vor.u32 %v2315, %v2318
      %v2320 = vrot.slane %v2319, 4
      %v2322 = vshll.u32 %v2001, 16
      %v2324 = vrot.slane %v2322, 5
      %v2325 = vsel %vm1156, %v2320, %v2324
      %v2326 = vshrl.u32 %v2001, 16
      %v2328 = vrot.slane %v2326, 4
      %v2329 = vor.u32 %v2328, %v2324
      %v2330 = vrot.slane %v2329, 4
      %v2332 = vshll.u32 %v2020, 16
      %v2334 = vrot.slane %v2332, 5
      %v2335 = vsel %vm1156, %v2330, %v2334
      %v2337 = vshrl.u32 %v2002, 16
      %v2339 = vrot.slane %v2337, 4
      %v2340 = vshll.u32 %v2002, 16
      %v2342 = vrot.slane %v2340, 5
      %v2343 = vor.u32 %v2339, %v2342
      %v2344 = vrot.slane %v2343, 4
      %v2346 = vshll.u32 %v2003, 16
      %v2348 = vrot.slane %v2346, 5
      %v2349 = vsel %vm1156, %v2344, %v2348
      %v2350 = vshrl.u32 %v2003, 16
      %v2352 = vrot.slane %v2350, 4
      %v2353 = vor.u32 %v2352, %v2348
      %v2354 = vrot.slane %v2353, 4
      %v2356 = vshll.u32 %v2021, 16
      %v2358 = vrot.slane %v2356, 5
      %v2359 = vsel %vm1156, %v2354, %v2358
      %v2361 = vshrl.u32 %v2004, 16
      %v2363 = vrot.slane %v2361, 4
      %v2364 = vshll.u32 %v2004, 16
      %v2366 = vrot.slane %v2364, 5
      %v2367 = vor.u32 %v2363, %v2366
      %v2368 = vrot.slane %v2367, 4
      %v2370 = vshll.u32 %v2005, 16
      %v2372 = vrot.slane %v2370, 5
      %v2373 = vsel %vm1156, %v2368, %v2372
      %v2374 = vshrl.u32 %v2005, 16
      %v2376 = vrot.slane %v2374, 4
      %v2377 = vor.u32 %v2376, %v2372
      %v2378 = vrot.slane %v2377, 4
      %v2380 = vshll.u32 %v2022, 16
      %v2382 = vrot.slane %v2380, 5
      %v2383 = vsel %vm1156, %v2378, %v2382
      %v2385 = vshrl.u32 %v2006, 16
      %v2387 = vrot.slane %v2385, 4
      %v2388 = vshll.u32 %v2006, 16
      %v2390 = vrot.slane %v2388, 5
      %v2391 = vor.u32 %v2387, %v2390
      %v2392 = vrot.slane %v2391, 4
      %v2394 = vshll.u32 %v2007, 16
      %v2396 = vrot.slane %v2394, 5
      %v2397 = vsel %vm1156, %v2392, %v2396
      %v2398 = vshrl.u32 %v2007, 16
      %v2400 = vrot.slane %v2398, 4
      %v2401 = vor.u32 %v2400, %v2396
      %v2402 = vrot.slane %v2401, 4
      %v2404 = vshll.u32 %v2023, 16
      %v2406 = vrot.slane %v2404, 5
      %v2407 = vsel %vm1156, %v2402, %v2406
      %v2408 = vld [vmem:[%s869] sm:$0xe]
      %v2409 = vld [vmem:[%s869 + $0xc] sm:$0xe]
      %v2410 = vld [vmem:[%s869 + $0x18] sm:$0xe]
      %v2411 = vld [vmem:[%s869 + $0x24] sm:$0xe]
      %v2412 = vld [vmem:[%s869 + $0x30] sm:$0xe]
      %v2413 = vld [vmem:[%s869 + $0x3c] sm:$0xe]
      %v2414 = vld [vmem:[%s869 + $0x48] sm:$0xe]
      %v2415 = vld [vmem:[%s869 + $0x54] sm:$0xe]
      %v2416 = vld [vmem:[%s869 + $0x60] sm:$0xe]
      %v2417 = vld [vmem:[%s869 + $0x6c] sm:$0xe]
      %v2418 = vld [vmem:[%s869 + $0x78] sm:$0xe]
      %v2419 = vld [vmem:[%s869 + $0x84] sm:$0xe]
      %v2420 = vld [vmem:[%s869 + $0x90] sm:$0xe]
      %v2421 = vld [vmem:[%s869 + $0x9c] sm:$0xe]
      %v2422 = vld [vmem:[%s869 + $0xa8] sm:$0xe]
      %v2423 = vld [vmem:[%s869 + $0xb4] sm:$0xe]
      %v2472 = vrot.slane %v2408, 5
      %v2473 = vrot.slane %v2472, 4
      %v2474 = vrot.slane %v1977, 5
      %v2475 = vsel %vm1607, %v2473, %v2474
      %v2476 = vrot.slane %v2474, 4
      %v2477 = vrot.slane %v2008, 5
      %v2478 = vsel %vm1607, %v2476, %v2477
      %v2479 = vrot.slane %v2409, 5
      %v2480 = vrot.slane %v2479, 4
      %v2481 = vrot.slane %v1979, 5
      %v2482 = vsel %vm1607, %v2480, %v2481
      %v2483 = vrot.slane %v2481, 4
      %v2484 = vrot.slane %v2009, 5
      %v2485 = vsel %vm1607, %v2483, %v2484
      %v2486 = vrot.slane %v2410, 5
      %v2487 = vrot.slane %v2486, 4
      %v2488 = vrot.slane %v1981, 5
      %v2489 = vsel %vm1607, %v2487, %v2488
      %v2490 = vrot.slane %v2488, 4
      %v2491 = vrot.slane %v2010, 5
      %v2492 = vsel %vm1607, %v2490, %v2491
      %v2493 = vrot.slane %v2411, 5
      %v2494 = vrot.slane %v2493, 4
      %v2495 = vrot.slane %v1983, 5
      %v2496 = vsel %vm1607, %v2494, %v2495
      %v2497 = vrot.slane %v2495, 4
      %v2498 = vrot.slane %v2011, 5
      %v2499 = vsel %vm1607, %v2497, %v2498
      %v2500 = vrot.slane %v2412, 5
      %v2501 = vrot.slane %v2500, 4
      %v2502 = vrot.slane %v1985, 5
      %v2503 = vsel %vm1607, %v2501, %v2502
      %v2504 = vrot.slane %v2502, 4
      %v2505 = vrot.slane %v2012, 5
      %v2506 = vsel %vm1607, %v2504, %v2505
      %v2507 = vrot.slane %v2413, 5
      %v2508 = vrot.slane %v2507, 4
      %v2509 = vrot.slane %v1987, 5
      %v2510 = vsel %vm1607, %v2508, %v2509
      %v2511 = vrot.slane %v2509, 4
      %v2512 = vrot.slane %v2013, 5
      %v2513 = vsel %vm1607, %v2511, %v2512
      %v2514 = vrot.slane %v2414, 5
      %v2515 = vrot.slane %v2514, 4
      %v2516 = vrot.slane %v1989, 5
      %v2517 = vsel %vm1607, %v2515, %v2516
      %v2518 = vrot.slane %v2516, 4
      %v2519 = vrot.slane %v2014, 5
      %v2520 = vsel %vm1607, %v2518, %v2519
      %v2521 = vrot.slane %v2415, 5
      %v2522 = vrot.slane %v2521, 4
      %v2523 = vrot.slane %v1991, 5
      %v2524 = vsel %vm1607, %v2522, %v2523
      %v2525 = vrot.slane %v2523, 4
      %v2526 = vrot.slane %v2015, 5
      %v2527 = vsel %vm1607, %v2525, %v2526
      %v2528 = vrot.slane %v2416, 5
      %v2529 = vrot.slane %v2528, 4
      %v2530 = vrot.slane %v1993, 5
      %v2531 = vsel %vm1607, %v2529, %v2530
      %v2532 = vrot.slane %v2530, 4
      %v2533 = vrot.slane %v2016, 5
      %v2534 = vsel %vm1607, %v2532, %v2533
      %v2535 = vrot.slane %v2417, 5
      %v2536 = vrot.slane %v2535, 4
      %v2537 = vrot.slane %v1995, 5
      %v2538 = vsel %vm1607, %v2536, %v2537
      %v2539 = vrot.slane %v2537, 4
      %v2540 = vrot.slane %v2017, 5
      %v2541 = vsel %vm1607, %v2539, %v2540
      %v2542 = vrot.slane %v2418, 5
      %v2543 = vrot.slane %v2542, 4
      %v2544 = vrot.slane %v1997, 5
      %v2545 = vsel %vm1607, %v2543, %v2544
      %v2546 = vrot.slane %v2544, 4
      %v2547 = vrot.slane %v2018, 5
      %v2548 = vsel %vm1607, %v2546, %v2547
      %v2549 = vrot.slane %v2419, 5
      %v2550 = vrot.slane %v2549, 4
      %v2551 = vrot.slane %v1999, 5
      %v2552 = vsel %vm1607, %v2550, %v2551
      %v2553 = vrot.slane %v2551, 4
      %v2554 = vrot.slane %v2019, 5
      %v2555 = vsel %vm1607, %v2553, %v2554
      %v2556 = vrot.slane %v2420, 5
      %v2557 = vrot.slane %v2556, 4
      %v2558 = vrot.slane %v2001, 5
      %v2559 = vsel %vm1607, %v2557, %v2558
      %v2560 = vrot.slane %v2558, 4
      %v2561 = vrot.slane %v2020, 5
      %v2562 = vsel %vm1607, %v2560, %v2561
      %v2563 = vrot.slane %v2421, 5
      %v2564 = vrot.slane %v2563, 4
      %v2565 = vrot.slane %v2003, 5
      %v2566 = vsel %vm1607, %v2564, %v2565
      %v2567 = vrot.slane %v2565, 4
      %v2568 = vrot.slane %v2021, 5
      %v2569 = vsel %vm1607, %v2567, %v2568
      %v2570 = vrot.slane %v2422, 5
      %v2571 = vrot.slane %v2570, 4
      %v2572 = vrot.slane %v2005, 5
      %v2573 = vsel %vm1607, %v2571, %v2572
      %v2574 = vrot.slane %v2572, 4
      %v2575 = vrot.slane %v2022, 5
      %v2576 = vsel %vm1607, %v2574, %v2575
      %v2577 = vrot.slane %v2423, 5
      %v2578 = vrot.slane %v2577, 4
      %v2579 = vrot.slane %v2007, 5
      %v2580 = vsel %vm1607, %v2578, %v2579
      %v2581 = vrot.slane %v2579, 4
      %v2582 = vrot.slane %v2023, 5
      %v2583 = vsel %vm1607, %v2581, %v2582
      %v2600 = vunpack.c.l.b16 %v1976
      %v2601 = vunpack.c.l.b16 %v1977
      %v2602 = vunpack.c.l.b16 %v1978
      %v2603 = vunpack.c.l.b16 %v1979
      %v2604 = vunpack.c.l.b16 %v1980
      %v2605 = vunpack.c.l.b16 %v1981
      %v2606 = vunpack.c.l.b16 %v1982
      %v2607 = vunpack.c.l.b16 %v1983
      %v2608 = vunpack.c.l.b16 %v1984
      %v2609 = vunpack.c.l.b16 %v1985
      %v2610 = vunpack.c.l.b16 %v1986
      %v2611 = vunpack.c.l.b16 %v1987
      %v2612 = vunpack.c.l.b16 %v1988
      %v2613 = vunpack.c.l.b16 %v1989
      %v2614 = vunpack.c.l.b16 %v1990
      %v2615 = vunpack.c.l.b16 %v1991
      %v2616 = vunpack.c.l.b16 %v1992
      %v2617 = vunpack.c.l.b16 %v1993
      %v2618 = vunpack.c.l.b16 %v1994
      %v2619 = vunpack.c.l.b16 %v1995
      %v2620 = vunpack.c.l.b16 %v1996
      %v2621 = vunpack.c.l.b16 %v1997
      %v2622 = vunpack.c.l.b16 %v1998
      %v2623 = vunpack.c.l.b16 %v1999
      %v2624 = vunpack.c.l.b16 %v2000
      %v2625 = vunpack.c.l.b16 %v2001
      %v2626 = vunpack.c.l.b16 %v2002
      %v2627 = vunpack.c.l.b16 %v2003
      %v2628 = vunpack.c.l.b16 %v2004
      %v2629 = vunpack.c.l.b16 %v2005
      %v2630 = vunpack.c.l.b16 %v2006
      %v2631 = vunpack.c.l.b16 %v2007
      %v2632 = vpack.c.b16 %v2601, %v2600
      %v2633 = vpack.c.b16 %v2603, %v2602
      %v2634 = vpack.c.b16 %v2605, %v2604
      %v2635 = vpack.c.b16 %v2607, %v2606
      %v2636 = vpack.c.b16 %v2609, %v2608
      %v2637 = vpack.c.b16 %v2611, %v2610
      %v2638 = vpack.c.b16 %v2613, %v2612
      %v2639 = vpack.c.b16 %v2615, %v2614
      %v2640 = vpack.c.b16 %v2617, %v2616
      %v2641 = vpack.c.b16 %v2619, %v2618
      %v2642 = vpack.c.b16 %v2621, %v2620
      %v2643 = vpack.c.b16 %v2623, %v2622
      %v2644 = vpack.c.b16 %v2625, %v2624
      %v2645 = vpack.c.b16 %v2627, %v2626
      %v2646 = vpack.c.b16 %v2629, %v2628
      %v2647 = vpack.c.b16 %v2631, %v2630
      %v2664 = vunpack.c.l.b16 %v2037
      %v2665 = vunpack.c.l.b16 %v2047
      %v2666 = vunpack.c.l.b16 %v2061
      %v2667 = vunpack.c.l.b16 %v2071
      %v2668 = vunpack.c.l.b16 %v2085
      %v2669 = vunpack.c.l.b16 %v2095
      %v2670 = vunpack.c.l.b16 %v2109
      %v2671 = vunpack.c.l.b16 %v2119
      %v2672 = vunpack.c.l.b16 %v2133
      %v2673 = vunpack.c.l.b16 %v2143
      %v2674 = vunpack.c.l.b16 %v2157
      %v2675 = vunpack.c.l.b16 %v2167
      %v2676 = vunpack.c.l.b16 %v2181
      %v2677 = vunpack.c.l.b16 %v2191
      %v2678 = vunpack.c.l.b16 %v2205
      %v2679 = vunpack.c.l.b16 %v2215
      %v2680 = vunpack.c.l.b16 %v2229
      %v2681 = vunpack.c.l.b16 %v2239
      %v2682 = vunpack.c.l.b16 %v2253
      %v2683 = vunpack.c.l.b16 %v2263
      %v2684 = vunpack.c.l.b16 %v2277
      %v2685 = vunpack.c.l.b16 %v2287
      %v2686 = vunpack.c.l.b16 %v2301
      %v2687 = vunpack.c.l.b16 %v2311
      %v2688 = vunpack.c.l.b16 %v2325
      %v2689 = vunpack.c.l.b16 %v2335
      %v2690 = vunpack.c.l.b16 %v2349
      %v2691 = vunpack.c.l.b16 %v2359
      %v2692 = vunpack.c.l.b16 %v2373
      %v2693 = vunpack.c.l.b16 %v2383
      %v2694 = vunpack.c.l.b16 %v2397
      %v2695 = vunpack.c.l.b16 %v2407
      %v2696 = vpack.c.b16 %v2665, %v2664
      %v2697 = vpack.c.b16 %v2667, %v2666
      %v2698 = vpack.c.b16 %v2669, %v2668
      %v2699 = vpack.c.b16 %v2671, %v2670
      %v2700 = vpack.c.b16 %v2673, %v2672
      %v2701 = vpack.c.b16 %v2675, %v2674
      %v2702 = vpack.c.b16 %v2677, %v2676
      %v2703 = vpack.c.b16 %v2679, %v2678
      %v2704 = vpack.c.b16 %v2681, %v2680
      %v2705 = vpack.c.b16 %v2683, %v2682
      %v2706 = vpack.c.b16 %v2685, %v2684
      %v2707 = vpack.c.b16 %v2687, %v2686
      %v2708 = vpack.c.b16 %v2689, %v2688
      %v2709 = vpack.c.b16 %v2691, %v2690
      %v2710 = vpack.c.b16 %v2693, %v2692
      %v2711 = vpack.c.b16 %v2695, %v2694
      %v2728 = vunpack.c.l.b16 %v2475
      %v2729 = vunpack.c.l.b16 %v2478
      %v2730 = vunpack.c.l.b16 %v2482
      %v2731 = vunpack.c.l.b16 %v2485
      %v2732 = vunpack.c.l.b16 %v2489
      %v2733 = vunpack.c.l.b16 %v2492
      %v2734 = vunpack.c.l.b16 %v2496
      %v2735 = vunpack.c.l.b16 %v2499
      %v2736 = vunpack.c.l.b16 %v2503
      %v2737 = vunpack.c.l.b16 %v2506
      %v2738 = vunpack.c.l.b16 %v2510
      %v2739 = vunpack.c.l.b16 %v2513
      %v2740 = vunpack.c.l.b16 %v2517
      %v2741 = vunpack.c.l.b16 %v2520
      %v2742 = vunpack.c.l.b16 %v2524
      %v2743 = vunpack.c.l.b16 %v2527
      %v2744 = vunpack.c.l.b16 %v2531
      %v2745 = vunpack.c.l.b16 %v2534
      %v2746 = vunpack.c.l.b16 %v2538
      %v2747 = vunpack.c.l.b16 %v2541
      %v2748 = vunpack.c.l.b16 %v2545
      %v2749 = vunpack.c.l.b16 %v2548
      %v2750 = vunpack.c.l.b16 %v2552
      %v2751 = vunpack.c.l.b16 %v2555
      %v2752 = vunpack.c.l.b16 %v2559
      %v2753 = vunpack.c.l.b16 %v2562
      %v2754 = vunpack.c.l.b16 %v2566
      %v2755 = vunpack.c.l.b16 %v2569
      %v2756 = vunpack.c.l.b16 %v2573
      %v2757 = vunpack.c.l.b16 %v2576
      %v2758 = vunpack.c.l.b16 %v2580
      %v2759 = vunpack.c.l.b16 %v2583
      %v2760 = vpack.c.b16 %v2729, %v2728
      %v2761 = vpack.c.b16 %v2731, %v2730
      %v2762 = vpack.c.b16 %v2733, %v2732
      %v2763 = vpack.c.b16 %v2735, %v2734
      %v2764 = vpack.c.b16 %v2737, %v2736
      %v2765 = vpack.c.b16 %v2739, %v2738
      %v2766 = vpack.c.b16 %v2741, %v2740
      %v2767 = vpack.c.b16 %v2743, %v2742
      %v2768 = vpack.c.b16 %v2745, %v2744
      %v2769 = vpack.c.b16 %v2747, %v2746
      %v2770 = vpack.c.b16 %v2749, %v2748
      %v2771 = vpack.c.b16 %v2751, %v2750
      %v2772 = vpack.c.b16 %v2753, %v2752
      %v2773 = vpack.c.b16 %v2755, %v2754
      %v2774 = vpack.c.b16 %v2757, %v2756
      %v2775 = vpack.c.b16 %v2759, %v2758
      %v2792 = vld [vmem:[%s1 + $0xc0] sm:$0xf]
      %v2793 = vld [vmem:[%s1 + $0xc4] sm:$0xf]
      %v2794 = vld [vmem:[%s1 + $0xc8] sm:$0xf]
      %v2795 = vld [vmem:[%s1 + $0xcc] sm:$0xf]
      %v2796 = vld [vmem:[%s1 + $0xd0] sm:$0xf]
      %v2797 = vld [vmem:[%s1 + $0xd4] sm:$0xf]
      %v2798 = vld [vmem:[%s1 + $0xd8] sm:$0xf]
      %v2799 = vld [vmem:[%s1 + $0xdc] sm:$0xf]
      %v2800 = vld [vmem:[%s1 + $0xe0] sm:$0xf]
      %v2801 = vld [vmem:[%s1 + $0xe4] sm:$0xf]
      %v2802 = vld [vmem:[%s1 + $0xe8] sm:$0xf]
      %v2803 = vld [vmem:[%s1 + $0xec] sm:$0xf]
      %v2804 = vld [vmem:[%s1 + $0xf0] sm:$0xf]
      %v2805 = vld [vmem:[%s1 + $0xf4] sm:$0xf]
      %v2806 = vld [vmem:[%s1 + $0xf8] sm:$0xf]
      %v2807 = vld [vmem:[%s1 + $0xfc] sm:$0xf]
      %v2808 = vld [vmem:[%s1 + $0x100] sm:$0xf]
      %v2809 = vld [vmem:[%s1 + $0x104] sm:$0xf]
      %v2810 = vld [vmem:[%s1 + $0x108] sm:$0xf]
      %v2811 = vld [vmem:[%s1 + $0x10c] sm:$0xf]
      %v2812 = vld [vmem:[%s1 + $0x110] sm:$0xf]
      %v2813 = vld [vmem:[%s1 + $0x114] sm:$0xf]
      %v2814 = vld [vmem:[%s1 + $0x118] sm:$0xf]
      %v2815 = vld [vmem:[%s1 + $0x11c] sm:$0xf]
      %v2816 = vld [vmem:[%s1 + $0x120] sm:$0xf]
      %v2817 = vld [vmem:[%s1 + $0x124] sm:$0xf]
      %v2818 = vld [vmem:[%s1 + $0x128] sm:$0xf]
      %v2819 = vld [vmem:[%s1 + $0x12c] sm:$0xf]
      %v2820 = vld [vmem:[%s1 + $0x130] sm:$0xf]
      %v2821 = vld [vmem:[%s1 + $0x134] sm:$0xf]
      %v2822 = vld [vmem:[%s1 + $0x138] sm:$0xf]
      %v2823 = vld [vmem:[%s1 + $0x13c] sm:$0xf]
      %v2824 = vld [vmem:[%s1 + $0x140] sm:$0xf]
      %v2825 = vld [vmem:[%s1 + $0x144] sm:$0xf]
      %v2826 = vld [vmem:[%s1 + $0x148] sm:$0xf]
      %v2827 = vld [vmem:[%s1 + $0x14c] sm:$0xf]
      %v2828 = vld [vmem:[%s1 + $0x150] sm:$0xf]
      %v2829 = vld [vmem:[%s1 + $0x154] sm:$0xf]
      %v2830 = vld [vmem:[%s1 + $0x158] sm:$0xf]
      %v2831 = vld [vmem:[%s1 + $0x15c] sm:$0xf]
      %v2832 = vld [vmem:[%s1 + $0x160] sm:$0xf]
      %v2833 = vld [vmem:[%s1 + $0x164] sm:$0xf]
      %v2834 = vld [vmem:[%s1 + $0x168] sm:$0xf]
      %v2835 = vld [vmem:[%s1 + $0x16c] sm:$0xf]
      %v2836 = vld [vmem:[%s1 + $0x170] sm:$0xf]
      %v2837 = vld [vmem:[%s1 + $0x174] sm:$0xf]
      %v2838 = vld [vmem:[%s1 + $0x178] sm:$0xf]
      %v2839 = vld [vmem:[%s1 + $0x17c] sm:$0xf]
      %v2888 = vunpack.c.l.b16 %v2792
      %v2889 = vunpack.c.l.b16 %v2793
      %v2890 = vunpack.c.l.b16 %v2794
      %v2891 = vunpack.c.l.b16 %v2795
      %v2892 = vunpack.c.l.b16 %v2796
      %v2893 = vunpack.c.l.b16 %v2797
      %v2894 = vunpack.c.l.b16 %v2798
      %v2895 = vunpack.c.l.b16 %v2799
      %v2896 = vunpack.c.l.b16 %v2800
      %v2897 = vunpack.c.l.b16 %v2801
      %v2898 = vunpack.c.l.b16 %v2802
      %v2899 = vunpack.c.l.b16 %v2803
      %v2900 = vunpack.c.l.b16 %v2804
      %v2901 = vunpack.c.l.b16 %v2805
      %v2902 = vunpack.c.l.b16 %v2806
      %v2903 = vunpack.c.l.b16 %v2807
      %v2904 = vunpack.c.l.b16 %v2808
      %v2905 = vunpack.c.l.b16 %v2809
      %v2906 = vunpack.c.l.b16 %v2810
      %v2907 = vunpack.c.l.b16 %v2811
      %v2908 = vunpack.c.l.b16 %v2812
      %v2909 = vunpack.c.l.b16 %v2813
      %v2910 = vunpack.c.l.b16 %v2814
      %v2911 = vunpack.c.l.b16 %v2815
      %v2912 = vunpack.c.l.b16 %v2816
      %v2913 = vunpack.c.l.b16 %v2817
      %v2914 = vunpack.c.l.b16 %v2818
      %v2915 = vunpack.c.l.b16 %v2819
      %v2916 = vunpack.c.l.b16 %v2820
      %v2917 = vunpack.c.l.b16 %v2821
      %v2918 = vunpack.c.l.b16 %v2822
      %v2919 = vunpack.c.l.b16 %v2823
      %v2920 = vunpack.c.l.b16 %v2824
      %v2921 = vunpack.c.l.b16 %v2825
      %v2922 = vunpack.c.l.b16 %v2826
      %v2923 = vunpack.c.l.b16 %v2827
      %v2924 = vunpack.c.l.b16 %v2828
      %v2925 = vunpack.c.l.b16 %v2829
      %v2926 = vunpack.c.l.b16 %v2830
      %v2927 = vunpack.c.l.b16 %v2831
      %v2928 = vunpack.c.l.b16 %v2832
      %v2929 = vunpack.c.l.b16 %v2833
      %v2930 = vunpack.c.l.b16 %v2834
      %v2931 = vunpack.c.l.b16 %v2835
      %v2932 = vunpack.c.l.b16 %v2836
      %v2933 = vunpack.c.l.b16 %v2837
      %v2934 = vunpack.c.l.b16 %v2838
      %v2935 = vunpack.c.l.b16 %v2839
      %v2936 = vpack.c.b16 %v2889, %v2888
      %v2937 = vpack.c.b16 %v2891, %v2890
      %v2938 = vpack.c.b16 %v2893, %v2892
      %v2939 = vpack.c.b16 %v2895, %v2894
      %v2940 = vpack.c.b16 %v2897, %v2896
      %v2941 = vpack.c.b16 %v2899, %v2898
      %v2942 = vpack.c.b16 %v2901, %v2900
      %v2943 = vpack.c.b16 %v2903, %v2902
      %v2944 = vpack.c.b16 %v2905, %v2904
      %v2945 = vpack.c.b16 %v2907, %v2906
      %v2946 = vpack.c.b16 %v2909, %v2908
      %v2947 = vpack.c.b16 %v2911, %v2910
      %v2948 = vpack.c.b16 %v2913, %v2912
      %v2949 = vpack.c.b16 %v2915, %v2914
      %v2950 = vpack.c.b16 %v2917, %v2916
      %v2951 = vpack.c.b16 %v2919, %v2918
      %v2952 = vpack.c.b16 %v2921, %v2920
      %v2953 = vpack.c.b16 %v2923, %v2922
      %v2954 = vpack.c.b16 %v2925, %v2924
      %v2955 = vpack.c.b16 %v2927, %v2926
      %v2956 = vpack.c.b16 %v2929, %v2928
      %v2957 = vpack.c.b16 %v2931, %v2930
      %v2958 = vpack.c.b16 %v2933, %v2932
      %v2959 = vpack.c.b16 %v2935, %v2934
      %2984 = vmatprep.subr.bf16.mxu0 0
      %2985 = vmatpush1.bf16.msra.mxu0 %v2943
      %2986 = vmatprep.subr.bf16.mxu0 0
      %2987 = vmatpush1.bf16.msra.mxu0 %v2942
      %2988 = vmatprep.subr.bf16.mxu0 0
      %2989 = vmatpush1.bf16.msra.mxu0 %v2941
      %2990 = vmatprep.subr.bf16.mxu0 0
      %2991 = vmatpush1.bf16.msra.mxu0 %v2940
      %2992 = vmatprep.subr.bf16.mxu0 0
      %2993 = vmatpush1.bf16.msra.mxu0 %v2939
      %2994 = vmatprep.subr.bf16.mxu0 0
      %2995 = vmatpush1.bf16.msra.mxu0 %v2938
      %2996 = vmatprep.subr.bf16.mxu0 0
      %2997 = vmatpush1.bf16.msra.mxu0 %v2937
      %2998 = vmatprep.subr.bf16.mxu0 0
      %2999 = vmatpush1.bf16.msra.mxu0 %v2936
      %3000 = vmatprep.subr.bf16.mxu0 0
      %3001 = vmatpush2.bf16.msra.mxu0 %v2951
      %3002 = vmatprep.subr.bf16.mxu0 0
      %3003 = vmatpush2.bf16.msra.mxu0 %v2950
      %3004 = vmatprep.subr.bf16.mxu0 0
      %3005 = vmatpush2.bf16.msra.mxu0 %v2949
      %3006 = vmatprep.subr.bf16.mxu0 0
      %3007 = vmatpush2.bf16.msra.mxu0 %v2948
      %3008 = vmatprep.subr.bf16.mxu0 0
      %3009 = vmatpush2.bf16.msra.mxu0 %v2947
      %3010 = vmatprep.subr.bf16.mxu0 0
      %3011 = vmatpush2.bf16.msra.mxu0 %v2946
      %3012 = vmatprep.subr.bf16.mxu0 0
      %3013 = vmatpush2.bf16.msra.mxu0 %v2945
      %3014 = vmatprep.subr.bf16.mxu0 0
      %3015 = vmatpush2.bf16.msra.mxu0 %v2944
      %3016 = vmatprep.mubr.bf16.mxu0 %v2696
      %3017 = vmatmul.mubr.bf16.gmra.mxu0 %v2632
      %v3018 = vpop.f32.mrf.mxu0
      %v3019 = vadd.f32 0.0, %v3018
      %v3020 = vpop.f32.mrf.mxu0
      %v3021 = vpop.f32.mrf.mxu0
      %v3022 = vadd.f32 0.0, %v3021
      %v3023 = vpop.f32.mrf.mxu0
      %3024 = vmatprep.mubr.bf16.mxu0 %v2697
      %3025 = vmatmul.mubr.bf16.gmra.mxu0 %v2633
      %v3026 = vpop.f32.mrf.mxu0
      %v3027 = vadd.f32 0.0, %v3026
      %v3028 = vpop.f32.mrf.mxu0
      %v3029 = vpop.f32.mrf.mxu0
      %v3030 = vadd.f32 0.0, %v3029
      %v3031 = vpop.f32.mrf.mxu0
      %3032 = vmatprep.mubr.bf16.mxu0 %v2698
      %3033 = vmatmul.mubr.bf16.gmra.mxu0 %v2634
      %v3034 = vpop.f32.mrf.mxu0
      %v3035 = vadd.f32 0.0, %v3034
      %v3036 = vpop.f32.mrf.mxu0
      %v3037 = vpop.f32.mrf.mxu0
      %v3038 = vadd.f32 0.0, %v3037
      %v3039 = vpop.f32.mrf.mxu0
      %3040 = vmatprep.mubr.bf16.mxu0 %v2699
      %3041 = vmatmul.mubr.bf16.gmra.mxu0 %v2635
      %v3042 = vpop.f32.mrf.mxu0
      %v3043 = vadd.f32 0.0, %v3042
      %v3044 = vpop.f32.mrf.mxu0
      %v3045 = vpop.f32.mrf.mxu0
      %v3046 = vadd.f32 0.0, %v3045
      %v3047 = vpop.f32.mrf.mxu0
      %3048 = vmatprep.mubr.bf16.mxu0 %v2700
      %3049 = vmatmul.mubr.bf16.gmra.mxu0 %v2636
      %v3050 = vpop.f32.mrf.mxu0
      %v3051 = vadd.f32 0.0, %v3050
      %v3052 = vpop.f32.mrf.mxu0
      %v3053 = vpop.f32.mrf.mxu0
      %v3054 = vadd.f32 0.0, %v3053
      %v3055 = vpop.f32.mrf.mxu0
      %3056 = vmatprep.mubr.bf16.mxu0 %v2701
      %3057 = vmatmul.mubr.bf16.gmra.mxu0 %v2637
      %v3058 = vpop.f32.mrf.mxu0
      %v3059 = vadd.f32 0.0, %v3058
      %v3060 = vpop.f32.mrf.mxu0
      %v3061 = vpop.f32.mrf.mxu0
      %v3062 = vadd.f32 0.0, %v3061
      %v3063 = vpop.f32.mrf.mxu0
      %3064 = vmatprep.mubr.bf16.mxu0 %v2702
      %3065 = vmatmul.mubr.bf16.gmra.mxu0 %v2638
      %v3066 = vpop.f32.mrf.mxu0
      %v3067 = vadd.f32 0.0, %v3066
      %v3068 = vpop.f32.mrf.mxu0
      %v3069 = vpop.f32.mrf.mxu0
      %v3070 = vadd.f32 0.0, %v3069
      %v3071 = vpop.f32.mrf.mxu0
      %3072 = vmatprep.mubr.bf16.mxu0 %v2703
      %3073 = vmatmul.mubr.bf16.gmra.mxu0 %v2639
      %v3074 = vpop.f32.mrf.mxu0
      %v3075 = vadd.f32 0.0, %v3074
      %v3076 = vpop.f32.mrf.mxu0
      %v3077 = vpop.f32.mrf.mxu0
      %v3078 = vadd.f32 0.0, %v3077
      %v3079 = vpop.f32.mrf.mxu0
      %3080 = vmatprep.mubr.bf16.mxu0 %v2704
      %3081 = vmatmul.mubr.bf16.gmra.mxu0 %v2640
      %v3082 = vpop.f32.mrf.mxu0
      %v3083 = vadd.f32 0.0, %v3082
      %v3084 = vpop.f32.mrf.mxu0
      %v3085 = vpop.f32.mrf.mxu0
      %v3086 = vadd.f32 0.0, %v3085
      %v3087 = vpop.f32.mrf.mxu0
      %3088 = vmatprep.mubr.bf16.mxu0 %v2705
      %3089 = vmatmul.mubr.bf16.gmra.mxu0 %v2641
      %v3090 = vpop.f32.mrf.mxu0
      %v3091 = vadd.f32 0.0, %v3090
      %v3092 = vpop.f32.mrf.mxu0
      %v3093 = vpop.f32.mrf.mxu0
      %v3094 = vadd.f32 0.0, %v3093
      %v3095 = vpop.f32.mrf.mxu0
      %3096 = vmatprep.mubr.bf16.mxu0 %v2706
      %3097 = vmatmul.mubr.bf16.gmra.mxu0 %v2642
      %v3098 = vpop.f32.mrf.mxu0
      %v3099 = vadd.f32 0.0, %v3098
      %v3100 = vpop.f32.mrf.mxu0
      %v3101 = vpop.f32.mrf.mxu0
      %v3102 = vadd.f32 0.0, %v3101
      %v3103 = vpop.f32.mrf.mxu0
      %3104 = vmatprep.mubr.bf16.mxu0 %v2707
      %3105 = vmatmul.mubr.bf16.gmra.mxu0 %v2643
      %v3106 = vpop.f32.mrf.mxu0
      %v3107 = vadd.f32 0.0, %v3106
      %v3108 = vpop.f32.mrf.mxu0
      %v3109 = vpop.f32.mrf.mxu0
      %v3110 = vadd.f32 0.0, %v3109
      %v3111 = vpop.f32.mrf.mxu0
      %3112 = vmatprep.mubr.bf16.mxu0 %v2708
      %3113 = vmatmul.mubr.bf16.gmra.mxu0 %v2644
      %v3114 = vpop.f32.mrf.mxu0
      %v3115 = vadd.f32 0.0, %v3114
      %v3116 = vpop.f32.mrf.mxu0
      %v3117 = vpop.f32.mrf.mxu0
      %v3118 = vadd.f32 0.0, %v3117
      %v3119 = vpop.f32.mrf.mxu0
      %3120 = vmatprep.mubr.bf16.mxu0 %v2709
      %3121 = vmatmul.mubr.bf16.gmra.mxu0 %v2645
      %v3122 = vpop.f32.mrf.mxu0
      %v3123 = vadd.f32 0.0, %v3122
      %v3124 = vpop.f32.mrf.mxu0
      %v3125 = vpop.f32.mrf.mxu0
      %v3126 = vadd.f32 0.0, %v3125
      %v3127 = vpop.f32.mrf.mxu0
      %3128 = vmatprep.mubr.bf16.mxu0 %v2710
      %3129 = vmatmul.mubr.bf16.gmra.mxu0 %v2646
      %v3130 = vpop.f32.mrf.mxu0
      %v3131 = vadd.f32 0.0, %v3130
      %v3132 = vpop.f32.mrf.mxu0
      %v3133 = vpop.f32.mrf.mxu0
      %v3134 = vadd.f32 0.0, %v3133
      %v3135 = vpop.f32.mrf.mxu0
      %3136 = vmatprep.mubr.bf16.mxu0 %v2711
      %3137 = vmatmul.mubr.bf16.gmra.mxu0 %v2647
      %v3138 = vpop.f32.mrf.mxu0
      %v3139 = vadd.f32 0.0, %v3138
      %v3140 = vpop.f32.mrf.mxu0
      %v3141 = vpop.f32.mrf.mxu0
      %v3142 = vadd.f32 0.0, %v3141
      %v3143 = vpop.f32.mrf.mxu0
      %3144 = vdwg.mxu0
      %3145 = vmatprep.subr.bf16.mxu0 0
      %3146 = vmatpush1.bf16.msra.mxu0 %v2959
      %3147 = vmatprep.subr.bf16.mxu0 0
      %3148 = vmatpush1.bf16.msra.mxu0 %v2958
      %3149 = vmatprep.subr.bf16.mxu0 0
      %3150 = vmatpush1.bf16.msra.mxu0 %v2957
      %3151 = vmatprep.subr.bf16.mxu0 0
      %3152 = vmatpush1.bf16.msra.mxu0 %v2956
      %3153 = vmatprep.subr.bf16.mxu0 0
      %3154 = vmatpush1.bf16.msra.mxu0 %v2955
      %3155 = vmatprep.subr.bf16.mxu0 0
      %3156 = vmatpush1.bf16.msra.mxu0 %v2954
      %3157 = vmatprep.subr.bf16.mxu0 0
      %3158 = vmatpush1.bf16.msra.mxu0 %v2953
      %3159 = vmatprep.subr.bf16.mxu0 0
      %3160 = vmatpush1.bf16.msra.mxu0 %v2952
      %3161 = vmatprep.subr.bf16.mxu0 0
      %3162 = vmatpush2.bf16.msra.mxu0 0
      %3163 = vmatprep.subr.bf16.mxu0 0
      %3164 = vmatpush2.bf16.msra.mxu0 0
      %3165 = vmatprep.subr.bf16.mxu0 0
      %3166 = vmatpush2.bf16.msra.mxu0 0
      %3167 = vmatprep.subr.bf16.mxu0 0
      %3168 = vmatpush2.bf16.msra.mxu0 0
      %3169 = vmatprep.subr.bf16.mxu0 0
      %3170 = vmatpush2.bf16.msra.mxu0 0
      %3171 = vmatprep.subr.bf16.mxu0 0
      %3172 = vmatpush2.bf16.msra.mxu0 0
      %3173 = vmatprep.subr.bf16.mxu0 0
      %3174 = vmatpush2.bf16.msra.mxu0 0
      %3175 = vmatprep.subr.bf16.mxu0 0
      %3176 = vmatpush2.bf16.msra.mxu0 0
      %3177 = vmatprep.mubr.bf16.mxu0 0
      %3178 = vmatmul.mubr.bf16.gmra.mxu0 %v2760
      %v3179 = vpop.f32.mrf.mxu0
      %v3180 = vadd.f32 %v3019, %v3179
      %v3181 = vpop.f32.mrf.mxu0
      %v3182 = vpop.f32.mrf.mxu0
      %v3183 = vadd.f32 %v3022, %v3182
      %v3184 = vpop.f32.mrf.mxu0
      %3185 = vmatprep.mubr.bf16.mxu0 0
      %3186 = vmatmul.mubr.bf16.gmra.mxu0 %v2761
      %v3187 = vpop.f32.mrf.mxu0
      %v3188 = vadd.f32 %v3027, %v3187
      %v3189 = vpop.f32.mrf.mxu0
      %v3190 = vpop.f32.mrf.mxu0
      %v3191 = vadd.f32 %v3030, %v3190
      %v3192 = vpop.f32.mrf.mxu0
      %3193 = vmatprep.mubr.bf16.mxu0 0
      %3194 = vmatmul.mubr.bf16.gmra.mxu0 %v2762
      %v3195 = vpop.f32.mrf.mxu0
      %v3196 = vadd.f32 %v3035, %v3195
      %v3197 = vpop.f32.mrf.mxu0
      %v3198 = vpop.f32.mrf.mxu0
      %v3199 = vadd.f32 %v3038, %v3198
      %v3200 = vpop.f32.mrf.mxu0
      %3201 = vmatprep.mubr.bf16.mxu0 0
      %3202 = vmatmul.mubr.bf16.gmra.mxu0 %v2763
      %v3203 = vpop.f32.mrf.mxu0
      %v3204 = vadd.f32 %v3043, %v3203
      %v3205 = vpop.f32.mrf.mxu0
      %v3206 = vpop.f32.mrf.mxu0
      %v3207 = vadd.f32 %v3046, %v3206
      %v3208 = vpop.f32.mrf.mxu0
      %3209 = vmatprep.mubr.bf16.mxu0 0
      %3210 = vmatmul.mubr.bf16.gmra.mxu0 %v2764
      %v3211 = vpop.f32.mrf.mxu0
      %v3212 = vadd.f32 %v3051, %v3211
      %v3213 = vpop.f32.mrf.mxu0
      %v3214 = vpop.f32.mrf.mxu0
      %v3215 = vadd.f32 %v3054, %v3214
      %v3216 = vpop.f32.mrf.mxu0
      %3217 = vmatprep.mubr.bf16.mxu0 0
      %3218 = vmatmul.mubr.bf16.gmra.mxu0 %v2765
      %v3219 = vpop.f32.mrf.mxu0
      %v3220 = vadd.f32 %v3059, %v3219
      %v3221 = vpop.f32.mrf.mxu0
      %v3222 = vpop.f32.mrf.mxu0
      %v3223 = vadd.f32 %v3062, %v3222
      %v3224 = vpop.f32.mrf.mxu0
      %3225 = vmatprep.mubr.bf16.mxu0 0
      %3226 = vmatmul.mubr.bf16.gmra.mxu0 %v2766
      %v3227 = vpop.f32.mrf.mxu0
      %v3228 = vadd.f32 %v3067, %v3227
      %v3229 = vpop.f32.mrf.mxu0
      %v3230 = vpop.f32.mrf.mxu0
      %v3231 = vadd.f32 %v3070, %v3230
      %v3232 = vpop.f32.mrf.mxu0
      %3233 = vmatprep.mubr.bf16.mxu0 0
      %3234 = vmatmul.mubr.bf16.gmra.mxu0 %v2767
      %v3235 = vpop.f32.mrf.mxu0
      %v3236 = vadd.f32 %v3075, %v3235
      %v3237 = vpop.f32.mrf.mxu0
      %v3238 = vpop.f32.mrf.mxu0
      %v3239 = vadd.f32 %v3078, %v3238
      %v3240 = vpop.f32.mrf.mxu0
      %3241 = vmatprep.mubr.bf16.mxu0 0
      %3242 = vmatmul.mubr.bf16.gmra.mxu0 %v2768
      %v3243 = vpop.f32.mrf.mxu0
      %v3244 = vadd.f32 %v3083, %v3243
      %v3245 = vpop.f32.mrf.mxu0
      %v3246 = vpop.f32.mrf.mxu0
      %v3247 = vadd.f32 %v3086, %v3246
      %v3248 = vpop.f32.mrf.mxu0
      %3249 = vmatprep.mubr.bf16.mxu0 0
      %3250 = vmatmul.mubr.bf16.gmra.mxu0 %v2769
      %v3251 = vpop.f32.mrf.mxu0
      %v3252 = vadd.f32 %v3091, %v3251
      %v3253 = vpop.f32.mrf.mxu0
      %v3254 = vpop.f32.mrf.mxu0
      %v3255 = vadd.f32 %v3094, %v3254
      %v3256 = vpop.f32.mrf.mxu0
      %3257 = vmatprep.mubr.bf16.mxu0 0
      %3258 = vmatmul.mubr.bf16.gmra.mxu0 %v2770
      %v3259 = vpop.f32.mrf.mxu0
      %v3260 = vadd.f32 %v3099, %v3259
      %v3261 = vpop.f32.mrf.mxu0
      %v3262 = vpop.f32.mrf.mxu0
      %v3263 = vadd.f32 %v3102, %v3262
      %v3264 = vpop.f32.mrf.mxu0
      %3265 = vmatprep.mubr.bf16.mxu0 0
      %3266 = vmatmul.mubr.bf16.gmra.mxu0 %v2771
      %v3267 = vpop.f32.mrf.mxu0
      %v3268 = vadd.f32 %v3107, %v3267
      %v3269 = vpop.f32.mrf.mxu0
      %v3270 = vpop.f32.mrf.mxu0
      %v3271 = vadd.f32 %v3110, %v3270
      %v3272 = vpop.f32.mrf.mxu0
      %3273 = vmatprep.mubr.bf16.mxu0 0
      %3274 = vmatmul.mubr.bf16.gmra.mxu0 %v2772
      %v3275 = vpop.f32.mrf.mxu0
      %v3276 = vadd.f32 %v3115, %v3275
      %v3277 = vpop.f32.mrf.mxu0
      %v3278 = vpop.f32.mrf.mxu0
      %v3279 = vadd.f32 %v3118, %v3278
      %v3280 = vpop.f32.mrf.mxu0
      %3281 = vmatprep.mubr.bf16.mxu0 0
      %3282 = vmatmul.mubr.bf16.gmra.mxu0 %v2773
      %v3283 = vpop.f32.mrf.mxu0
      %v3284 = vadd.f32 %v3123, %v3283
      %v3285 = vpop.f32.mrf.mxu0
      %v3286 = vpop.f32.mrf.mxu0
      %v3287 = vadd.f32 %v3126, %v3286
      %v3288 = vpop.f32.mrf.mxu0
      %3289 = vmatprep.mubr.bf16.mxu0 0
      %3290 = vmatmul.mubr.bf16.gmra.mxu0 %v2774
      %v3291 = vpop.f32.mrf.mxu0
      %v3292 = vadd.f32 %v3131, %v3291
      %v3293 = vpop.f32.mrf.mxu0
      %v3294 = vpop.f32.mrf.mxu0
      %v3295 = vadd.f32 %v3134, %v3294
      %v3296 = vpop.f32.mrf.mxu0
      %3297 = vmatprep.mubr.bf16.mxu0 0
      %3298 = vmatmul.mubr.bf16.gmra.mxu0 %v2775
      %v3299 = vpop.f32.mrf.mxu0
      %v3300 = vadd.f32 %v3139, %v3299
      %v3301 = vpop.f32.mrf.mxu0
      %v3302 = vpop.f32.mrf.mxu0
      %v3303 = vadd.f32 %v3142, %v3302
      %v3304 = vpop.f32.mrf.mxu0
      %3305 = vdwg.mxu0
      %v3354 = vunpack.c.l.b16 %v1928
      %v3355 = vunpack.c.l.b16 %v1929
      %v3356 = vunpack.c.l.b16 %v1930
      %v3357 = vunpack.c.l.b16 %v1931
      %v3358 = vunpack.c.l.b16 %v1932
      %v3359 = vunpack.c.l.b16 %v1933
      %v3360 = vunpack.c.l.b16 %v1934
      %v3361 = vunpack.c.l.b16 %v1935
      %v3362 = vunpack.c.l.b16 %v1936
      %v3363 = vunpack.c.l.b16 %v1937
      %v3364 = vunpack.c.l.b16 %v1938
      %v3365 = vunpack.c.l.b16 %v1939
      %v3366 = vunpack.c.l.b16 %v1940
      %v3367 = vunpack.c.l.b16 %v1941
      %v3368 = vunpack.c.l.b16 %v1942
      %v3369 = vunpack.c.l.b16 %v1943
      %v3370 = vunpack.c.l.b16 %v1944
      %v3371 = vunpack.c.l.b16 %v1945
      %v3372 = vunpack.c.l.b16 %v1946
      %v3373 = vunpack.c.l.b16 %v1947
      %v3374 = vunpack.c.l.b16 %v1948
      %v3375 = vunpack.c.l.b16 %v1949
      %v3376 = vunpack.c.l.b16 %v1950
      %v3377 = vunpack.c.l.b16 %v1951
      %v3378 = vunpack.c.l.b16 %v1952
      %v3379 = vunpack.c.l.b16 %v1953
      %v3380 = vunpack.c.l.b16 %v1954
      %v3381 = vunpack.c.l.b16 %v1955
      %v3382 = vunpack.c.l.b16 %v1956
      %v3383 = vunpack.c.l.b16 %v1957
      %v3384 = vunpack.c.l.b16 %v1958
      %v3385 = vunpack.c.l.b16 %v1959
      %v3386 = vunpack.c.l.b16 %v1960
      %v3387 = vunpack.c.l.b16 %v1961
      %v3388 = vunpack.c.l.b16 %v1962
      %v3389 = vunpack.c.l.b16 %v1963
      %v3390 = vunpack.c.l.b16 %v1964
      %v3391 = vunpack.c.l.b16 %v1965
      %v3392 = vunpack.c.l.b16 %v1966
      %v3393 = vunpack.c.l.b16 %v1967
      %v3394 = vunpack.c.l.b16 %v1968
      %v3395 = vunpack.c.l.b16 %v1969
      %v3396 = vunpack.c.l.b16 %v1970
      %v3397 = vunpack.c.l.b16 %v1971
      %v3398 = vunpack.c.l.b16 %v1972
      %v3399 = vunpack.c.l.b16 %v1973
      %v3400 = vunpack.c.l.b16 %v1974
      %v3401 = vunpack.c.l.b16 %v1975
      %v3402 = vpack.c.b16 %v3355, %v3354
      %v3403 = vpack.c.b16 %v3357, %v3356
      %v3404 = vpack.c.b16 %v3359, %v3358
      %v3405 = vpack.c.b16 %v3361, %v3360
      %v3406 = vpack.c.b16 %v3363, %v3362
      %v3407 = vpack.c.b16 %v3365, %v3364
      %v3408 = vpack.c.b16 %v3367, %v3366
      %v3409 = vpack.c.b16 %v3369, %v3368
      %v3410 = vpack.c.b16 %v3371, %v3370
      %v3411 = vpack.c.b16 %v3373, %v3372
      %v3412 = vpack.c.b16 %v3375, %v3374
      %v3413 = vpack.c.b16 %v3377, %v3376
      %v3414 = vpack.c.b16 %v3379, %v3378
      %v3415 = vpack.c.b16 %v3381, %v3380
      %v3416 = vpack.c.b16 %v3383, %v3382
      %v3417 = vpack.c.b16 %v3385, %v3384
      %v3418 = vpack.c.b16 %v3387, %v3386
      %v3419 = vpack.c.b16 %v3389, %v3388
      %v3420 = vpack.c.b16 %v3391, %v3390
      %v3421 = vpack.c.b16 %v3393, %v3392
      %v3422 = vpack.c.b16 %v3395, %v3394
      %v3423 = vpack.c.b16 %v3397, %v3396
      %v3424 = vpack.c.b16 %v3399, %v3398
      %v3425 = vpack.c.b16 %v3401, %v3400
      %3450 = vmatprep.subr.bf16.mxu0 0
      %3451 = vmatpush1.bf16.msra.mxu0 %v3409
      %3452 = vmatprep.subr.bf16.mxu0 0
      %3453 = vmatpush1.bf16.msra.mxu0 %v3408
      %3454 = vmatprep.subr.bf16.mxu0 0
      %3455 = vmatpush1.bf16.msra.mxu0 %v3407
      %3456 = vmatprep.subr.bf16.mxu0 0
      %3457 = vmatpush1.bf16.msra.mxu0 %v3406
      %3458 = vmatprep.subr.bf16.mxu0 0
      %3459 = vmatpush1.bf16.msra.mxu0 %v3405
      %3460 = vmatprep.subr.bf16.mxu0 0
      %3461 = vmatpush1.bf16.msra.mxu0 %v3404
      %3462 = vmatprep.subr.bf16.mxu0 0
      %3463 = vmatpush1.bf16.msra.mxu0 %v3403
      %3464 = vmatprep.subr.bf16.mxu0 0
      %3465 = vmatpush1.bf16.msra.mxu0 %v3402
      %3466 = vmatprep.subr.bf16.mxu0 0
      %3467 = vmatpush2.bf16.msra.mxu0 %v3417
      %3468 = vmatprep.subr.bf16.mxu0 0
      %3469 = vmatpush2.bf16.msra.mxu0 %v3416
      %3470 = vmatprep.subr.bf16.mxu0 0
      %3471 = vmatpush2.bf16.msra.mxu0 %v3415
      %3472 = vmatprep.subr.bf16.mxu0 0
      %3473 = vmatpush2.bf16.msra.mxu0 %v3414
      %3474 = vmatprep.subr.bf16.mxu0 0
      %3475 = vmatpush2.bf16.msra.mxu0 %v3413
      %3476 = vmatprep.subr.bf16.mxu0 0
      %3477 = vmatpush2.bf16.msra.mxu0 %v3412
      %3478 = vmatprep.subr.bf16.mxu0 0
      %3479 = vmatpush2.bf16.msra.mxu0 %v3411
      %3480 = vmatprep.subr.bf16.mxu0 0
      %3481 = vmatpush2.bf16.msra.mxu0 %v3410
      %3482 = vmatprep.mubr.bf16.mxu0 %v1832
      %3483 = vmatmul.mubr.bf16.gmra.mxu0 %v1768
      %v3484 = vpop.f32.mrf.mxu0
      %v3485 = vadd.f32 %v3180, %v3484
      %v3486 = vpop.f32.mrf.mxu0
      %v3487 = vpop.f32.mrf.mxu0
      %v3488 = vadd.f32 %v3183, %v3487
      %v3489 = vpop.f32.mrf.mxu0
      %3490 = vmatprep.mubr.bf16.mxu0 %v1833
      %3491 = vmatmul.mubr.bf16.gmra.mxu0 %v1769
      %v3492 = vpop.f32.mrf.mxu0
      %v3493 = vadd.f32 %v3188, %v3492
      %v3494 = vpop.f32.mrf.mxu0
      %v3495 = vpop.f32.mrf.mxu0
      %v3496 = vadd.f32 %v3191, %v3495
      %v3497 = vpop.f32.mrf.mxu0
      %3498 = vmatprep.mubr.bf16.mxu0 %v1834
      %3499 = vmatmul.mubr.bf16.gmra.mxu0 %v1770
      %v3500 = vpop.f32.mrf.mxu0
      %v3501 = vadd.f32 %v3196, %v3500
      %v3502 = vpop.f32.mrf.mxu0
      %v3503 = vpop.f32.mrf.mxu0
      %v3504 = vadd.f32 %v3199, %v3503
      %v3505 = vpop.f32.mrf.mxu0
      %3506 = vmatprep.mubr.bf16.mxu0 %v1835
      %3507 = vmatmul.mubr.bf16.gmra.mxu0 %v1771
      %v3508 = vpop.f32.mrf.mxu0
      %v3509 = vadd.f32 %v3204, %v3508
      %v3510 = vpop.f32.mrf.mxu0
      %v3511 = vpop.f32.mrf.mxu0
      %v3512 = vadd.f32 %v3207, %v3511
      %v3513 = vpop.f32.mrf.mxu0
      %3514 = vmatprep.mubr.bf16.mxu0 %v1836
      %3515 = vmatmul.mubr.bf16.gmra.mxu0 %v1772
      %v3516 = vpop.f32.mrf.mxu0
      %v3517 = vadd.f32 %v3212, %v3516
      %v3518 = vpop.f32.mrf.mxu0
      %v3519 = vpop.f32.mrf.mxu0
      %v3520 = vadd.f32 %v3215, %v3519
      %v3521 = vpop.f32.mrf.mxu0
      %3522 = vmatprep.mubr.bf16.mxu0 %v1837
      %3523 = vmatmul.mubr.bf16.gmra.mxu0 %v1773
      %v3524 = vpop.f32.mrf.mxu0
      %v3525 = vadd.f32 %v3220, %v3524
      %v3526 = vpop.f32.mrf.mxu0
      %v3527 = vpop.f32.mrf.mxu0
      %v3528 = vadd.f32 %v3223, %v3527
      %v3529 = vpop.f32.mrf.mxu0
      %3530 = vmatprep.mubr.bf16.mxu0 %v1838
      %3531 = vmatmul.mubr.bf16.gmra.mxu0 %v1774
      %v3532 = vpop.f32.mrf.mxu0
      %v3533 = vadd.f32 %v3228, %v3532
      %v3534 = vpop.f32.mrf.mxu0
      %v3535 = vpop.f32.mrf.mxu0
      %v3536 = vadd.f32 %v3231, %v3535
      %v3537 = vpop.f32.mrf.mxu0
      %3538 = vmatprep.mubr.bf16.mxu0 %v1839
      %3539 = vmatmul.mubr.bf16.gmra.mxu0 %v1775
      %v3540 = vpop.f32.mrf.mxu0
      %v3541 = vadd.f32 %v3236, %v3540
      %v3542 = vpop.f32.mrf.mxu0
      %v3543 = vpop.f32.mrf.mxu0
      %v3544 = vadd.f32 %v3239, %v3543
      %v3545 = vpop.f32.mrf.mxu0
      %3546 = vmatprep.mubr.bf16.mxu0 %v1840
      %3547 = vmatmul.mubr.bf16.gmra.mxu0 %v1776
      %v3548 = vpop.f32.mrf.mxu0
      %v3549 = vadd.f32 %v3244, %v3548
      %v3550 = vpop.f32.mrf.mxu0
      %v3551 = vpop.f32.mrf.mxu0
      %v3552 = vadd.f32 %v3247, %v3551
      %v3553 = vpop.f32.mrf.mxu0
      %3554 = vmatprep.mubr.bf16.mxu0 %v1841
      %3555 = vmatmul.mubr.bf16.gmra.mxu0 %v1777
      %v3556 = vpop.f32.mrf.mxu0
      %v3557 = vadd.f32 %v3252, %v3556
      %v3558 = vpop.f32.mrf.mxu0
      %v3559 = vpop.f32.mrf.mxu0
      %v3560 = vadd.f32 %v3255, %v3559
      %v3561 = vpop.f32.mrf.mxu0
      %3562 = vmatprep.mubr.bf16.mxu0 %v1842
      %3563 = vmatmul.mubr.bf16.gmra.mxu0 %v1778
      %v3564 = vpop.f32.mrf.mxu0
      %v3565 = vadd.f32 %v3260, %v3564
      %v3566 = vpop.f32.mrf.mxu0
      %v3567 = vpop.f32.mrf.mxu0
      %v3568 = vadd.f32 %v3263, %v3567
      %v3569 = vpop.f32.mrf.mxu0
      %3570 = vmatprep.mubr.bf16.mxu0 %v1843
      %3571 = vmatmul.mubr.bf16.gmra.mxu0 %v1779
      %v3572 = vpop.f32.mrf.mxu0
      %v3573 = vadd.f32 %v3268, %v3572
      %v3574 = vpop.f32.mrf.mxu0
      %v3575 = vpop.f32.mrf.mxu0
      %v3576 = vadd.f32 %v3271, %v3575
      %v3577 = vpop.f32.mrf.mxu0
      %3578 = vmatprep.mubr.bf16.mxu0 %v1844
      %3579 = vmatmul.mubr.bf16.gmra.mxu0 %v1780
      %v3580 = vpop.f32.mrf.mxu0
      %v3581 = vadd.f32 %v3276, %v3580
      %v3582 = vpop.f32.mrf.mxu0
      %v3583 = vpop.f32.mrf.mxu0
      %v3584 = vadd.f32 %v3279, %v3583
      %v3585 = vpop.f32.mrf.mxu0
      %3586 = vmatprep.mubr.bf16.mxu0 %v1845
      %3587 = vmatmul.mubr.bf16.gmra.mxu0 %v1781
      %v3588 = vpop.f32.mrf.mxu0
      %v3589 = vadd.f32 %v3284, %v3588
      %v3590 = vpop.f32.mrf.mxu0
      %v3591 = vpop.f32.mrf.mxu0
      %v3592 = vadd.f32 %v3287, %v3591
      %v3593 = vpop.f32.mrf.mxu0
      %3594 = vmatprep.mubr.bf16.mxu0 %v1846
      %3595 = vmatmul.mubr.bf16.gmra.mxu0 %v1782
      %v3596 = vpop.f32.mrf.mxu0
      %v3597 = vadd.f32 %v3292, %v3596
      %v3598 = vpop.f32.mrf.mxu0
      %v3599 = vpop.f32.mrf.mxu0
      %v3600 = vadd.f32 %v3295, %v3599
      %v3601 = vpop.f32.mrf.mxu0
      %3602 = vmatprep.mubr.bf16.mxu0 %v1847
      %3603 = vmatmul.mubr.bf16.gmra.mxu0 %v1783
      %v3604 = vpop.f32.mrf.mxu0
      %v3605 = vadd.f32 %v3300, %v3604
      %v3606 = vpop.f32.mrf.mxu0
      %v3607 = vpop.f32.mrf.mxu0
      %v3608 = vadd.f32 %v3303, %v3607
      %v3609 = vpop.f32.mrf.mxu0
      %3610 = vdwg.mxu0
      %3611 = vmatprep.subr.bf16.mxu0 0
      %3612 = vmatpush1.bf16.msra.mxu0 %v3425
      %3613 = vmatprep.subr.bf16.mxu0 0
      %3614 = vmatpush1.bf16.msra.mxu0 %v3424
      %3615 = vmatprep.subr.bf16.mxu0 0
      %3616 = vmatpush1.bf16.msra.mxu0 %v3423
      %3617 = vmatprep.subr.bf16.mxu0 0
      %3618 = vmatpush1.bf16.msra.mxu0 %v3422
      %3619 = vmatprep.subr.bf16.mxu0 0
      %3620 = vmatpush1.bf16.msra.mxu0 %v3421
      %3621 = vmatprep.subr.bf16.mxu0 0
      %3622 = vmatpush1.bf16.msra.mxu0 %v3420
      %3623 = vmatprep.subr.bf16.mxu0 0
      %3624 = vmatpush1.bf16.msra.mxu0 %v3419
      %3625 = vmatprep.subr.bf16.mxu0 0
      %3626 = vmatpush1.bf16.msra.mxu0 %v3418
      %3627 = vmatprep.subr.bf16.mxu0 0
      %3628 = vmatpush2.bf16.msra.mxu0 0
      %3629 = vmatprep.subr.bf16.mxu0 0
      %3630 = vmatpush2.bf16.msra.mxu0 0
      %3631 = vmatprep.subr.bf16.mxu0 0
      %3632 = vmatpush2.bf16.msra.mxu0 0
      %3633 = vmatprep.subr.bf16.mxu0 0
      %3634 = vmatpush2.bf16.msra.mxu0 0
      %3635 = vmatprep.subr.bf16.mxu0 0
      %3636 = vmatpush2.bf16.msra.mxu0 0
      %3637 = vmatprep.subr.bf16.mxu0 0
      %3638 = vmatpush2.bf16.msra.mxu0 0
      %3639 = vmatprep.subr.bf16.mxu0 0
      %3640 = vmatpush2.bf16.msra.mxu0 0
      %3641 = vmatprep.subr.bf16.mxu0 0
      %3642 = vmatpush2.bf16.msra.mxu0 0
      %3643 = vmatprep.mubr.bf16.mxu0 0
      %3644 = vmatmul.mubr.bf16.gmra.mxu0 %v1896
      %v3645 = vpop.f32.mrf.mxu0
      %v3646 = vadd.f32 %v3485, %v3645
      %v3647 = vpop.f32.mrf.mxu0
      %v3648 = vpop.f32.mrf.mxu0
      %v3649 = vadd.f32 %v3488, %v3648
      %v3650 = vpop.f32.mrf.mxu0
      %3651 = vmatprep.mubr.bf16.mxu0 0
      %3652 = vmatmul.mubr.bf16.gmra.mxu0 %v1897
      %v3653 = vpop.f32.mrf.mxu0
      %v3654 = vadd.f32 %v3493, %v3653
      %v3655 = vpop.f32.mrf.mxu0
      %v3656 = vpop.f32.mrf.mxu0
      %v3657 = vadd.f32 %v3496, %v3656
      %v3658 = vpop.f32.mrf.mxu0
      %3659 = vmatprep.mubr.bf16.mxu0 0
      %3660 = vmatmul.mubr.bf16.gmra.mxu0 %v1898
      %v3661 = vpop.f32.mrf.mxu0
      %v3662 = vadd.f32 %v3501, %v3661
      %v3663 = vpop.f32.mrf.mxu0
      %v3664 = vpop.f32.mrf.mxu0
      %v3665 = vadd.f32 %v3504, %v3664
      %v3666 = vpop.f32.mrf.mxu0
      %3667 = vmatprep.mubr.bf16.mxu0 0
      %3668 = vmatmul.mubr.bf16.gmra.mxu0 %v1899
      %v3669 = vpop.f32.mrf.mxu0
      %v3670 = vadd.f32 %v3509, %v3669
      %v3671 = vpop.f32.mrf.mxu0
      %v3672 = vpop.f32.mrf.mxu0
      %v3673 = vadd.f32 %v3512, %v3672
      %v3674 = vpop.f32.mrf.mxu0
      %3675 = vmatprep.mubr.bf16.mxu0 0
      %3676 = vmatmul.mubr.bf16.gmra.mxu0 %v1900
      %v3677 = vpop.f32.mrf.mxu0
      %v3678 = vadd.f32 %v3517, %v3677
      %v3679 = vpop.f32.mrf.mxu0
      %v3680 = vpop.f32.mrf.mxu0
      %v3681 = vadd.f32 %v3520, %v3680
      %v3682 = vpop.f32.mrf.mxu0
      %3683 = vmatprep.mubr.bf16.mxu0 0
      %3684 = vmatmul.mubr.bf16.gmra.mxu0 %v1901
      %v3685 = vpop.f32.mrf.mxu0
      %v3686 = vadd.f32 %v3525, %v3685
      %v3687 = vpop.f32.mrf.mxu0
      %v3688 = vpop.f32.mrf.mxu0
      %v3689 = vadd.f32 %v3528, %v3688
      %v3690 = vpop.f32.mrf.mxu0
      %3691 = vmatprep.mubr.bf16.mxu0 0
      %3692 = vmatmul.mubr.bf16.gmra.mxu0 %v1902
      %v3693 = vpop.f32.mrf.mxu0
      %v3694 = vadd.f32 %v3533, %v3693
      %v3695 = vpop.f32.mrf.mxu0
      %v3696 = vpop.f32.mrf.mxu0
      %v3697 = vadd.f32 %v3536, %v3696
      %v3698 = vpop.f32.mrf.mxu0
      %3699 = vmatprep.mubr.bf16.mxu0 0
      %3700 = vmatmul.mubr.bf16.gmra.mxu0 %v1903
      %v3701 = vpop.f32.mrf.mxu0
      %v3702 = vadd.f32 %v3541, %v3701
      %v3703 = vpop.f32.mrf.mxu0
      %v3704 = vpop.f32.mrf.mxu0
      %v3705 = vadd.f32 %v3544, %v3704
      %v3706 = vpop.f32.mrf.mxu0
      %3707 = vmatprep.mubr.bf16.mxu0 0
      %3708 = vmatmul.mubr.bf16.gmra.mxu0 %v1904
      %v3709 = vpop.f32.mrf.mxu0
      %v3710 = vadd.f32 %v3549, %v3709
      %v3711 = vpop.f32.mrf.mxu0
      %v3712 = vpop.f32.mrf.mxu0
      %v3713 = vadd.f32 %v3552, %v3712
      %v3714 = vpop.f32.mrf.mxu0
      %3715 = vmatprep.mubr.bf16.mxu0 0
      %3716 = vmatmul.mubr.bf16.gmra.mxu0 %v1905
      %v3717 = vpop.f32.mrf.mxu0
      %v3718 = vadd.f32 %v3557, %v3717
      %v3719 = vpop.f32.mrf.mxu0
      %v3720 = vpop.f32.mrf.mxu0
      %v3721 = vadd.f32 %v3560, %v3720
      %v3722 = vpop.f32.mrf.mxu0
      %3723 = vmatprep.mubr.bf16.mxu0 0
      %3724 = vmatmul.mubr.bf16.gmra.mxu0 %v1906
      %v3725 = vpop.f32.mrf.mxu0
      %v3726 = vadd.f32 %v3565, %v3725
      %v3727 = vpop.f32.mrf.mxu0
      %v3728 = vpop.f32.mrf.mxu0
      %v3729 = vadd.f32 %v3568, %v3728
      %v3730 = vpop.f32.mrf.mxu0
      %3731 = vmatprep.mubr.bf16.mxu0 0
      %3732 = vmatmul.mubr.bf16.gmra.mxu0 %v1907
      %v3733 = vpop.f32.mrf.mxu0
      %v3734 = vadd.f32 %v3573, %v3733
      %v3735 = vpop.f32.mrf.mxu0
      %v3736 = vpop.f32.mrf.mxu0
      %v3737 = vadd.f32 %v3576, %v3736
      %v3738 = vpop.f32.mrf.mxu0
      %3739 = vmatprep.mubr.bf16.mxu0 0
      %3740 = vmatmul.mubr.bf16.gmra.mxu0 %v1908
      %v3741 = vpop.f32.mrf.mxu0
      %v3742 = vadd.f32 %v3581, %v3741
      %v3743 = vpop.f32.mrf.mxu0
      %v3744 = vpop.f32.mrf.mxu0
      %v3745 = vadd.f32 %v3584, %v3744
      %v3746 = vpop.f32.mrf.mxu0
      %3747 = vmatprep.mubr.bf16.mxu0 0
      %3748 = vmatmul.mubr.bf16.gmra.mxu0 %v1909
      %v3749 = vpop.f32.mrf.mxu0
      %v3750 = vadd.f32 %v3589, %v3749
      %v3751 = vpop.f32.mrf.mxu0
      %v3752 = vpop.f32.mrf.mxu0
      %v3753 = vadd.f32 %v3592, %v3752
      %v3754 = vpop.f32.mrf.mxu0
      %3755 = vmatprep.mubr.bf16.mxu0 0
      %3756 = vmatmul.mubr.bf16.gmra.mxu0 %v1910
      %v3757 = vpop.f32.mrf.mxu0
      %v3758 = vadd.f32 %v3597, %v3757
      %v3759 = vpop.f32.mrf.mxu0
      %v3760 = vpop.f32.mrf.mxu0
      %v3761 = vadd.f32 %v3600, %v3760
      %v3762 = vpop.f32.mrf.mxu0
      %3763 = vmatprep.mubr.bf16.mxu0 0
      %3764 = vmatmul.mubr.bf16.gmra.mxu0 %v1911
      %v3765 = vpop.f32.mrf.mxu0
      %v3766 = vadd.f32 %v3605, %v3765
      %v3767 = vpop.f32.mrf.mxu0
      %v3768 = vpop.f32.mrf.mxu0
      %v3769 = vadd.f32 %v3608, %v3768
      %v3770 = vpop.f32.mrf.mxu0
      %3771 = vdwg.mxu0
      %s3772 = scalar_lea.vmem [#allocation2], 24
      %v3773 = vld [vmem:[%s3772] sm:$0xf]
      %v3774 = vld [vmem:[%s3772 + $0x4] sm:$0xf]
      %v3775 = vld [vmem:[%s3772 + $0xc] sm:$0xf]
      %v3776 = vld [vmem:[%s3772 + $0x10] sm:$0xf]
      %v3777 = vld [vmem:[%s3772 + $0x18] sm:$0xf]
      %v3778 = vld [vmem:[%s3772 + $0x1c] sm:$0xf]
      %v3779 = vld [vmem:[%s3772 + $0x24] sm:$0xf]
      %v3780 = vld [vmem:[%s3772 + $0x28] sm:$0xf]
      %v3781 = vld [vmem:[%s3772 + $0x30] sm:$0xf]
      %v3782 = vld [vmem:[%s3772 + $0x34] sm:$0xf]
      %v3783 = vld [vmem:[%s3772 + $0x3c] sm:$0xf]
      %v3784 = vld [vmem:[%s3772 + $0x40] sm:$0xf]
      %v3785 = vld [vmem:[%s3772 + $0x48] sm:$0xf]
      %v3786 = vld [vmem:[%s3772 + $0x4c] sm:$0xf]
      %v3787 = vld [vmem:[%s3772 + $0x54] sm:$0xf]
      %v3788 = vld [vmem:[%s3772 + $0x58] sm:$0xf]
      %v3789 = vld [vmem:[%s3772 + $0x60] sm:$0xf]
      %v3790 = vld [vmem:[%s3772 + $0x64] sm:$0xf]
      %v3791 = vld [vmem:[%s3772 + $0x6c] sm:$0xf]
      %v3792 = vld [vmem:[%s3772 + $0x70] sm:$0xf]
      %v3793 = vld [vmem:[%s3772 + $0x78] sm:$0xf]
      %v3794 = vld [vmem:[%s3772 + $0x7c] sm:$0xf]
      %v3795 = vld [vmem:[%s3772 + $0x84] sm:$0xf]
      %v3796 = vld [vmem:[%s3772 + $0x88] sm:$0xf]
      %v3797 = vld [vmem:[%s3772 + $0x90] sm:$0xf]
      %v3798 = vld [vmem:[%s3772 + $0x94] sm:$0xf]
      %v3799 = vld [vmem:[%s3772 + $0x9c] sm:$0xf]
      %v3800 = vld [vmem:[%s3772 + $0xa0] sm:$0xf]
      %v3801 = vld [vmem:[%s3772 + $0xa8] sm:$0xf]
      %v3802 = vld [vmem:[%s3772 + $0xac] sm:$0xf]
      %v3803 = vld [vmem:[%s3772 + $0xb4] sm:$0xf]
      %v3804 = vld [vmem:[%s3772 + $0xb8] sm:$0xf]
      %v3805 = vld [vmem:[%s3772 + $0x8] sm:$0x1]
      %v3806 = vld [vmem:[%s3772 + $0x14] sm:$0x1]
      %v3807 = vld [vmem:[%s3772 + $0x20] sm:$0x1]
      %v3808 = vld [vmem:[%s3772 + $0x2c] sm:$0x1]
      %v3809 = vld [vmem:[%s3772 + $0x38] sm:$0x1]
      %v3810 = vld [vmem:[%s3772 + $0x44] sm:$0x1]
      %v3811 = vld [vmem:[%s3772 + $0x50] sm:$0x1]
      %v3812 = vld [vmem:[%s3772 + $0x5c] sm:$0x1]
      %v3813 = vld [vmem:[%s3772 + $0x68] sm:$0x1]
      %v3814 = vld [vmem:[%s3772 + $0x74] sm:$0x1]
      %v3815 = vld [vmem:[%s3772 + $0x80] sm:$0x1]
      %v3816 = vld [vmem:[%s3772 + $0x8c] sm:$0x1]
      %v3817 = vld [vmem:[%s3772 + $0x98] sm:$0x1]
      %v3818 = vld [vmem:[%s3772 + $0xa4] sm:$0x1]
      %v3819 = vld [vmem:[%s3772 + $0xb0] sm:$0x1]
      %v3820 = vld [vmem:[%s3772 + $0xbc] sm:$0x1]
      %v3822 = vshrl.u32 %v3773, 16
      %v3824 = vrot.slane %v3822, 4
      %v3825 = vshll.u32 %v3773, 16
      %v3827 = vrot.slane %v3825, 5
      %v3828 = vor.u32 %v3824, %v3827
      %v3829 = vrot.slane %v3828, 4
      %v3831 = vshll.u32 %v3774, 16
      %v3833 = vrot.slane %v3831, 5
      %v3834 = vsel %vm1156, %v3829, %v3833
      %v3835 = vshrl.u32 %v3774, 16
      %v3837 = vrot.slane %v3835, 4
      %v3838 = vor.u32 %v3837, %v3833
      %v3839 = vrot.slane %v3838, 4
      %v3841 = vshll.u32 %v3805, 16
      %v3843 = vrot.slane %v3841, 5
      %v3844 = vsel %vm1156, %v3839, %v3843
      %v3846 = vshrl.u32 %v3775, 16
      %v3848 = vrot.slane %v3846, 4
      %v3849 = vshll.u32 %v3775, 16
      %v3851 = vrot.slane %v3849, 5
      %v3852 = vor.u32 %v3848, %v3851
      %v3853 = vrot.slane %v3852, 4
      %v3855 = vshll.u32 %v3776, 16
      %v3857 = vrot.slane %v3855, 5
      %v3858 = vsel %vm1156, %v3853, %v3857
      %v3859 = vshrl.u32 %v3776, 16
      %v3861 = vrot.slane %v3859, 4
      %v3862 = vor.u32 %v3861, %v3857
      %v3863 = vrot.slane %v3862, 4
      %v3865 = vshll.u32 %v3806, 16
      %v3867 = vrot.slane %v3865, 5
      %v3868 = vsel %vm1156, %v3863, %v3867
      %v3870 = vshrl.u32 %v3777, 16
      %v3872 = vrot.slane %v3870, 4
      %v3873 = vshll.u32 %v3777, 16
      %v3875 = vrot.slane %v3873, 5
      %v3876 = vor.u32 %v3872, %v3875
      %v3877 = vrot.slane %v3876, 4
      %v3879 = vshll.u32 %v3778, 16
      %v3881 = vrot.slane %v3879, 5
      %v3882 = vsel %vm1156, %v3877, %v3881
      %v3883 = vshrl.u32 %v3778, 16
      %v3885 = vrot.slane %v3883, 4
      %v3886 = vor.u32 %v3885, %v3881
      %v3887 = vrot.slane %v3886, 4
      %v3889 = vshll.u32 %v3807, 16
      %v3891 = vrot.slane %v3889, 5
      %v3892 = vsel %vm1156, %v3887, %v3891
      %v3894 = vshrl.u32 %v3779, 16
      %v3896 = vrot.slane %v3894, 4
      %v3897 = vshll.u32 %v3779, 16
      %v3899 = vrot.slane %v3897, 5
      %v3900 = vor.u32 %v3896, %v3899
      %v3901 = vrot.slane %v3900, 4
      %v3903 = vshll.u32 %v3780, 16
      %v3905 = vrot.slane %v3903, 5
      %v3906 = vsel %vm1156, %v3901, %v3905
      %v3907 = vshrl.u32 %v3780, 16
      %v3909 = vrot.slane %v3907, 4
      %v3910 = vor.u32 %v3909, %v3905
      %v3911 = vrot.slane %v3910, 4
      %v3913 = vshll.u32 %v3808, 16
      %v3915 = vrot.slane %v3913, 5
      %v3916 = vsel %vm1156, %v3911, %v3915
      %v3918 = vshrl.u32 %v3781, 16
      %v3920 = vrot.slane %v3918, 4
      %v3921 = vshll.u32 %v3781, 16
      %v3923 = vrot.slane %v3921, 5
      %v3924 = vor.u32 %v3920, %v3923
      %v3925 = vrot.slane %v3924, 4
      %v3927 = vshll.u32 %v3782, 16
      %v3929 = vrot.slane %v3927, 5
      %v3930 = vsel %vm1156, %v3925, %v3929
      %v3931 = vshrl.u32 %v3782, 16
      %v3933 = vrot.slane %v3931, 4
      %v3934 = vor.u32 %v3933, %v3929
      %v3935 = vrot.slane %v3934, 4
      %v3937 = vshll.u32 %v3809, 16
      %v3939 = vrot.slane %v3937, 5
      %v3940 = vsel %vm1156, %v3935, %v3939
      %v3942 = vshrl.u32 %v3783, 16
      %v3944 = vrot.slane %v3942, 4
      %v3945 = vshll.u32 %v3783, 16
      %v3947 = vrot.slane %v3945, 5
      %v3948 = vor.u32 %v3944, %v3947
      %v3949 = vrot.slane %v3948, 4
      %v3951 = vshll.u32 %v3784, 16
      %v3953 = vrot.slane %v3951, 5
      %v3954 = vsel %vm1156, %v3949, %v3953
      %v3955 = vshrl.u32 %v3784, 16
      %v3957 = vrot.slane %v3955, 4
      %v3958 = vor.u32 %v3957, %v3953
      %v3959 = vrot.slane %v3958, 4
      %v3961 = vshll.u32 %v3810, 16
      %v3963 = vrot.slane %v3961, 5
      %v3964 = vsel %vm1156, %v3959, %v3963
      %v3966 = vshrl.u32 %v3785, 16
      %v3968 = vrot.slane %v3966, 4
      %v3969 = vshll.u32 %v3785, 16
      %v3971 = vrot.slane %v3969, 5
      %v3972 = vor.u32 %v3968, %v3971
      %v3973 = vrot.slane %v3972, 4
      %v3975 = vshll.u32 %v3786, 16
      %v3977 = vrot.slane %v3975, 5
      %v3978 = vsel %vm1156, %v3973, %v3977
      %v3979 = vshrl.u32 %v3786, 16
      %v3981 = vrot.slane %v3979, 4
      %v3982 = vor.u32 %v3981, %v3977
      %v3983 = vrot.slane %v3982, 4
      %v3985 = vshll.u32 %v3811, 16
      %v3987 = vrot.slane %v3985, 5
      %v3988 = vsel %vm1156, %v3983, %v3987
      %v3990 = vshrl.u32 %v3787, 16
      %v3992 = vrot.slane %v3990, 4
      %v3993 = vshll.u32 %v3787, 16
      %v3995 = vrot.slane %v3993, 5
      %v3996 = vor.u32 %v3992, %v3995
      %v3997 = vrot.slane %v3996, 4
      %v3999 = vshll.u32 %v3788, 16
      %v4001 = vrot.slane %v3999, 5
      %v4002 = vsel %vm1156, %v3997, %v4001
      %v4003 = vshrl.u32 %v3788, 16
      %v4005 = vrot.slane %v4003, 4
      %v4006 = vor.u32 %v4005, %v4001
      %v4007 = vrot.slane %v4006, 4
      %v4009 = vshll.u32 %v3812, 16
      %v4011 = vrot.slane %v4009, 5
      %v4012 = vsel %vm1156, %v4007, %v4011
      %v4014 = vshrl.u32 %v3789, 16
      %v4016 = vrot.slane %v4014, 4
      %v4017 = vshll.u32 %v3789, 16
      %v4019 = vrot.slane %v4017, 5
      %v4020 = vor.u32 %v4016, %v4019
      %v4021 = vrot.slane %v4020, 4
      %v4023 = vshll.u32 %v3790, 16
      %v4025 = vrot.slane %v4023, 5
      %v4026 = vsel %vm1156, %v4021, %v4025
      %v4027 = vshrl.u32 %v3790, 16
      %v4029 = vrot.slane %v4027, 4
      %v4030 = vor.u32 %v4029, %v4025
      %v4031 = vrot.slane %v4030, 4
      %v4033 = vshll.u32 %v3813, 16
      %v4035 = vrot.slane %v4033, 5
      %v4036 = vsel %vm1156, %v4031, %v4035
      %v4038 = vshrl.u32 %v3791, 16
      %v4040 = vrot.slane %v4038, 4
      %v4041 = vshll.u32 %v3791, 16
      %v4043 = vrot.slane %v4041, 5
      %v4044 = vor.u32 %v4040, %v4043
      %v4045 = vrot.slane %v4044, 4
      %v4047 = vshll.u32 %v3792, 16
      %v4049 = vrot.slane %v4047, 5
      %v4050 = vsel %vm1156, %v4045, %v4049
      %v4051 = vshrl.u32 %v3792, 16
      %v4053 = vrot.slane %v4051, 4
      %v4054 = vor.u32 %v4053, %v4049
      %v4055 = vrot.slane %v4054, 4
      %v4057 = vshll.u32 %v3814, 16
      %v4059 = vrot.slane %v4057, 5
      %v4060 = vsel %vm1156, %v4055, %v4059
      %v4062 = vshrl.u32 %v3793, 16
      %v4064 = vrot.slane %v4062, 4
      %v4065 = vshll.u32 %v3793, 16
      %v4067 = vrot.slane %v4065, 5
      %v4068 = vor.u32 %v4064, %v4067
      %v4069 = vrot.slane %v4068, 4
      %v4071 = vshll.u32 %v3794, 16
      %v4073 = vrot.slane %v4071, 5
      %v4074 = vsel %vm1156, %v4069, %v4073
      %v4075 = vshrl.u32 %v3794, 16
      %v4077 = vrot.slane %v4075, 4
      %v4078 = vor.u32 %v4077, %v4073
      %v4079 = vrot.slane %v4078, 4
      %v4081 = vshll.u32 %v3815, 16
      %v4083 = vrot.slane %v4081, 5
      %v4084 = vsel %vm1156, %v4079, %v4083
      %v4086 = vshrl.u32 %v3795, 16
      %v4088 = vrot.slane %v4086, 4
      %v4089 = vshll.u32 %v3795, 16
      %v4091 = vrot.slane %v4089, 5
      %v4092 = vor.u32 %v4088, %v4091
      %v4093 = vrot.slane %v4092, 4
      %v4095 = vshll.u32 %v3796, 16
      %v4097 = vrot.slane %v4095, 5
      %v4098 = vsel %vm1156, %v4093, %v4097
      %v4099 = vshrl.u32 %v3796, 16
      %v4101 = vrot.slane %v4099, 4
      %v4102 = vor.u32 %v4101, %v4097
      %v4103 = vrot.slane %v4102, 4
      %v4105 = vshll.u32 %v3816, 16
      %v4107 = vrot.slane %v4105, 5
      %v4108 = vsel %vm1156, %v4103, %v4107
      %v4110 = vshrl.u32 %v3797, 16
      %v4112 = vrot.slane %v4110, 4
      %v4113 = vshll.u32 %v3797, 16
      %v4115 = vrot.slane %v4113, 5
      %v4116 = vor.u32 %v4112, %v4115
      %v4117 = vrot.slane %v4116, 4
      %v4119 = vshll.u32 %v3798, 16
      %v4121 = vrot.slane %v4119, 5
      %v4122 = vsel %vm1156, %v4117, %v4121
      %v4123 = vshrl.u32 %v3798, 16
      %v4125 = vrot.slane %v4123, 4
      %v4126 = vor.u32 %v4125, %v4121
      %v4127 = vrot.slane %v4126, 4
      %v4129 = vshll.u32 %v3817, 16
      %v4131 = vrot.slane %v4129, 5
      %v4132 = vsel %vm1156, %v4127, %v4131
      %v4134 = vshrl.u32 %v3799, 16
      %v4136 = vrot.slane %v4134, 4
      %v4137 = vshll.u32 %v3799, 16
      %v4139 = vrot.slane %v4137, 5
      %v4140 = vor.u32 %v4136, %v4139
      %v4141 = vrot.slane %v4140, 4
      %v4143 = vshll.u32 %v3800, 16
      %v4145 = vrot.slane %v4143, 5
      %v4146 = vsel %vm1156, %v4141, %v4145
      %v4147 = vshrl.u32 %v3800, 16
      %v4149 = vrot.slane %v4147, 4
      %v4150 = vor.u32 %v4149, %v4145
      %v4151 = vrot.slane %v4150, 4
      %v4153 = vshll.u32 %v3818, 16
      %v4155 = vrot.slane %v4153, 5
      %v4156 = vsel %vm1156, %v4151, %v4155
      %v4158 = vshrl.u32 %v3801, 16
      %v4160 = vrot.slane %v4158, 4
      %v4161 = vshll.u32 %v3801, 16
      %v4163 = vrot.slane %v4161, 5
      %v4164 = vor.u32 %v4160, %v4163
      %v4165 = vrot.slane %v4164, 4
      %v4167 = vshll.u32 %v3802, 16
      %v4169 = vrot.slane %v4167, 5
      %v4170 = vsel %vm1156, %v4165, %v4169
      %v4171 = vshrl.u32 %v3802, 16
      %v4173 = vrot.slane %v4171, 4
      %v4174 = vor.u32 %v4173, %v4169
      %v4175 = vrot.slane %v4174, 4
      %v4177 = vshll.u32 %v3819, 16
      %v4179 = vrot.slane %v4177, 5
      %v4180 = vsel %vm1156, %v4175, %v4179
      %v4182 = vshrl.u32 %v3803, 16
      %v4184 = vrot.slane %v4182, 4
      %v4185 = vshll.u32 %v3803, 16
      %v4187 = vrot.slane %v4185, 5
      %v4188 = vor.u32 %v4184, %v4187
      %v4189 = vrot.slane %v4188, 4
      %v4191 = vshll.u32 %v3804, 16
      %v4193 = vrot.slane %v4191, 5
      %v4194 = vsel %vm1156, %v4189, %v4193
      %v4195 = vshrl.u32 %v3804, 16
      %v4197 = vrot.slane %v4195, 4
      %v4198 = vor.u32 %v4197, %v4193
      %v4199 = vrot.slane %v4198, 4
      %v4201 = vshll.u32 %v3820, 16
      %v4203 = vrot.slane %v4201, 5
      %v4204 = vsel %vm1156, %v4199, %v4203
      %v4205 = vld [vmem:[%s3772] sm:$0xe]
      %v4206 = vld [vmem:[%s3772 + $0xc] sm:$0xe]
      %v4207 = vld [vmem:[%s3772 + $0x18] sm:$0xe]
      %v4208 = vld [vmem:[%s3772 + $0x24] sm:$0xe]
      %v4209 = vld [vmem:[%s3772 + $0x30] sm:$0xe]
      %v4210 = vld [vmem:[%s3772 + $0x3c] sm:$0xe]
      %v4211 = vld [vmem:[%s3772 + $0x48] sm:$0xe]
      %v4212 = vld [vmem:[%s3772 + $0x54] sm:$0xe]
      %v4213 = vld [vmem:[%s3772 + $0x60] sm:$0xe]
      %v4214 = vld [vmem:[%s3772 + $0x6c] sm:$0xe]
      %v4215 = vld [vmem:[%s3772 + $0x78] sm:$0xe]
      %v4216 = vld [vmem:[%s3772 + $0x84] sm:$0xe]
      %v4217 = vld [vmem:[%s3772 + $0x90] sm:$0xe]
      %v4218 = vld [vmem:[%s3772 + $0x9c] sm:$0xe]
      %v4219 = vld [vmem:[%s3772 + $0xa8] sm:$0xe]
      %v4220 = vld [vmem:[%s3772 + $0xb4] sm:$0xe]
      %v4269 = vrot.slane %v4205, 5
      %v4270 = vrot.slane %v4269, 4
      %v4271 = vrot.slane %v3774, 5
      %v4272 = vsel %vm1607, %v4270, %v4271
      %v4273 = vrot.slane %v4271, 4
      %v4274 = vrot.slane %v3805, 5
      %v4275 = vsel %vm1607, %v4273, %v4274
      %v4276 = vrot.slane %v4206, 5
      %v4277 = vrot.slane %v4276, 4
      %v4278 = vrot.slane %v3776, 5
      %v4279 = vsel %vm1607, %v4277, %v4278
      %v4280 = vrot.slane %v4278, 4
      %v4281 = vrot.slane %v3806, 5
      %v4282 = vsel %vm1607, %v4280, %v4281
      %v4283 = vrot.slane %v4207, 5
      %v4284 = vrot.slane %v4283, 4
      %v4285 = vrot.slane %v3778, 5
      %v4286 = vsel %vm1607, %v4284, %v4285
      %v4287 = vrot.slane %v4285, 4
      %v4288 = vrot.slane %v3807, 5
      %v4289 = vsel %vm1607, %v4287, %v4288
      %v4290 = vrot.slane %v4208, 5
      %v4291 = vrot.slane %v4290, 4
      %v4292 = vrot.slane %v3780, 5
      %v4293 = vsel %vm1607, %v4291, %v4292
      %v4294 = vrot.slane %v4292, 4
      %v4295 = vrot.slane %v3808, 5
      %v4296 = vsel %vm1607, %v4294, %v4295
      %v4297 = vrot.slane %v4209, 5
      %v4298 = vrot.slane %v4297, 4
      %v4299 = vrot.slane %v3782, 5
      %v4300 = vsel %vm1607, %v4298, %v4299
      %v4301 = vrot.slane %v4299, 4
      %v4302 = vrot.slane %v3809, 5
      %v4303 = vsel %vm1607, %v4301, %v4302
      %v4304 = vrot.slane %v4210, 5
      %v4305 = vrot.slane %v4304, 4
      %v4306 = vrot.slane %v3784, 5
      %v4307 = vsel %vm1607, %v4305, %v4306
      %v4308 = vrot.slane %v4306, 4
      %v4309 = vrot.slane %v3810, 5
      %v4310 = vsel %vm1607, %v4308, %v4309
      %v4311 = vrot.slane %v4211, 5
      %v4312 = vrot.slane %v4311, 4
      %v4313 = vrot.slane %v3786, 5
      %v4314 = vsel %vm1607, %v4312, %v4313
      %v4315 = vrot.slane %v4313, 4
      %v4316 = vrot.slane %v3811, 5
      %v4317 = vsel %vm1607, %v4315, %v4316
      %v4318 = vrot.slane %v4212, 5
      %v4319 = vrot.slane %v4318, 4
      %v4320 = vrot.slane %v3788, 5
      %v4321 = vsel %vm1607, %v4319, %v4320
      %v4322 = vrot.slane %v4320, 4
      %v4323 = vrot.slane %v3812, 5
      %v4324 = vsel %vm1607, %v4322, %v4323
      %v4325 = vrot.slane %v4213, 5
      %v4326 = vrot.slane %v4325, 4
      %v4327 = vrot.slane %v3790, 5
      %v4328 = vsel %vm1607, %v4326, %v4327
      %v4329 = vrot.slane %v4327, 4
      %v4330 = vrot.slane %v3813, 5
      %v4331 = vsel %vm1607, %v4329, %v4330
      %v4332 = vrot.slane %v4214, 5
      %v4333 = vrot.slane %v4332, 4
      %v4334 = vrot.slane %v3792, 5
      %v4335 = vsel %vm1607, %v4333, %v4334
      %v4336 = vrot.slane %v4334, 4
      %v4337 = vrot.slane %v3814, 5
      %v4338 = vsel %vm1607, %v4336, %v4337
      %v4339 = vrot.slane %v4215, 5
      %v4340 = vrot.slane %v4339, 4
      %v4341 = vrot.slane %v3794, 5
      %v4342 = vsel %vm1607, %v4340, %v4341
      %v4343 = vrot.slane %v4341, 4
      %v4344 = vrot.slane %v3815, 5
      %v4345 = vsel %vm1607, %v4343, %v4344
      %v4346 = vrot.slane %v4216, 5
      %v4347 = vrot.slane %v4346, 4
      %v4348 = vrot.slane %v3796, 5
      %v4349 = vsel %vm1607, %v4347, %v4348
      %v4350 = vrot.slane %v4348, 4
      %v4351 = vrot.slane %v3816, 5
      %v4352 = vsel %vm1607, %v4350, %v4351
      %v4353 = vrot.slane %v4217, 5
      %v4354 = vrot.slane %v4353, 4
      %v4355 = vrot.slane %v3798, 5
      %v4356 = vsel %vm1607, %v4354, %v4355
      %v4357 = vrot.slane %v4355, 4
      %v4358 = vrot.slane %v3817, 5
      %v4359 = vsel %vm1607, %v4357, %v4358
      %v4360 = vrot.slane %v4218, 5
      %v4361 = vrot.slane %v4360, 4
      %v4362 = vrot.slane %v3800, 5
      %v4363 = vsel %vm1607, %v4361, %v4362
      %v4364 = vrot.slane %v4362, 4
      %v4365 = vrot.slane %v3818, 5
      %v4366 = vsel %vm1607, %v4364, %v4365
      %v4367 = vrot.slane %v4219, 5
      %v4368 = vrot.slane %v4367, 4
      %v4369 = vrot.slane %v3802, 5
      %v4370 = vsel %vm1607, %v4368, %v4369
      %v4371 = vrot.slane %v4369, 4
      %v4372 = vrot.slane %v3819, 5
      %v4373 = vsel %vm1607, %v4371, %v4372
      %v4374 = vrot.slane %v4220, 5
      %v4375 = vrot.slane %v4374, 4
      %v4376 = vrot.slane %v3804, 5
      %v4377 = vsel %vm1607, %v4375, %v4376
      %v4378 = vrot.slane %v4376, 4
      %v4379 = vrot.slane %v3820, 5
      %v4380 = vsel %vm1607, %v4378, %v4379
      %v4397 = vunpack.c.l.b16 %v3773
      %v4398 = vunpack.c.l.b16 %v3774
      %v4399 = vunpack.c.l.b16 %v3775
      %v4400 = vunpack.c.l.b16 %v3776
      %v4401 = vunpack.c.l.b16 %v3777
      %v4402 = vunpack.c.l.b16 %v3778
      %v4403 = vunpack.c.l.b16 %v3779
      %v4404 = vunpack.c.l.b16 %v3780
      %v4405 = vunpack.c.l.b16 %v3781
      %v4406 = vunpack.c.l.b16 %v3782
      %v4407 = vunpack.c.l.b16 %v3783
      %v4408 = vunpack.c.l.b16 %v3784
      %v4409 = vunpack.c.l.b16 %v3785
      %v4410 = vunpack.c.l.b16 %v3786
      %v4411 = vunpack.c.l.b16 %v3787
      %v4412 = vunpack.c.l.b16 %v3788
      %v4413 = vunpack.c.l.b16 %v3789
      %v4414 = vunpack.c.l.b16 %v3790
      %v4415 = vunpack.c.l.b16 %v3791
      %v4416 = vunpack.c.l.b16 %v3792
      %v4417 = vunpack.c.l.b16 %v3793
      %v4418 = vunpack.c.l.b16 %v3794
      %v4419 = vunpack.c.l.b16 %v3795
      %v4420 = vunpack.c.l.b16 %v3796
      %v4421 = vunpack.c.l.b16 %v3797
      %v4422 = vunpack.c.l.b16 %v3798
      %v4423 = vunpack.c.l.b16 %v3799
      %v4424 = vunpack.c.l.b16 %v3800
      %v4425 = vunpack.c.l.b16 %v3801
      %v4426 = vunpack.c.l.b16 %v3802
      %v4427 = vunpack.c.l.b16 %v3803
      %v4428 = vunpack.c.l.b16 %v3804
      %v4429 = vpack.c.b16 %v4398, %v4397
      %v4430 = vpack.c.b16 %v4400, %v4399
      %v4431 = vpack.c.b16 %v4402, %v4401
      %v4432 = vpack.c.b16 %v4404, %v4403
      %v4433 = vpack.c.b16 %v4406, %v4405
      %v4434 = vpack.c.b16 %v4408, %v4407
      %v4435 = vpack.c.b16 %v4410, %v4409
      %v4436 = vpack.c.b16 %v4412, %v4411
      %v4437 = vpack.c.b16 %v4414, %v4413
      %v4438 = vpack.c.b16 %v4416, %v4415
      %v4439 = vpack.c.b16 %v4418, %v4417
      %v4440 = vpack.c.b16 %v4420, %v4419
      %v4441 = vpack.c.b16 %v4422, %v4421
      %v4442 = vpack.c.b16 %v4424, %v4423
      %v4443 = vpack.c.b16 %v4426, %v4425
      %v4444 = vpack.c.b16 %v4428, %v4427
      %v4461 = vunpack.c.l.b16 %v3834
      %v4462 = vunpack.c.l.b16 %v3844
      %v4463 = vunpack.c.l.b16 %v3858
      %v4464 = vunpack.c.l.b16 %v3868
      %v4465 = vunpack.c.l.b16 %v3882
      %v4466 = vunpack.c.l.b16 %v3892
      %v4467 = vunpack.c.l.b16 %v3906
      %v4468 = vunpack.c.l.b16 %v3916
      %v4469 = vunpack.c.l.b16 %v3930
      %v4470 = vunpack.c.l.b16 %v3940
      %v4471 = vunpack.c.l.b16 %v3954
      %v4472 = vunpack.c.l.b16 %v3964
      %v4473 = vunpack.c.l.b16 %v3978
      %v4474 = vunpack.c.l.b16 %v3988
      %v4475 = vunpack.c.l.b16 %v4002
      %v4476 = vunpack.c.l.b16 %v4012
      %v4477 = vunpack.c.l.b16 %v4026
      %v4478 = vunpack.c.l.b16 %v4036
      %v4479 = vunpack.c.l.b16 %v4050
      %v4480 = vunpack.c.l.b16 %v4060
      %v4481 = vunpack.c.l.b16 %v4074
      %v4482 = vunpack.c.l.b16 %v4084
      %v4483 = vunpack.c.l.b16 %v4098
      %v4484 = vunpack.c.l.b16 %v4108
      %v4485 = vunpack.c.l.b16 %v4122
      %v4486 = vunpack.c.l.b16 %v4132
      %v4487 = vunpack.c.l.b16 %v4146
      %v4488 = vunpack.c.l.b16 %v4156
      %v4489 = vunpack.c.l.b16 %v4170
      %v4490 = vunpack.c.l.b16 %v4180
      %v4491 = vunpack.c.l.b16 %v4194
      %v4492 = vunpack.c.l.b16 %v4204
      %v4493 = vpack.c.b16 %v4462, %v4461
      %v4494 = vpack.c.b16 %v4464, %v4463
      %v4495 = vpack.c.b16 %v4466, %v4465
      %v4496 = vpack.c.b16 %v4468, %v4467
      %v4497 = vpack.c.b16 %v4470, %v4469
      %v4498 = vpack.c.b16 %v4472, %v4471
      %v4499 = vpack.c.b16 %v4474, %v4473
      %v4500 = vpack.c.b16 %v4476, %v4475
      %v4501 = vpack.c.b16 %v4478, %v4477
      %v4502 = vpack.c.b16 %v4480, %v4479
      %v4503 = vpack.c.b16 %v4482, %v4481
      %v4504 = vpack.c.b16 %v4484, %v4483
      %v4505 = vpack.c.b16 %v4486, %v4485
      %v4506 = vpack.c.b16 %v4488, %v4487
      %v4507 = vpack.c.b16 %v4490, %v4489
      %v4508 = vpack.c.b16 %v4492, %v4491
      %v4525 = vunpack.c.l.b16 %v4272
      %v4526 = vunpack.c.l.b16 %v4275
      %v4527 = vunpack.c.l.b16 %v4279
      %v4528 = vunpack.c.l.b16 %v4282
      %v4529 = vunpack.c.l.b16 %v4286
      %v4530 = vunpack.c.l.b16 %v4289
      %v4531 = vunpack.c.l.b16 %v4293
      %v4532 = vunpack.c.l.b16 %v4296
      %v4533 = vunpack.c.l.b16 %v4300
      %v4534 = vunpack.c.l.b16 %v4303
      %v4535 = vunpack.c.l.b16 %v4307
      %v4536 = vunpack.c.l.b16 %v4310
      %v4537 = vunpack.c.l.b16 %v4314
      %v4538 = vunpack.c.l.b16 %v4317
      %v4539 = vunpack.c.l.b16 %v4321
      %v4540 = vunpack.c.l.b16 %v4324
      %v4541 = vunpack.c.l.b16 %v4328
      %v4542 = vunpack.c.l.b16 %v4331
      %v4543 = vunpack.c.l.b16 %v4335
      %v4544 = vunpack.c.l.b16 %v4338
      %v4545 = vunpack.c.l.b16 %v4342
      %v4546 = vunpack.c.l.b16 %v4345
      %v4547 = vunpack.c.l.b16 %v4349
      %v4548 = vunpack.c.l.b16 %v4352
      %v4549 = vunpack.c.l.b16 %v4356
      %v4550 = vunpack.c.l.b16 %v4359
      %v4551 = vunpack.c.l.b16 %v4363
      %v4552 = vunpack.c.l.b16 %v4366
      %v4553 = vunpack.c.l.b16 %v4370
      %v4554 = vunpack.c.l.b16 %v4373
      %v4555 = vunpack.c.l.b16 %v4377
      %v4556 = vunpack.c.l.b16 %v4380
      %v4557 = vpack.c.b16 %v4526, %v4525
      %v4558 = vpack.c.b16 %v4528, %v4527
      %v4559 = vpack.c.b16 %v4530, %v4529
      %v4560 = vpack.c.b16 %v4532, %v4531
      %v4561 = vpack.c.b16 %v4534, %v4533
      %v4562 = vpack.c.b16 %v4536, %v4535
      %v4563 = vpack.c.b16 %v4538, %v4537
      %v4564 = vpack.c.b16 %v4540, %v4539
      %v4565 = vpack.c.b16 %v4542, %v4541
      %v4566 = vpack.c.b16 %v4544, %v4543
      %v4567 = vpack.c.b16 %v4546, %v4545
      %v4568 = vpack.c.b16 %v4548, %v4547
      %v4569 = vpack.c.b16 %v4550, %v4549
      %v4570 = vpack.c.b16 %v4552, %v4551
      %v4571 = vpack.c.b16 %v4554, %v4553
      %v4572 = vpack.c.b16 %v4556, %v4555
      %v4589 = vld [vmem:[%s1 + $0x180] sm:$0xf]
      %v4590 = vld [vmem:[%s1 + $0x184] sm:$0xf]
      %v4591 = vld [vmem:[%s1 + $0x188] sm:$0xf]
      %v4592 = vld [vmem:[%s1 + $0x18c] sm:$0xf]
      %v4593 = vld [vmem:[%s1 + $0x190] sm:$0xf]
      %v4594 = vld [vmem:[%s1 + $0x194] sm:$0xf]
      %v4595 = vld [vmem:[%s1 + $0x198] sm:$0xf]
      %v4596 = vld [vmem:[%s1 + $0x19c] sm:$0xf]
      %v4597 = vld [vmem:[%s1 + $0x1a0] sm:$0xf]
      %v4598 = vld [vmem:[%s1 + $0x1a4] sm:$0xf]
      %v4599 = vld [vmem:[%s1 + $0x1a8] sm:$0xf]
      %v4600 = vld [vmem:[%s1 + $0x1ac] sm:$0xf]
      %v4601 = vld [vmem:[%s1 + $0x1b0] sm:$0xf]
      %v4602 = vld [vmem:[%s1 + $0x1b4] sm:$0xf]
      %v4603 = vld [vmem:[%s1 + $0x1b8] sm:$0xf]
      %v4604 = vld [vmem:[%s1 + $0x1bc] sm:$0xf]
      %v4605 = vld [vmem:[%s1 + $0x1c0] sm:$0xf]
      %v4606 = vld [vmem:[%s1 + $0x1c4] sm:$0xf]
      %v4607 = vld [vmem:[%s1 + $0x1c8] sm:$0xf]
      %v4608 = vld [vmem:[%s1 + $0x1cc] sm:$0xf]
      %v4609 = vld [vmem:[%s1 + $0x1d0] sm:$0xf]
      %v4610 = vld [vmem:[%s1 + $0x1d4] sm:$0xf]
      %v4611 = vld [vmem:[%s1 + $0x1d8] sm:$0xf]
      %v4612 = vld [vmem:[%s1 + $0x1dc] sm:$0xf]
      %v4613 = vld [vmem:[%s1 + $0x1e0] sm:$0xf]
      %v4614 = vld [vmem:[%s1 + $0x1e4] sm:$0xf]
      %v4615 = vld [vmem:[%s1 + $0x1e8] sm:$0xf]
      %v4616 = vld [vmem:[%s1 + $0x1ec] sm:$0xf]
      %v4617 = vld [vmem:[%s1 + $0x1f0] sm:$0xf]
      %v4618 = vld [vmem:[%s1 + $0x1f4] sm:$0xf]
      %v4619 = vld [vmem:[%s1 + $0x1f8] sm:$0xf]
      %v4620 = vld [vmem:[%s1 + $0x1fc] sm:$0xf]
      %v4621 = vld [vmem:[%s1 + $0x200] sm:$0xf]
      %v4622 = vld [vmem:[%s1 + $0x204] sm:$0xf]
      %v4623 = vld [vmem:[%s1 + $0x208] sm:$0xf]
      %v4624 = vld [vmem:[%s1 + $0x20c] sm:$0xf]
      %v4625 = vld [vmem:[%s1 + $0x210] sm:$0xf]
      %v4626 = vld [vmem:[%s1 + $0x214] sm:$0xf]
      %v4627 = vld [vmem:[%s1 + $0x218] sm:$0xf]
      %v4628 = vld [vmem:[%s1 + $0x21c] sm:$0xf]
      %v4629 = vld [vmem:[%s1 + $0x220] sm:$0xf]
      %v4630 = vld [vmem:[%s1 + $0x224] sm:$0xf]
      %v4631 = vld [vmem:[%s1 + $0x228] sm:$0xf]
      %v4632 = vld [vmem:[%s1 + $0x22c] sm:$0xf]
      %v4633 = vld [vmem:[%s1 + $0x230] sm:$0xf]
      %v4634 = vld [vmem:[%s1 + $0x234] sm:$0xf]
      %v4635 = vld [vmem:[%s1 + $0x238] sm:$0xf]
      %v4636 = vld [vmem:[%s1 + $0x23c] sm:$0xf]
      %v4685 = vunpack.c.l.b16 %v4589
      %v4686 = vunpack.c.l.b16 %v4590
      %v4687 = vunpack.c.l.b16 %v4591
      %v4688 = vunpack.c.l.b16 %v4592
      %v4689 = vunpack.c.l.b16 %v4593
      %v4690 = vunpack.c.l.b16 %v4594
      %v4691 = vunpack.c.l.b16 %v4595
      %v4692 = vunpack.c.l.b16 %v4596
      %v4693 = vunpack.c.l.b16 %v4597
      %v4694 = vunpack.c.l.b16 %v4598
      %v4695 = vunpack.c.l.b16 %v4599
      %v4696 = vunpack.c.l.b16 %v4600
      %v4697 = vunpack.c.l.b16 %v4601
      %v4698 = vunpack.c.l.b16 %v4602
      %v4699 = vunpack.c.l.b16 %v4603
      %v4700 = vunpack.c.l.b16 %v4604
      %v4701 = vunpack.c.l.b16 %v4605
      %v4702 = vunpack.c.l.b16 %v4606
      %v4703 = vunpack.c.l.b16 %v4607
      %v4704 = vunpack.c.l.b16 %v4608
      %v4705 = vunpack.c.l.b16 %v4609
      %v4706 = vunpack.c.l.b16 %v4610
      %v4707 = vunpack.c.l.b16 %v4611
      %v4708 = vunpack.c.l.b16 %v4612
      %v4709 = vunpack.c.l.b16 %v4613
      %v4710 = vunpack.c.l.b16 %v4614
      %v4711 = vunpack.c.l.b16 %v4615
      %v4712 = vunpack.c.l.b16 %v4616
      %v4713 = vunpack.c.l.b16 %v4617
      %v4714 = vunpack.c.l.b16 %v4618
      %v4715 = vunpack.c.l.b16 %v4619
      %v4716 = vunpack.c.l.b16 %v4620
      %v4717 = vunpack.c.l.b16 %v4621
      %v4718 = vunpack.c.l.b16 %v4622
      %v4719 = vunpack.c.l.b16 %v4623
      %v4720 = vunpack.c.l.b16 %v4624
      %v4721 = vunpack.c.l.b16 %v4625
      %v4722 = vunpack.c.l.b16 %v4626
      %v4723 = vunpack.c.l.b16 %v4627
      %v4724 = vunpack.c.l.b16 %v4628
      %v4725 = vunpack.c.l.b16 %v4629
      %v4726 = vunpack.c.l.b16 %v4630
      %v4727 = vunpack.c.l.b16 %v4631
      %v4728 = vunpack.c.l.b16 %v4632
      %v4729 = vunpack.c.l.b16 %v4633
      %v4730 = vunpack.c.l.b16 %v4634
      %v4731 = vunpack.c.l.b16 %v4635
      %v4732 = vunpack.c.l.b16 %v4636
      %v4733 = vpack.c.b16 %v4686, %v4685
      %v4734 = vpack.c.b16 %v4688, %v4687
      %v4735 = vpack.c.b16 %v4690, %v4689
      %v4736 = vpack.c.b16 %v4692, %v4691
      %v4737 = vpack.c.b16 %v4694, %v4693
      %v4738 = vpack.c.b16 %v4696, %v4695
      %v4739 = vpack.c.b16 %v4698, %v4697
      %v4740 = vpack.c.b16 %v4700, %v4699
      %v4741 = vpack.c.b16 %v4702, %v4701
      %v4742 = vpack.c.b16 %v4704, %v4703
      %v4743 = vpack.c.b16 %v4706, %v4705
      %v4744 = vpack.c.b16 %v4708, %v4707
      %v4745 = vpack.c.b16 %v4710, %v4709
      %v4746 = vpack.c.b16 %v4712, %v4711
      %v4747 = vpack.c.b16 %v4714, %v4713
      %v4748 = vpack.c.b16 %v4716, %v4715
      %v4749 = vpack.c.b16 %v4718, %v4717
      %v4750 = vpack.c.b16 %v4720, %v4719
      %v4751 = vpack.c.b16 %v4722, %v4721
      %v4752 = vpack.c.b16 %v4724, %v4723
      %v4753 = vpack.c.b16 %v4726, %v4725
      %v4754 = vpack.c.b16 %v4728, %v4727
      %v4755 = vpack.c.b16 %v4730, %v4729
      %v4756 = vpack.c.b16 %v4732, %v4731
      %4781 = vmatprep.subr.bf16.mxu0 0
      %4782 = vmatpush1.bf16.msra.mxu0 %v4740
      %4783 = vmatprep.subr.bf16.mxu0 0
      %4784 = vmatpush1.bf16.msra.mxu0 %v4739
      %4785 = vmatprep.subr.bf16.mxu0 0
      %4786 = vmatpush1.bf16.msra.mxu0 %v4738
      %4787 = vmatprep.subr.bf16.mxu0 0
      %4788 = vmatpush1.bf16.msra.mxu0 %v4737
      %4789 = vmatprep.subr.bf16.mxu0 0
      %4790 = vmatpush1.bf16.msra.mxu0 %v4736
      %4791 = vmatprep.subr.bf16.mxu0 0
      %4792 = vmatpush1.bf16.msra.mxu0 %v4735
      %4793 = vmatprep.subr.bf16.mxu0 0
      %4794 = vmatpush1.bf16.msra.mxu0 %v4734
      %4795 = vmatprep.subr.bf16.mxu0 0
      %4796 = vmatpush1.bf16.msra.mxu0 %v4733
      %4797 = vmatprep.subr.bf16.mxu0 0
      %4798 = vmatpush2.bf16.msra.mxu0 %v4748
      %4799 = vmatprep.subr.bf16.mxu0 0
      %4800 = vmatpush2.bf16.msra.mxu0 %v4747
      %4801 = vmatprep.subr.bf16.mxu0 0
      %4802 = vmatpush2.bf16.msra.mxu0 %v4746
      %4803 = vmatprep.subr.bf16.mxu0 0
      %4804 = vmatpush2.bf16.msra.mxu0 %v4745
      %4805 = vmatprep.subr.bf16.mxu0 0
      %4806 = vmatpush2.bf16.msra.mxu0 %v4744
      %4807 = vmatprep.subr.bf16.mxu0 0
      %4808 = vmatpush2.bf16.msra.mxu0 %v4743
      %4809 = vmatprep.subr.bf16.mxu0 0
      %4810 = vmatpush2.bf16.msra.mxu0 %v4742
      %4811 = vmatprep.subr.bf16.mxu0 0
      %4812 = vmatpush2.bf16.msra.mxu0 %v4741
      %4813 = vmatprep.mubr.bf16.mxu0 %v4493
      %4814 = vmatmul.mubr.bf16.gmra.mxu0 %v4429
      %v4815 = vpop.f32.mrf.mxu0
      %v4816 = vadd.f32 0.0, %v4815
      %v4817 = vpop.f32.mrf.mxu0
      %v4818 = vpop.f32.mrf.mxu0
      %v4819 = vadd.f32 0.0, %v4818
      %v4820 = vpop.f32.mrf.mxu0
      %4821 = vmatprep.mubr.bf16.mxu0 %v4494
      %4822 = vmatmul.mubr.bf16.gmra.mxu0 %v4430
      %v4823 = vpop.f32.mrf.mxu0
      %v4824 = vadd.f32 0.0, %v4823
      %v4825 = vpop.f32.mrf.mxu0
      %v4826 = vpop.f32.mrf.mxu0
      %v4827 = vadd.f32 0.0, %v4826
      %v4828 = vpop.f32.mrf.mxu0
      %4829 = vmatprep.mubr.bf16.mxu0 %v4495
      %4830 = vmatmul.mubr.bf16.gmra.mxu0 %v4431
      %v4831 = vpop.f32.mrf.mxu0
      %v4832 = vadd.f32 0.0, %v4831
      %v4833 = vpop.f32.mrf.mxu0
      %v4834 = vpop.f32.mrf.mxu0
      %v4835 = vadd.f32 0.0, %v4834
      %v4836 = vpop.f32.mrf.mxu0
      %4837 = vmatprep.mubr.bf16.mxu0 %v4496
      %4838 = vmatmul.mubr.bf16.gmra.mxu0 %v4432
      %v4839 = vpop.f32.mrf.mxu0
      %v4840 = vadd.f32 0.0, %v4839
      %v4841 = vpop.f32.mrf.mxu0
      %v4842 = vpop.f32.mrf.mxu0
      %v4843 = vadd.f32 0.0, %v4842
      %v4844 = vpop.f32.mrf.mxu0
      %4845 = vmatprep.mubr.bf16.mxu0 %v4497
      %4846 = vmatmul.mubr.bf16.gmra.mxu0 %v4433
      %v4847 = vpop.f32.mrf.mxu0
      %v4848 = vadd.f32 0.0, %v4847
      %v4849 = vpop.f32.mrf.mxu0
      %v4850 = vpop.f32.mrf.mxu0
      %v4851 = vadd.f32 0.0, %v4850
      %v4852 = vpop.f32.mrf.mxu0
      %4853 = vmatprep.mubr.bf16.mxu0 %v4498
      %4854 = vmatmul.mubr.bf16.gmra.mxu0 %v4434
      %v4855 = vpop.f32.mrf.mxu0
      %v4856 = vadd.f32 0.0, %v4855
      %v4857 = vpop.f32.mrf.mxu0
      %v4858 = vpop.f32.mrf.mxu0
      %v4859 = vadd.f32 0.0, %v4858
      %v4860 = vpop.f32.mrf.mxu0
      %4861 = vmatprep.mubr.bf16.mxu0 %v4499
      %4862 = vmatmul.mubr.bf16.gmra.mxu0 %v4435
      %v4863 = vpop.f32.mrf.mxu0
      %v4864 = vadd.f32 0.0, %v4863
      %v4865 = vpop.f32.mrf.mxu0
      %v4866 = vpop.f32.mrf.mxu0
      %v4867 = vadd.f32 0.0, %v4866
      %v4868 = vpop.f32.mrf.mxu0
      %4869 = vmatprep.mubr.bf16.mxu0 %v4500
      %4870 = vmatmul.mubr.bf16.gmra.mxu0 %v4436
      %v4871 = vpop.f32.mrf.mxu0
      %v4872 = vadd.f32 0.0, %v4871
      %v4873 = vpop.f32.mrf.mxu0
      %v4874 = vpop.f32.mrf.mxu0
      %v4875 = vadd.f32 0.0, %v4874
      %v4876 = vpop.f32.mrf.mxu0
      %4877 = vmatprep.mubr.bf16.mxu0 %v4501
      %4878 = vmatmul.mubr.bf16.gmra.mxu0 %v4437
      %v4879 = vpop.f32.mrf.mxu0
      %v4880 = vadd.f32 0.0, %v4879
      %v4881 = vpop.f32.mrf.mxu0
      %v4882 = vpop.f32.mrf.mxu0
      %v4883 = vadd.f32 0.0, %v4882
      %v4884 = vpop.f32.mrf.mxu0
      %4885 = vmatprep.mubr.bf16.mxu0 %v4502
      %4886 = vmatmul.mubr.bf16.gmra.mxu0 %v4438
      %v4887 = vpop.f32.mrf.mxu0
      %v4888 = vadd.f32 0.0, %v4887
      %v4889 = vpop.f32.mrf.mxu0
      %v4890 = vpop.f32.mrf.mxu0
      %v4891 = vadd.f32 0.0, %v4890
      %v4892 = vpop.f32.mrf.mxu0
      %4893 = vmatprep.mubr.bf16.mxu0 %v4503
      %4894 = vmatmul.mubr.bf16.gmra.mxu0 %v4439
      %v4895 = vpop.f32.mrf.mxu0
      %v4896 = vadd.f32 0.0, %v4895
      %v4897 = vpop.f32.mrf.mxu0
      %v4898 = vpop.f32.mrf.mxu0
      %v4899 = vadd.f32 0.0, %v4898
      %v4900 = vpop.f32.mrf.mxu0
      %4901 = vmatprep.mubr.bf16.mxu0 %v4504
      %4902 = vmatmul.mubr.bf16.gmra.mxu0 %v4440
      %v4903 = vpop.f32.mrf.mxu0
      %v4904 = vadd.f32 0.0, %v4903
      %v4905 = vpop.f32.mrf.mxu0
      %v4906 = vpop.f32.mrf.mxu0
      %v4907 = vadd.f32 0.0, %v4906
      %v4908 = vpop.f32.mrf.mxu0
      %4909 = vmatprep.mubr.bf16.mxu0 %v4505
      %4910 = vmatmul.mubr.bf16.gmra.mxu0 %v4441
      %v4911 = vpop.f32.mrf.mxu0
      %v4912 = vadd.f32 0.0, %v4911
      %v4913 = vpop.f32.mrf.mxu0
      %v4914 = vpop.f32.mrf.mxu0
      %v4915 = vadd.f32 0.0, %v4914
      %v4916 = vpop.f32.mrf.mxu0
      %4917 = vmatprep.mubr.bf16.mxu0 %v4506
      %4918 = vmatmul.mubr.bf16.gmra.mxu0 %v4442
      %v4919 = vpop.f32.mrf.mxu0
      %v4920 = vadd.f32 0.0, %v4919
      %v4921 = vpop.f32.mrf.mxu0
      %v4922 = vpop.f32.mrf.mxu0
      %v4923 = vadd.f32 0.0, %v4922
      %v4924 = vpop.f32.mrf.mxu0
      %4925 = vmatprep.mubr.bf16.mxu0 %v4507
      %4926 = vmatmul.mubr.bf16.gmra.mxu0 %v4443
      %v4927 = vpop.f32.mrf.mxu0
      %v4928 = vadd.f32 0.0, %v4927
      %v4929 = vpop.f32.mrf.mxu0
      %v4930 = vpop.f32.mrf.mxu0
      %v4931 = vadd.f32 0.0, %v4930
      %v4932 = vpop.f32.mrf.mxu0
      %4933 = vmatprep.mubr.bf16.mxu0 %v4508
      %4934 = vmatmul.mubr.bf16.gmra.mxu0 %v4444
      %v4935 = vpop.f32.mrf.mxu0
      %v4936 = vadd.f32 0.0, %v4935
      %v4937 = vpop.f32.mrf.mxu0
      %v4938 = vpop.f32.mrf.mxu0
      %v4939 = vadd.f32 0.0, %v4938
      %v4940 = vpop.f32.mrf.mxu0
      %4941 = vdwg.mxu0
      %4942 = vmatprep.subr.bf16.mxu0 0
      %4943 = vmatpush1.bf16.msra.mxu0 %v4756
      %4944 = vmatprep.subr.bf16.mxu0 0
      %4945 = vmatpush1.bf16.msra.mxu0 %v4755
      %4946 = vmatprep.subr.bf16.mxu0 0
      %4947 = vmatpush1.bf16.msra.mxu0 %v4754
      %4948 = vmatprep.subr.bf16.mxu0 0
      %4949 = vmatpush1.bf16.msra.mxu0 %v4753
      %4950 = vmatprep.subr.bf16.mxu0 0
      %4951 = vmatpush1.bf16.msra.mxu0 %v4752
      %4952 = vmatprep.subr.bf16.mxu0 0
      %4953 = vmatpush1.bf16.msra.mxu0 %v4751
      %4954 = vmatprep.subr.bf16.mxu0 0
      %4955 = vmatpush1.bf16.msra.mxu0 %v4750
      %4956 = vmatprep.subr.bf16.mxu0 0
      %4957 = vmatpush1.bf16.msra.mxu0 %v4749
      %4958 = vmatprep.subr.bf16.mxu0 0
      %4959 = vmatpush2.bf16.msra.mxu0 0
      %4960 = vmatprep.subr.bf16.mxu0 0
      %4961 = vmatpush2.bf16.msra.mxu0 0
      %4962 = vmatprep.subr.bf16.mxu0 0
      %4963 = vmatpush2.bf16.msra.mxu0 0
      %4964 = vmatprep.subr.bf16.mxu0 0
      %4965 = vmatpush2.bf16.msra.mxu0 0
      %4966 = vmatprep.subr.bf16.mxu0 0
      %4967 = vmatpush2.bf16.msra.mxu0 0
      %4968 = vmatprep.subr.bf16.mxu0 0
      %4969 = vmatpush2.bf16.msra.mxu0 0
      %4970 = vmatprep.subr.bf16.mxu0 0
      %4971 = vmatpush2.bf16.msra.mxu0 0
      %4972 = vmatprep.subr.bf16.mxu0 0
      %4973 = vmatpush2.bf16.msra.mxu0 0
      %4974 = vmatprep.mubr.bf16.mxu0 0
      %4975 = vmatmul.mubr.bf16.gmra.mxu0 %v4557
      %v4976 = vpop.f32.mrf.mxu0
      %v4977 = vadd.f32 %v4816, %v4976
      %v4978 = vpop.f32.mrf.mxu0
      %v4979 = vpop.f32.mrf.mxu0
      %v4980 = vadd.f32 %v4819, %v4979
      %v4981 = vpop.f32.mrf.mxu0
      %4982 = vmatprep.mubr.bf16.mxu0 0
      %4983 = vmatmul.mubr.bf16.gmra.mxu0 %v4558
      %v4984 = vpop.f32.mrf.mxu0
      %v4985 = vadd.f32 %v4824, %v4984
      %v4986 = vpop.f32.mrf.mxu0
      %v4987 = vpop.f32.mrf.mxu0
      %v4988 = vadd.f32 %v4827, %v4987
      %v4989 = vpop.f32.mrf.mxu0
      %4990 = vmatprep.mubr.bf16.mxu0 0
      %4991 = vmatmul.mubr.bf16.gmra.mxu0 %v4559
      %v4992 = vpop.f32.mrf.mxu0
      %v4993 = vadd.f32 %v4832, %v4992
      %v4994 = vpop.f32.mrf.mxu0
      %v4995 = vpop.f32.mrf.mxu0
      %v4996 = vadd.f32 %v4835, %v4995
      %v4997 = vpop.f32.mrf.mxu0
      %4998 = vmatprep.mubr.bf16.mxu0 0
      %4999 = vmatmul.mubr.bf16.gmra.mxu0 %v4560
      %v5000 = vpop.f32.mrf.mxu0
      %v5001 = vadd.f32 %v4840, %v5000
      %v5002 = vpop.f32.mrf.mxu0
      %v5003 = vpop.f32.mrf.mxu0
      %v5004 = vadd.f32 %v4843, %v5003
      %v5005 = vpop.f32.mrf.mxu0
      %5006 = vmatprep.mubr.bf16.mxu0 0
      %5007 = vmatmul.mubr.bf16.gmra.mxu0 %v4561
      %v5008 = vpop.f32.mrf.mxu0
      %v5009 = vadd.f32 %v4848, %v5008
      %v5010 = vpop.f32.mrf.mxu0
      %v5011 = vpop.f32.mrf.mxu0
      %v5012 = vadd.f32 %v4851, %v5011
      %v5013 = vpop.f32.mrf.mxu0
      %5014 = vmatprep.mubr.bf16.mxu0 0
      %5015 = vmatmul.mubr.bf16.gmra.mxu0 %v4562
      %v5016 = vpop.f32.mrf.mxu0
      %v5017 = vadd.f32 %v4856, %v5016
      %v5018 = vpop.f32.mrf.mxu0
      %v5019 = vpop.f32.mrf.mxu0
      %v5020 = vadd.f32 %v4859, %v5019
      %v5021 = vpop.f32.mrf.mxu0
      %5022 = vmatprep.mubr.bf16.mxu0 0
      %5023 = vmatmul.mubr.bf16.gmra.mxu0 %v4563
      %v5024 = vpop.f32.mrf.mxu0
      %v5025 = vadd.f32 %v4864, %v5024
      %v5026 = vpop.f32.mrf.mxu0
      %v5027 = vpop.f32.mrf.mxu0
      %v5028 = vadd.f32 %v4867, %v5027
      %v5029 = vpop.f32.mrf.mxu0
      %5030 = vmatprep.mubr.bf16.mxu0 0
      %5031 = vmatmul.mubr.bf16.gmra.mxu0 %v4564
      %v5032 = vpop.f32.mrf.mxu0
      %v5033 = vadd.f32 %v4872, %v5032
      %v5034 = vpop.f32.mrf.mxu0
      %v5035 = vpop.f32.mrf.mxu0
      %v5036 = vadd.f32 %v4875, %v5035
      %v5037 = vpop.f32.mrf.mxu0
      %5038 = vmatprep.mubr.bf16.mxu0 0
      %5039 = vmatmul.mubr.bf16.gmra.mxu0 %v4565
      %v5040 = vpop.f32.mrf.mxu0
      %v5041 = vadd.f32 %v4880, %v5040
      %v5042 = vpop.f32.mrf.mxu0
      %v5043 = vpop.f32.mrf.mxu0
      %v5044 = vadd.f32 %v4883, %v5043
      %v5045 = vpop.f32.mrf.mxu0
      %5046 = vmatprep.mubr.bf16.mxu0 0
      %5047 = vmatmul.mubr.bf16.gmra.mxu0 %v4566
      %v5048 = vpop.f32.mrf.mxu0
      %v5049 = vadd.f32 %v4888, %v5048
      %v5050 = vpop.f32.mrf.mxu0
      %v5051 = vpop.f32.mrf.mxu0
      %v5052 = vadd.f32 %v4891, %v5051
      %v5053 = vpop.f32.mrf.mxu0
      %5054 = vmatprep.mubr.bf16.mxu0 0
      %5055 = vmatmul.mubr.bf16.gmra.mxu0 %v4567
      %v5056 = vpop.f32.mrf.mxu0
      %v5057 = vadd.f32 %v4896, %v5056
      %v5058 = vpop.f32.mrf.mxu0
      %v5059 = vpop.f32.mrf.mxu0
      %v5060 = vadd.f32 %v4899, %v5059
      %v5061 = vpop.f32.mrf.mxu0
      %5062 = vmatprep.mubr.bf16.mxu0 0
      %5063 = vmatmul.mubr.bf16.gmra.mxu0 %v4568
      %v5064 = vpop.f32.mrf.mxu0
      %v5065 = vadd.f32 %v4904, %v5064
      %v5066 = vpop.f32.mrf.mxu0
      %v5067 = vpop.f32.mrf.mxu0
      %v5068 = vadd.f32 %v4907, %v5067
      %v5069 = vpop.f32.mrf.mxu0
      %5070 = vmatprep.mubr.bf16.mxu0 0
      %5071 = vmatmul.mubr.bf16.gmra.mxu0 %v4569
      %v5072 = vpop.f32.mrf.mxu0
      %v5073 = vadd.f32 %v4912, %v5072
      %v5074 = vpop.f32.mrf.mxu0
      %v5075 = vpop.f32.mrf.mxu0
      %v5076 = vadd.f32 %v4915, %v5075
      %v5077 = vpop.f32.mrf.mxu0
      %5078 = vmatprep.mubr.bf16.mxu0 0
      %5079 = vmatmul.mubr.bf16.gmra.mxu0 %v4570
      %v5080 = vpop.f32.mrf.mxu0
      %v5081 = vadd.f32 %v4920, %v5080
      %v5082 = vpop.f32.mrf.mxu0
      %v5083 = vpop.f32.mrf.mxu0
      %v5084 = vadd.f32 %v4923, %v5083
      %v5085 = vpop.f32.mrf.mxu0
      %5086 = vmatprep.mubr.bf16.mxu0 0
      %5087 = vmatmul.mubr.bf16.gmra.mxu0 %v4571
      %v5088 = vpop.f32.mrf.mxu0
      %v5089 = vadd.f32 %v4928, %v5088
      %v5090 = vpop.f32.mrf.mxu0
      %v5091 = vpop.f32.mrf.mxu0
      %v5092 = vadd.f32 %v4931, %v5091
      %v5093 = vpop.f32.mrf.mxu0
      %5094 = vmatprep.mubr.bf16.mxu0 0
      %5095 = vmatmul.mubr.bf16.gmra.mxu0 %v4572
      %v5096 = vpop.f32.mrf.mxu0
      %v5097 = vadd.f32 %v4936, %v5096
      %v5098 = vpop.f32.mrf.mxu0
      %v5099 = vpop.f32.mrf.mxu0
      %v5100 = vadd.f32 %v4939, %v5099
      %v5101 = vpop.f32.mrf.mxu0
      %5102 = vdwg.mxu0
      %v5103 = vadd.f32 %v3646, %v4977
      %v5104 = vadd.f32 %v3649, %v4980
      %v5105 = vadd.f32 %v3654, %v4985
      %v5106 = vadd.f32 %v3657, %v4988
      %v5107 = vadd.f32 %v3662, %v4993
      %v5108 = vadd.f32 %v3665, %v4996
      %v5109 = vadd.f32 %v3670, %v5001
      %v5110 = vadd.f32 %v3673, %v5004
      %v5111 = vadd.f32 %v3678, %v5009
      %v5112 = vadd.f32 %v3681, %v5012
      %v5113 = vadd.f32 %v3686, %v5017
      %v5114 = vadd.f32 %v3689, %v5020
      %v5115 = vadd.f32 %v3694, %v5025
      %v5116 = vadd.f32 %v3697, %v5028
      %v5117 = vadd.f32 %v3702, %v5033
      %v5118 = vadd.f32 %v3705, %v5036
      %v5119 = vadd.f32 %v3710, %v5041
      %v5120 = vadd.f32 %v3713, %v5044
      %v5121 = vadd.f32 %v3718, %v5049
      %v5122 = vadd.f32 %v3721, %v5052
      %v5123 = vadd.f32 %v3726, %v5057
      %v5124 = vadd.f32 %v3729, %v5060
      %v5125 = vadd.f32 %v3734, %v5065
      %v5126 = vadd.f32 %v3737, %v5068
      %v5127 = vadd.f32 %v3742, %v5073
      %v5128 = vadd.f32 %v3745, %v5076
      %v5129 = vadd.f32 %v3750, %v5081
      %v5130 = vadd.f32 %v3753, %v5084
      %v5131 = vadd.f32 %v3758, %v5089
      %v5132 = vadd.f32 %v3761, %v5092
      %v5133 = vadd.f32 %v3766, %v5097
      %v5134 = vadd.f32 %v3769, %v5100
      %v5136 = vlaneseq
      %v5137 = vshrl.u32 %v5136, 7
      %v5138 = vsub.s32 0, %v5137
      %v5139 = vrot.slane %v1104, %v5138
      %v5141 = vmul.f32 %v5103, %v5139
      %v5142 = vmul.f32 %v5104, %v5139
      %v5143 = vmul.f32 %v5105, %v5139
      %v5144 = vmul.f32 %v5106, %v5139
      %v5145 = vmul.f32 %v5107, %v5139
      %v5146 = vmul.f32 %v5108, %v5139
      %v5147 = vmul.f32 %v5109, %v5139
      %v5148 = vmul.f32 %v5110, %v5139
      %v5149 = vmul.f32 %v5111, %v5139
      %v5150 = vmul.f32 %v5112, %v5139
      %v5151 = vmul.f32 %v5113, %v5139
      %v5152 = vmul.f32 %v5114, %v5139
      %v5153 = vmul.f32 %v5115, %v5139
      %v5154 = vmul.f32 %v5116, %v5139
      %v5155 = vmul.f32 %v5117, %v5139
      %v5156 = vmul.f32 %v5118, %v5139
      %v5157 = vmul.f32 %v5119, %v5139
      %v5158 = vmul.f32 %v5120, %v5139
      %v5159 = vmul.f32 %v5121, %v5139
      %v5160 = vmul.f32 %v5122, %v5139
      %v5161 = vmul.f32 %v5123, %v5139
      %v5162 = vmul.f32 %v5124, %v5139
      %v5163 = vmul.f32 %v5125, %v5139
      %v5164 = vmul.f32 %v5126, %v5139
      %v5165 = vmul.f32 %v5127, %v5139
      %v5166 = vmul.f32 %v5128, %v5139
      %v5167 = vmul.f32 %v5129, %v5139
      %v5168 = vmul.f32 %v5130, %v5139
      %v5169 = vmul.f32 %v5131, %v5139
      %v5170 = vmul.f32 %v5132, %v5139
      %v5171 = vmul.f32 %v5133, %v5139
      %v5172 = vmul.f32 %v5134, %v5139
      %v5174 = vlaneseq
      %v5175 = vshrl.u32 %v5174, 7
      %v5176 = vsub.s32 0, %v5175
      %v5177 = vrot.slane %v1105, %v5176
      %v5179 = vadd.f32 %v5141, %v5177
      %v5180 = vadd.f32 %v5142, %v5177
      %v5181 = vadd.f32 %v5143, %v5177
      %v5182 = vadd.f32 %v5144, %v5177
      %v5183 = vadd.f32 %v5145, %v5177
      %v5184 = vadd.f32 %v5146, %v5177
      %v5185 = vadd.f32 %v5147, %v5177
      %v5186 = vadd.f32 %v5148, %v5177
      %v5187 = vadd.f32 %v5149, %v5177
      %v5188 = vadd.f32 %v5150, %v5177
      %v5189 = vadd.f32 %v5151, %v5177
      %v5190 = vadd.f32 %v5152, %v5177
      %v5191 = vadd.f32 %v5153, %v5177
      %v5192 = vadd.f32 %v5154, %v5177
      %v5193 = vadd.f32 %v5155, %v5177
      %v5194 = vadd.f32 %v5156, %v5177
      %v5195 = vadd.f32 %v5157, %v5177
      %v5196 = vadd.f32 %v5158, %v5177
      %v5197 = vadd.f32 %v5159, %v5177
      %v5198 = vadd.f32 %v5160, %v5177
      %v5199 = vadd.f32 %v5161, %v5177
      %v5200 = vadd.f32 %v5162, %v5177
      %v5201 = vadd.f32 %v5163, %v5177
      %v5202 = vadd.f32 %v5164, %v5177
      %v5203 = vadd.f32 %v5165, %v5177
      %v5204 = vadd.f32 %v5166, %v5177
      %v5205 = vadd.f32 %v5167, %v5177
      %v5206 = vadd.f32 %v5168, %v5177
      %v5207 = vadd.f32 %v5169, %v5177
      %v5208 = vadd.f32 %v5170, %v5177
      %v5209 = vadd.f32 %v5171, %v5177
      %v5210 = vadd.f32 %v5172, %v5177
      %v5211 = vmax.f32 %v5179, 0.0
      %v5212 = vmax.f32 %v5180, 0.0
      %v5213 = vmax.f32 %v5181, 0.0
      %v5214 = vmax.f32 %v5182, 0.0
      %v5215 = vmax.f32 %v5183, 0.0
      %v5216 = vmax.f32 %v5184, 0.0
      %v5217 = vmax.f32 %v5185, 0.0
      %v5218 = vmax.f32 %v5186, 0.0
      %v5219 = vmax.f32 %v5187, 0.0
      %v5220 = vmax.f32 %v5188, 0.0
      %v5221 = vmax.f32 %v5189, 0.0
      %v5222 = vmax.f32 %v5190, 0.0
      %v5223 = vmax.f32 %v5191, 0.0
      %v5224 = vmax.f32 %v5192, 0.0
      %v5225 = vmax.f32 %v5193, 0.0
      %v5226 = vmax.f32 %v5194, 0.0
      %v5227 = vmax.f32 %v5195, 0.0
      %v5228 = vmax.f32 %v5196, 0.0
      %v5229 = vmax.f32 %v5197, 0.0
      %v5230 = vmax.f32 %v5198, 0.0
      %v5231 = vmax.f32 %v5199, 0.0
      %v5232 = vmax.f32 %v5200, 0.0
      %v5233 = vmax.f32 %v5201, 0.0
      %v5234 = vmax.f32 %v5202, 0.0
      %v5235 = vmax.f32 %v5203, 0.0
      %v5236 = vmax.f32 %v5204, 0.0
      %v5237 = vmax.f32 %v5205, 0.0
      %v5238 = vmax.f32 %v5206, 0.0
      %v5239 = vmax.f32 %v5207, 0.0
      %v5240 = vmax.f32 %v5208, 0.0
      %v5241 = vmax.f32 %v5209, 0.0
      %v5242 = vmax.f32 %v5210, 0.0
      %v5243 = vpack.c.bf16 %v5212, %v5211
      %v5244 = vpack.c.bf16 %v5214, %v5213
      %v5245 = vpack.c.bf16 %v5216, %v5215
      %v5246 = vpack.c.bf16 %v5218, %v5217
      %v5247 = vpack.c.bf16 %v5220, %v5219
      %v5248 = vpack.c.bf16 %v5222, %v5221
      %v5249 = vpack.c.bf16 %v5224, %v5223
      %v5250 = vpack.c.bf16 %v5226, %v5225
      %v5251 = vpack.c.bf16 %v5228, %v5227
      %v5252 = vpack.c.bf16 %v5230, %v5229
      %v5253 = vpack.c.bf16 %v5232, %v5231
      %v5254 = vpack.c.bf16 %v5234, %v5233
      %v5255 = vpack.c.bf16 %v5236, %v5235
      %v5256 = vpack.c.bf16 %v5238, %v5237
      %v5257 = vpack.c.bf16 %v5240, %v5239
      %v5258 = vpack.c.bf16 %v5242, %v5241
      %v5275 = vunpack.c.l.b16 %v5243
      %v5276 = vunpack.c.h.b16 %v5243
      %v5277 = vunpack.c.l.b16 %v5244
      %v5278 = vunpack.c.h.b16 %v5244
      %v5279 = vunpack.c.l.b16 %v5245
      %v5280 = vunpack.c.h.b16 %v5245
      %v5281 = vunpack.c.l.b16 %v5246
      %v5282 = vunpack.c.h.b16 %v5246
      %v5283 = vunpack.c.l.b16 %v5247
      %v5284 = vunpack.c.h.b16 %v5247
      %v5285 = vunpack.c.l.b16 %v5248
      %v5286 = vunpack.c.h.b16 %v5248
      %v5287 = vunpack.c.l.b16 %v5249
      %v5288 = vunpack.c.h.b16 %v5249
      %v5289 = vunpack.c.l.b16 %v5250
      %v5290 = vunpack.c.h.b16 %v5250
      %v5291 = vunpack.c.l.b16 %v5251
      %v5292 = vunpack.c.h.b16 %v5251
      %v5293 = vunpack.c.l.b16 %v5252
      %v5294 = vunpack.c.h.b16 %v5252
      %v5295 = vunpack.c.l.b16 %v5253
      %v5296 = vunpack.c.h.b16 %v5253
      %v5297 = vunpack.c.l.b16 %v5254
      %v5298 = vunpack.c.h.b16 %v5254
      %v5299 = vunpack.c.l.b16 %v5255
      %v5300 = vunpack.c.h.b16 %v5255
      %v5301 = vunpack.c.l.b16 %v5256
      %v5302 = vunpack.c.h.b16 %v5256
      %v5303 = vunpack.c.l.b16 %v5257
      %v5304 = vunpack.c.h.b16 %v5257
      %v5305 = vunpack.c.l.b16 %v5258
      %v5306 = vunpack.c.h.b16 %v5258
      %v5307 = vpack.c.b16 %v5275, %v5275
      %v5308 = vpack.c.b16 %v5276, %v5276
      %v5309 = vpack.c.b16 %v5277, %v5277
      %v5310 = vpack.c.b16 %v5278, %v5278
      %v5311 = vpack.c.b16 %v5279, %v5279
      %v5312 = vpack.c.b16 %v5280, %v5280
      %v5313 = vpack.c.b16 %v5281, %v5281
      %v5314 = vpack.c.b16 %v5282, %v5282
      %v5315 = vpack.c.b16 %v5283, %v5283
      %v5316 = vpack.c.b16 %v5284, %v5284
      %v5317 = vpack.c.b16 %v5285, %v5285
      %v5318 = vpack.c.b16 %v5286, %v5286
      %v5319 = vpack.c.b16 %v5287, %v5287
      %v5320 = vpack.c.b16 %v5288, %v5288
      %v5321 = vpack.c.b16 %v5289, %v5289
      %v5322 = vpack.c.b16 %v5290, %v5290
      %v5323 = vpack.c.b16 %v5291, %v5291
      %v5324 = vpack.c.b16 %v5292, %v5292
      %v5325 = vpack.c.b16 %v5293, %v5293
      %v5326 = vpack.c.b16 %v5294, %v5294
      %v5327 = vpack.c.b16 %v5295, %v5295
      %v5328 = vpack.c.b16 %v5296, %v5296
      %v5329 = vpack.c.b16 %v5297, %v5297
      %v5330 = vpack.c.b16 %v5298, %v5298
      %v5331 = vpack.c.b16 %v5299, %v5299
      %v5332 = vpack.c.b16 %v5300, %v5300
      %v5333 = vpack.c.b16 %v5301, %v5301
      %v5334 = vpack.c.b16 %v5302, %v5302
      %v5335 = vpack.c.b16 %v5303, %v5303
      %v5336 = vpack.c.b16 %v5304, %v5304
      %v5337 = vpack.c.b16 %v5305, %v5305
      %v5338 = vpack.c.b16 %v5306, %v5306
      %v5340 = vshrl.u32 %v5307, 16
      %v5342 = vrot.slane %v5340, 7
      %v5343 = vshll.u32 %v5307, 16
      %v5345 = vor.u32 %v5342, %v5343
      %v5346 = vrot.slane %v5342, 4
      %v5348 = vshrl.u32 %v5308, 16
      %v5350 = vrot.slane %v5348, 7
      %v5351 = vshll.u32 %v5308, 16
      %v5353 = vor.u32 %v5350, %v5351
      %v5354 = vsel %vm548, %v5346, %v5353
      %v5355 = vrot.slane %v5350, 4
      %v5357 = vshrl.u32 %v5309, 16
      %v5359 = vrot.slane %v5357, 7
      %v5360 = vshll.u32 %v5309, 16
      %v5362 = vor.u32 %v5359, %v5360
      %v5363 = vrot.slane %v5359, 4
      %v5365 = vshrl.u32 %v5310, 16
      %v5367 = vrot.slane %v5365, 7
      %v5368 = vshll.u32 %v5310, 16
      %v5370 = vor.u32 %v5367, %v5368
      %v5371 = vsel %vm548, %v5363, %v5370
      %v5372 = vrot.slane %v5367, 4
      %v5374 = vshrl.u32 %v5311, 16
      %v5376 = vrot.slane %v5374, 7
      %v5377 = vshll.u32 %v5311, 16
      %v5379 = vor.u32 %v5376, %v5377
      %v5380 = vrot.slane %v5376, 4
      %v5382 = vshrl.u32 %v5312, 16
      %v5384 = vrot.slane %v5382, 7
      %v5385 = vshll.u32 %v5312, 16
      %v5387 = vor.u32 %v5384, %v5385
      %v5388 = vsel %vm548, %v5380, %v5387
      %v5389 = vrot.slane %v5384, 4
      %v5391 = vshrl.u32 %v5313, 16
      %v5393 = vrot.slane %v5391, 7
      %v5394 = vshll.u32 %v5313, 16
      %v5396 = vor.u32 %v5393, %v5394
      %v5397 = vrot.slane %v5393, 4
      %v5399 = vshrl.u32 %v5314, 16
      %v5401 = vrot.slane %v5399, 7
      %v5402 = vshll.u32 %v5314, 16
      %v5404 = vor.u32 %v5401, %v5402
      %v5405 = vsel %vm548, %v5397, %v5404
      %v5406 = vrot.slane %v5401, 4
      %v5408 = vshrl.u32 %v5315, 16
      %v5410 = vrot.slane %v5408, 7
      %v5411 = vshll.u32 %v5315, 16
      %v5413 = vor.u32 %v5410, %v5411
      %v5414 = vrot.slane %v5410, 4
      %v5416 = vshrl.u32 %v5316, 16
      %v5418 = vrot.slane %v5416, 7
      %v5419 = vshll.u32 %v5316, 16
      %v5421 = vor.u32 %v5418, %v5419
      %v5422 = vsel %vm548, %v5414, %v5421
      %v5423 = vrot.slane %v5418, 4
      %v5425 = vshrl.u32 %v5317, 16
      %v5427 = vrot.slane %v5425, 7
      %v5428 = vshll.u32 %v5317, 16
      %v5430 = vor.u32 %v5427, %v5428
      %v5431 = vrot.slane %v5427, 4
      %v5433 = vshrl.u32 %v5318, 16
      %v5435 = vrot.slane %v5433, 7
      %v5436 = vshll.u32 %v5318, 16
      %v5438 = vor.u32 %v5435, %v5436
      %v5439 = vsel %vm548, %v5431, %v5438
      %v5440 = vrot.slane %v5435, 4
      %v5442 = vshrl.u32 %v5319, 16
      %v5444 = vrot.slane %v5442, 7
      %v5445 = vshll.u32 %v5319, 16
      %v5447 = vor.u32 %v5444, %v5445
      %v5448 = vrot.slane %v5444, 4
      %v5450 = vshrl.u32 %v5320, 16
      %v5452 = vrot.slane %v5450, 7
      %v5453 = vshll.u32 %v5320, 16
      %v5455 = vor.u32 %v5452, %v5453
      %v5456 = vsel %vm548, %v5448, %v5455
      %v5457 = vrot.slane %v5452, 4
      %v5459 = vshrl.u32 %v5321, 16
      %v5461 = vrot.slane %v5459, 7
      %v5462 = vshll.u32 %v5321, 16
      %v5464 = vor.u32 %v5461, %v5462
      %v5465 = vrot.slane %v5461, 4
      %v5467 = vshrl.u32 %v5322, 16
      %v5469 = vrot.slane %v5467, 7
      %v5470 = vshll.u32 %v5322, 16
      %v5472 = vor.u32 %v5469, %v5470
      %v5473 = vsel %vm548, %v5465, %v5472
      %v5474 = vrot.slane %v5469, 4
      %v5476 = vshrl.u32 %v5323, 16
      %v5478 = vrot.slane %v5476, 7
      %v5479 = vshll.u32 %v5323, 16
      %v5481 = vor.u32 %v5478, %v5479
      %v5482 = vrot.slane %v5478, 4
      %v5484 = vshrl.u32 %v5324, 16
      %v5486 = vrot.slane %v5484, 7
      %v5487 = vshll.u32 %v5324, 16
      %v5489 = vor.u32 %v5486, %v5487
      %v5490 = vsel %vm548, %v5482, %v5489
      %v5491 = vrot.slane %v5486, 4
      %v5493 = vshrl.u32 %v5325, 16
      %v5495 = vrot.slane %v5493, 7
      %v5496 = vshll.u32 %v5325, 16
      %v5498 = vor.u32 %v5495, %v5496
      %v5499 = vrot.slane %v5495, 4
      %v5501 = vshrl.u32 %v5326, 16
      %v5503 = vrot.slane %v5501, 7
      %v5504 = vshll.u32 %v5326, 16
      %v5506 = vor.u32 %v5503, %v5504
      %v5507 = vsel %vm548, %v5499, %v5506
      %v5508 = vrot.slane %v5503, 4
      %v5510 = vshrl.u32 %v5327, 16
      %v5512 = vrot.slane %v5510, 7
      %v5513 = vshll.u32 %v5327, 16
      %v5515 = vor.u32 %v5512, %v5513
      %v5516 = vrot.slane %v5512, 4
      %v5518 = vshrl.u32 %v5328, 16
      %v5520 = vrot.slane %v5518, 7
      %v5521 = vshll.u32 %v5328, 16
      %v5523 = vor.u32 %v5520, %v5521
      %v5524 = vsel %vm548, %v5516, %v5523
      %v5525 = vrot.slane %v5520, 4
      %v5527 = vshrl.u32 %v5329, 16
      %v5529 = vrot.slane %v5527, 7
      %v5530 = vshll.u32 %v5329, 16
      %v5532 = vor.u32 %v5529, %v5530
      %v5533 = vrot.slane %v5529, 4
      %v5535 = vshrl.u32 %v5330, 16
      %v5537 = vrot.slane %v5535, 7
      %v5538 = vshll.u32 %v5330, 16
      %v5540 = vor.u32 %v5537, %v5538
      %v5541 = vsel %vm548, %v5533, %v5540
      %v5542 = vrot.slane %v5537, 4
      %v5544 = vshrl.u32 %v5331, 16
      %v5546 = vrot.slane %v5544, 7
      %v5547 = vshll.u32 %v5331, 16
      %v5549 = vor.u32 %v5546, %v5547
      %v5550 = vrot.slane %v5546, 4
      %v5552 = vshrl.u32 %v5332, 16
      %v5554 = vrot.slane %v5552, 7
      %v5555 = vshll.u32 %v5332, 16
      %v5557 = vor.u32 %v5554, %v5555
      %v5558 = vsel %vm548, %v5550, %v5557
      %v5559 = vrot.slane %v5554, 4
      %v5561 = vshrl.u32 %v5333, 16
      %v5563 = vrot.slane %v5561, 7
      %v5564 = vshll.u32 %v5333, 16
      %v5566 = vor.u32 %v5563, %v5564
      %v5567 = vrot.slane %v5563, 4
      %v5569 = vshrl.u32 %v5334, 16
      %v5571 = vrot.slane %v5569, 7
      %v5572 = vshll.u32 %v5334, 16
      %v5574 = vor.u32 %v5571, %v5572
      %v5575 = vsel %vm548, %v5567, %v5574
      %v5576 = vrot.slane %v5571, 4
      %v5578 = vshrl.u32 %v5335, 16
      %v5580 = vrot.slane %v5578, 7
      %v5581 = vshll.u32 %v5335, 16
      %v5583 = vor.u32 %v5580, %v5581
      %v5584 = vrot.slane %v5580, 4
      %v5586 = vshrl.u32 %v5336, 16
      %v5588 = vrot.slane %v5586, 7
      %v5589 = vshll.u32 %v5336, 16
      %v5591 = vor.u32 %v5588, %v5589
      %v5592 = vsel %vm548, %v5584, %v5591
      %v5593 = vrot.slane %v5588, 4
      %v5595 = vshrl.u32 %v5337, 16
      %v5597 = vrot.slane %v5595, 7
      %v5598 = vshll.u32 %v5337, 16
      %v5600 = vor.u32 %v5597, %v5598
      %v5601 = vrot.slane %v5597, 4
      %v5603 = vshrl.u32 %v5338, 16
      %v5605 = vrot.slane %v5603, 7
      %v5606 = vshll.u32 %v5338, 16
      %v5608 = vor.u32 %v5605, %v5606
      %v5609 = vsel %vm548, %v5601, %v5608
      %v5610 = vrot.slane %v5605, 4
      %s5659 = scalar_lea.vmem [#allocation3], 12
      %vm5660 = vcmask 1043456
      %vm5661 = vmand %vm5660, %vm344
      %v5662 = vld [vmem:[%s5659] sm:$0xf]
      %v5663 = vsel %vm5661, %v5345, %v5662
      %5664 = vst [vmem:[%s5659] sm:$0xf] %v5663
      %5665 = vst [vmem:[%s5659 + $0x4] sm:$0xf] %v5354
      %v5666 = vld [vmem:[%s5659 + $0x8] sm:$0x1]
      %v5667 = vsel %vm289, %v5355, %v5666
      %5668 = vst [vmem:[%s5659 + $0x8] sm:$0x1] %v5667
      %v5669 = vld [vmem:[%s5659 + $0xc] sm:$0xf]
      %v5670 = vsel %vm5661, %v5362, %v5669
      %5671 = vst [vmem:[%s5659 + $0xc] sm:$0xf] %v5670
      %5672 = vst [vmem:[%s5659 + $0x10] sm:$0xf] %v5371
      %v5673 = vld [vmem:[%s5659 + $0x14] sm:$0x1]
      %v5674 = vsel %vm289, %v5372, %v5673
      %5675 = vst [vmem:[%s5659 + $0x14] sm:$0x1] %v5674
      %v5676 = vld [vmem:[%s5659 + $0x18] sm:$0xf]
      %v5677 = vsel %vm5661, %v5379, %v5676
      %5678 = vst [vmem:[%s5659 + $0x18] sm:$0xf] %v5677
      %5679 = vst [vmem:[%s5659 + $0x1c] sm:$0xf] %v5388
      %v5680 = vld [vmem:[%s5659 + $0x20] sm:$0x1]
      %v5681 = vsel %vm289, %v5389, %v5680
      %5682 = vst [vmem:[%s5659 + $0x20] sm:$0x1] %v5681
      %v5683 = vld [vmem:[%s5659 + $0x24] sm:$0xf]
      %v5684 = vsel %vm5661, %v5396, %v5683
      %5685 = vst [vmem:[%s5659 + $0x24] sm:$0xf] %v5684
      %5686 = vst [vmem:[%s5659 + $0x28] sm:$0xf] %v5405
      %v5687 = vld [vmem:[%s5659 + $0x2c] sm:$0x1]
      %v5688 = vsel %vm289, %v5406, %v5687
      %5689 = vst [vmem:[%s5659 + $0x2c] sm:$0x1] %v5688
      %v5690 = vld [vmem:[%s5659 + $0x30] sm:$0xf]
      %v5691 = vsel %vm5661, %v5413, %v5690
      %5692 = vst [vmem:[%s5659 + $0x30] sm:$0xf] %v5691
      %5693 = vst [vmem:[%s5659 + $0x34] sm:$0xf] %v5422
      %v5694 = vld [vmem:[%s5659 + $0x38] sm:$0x1]
      %v5695 = vsel %vm289, %v5423, %v5694
      %5696 = vst [vmem:[%s5659 + $0x38] sm:$0x1] %v5695
      %v5697 = vld [vmem:[%s5659 + $0x3c] sm:$0xf]
      %v5698 = vsel %vm5661, %v5430, %v5697
      %5699 = vst [vmem:[%s5659 + $0x3c] sm:$0xf] %v5698
      %5700 = vst [vmem:[%s5659 + $0x40] sm:$0xf] %v5439
      %v5701 = vld [vmem:[%s5659 + $0x44] sm:$0x1]
      %v5702 = vsel %vm289, %v5440, %v5701
      %5703 = vst [vmem:[%s5659 + $0x44] sm:$0x1] %v5702
      %v5704 = vld [vmem:[%s5659 + $0x48] sm:$0xf]
      %v5705 = vsel %vm5661, %v5447, %v5704
      %5706 = vst [vmem:[%s5659 + $0x48] sm:$0xf] %v5705
      %5707 = vst [vmem:[%s5659 + $0x4c] sm:$0xf] %v5456
      %v5708 = vld [vmem:[%s5659 + $0x50] sm:$0x1]
      %v5709 = vsel %vm289, %v5457, %v5708
      %5710 = vst [vmem:[%s5659 + $0x50] sm:$0x1] %v5709
      %v5711 = vld [vmem:[%s5659 + $0x54] sm:$0xf]
      %v5712 = vsel %vm5661, %v5464, %v5711
      %5713 = vst [vmem:[%s5659 + $0x54] sm:$0xf] %v5712
      %5714 = vst [vmem:[%s5659 + $0x58] sm:$0xf] %v5473
      %v5715 = vld [vmem:[%s5659 + $0x5c] sm:$0x1]
      %v5716 = vsel %vm289, %v5474, %v5715
      %5717 = vst [vmem:[%s5659 + $0x5c] sm:$0x1] %v5716
      %v5718 = vld [vmem:[%s5659 + $0x60] sm:$0xf]
      %v5719 = vsel %vm5661, %v5481, %v5718
      %5720 = vst [vmem:[%s5659 + $0x60] sm:$0xf] %v5719
      %5721 = vst [vmem:[%s5659 + $0x64] sm:$0xf] %v5490
      %v5722 = vld [vmem:[%s5659 + $0x68] sm:$0x1]
      %v5723 = vsel %vm289, %v5491, %v5722
      %5724 = vst [vmem:[%s5659 + $0x68] sm:$0x1] %v5723
      %v5725 = vld [vmem:[%s5659 + $0x6c] sm:$0xf]
      %v5726 = vsel %vm5661, %v5498, %v5725
      %5727 = vst [vmem:[%s5659 + $0x6c] sm:$0xf] %v5726
      %5728 = vst [vmem:[%s5659 + $0x70] sm:$0xf] %v5507
      %v5729 = vld [vmem:[%s5659 + $0x74] sm:$0x1]
      %v5730 = vsel %vm289, %v5508, %v5729
      %5731 = vst [vmem:[%s5659 + $0x74] sm:$0x1] %v5730
      %v5732 = vld [vmem:[%s5659 + $0x78] sm:$0xf]
      %v5733 = vsel %vm5661, %v5515, %v5732
      %5734 = vst [vmem:[%s5659 + $0x78] sm:$0xf] %v5733
      %5735 = vst [vmem:[%s5659 + $0x7c] sm:$0xf] %v5524
      %v5736 = vld [vmem:[%s5659 + $0x80] sm:$0x1]
      %v5737 = vsel %vm289, %v5525, %v5736
      %5738 = vst [vmem:[%s5659 + $0x80] sm:$0x1] %v5737
      %v5739 = vld [vmem:[%s5659 + $0x84] sm:$0xf]
      %v5740 = vsel %vm5661, %v5532, %v5739
      %5741 = vst [vmem:[%s5659 + $0x84] sm:$0xf] %v5740
      %5742 = vst [vmem:[%s5659 + $0x88] sm:$0xf] %v5541
      %v5743 = vld [vmem:[%s5659 + $0x8c] sm:$0x1]
      %v5744 = vsel %vm289, %v5542, %v5743
      %5745 = vst [vmem:[%s5659 + $0x8c] sm:$0x1] %v5744
      %v5746 = vld [vmem:[%s5659 + $0x90] sm:$0xf]
      %v5747 = vsel %vm5661, %v5549, %v5746
      %5748 = vst [vmem:[%s5659 + $0x90] sm:$0xf] %v5747
      %5749 = vst [vmem:[%s5659 + $0x94] sm:$0xf] %v5558
      %v5750 = vld [vmem:[%s5659 + $0x98] sm:$0x1]
      %v5751 = vsel %vm289, %v5559, %v5750
      %5752 = vst [vmem:[%s5659 + $0x98] sm:$0x1] %v5751
      %v5753 = vld [vmem:[%s5659 + $0x9c] sm:$0xf]
      %v5754 = vsel %vm5661, %v5566, %v5753
      %5755 = vst [vmem:[%s5659 + $0x9c] sm:$0xf] %v5754
      %5756 = vst [vmem:[%s5659 + $0xa0] sm:$0xf] %v5575
      %v5757 = vld [vmem:[%s5659 + $0xa4] sm:$0x1]
      %v5758 = vsel %vm289, %v5576, %v5757
      %5759 = vst [vmem:[%s5659 + $0xa4] sm:$0x1] %v5758
      %v5760 = vld [vmem:[%s5659 + $0xa8] sm:$0xf]
      %v5761 = vsel %vm5661, %v5583, %v5760
      %5762 = vst [vmem:[%s5659 + $0xa8] sm:$0xf] %v5761
      %5763 = vst [vmem:[%s5659 + $0xac] sm:$0xf] %v5592
      %v5764 = vld [vmem:[%s5659 + $0xb0] sm:$0x1]
      %v5765 = vsel %vm289, %v5593, %v5764
      %5766 = vst [vmem:[%s5659 + $0xb0] sm:$0x1] %v5765
      %v5767 = vld [vmem:[%s5659 + $0xb4] sm:$0xf]
      %v5768 = vsel %vm5661, %v5600, %v5767
      %5769 = vst [vmem:[%s5659 + $0xb4] sm:$0xf] %v5768
      %5770 = vst [vmem:[%s5659 + $0xb8] sm:$0xf] %v5609
      %v5771 = vld [vmem:[%s5659 + $0xbc] sm:$0x1]
      %v5772 = vsel %vm289, %v5610, %v5771
      %5773 = vst [vmem:[%s5659 + $0xbc] sm:$0x1] %v5772
      %v5774 = vld [vmem:[%s5] sm:$0x1]
      %v5775 = vld [vmem:[%s6] sm:$0x1]
      %v5776 = vld [vmem:[#allocation3] sm:$0xf]
      %v5777 = vld [vmem:[#allocation3 + $0x4] sm:$0xf]
      %v5778 = vld [vmem:[#allocation3 + $0xc] sm:$0xf]
      %v5779 = vld [vmem:[#allocation3 + $0x10] sm:$0xf]
      %v5780 = vld [vmem:[#allocation3 + $0x18] sm:$0xf]
      %v5781 = vld [vmem:[#allocation3 + $0x1c] sm:$0xf]
      %v5782 = vld [vmem:[#allocation3 + $0x24] sm:$0xf]
      %v5783 = vld [vmem:[#allocation3 + $0x28] sm:$0xf]
      %v5784 = vld [vmem:[#allocation3 + $0x30] sm:$0xf]
      %v5785 = vld [vmem:[#allocation3 + $0x34] sm:$0xf]
      %v5786 = vld [vmem:[#allocation3 + $0x3c] sm:$0xf]
      %v5787 = vld [vmem:[#allocation3 + $0x40] sm:$0xf]
      %v5788 = vld [vmem:[#allocation3 + $0x48] sm:$0xf]
      %v5789 = vld [vmem:[#allocation3 + $0x4c] sm:$0xf]
      %v5790 = vld [vmem:[#allocation3 + $0x54] sm:$0xf]
      %v5791 = vld [vmem:[#allocation3 + $0x58] sm:$0xf]
      %v5792 = vld [vmem:[#allocation3 + $0x60] sm:$0xf]
      %v5793 = vld [vmem:[#allocation3 + $0x64] sm:$0xf]
      %v5794 = vld [vmem:[#allocation3 + $0x6c] sm:$0xf]
      %v5795 = vld [vmem:[#allocation3 + $0x70] sm:$0xf]
      %v5796 = vld [vmem:[#allocation3 + $0x78] sm:$0xf]
      %v5797 = vld [vmem:[#allocation3 + $0x7c] sm:$0xf]
      %v5798 = vld [vmem:[#allocation3 + $0x84] sm:$0xf]
      %v5799 = vld [vmem:[#allocation3 + $0x88] sm:$0xf]
      %v5800 = vld [vmem:[#allocation3 + $0x90] sm:$0xf]
      %v5801 = vld [vmem:[#allocation3 + $0x94] sm:$0xf]
      %v5802 = vld [vmem:[#allocation3 + $0x9c] sm:$0xf]
      %v5803 = vld [vmem:[#allocation3 + $0xa0] sm:$0xf]
      %v5804 = vld [vmem:[#allocation3 + $0xa8] sm:$0xf]
      %v5805 = vld [vmem:[#allocation3 + $0xac] sm:$0xf]
      %v5806 = vld [vmem:[#allocation3 + $0xb4] sm:$0xf]
      %v5807 = vld [vmem:[#allocation3 + $0xb8] sm:$0xf]
      %v5808 = vld [vmem:[#allocation3 + $0x8] sm:$0x1]
      %v5809 = vld [vmem:[#allocation3 + $0x14] sm:$0x1]
      %v5810 = vld [vmem:[#allocation3 + $0x20] sm:$0x1]
      %v5811 = vld [vmem:[#allocation3 + $0x2c] sm:$0x1]
      %v5812 = vld [vmem:[#allocation3 + $0x38] sm:$0x1]
      %v5813 = vld [vmem:[#allocation3 + $0x44] sm:$0x1]
      %v5814 = vld [vmem:[#allocation3 + $0x50] sm:$0x1]
      %v5815 = vld [vmem:[#allocation3 + $0x5c] sm:$0x1]
      %v5816 = vld [vmem:[#allocation3 + $0x68] sm:$0x1]
      %v5817 = vld [vmem:[#allocation3 + $0x74] sm:$0x1]
      %v5818 = vld [vmem:[#allocation3 + $0x80] sm:$0x1]
      %v5819 = vld [vmem:[#allocation3 + $0x8c] sm:$0x1]
      %v5820 = vld [vmem:[#allocation3 + $0x98] sm:$0x1]
      %v5821 = vld [vmem:[#allocation3 + $0xa4] sm:$0x1]
      %v5822 = vld [vmem:[#allocation3 + $0xb0] sm:$0x1]
      %v5823 = vld [vmem:[#allocation3 + $0xbc] sm:$0x1]
      %v5825 = vshrl.u32 %v5776, 16
      %v5827 = vrot.slane %v5825, 4
      %v5828 = vshll.u32 %v5776, 16
      %v5830 = vrot.slane %v5828, 5
      %v5831 = vor.u32 %v5827, %v5830
      %v5832 = vrot.slane %v5831, 4
      %v5834 = vshll.u32 %v5777, 16
      %v5836 = vrot.slane %v5834, 5
      %v5837 = vsel %vm1156, %v5832, %v5836
      %v5838 = vshrl.u32 %v5777, 16
      %v5840 = vrot.slane %v5838, 4
      %v5841 = vor.u32 %v5840, %v5836
      %v5842 = vrot.slane %v5841, 4
      %v5844 = vshll.u32 %v5808, 16
      %v5846 = vrot.slane %v5844, 5
      %v5847 = vsel %vm1156, %v5842, %v5846
      %v5849 = vshrl.u32 %v5778, 16
      %v5851 = vrot.slane %v5849, 4
      %v5852 = vshll.u32 %v5778, 16
      %v5854 = vrot.slane %v5852, 5
      %v5855 = vor.u32 %v5851, %v5854
      %v5856 = vrot.slane %v5855, 4
      %v5858 = vshll.u32 %v5779, 16
      %v5860 = vrot.slane %v5858, 5
      %v5861 = vsel %vm1156, %v5856, %v5860
      %v5862 = vshrl.u32 %v5779, 16
      %v5864 = vrot.slane %v5862, 4
      %v5865 = vor.u32 %v5864, %v5860
      %v5866 = vrot.slane %v5865, 4
      %v5868 = vshll.u32 %v5809, 16
      %v5870 = vrot.slane %v5868, 5
      %v5871 = vsel %vm1156, %v5866, %v5870
      %v5873 = vshrl.u32 %v5780, 16
      %v5875 = vrot.slane %v5873, 4
      %v5876 = vshll.u32 %v5780, 16
      %v5878 = vrot.slane %v5876, 5
      %v5879 = vor.u32 %v5875, %v5878
      %v5880 = vrot.slane %v5879, 4
      %v5882 = vshll.u32 %v5781, 16
      %v5884 = vrot.slane %v5882, 5
      %v5885 = vsel %vm1156, %v5880, %v5884
      %v5886 = vshrl.u32 %v5781, 16
      %v5888 = vrot.slane %v5886, 4
      %v5889 = vor.u32 %v5888, %v5884
      %v5890 = vrot.slane %v5889, 4
      %v5892 = vshll.u32 %v5810, 16
      %v5894 = vrot.slane %v5892, 5
      %v5895 = vsel %vm1156, %v5890, %v5894
      %v5897 = vshrl.u32 %v5782, 16
      %v5899 = vrot.slane %v5897, 4
      %v5900 = vshll.u32 %v5782, 16
      %v5902 = vrot.slane %v5900, 5
      %v5903 = vor.u32 %v5899, %v5902
      %v5904 = vrot.slane %v5903, 4
      %v5906 = vshll.u32 %v5783, 16
      %v5908 = vrot.slane %v5906, 5
      %v5909 = vsel %vm1156, %v5904, %v5908
      %v5910 = vshrl.u32 %v5783, 16
      %v5912 = vrot.slane %v5910, 4
      %v5913 = vor.u32 %v5912, %v5908
      %v5914 = vrot.slane %v5913, 4
      %v5916 = vshll.u32 %v5811, 16
      %v5918 = vrot.slane %v5916, 5
      %v5919 = vsel %vm1156, %v5914, %v5918
      %v5921 = vshrl.u32 %v5784, 16
      %v5923 = vrot.slane %v5921, 4
      %v5924 = vshll.u32 %v5784, 16
      %v5926 = vrot.slane %v5924, 5
      %v5927 = vor.u32 %v5923, %v5926
      %v5928 = vrot.slane %v5927, 4
      %v5930 = vshll.u32 %v5785, 16
      %v5932 = vrot.slane %v5930, 5
      %v5933 = vsel %vm1156, %v5928, %v5932
      %v5934 = vshrl.u32 %v5785, 16
      %v5936 = vrot.slane %v5934, 4
      %v5937 = vor.u32 %v5936, %v5932
      %v5938 = vrot.slane %v5937, 4
      %v5940 = vshll.u32 %v5812, 16
      %v5942 = vrot.slane %v5940, 5
      %v5943 = vsel %vm1156, %v5938, %v5942
      %v5945 = vshrl.u32 %v5786, 16
      %v5947 = vrot.slane %v5945, 4
      %v5948 = vshll.u32 %v5786, 16
      %v5950 = vrot.slane %v5948, 5
      %v5951 = vor.u32 %v5947, %v5950
      %v5952 = vrot.slane %v5951, 4
      %v5954 = vshll.u32 %v5787, 16
      %v5956 = vrot.slane %v5954, 5
      %v5957 = vsel %vm1156, %v5952, %v5956
      %v5958 = vshrl.u32 %v5787, 16
      %v5960 = vrot.slane %v5958, 4
      %v5961 = vor.u32 %v5960, %v5956
      %v5962 = vrot.slane %v5961, 4
      %v5964 = vshll.u32 %v5813, 16
      %v5966 = vrot.slane %v5964, 5
      %v5967 = vsel %vm1156, %v5962, %v5966
      %v5969 = vshrl.u32 %v5788, 16
      %v5971 = vrot.slane %v5969, 4
      %v5972 = vshll.u32 %v5788, 16
      %v5974 = vrot.slane %v5972, 5
      %v5975 = vor.u32 %v5971, %v5974
      %v5976 = vrot.slane %v5975, 4
      %v5978 = vshll.u32 %v5789, 16
      %v5980 = vrot.slane %v5978, 5
      %v5981 = vsel %vm1156, %v5976, %v5980
      %v5982 = vshrl.u32 %v5789, 16
      %v5984 = vrot.slane %v5982, 4
      %v5985 = vor.u32 %v5984, %v5980
      %v5986 = vrot.slane %v5985, 4
      %v5988 = vshll.u32 %v5814, 16
      %v5990 = vrot.slane %v5988, 5
      %v5991 = vsel %vm1156, %v5986, %v5990
      %v5993 = vshrl.u32 %v5790, 16
      %v5995 = vrot.slane %v5993, 4
      %v5996 = vshll.u32 %v5790, 16
      %v5998 = vrot.slane %v5996, 5
      %v5999 = vor.u32 %v5995, %v5998
      %v6000 = vrot.slane %v5999, 4
      %v6002 = vshll.u32 %v5791, 16
      %v6004 = vrot.slane %v6002, 5
      %v6005 = vsel %vm1156, %v6000, %v6004
      %v6006 = vshrl.u32 %v5791, 16
      %v6008 = vrot.slane %v6006, 4
      %v6009 = vor.u32 %v6008, %v6004
      %v6010 = vrot.slane %v6009, 4
      %v6012 = vshll.u32 %v5815, 16
      %v6014 = vrot.slane %v6012, 5
      %v6015 = vsel %vm1156, %v6010, %v6014
      %v6017 = vshrl.u32 %v5792, 16
      %v6019 = vrot.slane %v6017, 4
      %v6020 = vshll.u32 %v5792, 16
      %v6022 = vrot.slane %v6020, 5
      %v6023 = vor.u32 %v6019, %v6022
      %v6024 = vrot.slane %v6023, 4
      %v6026 = vshll.u32 %v5793, 16
      %v6028 = vrot.slane %v6026, 5
      %v6029 = vsel %vm1156, %v6024, %v6028
      %v6030 = vshrl.u32 %v5793, 16
      %v6032 = vrot.slane %v6030, 4
      %v6033 = vor.u32 %v6032, %v6028
      %v6034 = vrot.slane %v6033, 4
      %v6036 = vshll.u32 %v5816, 16
      %v6038 = vrot.slane %v6036, 5
      %v6039 = vsel %vm1156, %v6034, %v6038
      %v6041 = vshrl.u32 %v5794, 16
      %v6043 = vrot.slane %v6041, 4
      %v6044 = vshll.u32 %v5794, 16
      %v6046 = vrot.slane %v6044, 5
      %v6047 = vor.u32 %v6043, %v6046
      %v6048 = vrot.slane %v6047, 4
      %v6050 = vshll.u32 %v5795, 16
      %v6052 = vrot.slane %v6050, 5
      %v6053 = vsel %vm1156, %v6048, %v6052
      %v6054 = vshrl.u32 %v5795, 16
      %v6056 = vrot.slane %v6054, 4
      %v6057 = vor.u32 %v6056, %v6052
      %v6058 = vrot.slane %v6057, 4
      %v6060 = vshll.u32 %v5817, 16
      %v6062 = vrot.slane %v6060, 5
      %v6063 = vsel %vm1156, %v6058, %v6062
      %v6065 = vshrl.u32 %v5796, 16
      %v6067 = vrot.slane %v6065, 4
      %v6068 = vshll.u32 %v5796, 16
      %v6070 = vrot.slane %v6068, 5
      %v6071 = vor.u32 %v6067, %v6070
      %v6072 = vrot.slane %v6071, 4
      %v6074 = vshll.u32 %v5797, 16
      %v6076 = vrot.slane %v6074, 5
      %v6077 = vsel %vm1156, %v6072, %v6076
      %v6078 = vshrl.u32 %v5797, 16
      %v6080 = vrot.slane %v6078, 4
      %v6081 = vor.u32 %v6080, %v6076
      %v6082 = vrot.slane %v6081, 4
      %v6084 = vshll.u32 %v5818, 16
      %v6086 = vrot.slane %v6084, 5
      %v6087 = vsel %vm1156, %v6082, %v6086
      %v6089 = vshrl.u32 %v5798, 16
      %v6091 = vrot.slane %v6089, 4
      %v6092 = vshll.u32 %v5798, 16
      %v6094 = vrot.slane %v6092, 5
      %v6095 = vor.u32 %v6091, %v6094
      %v6096 = vrot.slane %v6095, 4
      %v6098 = vshll.u32 %v5799, 16
      %v6100 = vrot.slane %v6098, 5
      %v6101 = vsel %vm1156, %v6096, %v6100
      %v6102 = vshrl.u32 %v5799, 16
      %v6104 = vrot.slane %v6102, 4
      %v6105 = vor.u32 %v6104, %v6100
      %v6106 = vrot.slane %v6105, 4
      %v6108 = vshll.u32 %v5819, 16
      %v6110 = vrot.slane %v6108, 5
      %v6111 = vsel %vm1156, %v6106, %v6110
      %v6113 = vshrl.u32 %v5800, 16
      %v6115 = vrot.slane %v6113, 4
      %v6116 = vshll.u32 %v5800, 16
      %v6118 = vrot.slane %v6116, 5
      %v6119 = vor.u32 %v6115, %v6118
      %v6120 = vrot.slane %v6119, 4
      %v6122 = vshll.u32 %v5801, 16
      %v6124 = vrot.slane %v6122, 5
      %v6125 = vsel %vm1156, %v6120, %v6124
      %v6126 = vshrl.u32 %v5801, 16
      %v6128 = vrot.slane %v6126, 4
      %v6129 = vor.u32 %v6128, %v6124
      %v6130 = vrot.slane %v6129, 4
      %v6132 = vshll.u32 %v5820, 16
      %v6134 = vrot.slane %v6132, 5
      %v6135 = vsel %vm1156, %v6130, %v6134
      %v6137 = vshrl.u32 %v5802, 16
      %v6139 = vrot.slane %v6137, 4
      %v6140 = vshll.u32 %v5802, 16
      %v6142 = vrot.slane %v6140, 5
      %v6143 = vor.u32 %v6139, %v6142
      %v6144 = vrot.slane %v6143, 4
      %v6146 = vshll.u32 %v5803, 16
      %v6148 = vrot.slane %v6146, 5
      %v6149 = vsel %vm1156, %v6144, %v6148
      %v6150 = vshrl.u32 %v5803, 16
      %v6152 = vrot.slane %v6150, 4
      %v6153 = vor.u32 %v6152, %v6148
      %v6154 = vrot.slane %v6153, 4
      %v6156 = vshll.u32 %v5821, 16
      %v6158 = vrot.slane %v6156, 5
      %v6159 = vsel %vm1156, %v6154, %v6158
      %v6161 = vshrl.u32 %v5804, 16
      %v6163 = vrot.slane %v6161, 4
      %v6164 = vshll.u32 %v5804, 16
      %v6166 = vrot.slane %v6164, 5
      %v6167 = vor.u32 %v6163, %v6166
      %v6168 = vrot.slane %v6167, 4
      %v6170 = vshll.u32 %v5805, 16
      %v6172 = vrot.slane %v6170, 5
      %v6173 = vsel %vm1156, %v6168, %v6172
      %v6174 = vshrl.u32 %v5805, 16
      %v6176 = vrot.slane %v6174, 4
      %v6177 = vor.u32 %v6176, %v6172
      %v6178 = vrot.slane %v6177, 4
      %v6180 = vshll.u32 %v5822, 16
      %v6182 = vrot.slane %v6180, 5
      %v6183 = vsel %vm1156, %v6178, %v6182
      %v6185 = vshrl.u32 %v5806, 16
      %v6187 = vrot.slane %v6185, 4
      %v6188 = vshll.u32 %v5806, 16
      %v6190 = vrot.slane %v6188, 5
      %v6191 = vor.u32 %v6187, %v6190
      %v6192 = vrot.slane %v6191, 4
      %v6194 = vshll.u32 %v5807, 16
      %v6196 = vrot.slane %v6194, 5
      %v6197 = vsel %vm1156, %v6192, %v6196
      %v6198 = vshrl.u32 %v5807, 16
      %v6200 = vrot.slane %v6198, 4
      %v6201 = vor.u32 %v6200, %v6196
      %v6202 = vrot.slane %v6201, 4
      %v6204 = vshll.u32 %v5823, 16
      %v6206 = vrot.slane %v6204, 5
      %v6207 = vsel %vm1156, %v6202, %v6206
      %v6208 = vld [vmem:[#allocation3] sm:$0xe]
      %v6209 = vld [vmem:[#allocation3 + $0xc] sm:$0xe]
      %v6210 = vld [vmem:[#allocation3 + $0x18] sm:$0xe]
      %v6211 = vld [vmem:[#allocation3 + $0x24] sm:$0xe]
      %v6212 = vld [vmem:[#allocation3 + $0x30] sm:$0xe]
      %v6213 = vld [vmem:[#allocation3 + $0x3c] sm:$0xe]
      %v6214 = vld [vmem:[#allocation3 + $0x48] sm:$0xe]
      %v6215 = vld [vmem:[#allocation3 + $0x54] sm:$0xe]
      %v6216 = vld [vmem:[#allocation3 + $0x60] sm:$0xe]
      %v6217 = vld [vmem:[#allocation3 + $0x6c] sm:$0xe]
      %v6218 = vld [vmem:[#allocation3 + $0x78] sm:$0xe]
      %v6219 = vld [vmem:[#allocation3 + $0x84] sm:$0xe]
      %v6220 = vld [vmem:[#allocation3 + $0x90] sm:$0xe]
      %v6221 = vld [vmem:[#allocation3 + $0x9c] sm:$0xe]
      %v6222 = vld [vmem:[#allocation3 + $0xa8] sm:$0xe]
      %v6223 = vld [vmem:[#allocation3 + $0xb4] sm:$0xe]
      %v6272 = vrot.slane %v6208, 5
      %v6273 = vrot.slane %v6272, 4
      %v6274 = vrot.slane %v5777, 5
      %v6275 = vsel %vm1607, %v6273, %v6274
      %v6276 = vrot.slane %v6274, 4
      %v6277 = vrot.slane %v5808, 5
      %v6278 = vsel %vm1607, %v6276, %v6277
      %v6279 = vrot.slane %v6209, 5
      %v6280 = vrot.slane %v6279, 4
      %v6281 = vrot.slane %v5779, 5
      %v6282 = vsel %vm1607, %v6280, %v6281
      %v6283 = vrot.slane %v6281, 4
      %v6284 = vrot.slane %v5809, 5
      %v6285 = vsel %vm1607, %v6283, %v6284
      %v6286 = vrot.slane %v6210, 5
      %v6287 = vrot.slane %v6286, 4
      %v6288 = vrot.slane %v5781, 5
      %v6289 = vsel %vm1607, %v6287, %v6288
      %v6290 = vrot.slane %v6288, 4
      %v6291 = vrot.slane %v5810, 5
      %v6292 = vsel %vm1607, %v6290, %v6291
      %v6293 = vrot.slane %v6211, 5
      %v6294 = vrot.slane %v6293, 4
      %v6295 = vrot.slane %v5783, 5
      %v6296 = vsel %vm1607, %v6294, %v6295
      %v6297 = vrot.slane %v6295, 4
      %v6298 = vrot.slane %v5811, 5
      %v6299 = vsel %vm1607, %v6297, %v6298
      %v6300 = vrot.slane %v6212, 5
      %v6301 = vrot.slane %v6300, 4
      %v6302 = vrot.slane %v5785, 5
      %v6303 = vsel %vm1607, %v6301, %v6302
      %v6304 = vrot.slane %v6302, 4
      %v6305 = vrot.slane %v5812, 5
      %v6306 = vsel %vm1607, %v6304, %v6305
      %v6307 = vrot.slane %v6213, 5
      %v6308 = vrot.slane %v6307, 4
      %v6309 = vrot.slane %v5787, 5
      %v6310 = vsel %vm1607, %v6308, %v6309
      %v6311 = vrot.slane %v6309, 4
      %v6312 = vrot.slane %v5813, 5
      %v6313 = vsel %vm1607, %v6311, %v6312
      %v6314 = vrot.slane %v6214, 5
      %v6315 = vrot.slane %v6314, 4
      %v6316 = vrot.slane %v5789, 5
      %v6317 = vsel %vm1607, %v6315, %v6316
      %v6318 = vrot.slane %v6316, 4
      %v6319 = vrot.slane %v5814, 5
      %v6320 = vsel %vm1607, %v6318, %v6319
      %v6321 = vrot.slane %v6215, 5
      %v6322 = vrot.slane %v6321, 4
      %v6323 = vrot.slane %v5791, 5
      %v6324 = vsel %vm1607, %v6322, %v6323
      %v6325 = vrot.slane %v6323, 4
      %v6326 = vrot.slane %v5815, 5
      %v6327 = vsel %vm1607, %v6325, %v6326
      %v6328 = vrot.slane %v6216, 5
      %v6329 = vrot.slane %v6328, 4
      %v6330 = vrot.slane %v5793, 5
      %v6331 = vsel %vm1607, %v6329, %v6330
      %v6332 = vrot.slane %v6330, 4
      %v6333 = vrot.slane %v5816, 5
      %v6334 = vsel %vm1607, %v6332, %v6333
      %v6335 = vrot.slane %v6217, 5
      %v6336 = vrot.slane %v6335, 4
      %v6337 = vrot.slane %v5795, 5
      %v6338 = vsel %vm1607, %v6336, %v6337
      %v6339 = vrot.slane %v6337, 4
      %v6340 = vrot.slane %v5817, 5
      %v6341 = vsel %vm1607, %v6339, %v6340
      %v6342 = vrot.slane %v6218, 5
      %v6343 = vrot.slane %v6342, 4
      %v6344 = vrot.slane %v5797, 5
      %v6345 = vsel %vm1607, %v6343, %v6344
      %v6346 = vrot.slane %v6344, 4
      %v6347 = vrot.slane %v5818, 5
      %v6348 = vsel %vm1607, %v6346, %v6347
      %v6349 = vrot.slane %v6219, 5
      %v6350 = vrot.slane %v6349, 4
      %v6351 = vrot.slane %v5799, 5
      %v6352 = vsel %vm1607, %v6350, %v6351
      %v6353 = vrot.slane %v6351, 4
      %v6354 = vrot.slane %v5819, 5
      %v6355 = vsel %vm1607, %v6353, %v6354
      %v6356 = vrot.slane %v6220, 5
      %v6357 = vrot.slane %v6356, 4
      %v6358 = vrot.slane %v5801, 5
      %v6359 = vsel %vm1607, %v6357, %v6358
      %v6360 = vrot.slane %v6358, 4
      %v6361 = vrot.slane %v5820, 5
      %v6362 = vsel %vm1607, %v6360, %v6361
      %v6363 = vrot.slane %v6221, 5
      %v6364 = vrot.slane %v6363, 4
      %v6365 = vrot.slane %v5803, 5
      %v6366 = vsel %vm1607, %v6364, %v6365
      %v6367 = vrot.slane %v6365, 4
      %v6368 = vrot.slane %v5821, 5
      %v6369 = vsel %vm1607, %v6367, %v6368
      %v6370 = vrot.slane %v6222, 5
      %v6371 = vrot.slane %v6370, 4
      %v6372 = vrot.slane %v5805, 5
      %v6373 = vsel %vm1607, %v6371, %v6372
      %v6374 = vrot.slane %v6372, 4
      %v6375 = vrot.slane %v5822, 5
      %v6376 = vsel %vm1607, %v6374, %v6375
      %v6377 = vrot.slane %v6223, 5
      %v6378 = vrot.slane %v6377, 4
      %v6379 = vrot.slane %v5807, 5
      %v6380 = vsel %vm1607, %v6378, %v6379
      %v6381 = vrot.slane %v6379, 4
      %v6382 = vrot.slane %v5823, 5
      %v6383 = vsel %vm1607, %v6381, %v6382
      %v6400 = vunpack.c.l.b16 %v5776
      %v6401 = vunpack.c.l.b16 %v5777
      %v6402 = vunpack.c.l.b16 %v5778
      %v6403 = vunpack.c.l.b16 %v5779
      %v6404 = vunpack.c.l.b16 %v5780
      %v6405 = vunpack.c.l.b16 %v5781
      %v6406 = vunpack.c.l.b16 %v5782
      %v6407 = vunpack.c.l.b16 %v5783
      %v6408 = vunpack.c.l.b16 %v5784
      %v6409 = vunpack.c.l.b16 %v5785
      %v6410 = vunpack.c.l.b16 %v5786
      %v6411 = vunpack.c.l.b16 %v5787
      %v6412 = vunpack.c.l.b16 %v5788
      %v6413 = vunpack.c.l.b16 %v5789
      %v6414 = vunpack.c.l.b16 %v5790
      %v6415 = vunpack.c.l.b16 %v5791
      %v6416 = vunpack.c.l.b16 %v5792
      %v6417 = vunpack.c.l.b16 %v5793
      %v6418 = vunpack.c.l.b16 %v5794
      %v6419 = vunpack.c.l.b16 %v5795
      %v6420 = vunpack.c.l.b16 %v5796
      %v6421 = vunpack.c.l.b16 %v5797
      %v6422 = vunpack.c.l.b16 %v5798
      %v6423 = vunpack.c.l.b16 %v5799
      %v6424 = vunpack.c.l.b16 %v5800
      %v6425 = vunpack.c.l.b16 %v5801
      %v6426 = vunpack.c.l.b16 %v5802
      %v6427 = vunpack.c.l.b16 %v5803
      %v6428 = vunpack.c.l.b16 %v5804
      %v6429 = vunpack.c.l.b16 %v5805
      %v6430 = vunpack.c.l.b16 %v5806
      %v6431 = vunpack.c.l.b16 %v5807
      %v6432 = vpack.c.b16 %v6401, %v6400
      %v6433 = vpack.c.b16 %v6403, %v6402
      %v6434 = vpack.c.b16 %v6405, %v6404
      %v6435 = vpack.c.b16 %v6407, %v6406
      %v6436 = vpack.c.b16 %v6409, %v6408
      %v6437 = vpack.c.b16 %v6411, %v6410
      %v6438 = vpack.c.b16 %v6413, %v6412
      %v6439 = vpack.c.b16 %v6415, %v6414
      %v6440 = vpack.c.b16 %v6417, %v6416
      %v6441 = vpack.c.b16 %v6419, %v6418
      %v6442 = vpack.c.b16 %v6421, %v6420
      %v6443 = vpack.c.b16 %v6423, %v6422
      %v6444 = vpack.c.b16 %v6425, %v6424
      %v6445 = vpack.c.b16 %v6427, %v6426
      %v6446 = vpack.c.b16 %v6429, %v6428
      %v6447 = vpack.c.b16 %v6431, %v6430
      %v6464 = vunpack.c.l.b16 %v5837
      %v6465 = vunpack.c.l.b16 %v5847
      %v6466 = vunpack.c.l.b16 %v5861
      %v6467 = vunpack.c.l.b16 %v5871
      %v6468 = vunpack.c.l.b16 %v5885
      %v6469 = vunpack.c.l.b16 %v5895
      %v6470 = vunpack.c.l.b16 %v5909
      %v6471 = vunpack.c.l.b16 %v5919
      %v6472 = vunpack.c.l.b16 %v5933
      %v6473 = vunpack.c.l.b16 %v5943
      %v6474 = vunpack.c.l.b16 %v5957
      %v6475 = vunpack.c.l.b16 %v5967
      %v6476 = vunpack.c.l.b16 %v5981
      %v6477 = vunpack.c.l.b16 %v5991
      %v6478 = vunpack.c.l.b16 %v6005
      %v6479 = vunpack.c.l.b16 %v6015
      %v6480 = vunpack.c.l.b16 %v6029
      %v6481 = vunpack.c.l.b16 %v6039
      %v6482 = vunpack.c.l.b16 %v6053
      %v6483 = vunpack.c.l.b16 %v6063
      %v6484 = vunpack.c.l.b16 %v6077
      %v6485 = vunpack.c.l.b16 %v6087
      %v6486 = vunpack.c.l.b16 %v6101
      %v6487 = vunpack.c.l.b16 %v6111
      %v6488 = vunpack.c.l.b16 %v6125
      %v6489 = vunpack.c.l.b16 %v6135
      %v6490 = vunpack.c.l.b16 %v6149
      %v6491 = vunpack.c.l.b16 %v6159
      %v6492 = vunpack.c.l.b16 %v6173
      %v6493 = vunpack.c.l.b16 %v6183
      %v6494 = vunpack.c.l.b16 %v6197
      %v6495 = vunpack.c.l.b16 %v6207
      %v6496 = vpack.c.b16 %v6465, %v6464
      %v6497 = vpack.c.b16 %v6467, %v6466
      %v6498 = vpack.c.b16 %v6469, %v6468
      %v6499 = vpack.c.b16 %v6471, %v6470
      %v6500 = vpack.c.b16 %v6473, %v6472
      %v6501 = vpack.c.b16 %v6475, %v6474
      %v6502 = vpack.c.b16 %v6477, %v6476
      %v6503 = vpack.c.b16 %v6479, %v6478
      %v6504 = vpack.c.b16 %v6481, %v6480
      %v6505 = vpack.c.b16 %v6483, %v6482
      %v6506 = vpack.c.b16 %v6485, %v6484
      %v6507 = vpack.c.b16 %v6487, %v6486
      %v6508 = vpack.c.b16 %v6489, %v6488
      %v6509 = vpack.c.b16 %v6491, %v6490
      %v6510 = vpack.c.b16 %v6493, %v6492
      %v6511 = vpack.c.b16 %v6495, %v6494
      %v6528 = vunpack.c.l.b16 %v6275
      %v6529 = vunpack.c.l.b16 %v6278
      %v6530 = vunpack.c.l.b16 %v6282
      %v6531 = vunpack.c.l.b16 %v6285
      %v6532 = vunpack.c.l.b16 %v6289
      %v6533 = vunpack.c.l.b16 %v6292
      %v6534 = vunpack.c.l.b16 %v6296
      %v6535 = vunpack.c.l.b16 %v6299
      %v6536 = vunpack.c.l.b16 %v6303
      %v6537 = vunpack.c.l.b16 %v6306
      %v6538 = vunpack.c.l.b16 %v6310
      %v6539 = vunpack.c.l.b16 %v6313
      %v6540 = vunpack.c.l.b16 %v6317
      %v6541 = vunpack.c.l.b16 %v6320
      %v6542 = vunpack.c.l.b16 %v6324
      %v6543 = vunpack.c.l.b16 %v6327
      %v6544 = vunpack.c.l.b16 %v6331
      %v6545 = vunpack.c.l.b16 %v6334
      %v6546 = vunpack.c.l.b16 %v6338
      %v6547 = vunpack.c.l.b16 %v6341
      %v6548 = vunpack.c.l.b16 %v6345
      %v6549 = vunpack.c.l.b16 %v6348
      %v6550 = vunpack.c.l.b16 %v6352
      %v6551 = vunpack.c.l.b16 %v6355
      %v6552 = vunpack.c.l.b16 %v6359
      %v6553 = vunpack.c.l.b16 %v6362
      %v6554 = vunpack.c.l.b16 %v6366
      %v6555 = vunpack.c.l.b16 %v6369
      %v6556 = vunpack.c.l.b16 %v6373
      %v6557 = vunpack.c.l.b16 %v6376
      %v6558 = vunpack.c.l.b16 %v6380
      %v6559 = vunpack.c.l.b16 %v6383
      %v6560 = vpack.c.b16 %v6529, %v6528
      %v6561 = vpack.c.b16 %v6531, %v6530
      %v6562 = vpack.c.b16 %v6533, %v6532
      %v6563 = vpack.c.b16 %v6535, %v6534
      %v6564 = vpack.c.b16 %v6537, %v6536
      %v6565 = vpack.c.b16 %v6539, %v6538
      %v6566 = vpack.c.b16 %v6541, %v6540
      %v6567 = vpack.c.b16 %v6543, %v6542
      %v6568 = vpack.c.b16 %v6545, %v6544
      %v6569 = vpack.c.b16 %v6547, %v6546
      %v6570 = vpack.c.b16 %v6549, %v6548
      %v6571 = vpack.c.b16 %v6551, %v6550
      %v6572 = vpack.c.b16 %v6553, %v6552
      %v6573 = vpack.c.b16 %v6555, %v6554
      %v6574 = vpack.c.b16 %v6557, %v6556
      %v6575 = vpack.c.b16 %v6559, %v6558
      %v6592 = vld [vmem:[%s4] sm:$0xf]
      %v6593 = vld [vmem:[%s4 + $0x4] sm:$0xf]
      %v6594 = vld [vmem:[%s4 + $0x8] sm:$0xf]
      %v6595 = vld [vmem:[%s4 + $0xc] sm:$0xf]
      %v6596 = vld [vmem:[%s4 + $0x10] sm:$0xf]
      %v6597 = vld [vmem:[%s4 + $0x14] sm:$0xf]
      %v6598 = vld [vmem:[%s4 + $0x18] sm:$0xf]
      %v6599 = vld [vmem:[%s4 + $0x1c] sm:$0xf]
      %v6600 = vld [vmem:[%s4 + $0x20] sm:$0xf]
      %v6601 = vld [vmem:[%s4 + $0x24] sm:$0xf]
      %v6602 = vld [vmem:[%s4 + $0x28] sm:$0xf]
      %v6603 = vld [vmem:[%s4 + $0x2c] sm:$0xf]
      %v6604 = vld [vmem:[%s4 + $0x30] sm:$0xf]
      %v6605 = vld [vmem:[%s4 + $0x34] sm:$0xf]
      %v6606 = vld [vmem:[%s4 + $0x38] sm:$0xf]
      %v6607 = vld [vmem:[%s4 + $0x3c] sm:$0xf]
      %v6608 = vld [vmem:[%s4 + $0x40] sm:$0xf]
      %v6609 = vld [vmem:[%s4 + $0x44] sm:$0xf]
      %v6610 = vld [vmem:[%s4 + $0x48] sm:$0xf]
      %v6611 = vld [vmem:[%s4 + $0x4c] sm:$0xf]
      %v6612 = vld [vmem:[%s4 + $0x50] sm:$0xf]
      %v6613 = vld [vmem:[%s4 + $0x54] sm:$0xf]
      %v6614 = vld [vmem:[%s4 + $0x58] sm:$0xf]
      %v6615 = vld [vmem:[%s4 + $0x5c] sm:$0xf]
      %v6616 = vld [vmem:[%s4 + $0x60] sm:$0xf]
      %v6617 = vld [vmem:[%s4 + $0x64] sm:$0xf]
      %v6618 = vld [vmem:[%s4 + $0x68] sm:$0xf]
      %v6619 = vld [vmem:[%s4 + $0x6c] sm:$0xf]
      %v6620 = vld [vmem:[%s4 + $0x70] sm:$0xf]
      %v6621 = vld [vmem:[%s4 + $0x74] sm:$0xf]
      %v6622 = vld [vmem:[%s4 + $0x78] sm:$0xf]
      %v6623 = vld [vmem:[%s4 + $0x7c] sm:$0xf]
      %v6624 = vld [vmem:[%s4 + $0x80] sm:$0xf]
      %v6625 = vld [vmem:[%s4 + $0x84] sm:$0xf]
      %v6626 = vld [vmem:[%s4 + $0x88] sm:$0xf]
      %v6627 = vld [vmem:[%s4 + $0x8c] sm:$0xf]
      %v6628 = vld [vmem:[%s4 + $0x90] sm:$0xf]
      %v6629 = vld [vmem:[%s4 + $0x94] sm:$0xf]
      %v6630 = vld [vmem:[%s4 + $0x98] sm:$0xf]
      %v6631 = vld [vmem:[%s4 + $0x9c] sm:$0xf]
      %v6632 = vld [vmem:[%s4 + $0xa0] sm:$0xf]
      %v6633 = vld [vmem:[%s4 + $0xa4] sm:$0xf]
      %v6634 = vld [vmem:[%s4 + $0xa8] sm:$0xf]
      %v6635 = vld [vmem:[%s4 + $0xac] sm:$0xf]
      %v6636 = vld [vmem:[%s4 + $0xb0] sm:$0xf]
      %v6637 = vld [vmem:[%s4 + $0xb4] sm:$0xf]
      %v6638 = vld [vmem:[%s4 + $0xb8] sm:$0xf]
      %v6639 = vld [vmem:[%s4 + $0xbc] sm:$0xf]
      %v6640 = vld [vmem:[%s5659] sm:$0xf]
      %v6641 = vld [vmem:[%s5659 + $0x4] sm:$0xf]
      %v6642 = vld [vmem:[%s5659 + $0xc] sm:$0xf]
      %v6643 = vld [vmem:[%s5659 + $0x10] sm:$0xf]
      %v6644 = vld [vmem:[%s5659 + $0x18] sm:$0xf]
      %v6645 = vld [vmem:[%s5659 + $0x1c] sm:$0xf]
      %v6646 = vld [vmem:[%s5659 + $0x24] sm:$0xf]
      %v6647 = vld [vmem:[%s5659 + $0x28] sm:$0xf]
      %v6648 = vld [vmem:[%s5659 + $0x30] sm:$0xf]
      %v6649 = vld [vmem:[%s5659 + $0x34] sm:$0xf]
      %v6650 = vld [vmem:[%s5659 + $0x3c] sm:$0xf]
      %v6651 = vld [vmem:[%s5659 + $0x40] sm:$0xf]
      %v6652 = vld [vmem:[%s5659 + $0x48] sm:$0xf]
      %v6653 = vld [vmem:[%s5659 + $0x4c] sm:$0xf]
      %v6654 = vld [vmem:[%s5659 + $0x54] sm:$0xf]
      %v6655 = vld [vmem:[%s5659 + $0x58] sm:$0xf]
      %v6656 = vld [vmem:[%s5659 + $0x60] sm:$0xf]
      %v6657 = vld [vmem:[%s5659 + $0x64] sm:$0xf]
      %v6658 = vld [vmem:[%s5659 + $0x6c] sm:$0xf]
      %v6659 = vld [vmem:[%s5659 + $0x70] sm:$0xf]
      %v6660 = vld [vmem:[%s5659 + $0x78] sm:$0xf]
      %v6661 = vld [vmem:[%s5659 + $0x7c] sm:$0xf]
      %v6662 = vld [vmem:[%s5659 + $0x84] sm:$0xf]
      %v6663 = vld [vmem:[%s5659 + $0x88] sm:$0xf]
      %v6664 = vld [vmem:[%s5659 + $0x90] sm:$0xf]
      %v6665 = vld [vmem:[%s5659 + $0x94] sm:$0xf]
      %v6666 = vld [vmem:[%s5659 + $0x9c] sm:$0xf]
      %v6667 = vld [vmem:[%s5659 + $0xa0] sm:$0xf]
      %v6668 = vld [vmem:[%s5659 + $0xa8] sm:$0xf]
      %v6669 = vld [vmem:[%s5659 + $0xac] sm:$0xf]
      %v6670 = vld [vmem:[%s5659 + $0xb4] sm:$0xf]
      %v6671 = vld [vmem:[%s5659 + $0xb8] sm:$0xf]
      %v6672 = vld [vmem:[%s5659 + $0x8] sm:$0x1]
      %v6673 = vld [vmem:[%s5659 + $0x14] sm:$0x1]
      %v6674 = vld [vmem:[%s5659 + $0x20] sm:$0x1]
      %v6675 = vld [vmem:[%s5659 + $0x2c] sm:$0x1]
      %v6676 = vld [vmem:[%s5659 + $0x38] sm:$0x1]
      %v6677 = vld [vmem:[%s5659 + $0x44] sm:$0x1]
      %v6678 = vld [vmem:[%s5659 + $0x50] sm:$0x1]
      %v6679 = vld [vmem:[%s5659 + $0x5c] sm:$0x1]
      %v6680 = vld [vmem:[%s5659 + $0x68] sm:$0x1]
      %v6681 = vld [vmem:[%s5659 + $0x74] sm:$0x1]
      %v6682 = vld [vmem:[%s5659 + $0x80] sm:$0x1]
      %v6683 = vld [vmem:[%s5659 + $0x8c] sm:$0x1]
      %v6684 = vld [vmem:[%s5659 + $0x98] sm:$0x1]
      %v6685 = vld [vmem:[%s5659 + $0xa4] sm:$0x1]
      %v6686 = vld [vmem:[%s5659 + $0xb0] sm:$0x1]
      %v6687 = vld [vmem:[%s5659 + $0xbc] sm:$0x1]
      %v6689 = vshrl.u32 %v6640, 16
      %v6691 = vrot.slane %v6689, 4
      %v6692 = vshll.u32 %v6640, 16
      %v6694 = vrot.slane %v6692, 5
      %v6695 = vor.u32 %v6691, %v6694
      %v6696 = vrot.slane %v6695, 4
      %v6698 = vshll.u32 %v6641, 16
      %v6700 = vrot.slane %v6698, 5
      %v6701 = vsel %vm1156, %v6696, %v6700
      %v6702 = vshrl.u32 %v6641, 16
      %v6704 = vrot.slane %v6702, 4
      %v6705 = vor.u32 %v6704, %v6700
      %v6706 = vrot.slane %v6705, 4
      %v6708 = vshll.u32 %v6672, 16
      %v6710 = vrot.slane %v6708, 5
      %v6711 = vsel %vm1156, %v6706, %v6710
      %v6713 = vshrl.u32 %v6642, 16
      %v6715 = vrot.slane %v6713, 4
      %v6716 = vshll.u32 %v6642, 16
      %v6718 = vrot.slane %v6716, 5
      %v6719 = vor.u32 %v6715, %v6718
      %v6720 = vrot.slane %v6719, 4
      %v6722 = vshll.u32 %v6643, 16
      %v6724 = vrot.slane %v6722, 5
      %v6725 = vsel %vm1156, %v6720, %v6724
      %v6726 = vshrl.u32 %v6643, 16
      %v6728 = vrot.slane %v6726, 4
      %v6729 = vor.u32 %v6728, %v6724
      %v6730 = vrot.slane %v6729, 4
      %v6732 = vshll.u32 %v6673, 16
      %v6734 = vrot.slane %v6732, 5
      %v6735 = vsel %vm1156, %v6730, %v6734
      %v6737 = vshrl.u32 %v6644, 16
      %v6739 = vrot.slane %v6737, 4
      %v6740 = vshll.u32 %v6644, 16
      %v6742 = vrot.slane %v6740, 5
      %v6743 = vor.u32 %v6739, %v6742
      %v6744 = vrot.slane %v6743, 4
      %v6746 = vshll.u32 %v6645, 16
      %v6748 = vrot.slane %v6746, 5
      %v6749 = vsel %vm1156, %v6744, %v6748
      %v6750 = vshrl.u32 %v6645, 16
      %v6752 = vrot.slane %v6750, 4
      %v6753 = vor.u32 %v6752, %v6748
      %v6754 = vrot.slane %v6753, 4
      %v6756 = vshll.u32 %v6674, 16
      %v6758 = vrot.slane %v6756, 5
      %v6759 = vsel %vm1156, %v6754, %v6758
      %v6761 = vshrl.u32 %v6646, 16
      %v6763 = vrot.slane %v6761, 4
      %v6764 = vshll.u32 %v6646, 16
      %v6766 = vrot.slane %v6764, 5
      %v6767 = vor.u32 %v6763, %v6766
      %v6768 = vrot.slane %v6767, 4
      %v6770 = vshll.u32 %v6647, 16
      %v6772 = vrot.slane %v6770, 5
      %v6773 = vsel %vm1156, %v6768, %v6772
      %v6774 = vshrl.u32 %v6647, 16
      %v6776 = vrot.slane %v6774, 4
      %v6777 = vor.u32 %v6776, %v6772
      %v6778 = vrot.slane %v6777, 4
      %v6780 = vshll.u32 %v6675, 16
      %v6782 = vrot.slane %v6780, 5
      %v6783 = vsel %vm1156, %v6778, %v6782
      %v6785 = vshrl.u32 %v6648, 16
      %v6787 = vrot.slane %v6785, 4
      %v6788 = vshll.u32 %v6648, 16
      %v6790 = vrot.slane %v6788, 5
      %v6791 = vor.u32 %v6787, %v6790
      %v6792 = vrot.slane %v6791, 4
      %v6794 = vshll.u32 %v6649, 16
      %v6796 = vrot.slane %v6794, 5
      %v6797 = vsel %vm1156, %v6792, %v6796
      %v6798 = vshrl.u32 %v6649, 16
      %v6800 = vrot.slane %v6798, 4
      %v6801 = vor.u32 %v6800, %v6796
      %v6802 = vrot.slane %v6801, 4
      %v6804 = vshll.u32 %v6676, 16
      %v6806 = vrot.slane %v6804, 5
      %v6807 = vsel %vm1156, %v6802, %v6806
      %v6809 = vshrl.u32 %v6650, 16
      %v6811 = vrot.slane %v6809, 4
      %v6812 = vshll.u32 %v6650, 16
      %v6814 = vrot.slane %v6812, 5
      %v6815 = vor.u32 %v6811, %v6814
      %v6816 = vrot.slane %v6815, 4
      %v6818 = vshll.u32 %v6651, 16
      %v6820 = vrot.slane %v6818, 5
      %v6821 = vsel %vm1156, %v6816, %v6820
      %v6822 = vshrl.u32 %v6651, 16
      %v6824 = vrot.slane %v6822, 4
      %v6825 = vor.u32 %v6824, %v6820
      %v6826 = vrot.slane %v6825, 4
      %v6828 = vshll.u32 %v6677, 16
      %v6830 = vrot.slane %v6828, 5
      %v6831 = vsel %vm1156, %v6826, %v6830
      %v6833 = vshrl.u32 %v6652, 16
      %v6835 = vrot.slane %v6833, 4
      %v6836 = vshll.u32 %v6652, 16
      %v6838 = vrot.slane %v6836, 5
      %v6839 = vor.u32 %v6835, %v6838
      %v6840 = vrot.slane %v6839, 4
      %v6842 = vshll.u32 %v6653, 16
      %v6844 = vrot.slane %v6842, 5
      %v6845 = vsel %vm1156, %v6840, %v6844
      %v6846 = vshrl.u32 %v6653, 16
      %v6848 = vrot.slane %v6846, 4
      %v6849 = vor.u32 %v6848, %v6844
      %v6850 = vrot.slane %v6849, 4
      %v6852 = vshll.u32 %v6678, 16
      %v6854 = vrot.slane %v6852, 5
      %v6855 = vsel %vm1156, %v6850, %v6854
      %v6857 = vshrl.u32 %v6654, 16
      %v6859 = vrot.slane %v6857, 4
      %v6860 = vshll.u32 %v6654, 16
      %v6862 = vrot.slane %v6860, 5
      %v6863 = vor.u32 %v6859, %v6862
      %v6864 = vrot.slane %v6863, 4
      %v6866 = vshll.u32 %v6655, 16
      %v6868 = vrot.slane %v6866, 5
      %v6869 = vsel %vm1156, %v6864, %v6868
      %v6870 = vshrl.u32 %v6655, 16
      %v6872 = vrot.slane %v6870, 4
      %v6873 = vor.u32 %v6872, %v6868
      %v6874 = vrot.slane %v6873, 4
      %v6876 = vshll.u32 %v6679, 16
      %v6878 = vrot.slane %v6876, 5
      %v6879 = vsel %vm1156, %v6874, %v6878
      %v6881 = vshrl.u32 %v6656, 16
      %v6883 = vrot.slane %v6881, 4
      %v6884 = vshll.u32 %v6656, 16
      %v6886 = vrot.slane %v6884, 5
      %v6887 = vor.u32 %v6883, %v6886
      %v6888 = vrot.slane %v6887, 4
      %v6890 = vshll.u32 %v6657, 16
      %v6892 = vrot.slane %v6890, 5
      %v6893 = vsel %vm1156, %v6888, %v6892
      %v6894 = vshrl.u32 %v6657, 16
      %v6896 = vrot.slane %v6894, 4
      %v6897 = vor.u32 %v6896, %v6892
      %v6898 = vrot.slane %v6897, 4
      %v6900 = vshll.u32 %v6680, 16
      %v6902 = vrot.slane %v6900, 5
      %v6903 = vsel %vm1156, %v6898, %v6902
      %v6905 = vshrl.u32 %v6658, 16
      %v6907 = vrot.slane %v6905, 4
      %v6908 = vshll.u32 %v6658, 16
      %v6910 = vrot.slane %v6908, 5
      %v6911 = vor.u32 %v6907, %v6910
      %v6912 = vrot.slane %v6911, 4
      %v6914 = vshll.u32 %v6659, 16
      %v6916 = vrot.slane %v6914, 5
      %v6917 = vsel %vm1156, %v6912, %v6916
      %v6918 = vshrl.u32 %v6659, 16
      %v6920 = vrot.slane %v6918, 4
      %v6921 = vor.u32 %v6920, %v6916
      %v6922 = vrot.slane %v6921, 4
      %v6924 = vshll.u32 %v6681, 16
      %v6926 = vrot.slane %v6924, 5
      %v6927 = vsel %vm1156, %v6922, %v6926
      %v6929 = vshrl.u32 %v6660, 16
      %v6931 = vrot.slane %v6929, 4
      %v6932 = vshll.u32 %v6660, 16
      %v6934 = vrot.slane %v6932, 5
      %v6935 = vor.u32 %v6931, %v6934
      %v6936 = vrot.slane %v6935, 4
      %v6938 = vshll.u32 %v6661, 16
      %v6940 = vrot.slane %v6938, 5
      %v6941 = vsel %vm1156, %v6936, %v6940
      %v6942 = vshrl.u32 %v6661, 16
      %v6944 = vrot.slane %v6942, 4
      %v6945 = vor.u32 %v6944, %v6940
      %v6946 = vrot.slane %v6945, 4
      %v6948 = vshll.u32 %v6682, 16
      %v6950 = vrot.slane %v6948, 5
      %v6951 = vsel %vm1156, %v6946, %v6950
      %v6953 = vshrl.u32 %v6662, 16
      %v6955 = vrot.slane %v6953, 4
      %v6956 = vshll.u32 %v6662, 16
      %v6958 = vrot.slane %v6956, 5
      %v6959 = vor.u32 %v6955, %v6958
      %v6960 = vrot.slane %v6959, 4
      %v6962 = vshll.u32 %v6663, 16
      %v6964 = vrot.slane %v6962, 5
      %v6965 = vsel %vm1156, %v6960, %v6964
      %v6966 = vshrl.u32 %v6663, 16
      %v6968 = vrot.slane %v6966, 4
      %v6969 = vor.u32 %v6968, %v6964
      %v6970 = vrot.slane %v6969, 4
      %v6972 = vshll.u32 %v6683, 16
      %v6974 = vrot.slane %v6972, 5
      %v6975 = vsel %vm1156, %v6970, %v6974
      %v6977 = vshrl.u32 %v6664, 16
      %v6979 = vrot.slane %v6977, 4
      %v6980 = vshll.u32 %v6664, 16
      %v6982 = vrot.slane %v6980, 5
      %v6983 = vor.u32 %v6979, %v6982
      %v6984 = vrot.slane %v6983, 4
      %v6986 = vshll.u32 %v6665, 16
      %v6988 = vrot.slane %v6986, 5
      %v6989 = vsel %vm1156, %v6984, %v6988
      %v6990 = vshrl.u32 %v6665, 16
      %v6992 = vrot.slane %v6990, 4
      %v6993 = vor.u32 %v6992, %v6988
      %v6994 = vrot.slane %v6993, 4
      %v6996 = vshll.u32 %v6684, 16
      %v6998 = vrot.slane %v6996, 5
      %v6999 = vsel %vm1156, %v6994, %v6998
      %v7001 = vshrl.u32 %v6666, 16
      %v7003 = vrot.slane %v7001, 4
      %v7004 = vshll.u32 %v6666, 16
      %v7006 = vrot.slane %v7004, 5
      %v7007 = vor.u32 %v7003, %v7006
      %v7008 = vrot.slane %v7007, 4
      %v7010 = vshll.u32 %v6667, 16
      %v7012 = vrot.slane %v7010, 5
      %v7013 = vsel %vm1156, %v7008, %v7012
      %v7014 = vshrl.u32 %v6667, 16
      %v7016 = vrot.slane %v7014, 4
      %v7017 = vor.u32 %v7016, %v7012
      %v7018 = vrot.slane %v7017, 4
      %v7020 = vshll.u32 %v6685, 16
      %v7022 = vrot.slane %v7020, 5
      %v7023 = vsel %vm1156, %v7018, %v7022
      %v7025 = vshrl.u32 %v6668, 16
      %v7027 = vrot.slane %v7025, 4
      %v7028 = vshll.u32 %v6668, 16
      %v7030 = vrot.slane %v7028, 5
      %v7031 = vor.u32 %v7027, %v7030
      %v7032 = vrot.slane %v7031, 4
      %v7034 = vshll.u32 %v6669, 16
      %v7036 = vrot.slane %v7034, 5
      %v7037 = vsel %vm1156, %v7032, %v7036
      %v7038 = vshrl.u32 %v6669, 16
      %v7040 = vrot.slane %v7038, 4
      %v7041 = vor.u32 %v7040, %v7036
      %v7042 = vrot.slane %v7041, 4
      %v7044 = vshll.u32 %v6686, 16
      %v7046 = vrot.slane %v7044, 5
      %v7047 = vsel %vm1156, %v7042, %v7046
      %v7049 = vshrl.u32 %v6670, 16
      %v7051 = vrot.slane %v7049, 4
      %v7052 = vshll.u32 %v6670, 16
      %v7054 = vrot.slane %v7052, 5
      %v7055 = vor.u32 %v7051, %v7054
      %v7056 = vrot.slane %v7055, 4
      %v7058 = vshll.u32 %v6671, 16
      %v7060 = vrot.slane %v7058, 5
      %v7061 = vsel %vm1156, %v7056, %v7060
      %v7062 = vshrl.u32 %v6671, 16
      %v7064 = vrot.slane %v7062, 4
      %v7065 = vor.u32 %v7064, %v7060
      %v7066 = vrot.slane %v7065, 4
      %v7068 = vshll.u32 %v6687, 16
      %v7070 = vrot.slane %v7068, 5
      %v7071 = vsel %vm1156, %v7066, %v7070
      %v7072 = vld [vmem:[%s5659] sm:$0xe]
      %v7073 = vld [vmem:[%s5659 + $0xc] sm:$0xe]
      %v7074 = vld [vmem:[%s5659 + $0x18] sm:$0xe]
      %v7075 = vld [vmem:[%s5659 + $0x24] sm:$0xe]
      %v7076 = vld [vmem:[%s5659 + $0x30] sm:$0xe]
      %v7077 = vld [vmem:[%s5659 + $0x3c] sm:$0xe]
      %v7078 = vld [vmem:[%s5659 + $0x48] sm:$0xe]
      %v7079 = vld [vmem:[%s5659 + $0x54] sm:$0xe]
      %v7080 = vld [vmem:[%s5659 + $0x60] sm:$0xe]
      %v7081 = vld [vmem:[%s5659 + $0x6c] sm:$0xe]
      %v7082 = vld [vmem:[%s5659 + $0x78] sm:$0xe]
      %v7083 = vld [vmem:[%s5659 + $0x84] sm:$0xe]
      %v7084 = vld [vmem:[%s5659 + $0x90] sm:$0xe]
      %v7085 = vld [vmem:[%s5659 + $0x9c] sm:$0xe]
      %v7086 = vld [vmem:[%s5659 + $0xa8] sm:$0xe]
      %v7087 = vld [vmem:[%s5659 + $0xb4] sm:$0xe]
      %v7136 = vrot.slane %v7072, 5
      %v7137 = vrot.slane %v7136, 4
      %v7138 = vrot.slane %v6641, 5
      %v7139 = vsel %vm1607, %v7137, %v7138
      %v7140 = vrot.slane %v7138, 4
      %v7141 = vrot.slane %v6672, 5
      %v7142 = vsel %vm1607, %v7140, %v7141
      %v7143 = vrot.slane %v7073, 5
      %v7144 = vrot.slane %v7143, 4
      %v7145 = vrot.slane %v6643, 5
      %v7146 = vsel %vm1607, %v7144, %v7145
      %v7147 = vrot.slane %v7145, 4
      %v7148 = vrot.slane %v6673, 5
      %v7149 = vsel %vm1607, %v7147, %v7148
      %v7150 = vrot.slane %v7074, 5
      %v7151 = vrot.slane %v7150, 4
      %v7152 = vrot.slane %v6645, 5
      %v7153 = vsel %vm1607, %v7151, %v7152
      %v7154 = vrot.slane %v7152, 4
      %v7155 = vrot.slane %v6674, 5
      %v7156 = vsel %vm1607, %v7154, %v7155
      %v7157 = vrot.slane %v7075, 5
      %v7158 = vrot.slane %v7157, 4
      %v7159 = vrot.slane %v6647, 5
      %v7160 = vsel %vm1607, %v7158, %v7159
      %v7161 = vrot.slane %v7159, 4
      %v7162 = vrot.slane %v6675, 5
      %v7163 = vsel %vm1607, %v7161, %v7162
      %v7164 = vrot.slane %v7076, 5
      %v7165 = vrot.slane %v7164, 4
      %v7166 = vrot.slane %v6649, 5
      %v7167 = vsel %vm1607, %v7165, %v7166
      %v7168 = vrot.slane %v7166, 4
      %v7169 = vrot.slane %v6676, 5
      %v7170 = vsel %vm1607, %v7168, %v7169
      %v7171 = vrot.slane %v7077, 5
      %v7172 = vrot.slane %v7171, 4
      %v7173 = vrot.slane %v6651, 5
      %v7174 = vsel %vm1607, %v7172, %v7173
      %v7175 = vrot.slane %v7173, 4
      %v7176 = vrot.slane %v6677, 5
      %v7177 = vsel %vm1607, %v7175, %v7176
      %v7178 = vrot.slane %v7078, 5
      %v7179 = vrot.slane %v7178, 4
      %v7180 = vrot.slane %v6653, 5
      %v7181 = vsel %vm1607, %v7179, %v7180
      %v7182 = vrot.slane %v7180, 4
      %v7183 = vrot.slane %v6678, 5
      %v7184 = vsel %vm1607, %v7182, %v7183
      %v7185 = vrot.slane %v7079, 5
      %v7186 = vrot.slane %v7185, 4
      %v7187 = vrot.slane %v6655, 5
      %v7188 = vsel %vm1607, %v7186, %v7187
      %v7189 = vrot.slane %v7187, 4
      %v7190 = vrot.slane %v6679, 5
      %v7191 = vsel %vm1607, %v7189, %v7190
      %v7192 = vrot.slane %v7080, 5
      %v7193 = vrot.slane %v7192, 4
      %v7194 = vrot.slane %v6657, 5
      %v7195 = vsel %vm1607, %v7193, %v7194
      %v7196 = vrot.slane %v7194, 4
      %v7197 = vrot.slane %v6680, 5
      %v7198 = vsel %vm1607, %v7196, %v7197
      %v7199 = vrot.slane %v7081, 5
      %v7200 = vrot.slane %v7199, 4
      %v7201 = vrot.slane %v6659, 5
      %v7202 = vsel %vm1607, %v7200, %v7201
      %v7203 = vrot.slane %v7201, 4
      %v7204 = vrot.slane %v6681, 5
      %v7205 = vsel %vm1607, %v7203, %v7204
      %v7206 = vrot.slane %v7082, 5
      %v7207 = vrot.slane %v7206, 4
      %v7208 = vrot.slane %v6661, 5
      %v7209 = vsel %vm1607, %v7207, %v7208
      %v7210 = vrot.slane %v7208, 4
      %v7211 = vrot.slane %v6682, 5
      %v7212 = vsel %vm1607, %v7210, %v7211
      %v7213 = vrot.slane %v7083, 5
      %v7214 = vrot.slane %v7213, 4
      %v7215 = vrot.slane %v6663, 5
      %v7216 = vsel %vm1607, %v7214, %v7215
      %v7217 = vrot.slane %v7215, 4
      %v7218 = vrot.slane %v6683, 5
      %v7219 = vsel %vm1607, %v7217, %v7218
      %v7220 = vrot.slane %v7084, 5
      %v7221 = vrot.slane %v7220, 4
      %v7222 = vrot.slane %v6665, 5
      %v7223 = vsel %vm1607, %v7221, %v7222
      %v7224 = vrot.slane %v7222, 4
      %v7225 = vrot.slane %v6684, 5
      %v7226 = vsel %vm1607, %v7224, %v7225
      %v7227 = vrot.slane %v7085, 5
      %v7228 = vrot.slane %v7227, 4
      %v7229 = vrot.slane %v6667, 5
      %v7230 = vsel %vm1607, %v7228, %v7229
      %v7231 = vrot.slane %v7229, 4
      %v7232 = vrot.slane %v6685, 5
      %v7233 = vsel %vm1607, %v7231, %v7232
      %v7234 = vrot.slane %v7086, 5
      %v7235 = vrot.slane %v7234, 4
      %v7236 = vrot.slane %v6669, 5
      %v7237 = vsel %vm1607, %v7235, %v7236
      %v7238 = vrot.slane %v7236, 4
      %v7239 = vrot.slane %v6686, 5
      %v7240 = vsel %vm1607, %v7238, %v7239
      %v7241 = vrot.slane %v7087, 5
      %v7242 = vrot.slane %v7241, 4
      %v7243 = vrot.slane %v6671, 5
      %v7244 = vsel %vm1607, %v7242, %v7243
      %v7245 = vrot.slane %v7243, 4
      %v7246 = vrot.slane %v6687, 5
      %v7247 = vsel %vm1607, %v7245, %v7246
      %v7264 = vunpack.c.l.b16 %v6640
      %v7265 = vunpack.c.l.b16 %v6641
      %v7266 = vunpack.c.l.b16 %v6642
      %v7267 = vunpack.c.l.b16 %v6643
      %v7268 = vunpack.c.l.b16 %v6644
      %v7269 = vunpack.c.l.b16 %v6645
      %v7270 = vunpack.c.l.b16 %v6646
      %v7271 = vunpack.c.l.b16 %v6647
      %v7272 = vunpack.c.l.b16 %v6648
      %v7273 = vunpack.c.l.b16 %v6649
      %v7274 = vunpack.c.l.b16 %v6650
      %v7275 = vunpack.c.l.b16 %v6651
      %v7276 = vunpack.c.l.b16 %v6652
      %v7277 = vunpack.c.l.b16 %v6653
      %v7278 = vunpack.c.l.b16 %v6654
      %v7279 = vunpack.c.l.b16 %v6655
      %v7280 = vunpack.c.l.b16 %v6656
      %v7281 = vunpack.c.l.b16 %v6657
      %v7282 = vunpack.c.l.b16 %v6658
      %v7283 = vunpack.c.l.b16 %v6659
      %v7284 = vunpack.c.l.b16 %v6660
      %v7285 = vunpack.c.l.b16 %v6661
      %v7286 = vunpack.c.l.b16 %v6662
      %v7287 = vunpack.c.l.b16 %v6663
      %v7288 = vunpack.c.l.b16 %v6664
      %v7289 = vunpack.c.l.b16 %v6665
      %v7290 = vunpack.c.l.b16 %v6666
      %v7291 = vunpack.c.l.b16 %v6667
      %v7292 = vunpack.c.l.b16 %v6668
      %v7293 = vunpack.c.l.b16 %v6669
      %v7294 = vunpack.c.l.b16 %v6670
      %v7295 = vunpack.c.l.b16 %v6671
      %v7296 = vpack.c.b16 %v7265, %v7264
      %v7297 = vpack.c.b16 %v7267, %v7266
      %v7298 = vpack.c.b16 %v7269, %v7268
      %v7299 = vpack.c.b16 %v7271, %v7270
      %v7300 = vpack.c.b16 %v7273, %v7272
      %v7301 = vpack.c.b16 %v7275, %v7274
      %v7302 = vpack.c.b16 %v7277, %v7276
      %v7303 = vpack.c.b16 %v7279, %v7278
      %v7304 = vpack.c.b16 %v7281, %v7280
      %v7305 = vpack.c.b16 %v7283, %v7282
      %v7306 = vpack.c.b16 %v7285, %v7284
      %v7307 = vpack.c.b16 %v7287, %v7286
      %v7308 = vpack.c.b16 %v7289, %v7288
      %v7309 = vpack.c.b16 %v7291, %v7290
      %v7310 = vpack.c.b16 %v7293, %v7292
      %v7311 = vpack.c.b16 %v7295, %v7294
      %v7328 = vunpack.c.l.b16 %v6701
      %v7329 = vunpack.c.l.b16 %v6711
      %v7330 = vunpack.c.l.b16 %v6725
      %v7331 = vunpack.c.l.b16 %v6735
      %v7332 = vunpack.c.l.b16 %v6749
      %v7333 = vunpack.c.l.b16 %v6759
      %v7334 = vunpack.c.l.b16 %v6773
      %v7335 = vunpack.c.l.b16 %v6783
      %v7336 = vunpack.c.l.b16 %v6797
      %v7337 = vunpack.c.l.b16 %v6807
      %v7338 = vunpack.c.l.b16 %v6821
      %v7339 = vunpack.c.l.b16 %v6831
      %v7340 = vunpack.c.l.b16 %v6845
      %v7341 = vunpack.c.l.b16 %v6855
      %v7342 = vunpack.c.l.b16 %v6869
      %v7343 = vunpack.c.l.b16 %v6879
      %v7344 = vunpack.c.l.b16 %v6893
      %v7345 = vunpack.c.l.b16 %v6903
      %v7346 = vunpack.c.l.b16 %v6917
      %v7347 = vunpack.c.l.b16 %v6927
      %v7348 = vunpack.c.l.b16 %v6941
      %v7349 = vunpack.c.l.b16 %v6951
      %v7350 = vunpack.c.l.b16 %v6965
      %v7351 = vunpack.c.l.b16 %v6975
      %v7352 = vunpack.c.l.b16 %v6989
      %v7353 = vunpack.c.l.b16 %v6999
      %v7354 = vunpack.c.l.b16 %v7013
      %v7355 = vunpack.c.l.b16 %v7023
      %v7356 = vunpack.c.l.b16 %v7037
      %v7357 = vunpack.c.l.b16 %v7047
      %v7358 = vunpack.c.l.b16 %v7061
      %v7359 = vunpack.c.l.b16 %v7071
      %v7360 = vpack.c.b16 %v7329, %v7328
      %v7361 = vpack.c.b16 %v7331, %v7330
      %v7362 = vpack.c.b16 %v7333, %v7332
      %v7363 = vpack.c.b16 %v7335, %v7334
      %v7364 = vpack.c.b16 %v7337, %v7336
      %v7365 = vpack.c.b16 %v7339, %v7338
      %v7366 = vpack.c.b16 %v7341, %v7340
      %v7367 = vpack.c.b16 %v7343, %v7342
      %v7368 = vpack.c.b16 %v7345, %v7344
      %v7369 = vpack.c.b16 %v7347, %v7346
      %v7370 = vpack.c.b16 %v7349, %v7348
      %v7371 = vpack.c.b16 %v7351, %v7350
      %v7372 = vpack.c.b16 %v7353, %v7352
      %v7373 = vpack.c.b16 %v7355, %v7354
      %v7374 = vpack.c.b16 %v7357, %v7356
      %v7375 = vpack.c.b16 %v7359, %v7358
      %v7392 = vunpack.c.l.b16 %v7139
      %v7393 = vunpack.c.l.b16 %v7142
      %v7394 = vunpack.c.l.b16 %v7146
      %v7395 = vunpack.c.l.b16 %v7149
      %v7396 = vunpack.c.l.b16 %v7153
      %v7397 = vunpack.c.l.b16 %v7156
      %v7398 = vunpack.c.l.b16 %v7160
      %v7399 = vunpack.c.l.b16 %v7163
      %v7400 = vunpack.c.l.b16 %v7167
      %v7401 = vunpack.c.l.b16 %v7170
      %v7402 = vunpack.c.l.b16 %v7174
      %v7403 = vunpack.c.l.b16 %v7177
      %v7404 = vunpack.c.l.b16 %v7181
      %v7405 = vunpack.c.l.b16 %v7184
      %v7406 = vunpack.c.l.b16 %v7188
      %v7407 = vunpack.c.l.b16 %v7191
      %v7408 = vunpack.c.l.b16 %v7195
      %v7409 = vunpack.c.l.b16 %v7198
      %v7410 = vunpack.c.l.b16 %v7202
      %v7411 = vunpack.c.l.b16 %v7205
      %v7412 = vunpack.c.l.b16 %v7209
      %v7413 = vunpack.c.l.b16 %v7212
      %v7414 = vunpack.c.l.b16 %v7216
      %v7415 = vunpack.c.l.b16 %v7219
      %v7416 = vunpack.c.l.b16 %v7223
      %v7417 = vunpack.c.l.b16 %v7226
      %v7418 = vunpack.c.l.b16 %v7230
      %v7419 = vunpack.c.l.b16 %v7233
      %v7420 = vunpack.c.l.b16 %v7237
      %v7421 = vunpack.c.l.b16 %v7240
      %v7422 = vunpack.c.l.b16 %v7244
      %v7423 = vunpack.c.l.b16 %v7247
      %v7424 = vpack.c.b16 %v7393, %v7392
      %v7425 = vpack.c.b16 %v7395, %v7394
      %v7426 = vpack.c.b16 %v7397, %v7396
      %v7427 = vpack.c.b16 %v7399, %v7398
      %v7428 = vpack.c.b16 %v7401, %v7400
      %v7429 = vpack.c.b16 %v7403, %v7402
      %v7430 = vpack.c.b16 %v7405, %v7404
      %v7431 = vpack.c.b16 %v7407, %v7406
      %v7432 = vpack.c.b16 %v7409, %v7408
      %v7433 = vpack.c.b16 %v7411, %v7410
      %v7434 = vpack.c.b16 %v7413, %v7412
      %v7435 = vpack.c.b16 %v7415, %v7414
      %v7436 = vpack.c.b16 %v7417, %v7416
      %v7437 = vpack.c.b16 %v7419, %v7418
      %v7438 = vpack.c.b16 %v7421, %v7420
      %v7439 = vpack.c.b16 %v7423, %v7422
      %v7456 = vld [vmem:[%s4 + $0xc0] sm:$0xf]
      %v7457 = vld [vmem:[%s4 + $0xc4] sm:$0xf]
      %v7458 = vld [vmem:[%s4 + $0xc8] sm:$0xf]
      %v7459 = vld [vmem:[%s4 + $0xcc] sm:$0xf]
      %v7460 = vld [vmem:[%s4 + $0xd0] sm:$0xf]
      %v7461 = vld [vmem:[%s4 + $0xd4] sm:$0xf]
      %v7462 = vld [vmem:[%s4 + $0xd8] sm:$0xf]
      %v7463 = vld [vmem:[%s4 + $0xdc] sm:$0xf]
      %v7464 = vld [vmem:[%s4 + $0xe0] sm:$0xf]
      %v7465 = vld [vmem:[%s4 + $0xe4] sm:$0xf]
      %v7466 = vld [vmem:[%s4 + $0xe8] sm:$0xf]
      %v7467 = vld [vmem:[%s4 + $0xec] sm:$0xf]
      %v7468 = vld [vmem:[%s4 + $0xf0] sm:$0xf]
      %v7469 = vld [vmem:[%s4 + $0xf4] sm:$0xf]
      %v7470 = vld [vmem:[%s4 + $0xf8] sm:$0xf]
      %v7471 = vld [vmem:[%s4 + $0xfc] sm:$0xf]
      %v7472 = vld [vmem:[%s4 + $0x100] sm:$0xf]
      %v7473 = vld [vmem:[%s4 + $0x104] sm:$0xf]
      %v7474 = vld [vmem:[%s4 + $0x108] sm:$0xf]
      %v7475 = vld [vmem:[%s4 + $0x10c] sm:$0xf]
      %v7476 = vld [vmem:[%s4 + $0x110] sm:$0xf]
      %v7477 = vld [vmem:[%s4 + $0x114] sm:$0xf]
      %v7478 = vld [vmem:[%s4 + $0x118] sm:$0xf]
      %v7479 = vld [vmem:[%s4 + $0x11c] sm:$0xf]
      %v7480 = vld [vmem:[%s4 + $0x120] sm:$0xf]
      %v7481 = vld [vmem:[%s4 + $0x124] sm:$0xf]
      %v7482 = vld [vmem:[%s4 + $0x128] sm:$0xf]
      %v7483 = vld [vmem:[%s4 + $0x12c] sm:$0xf]
      %v7484 = vld [vmem:[%s4 + $0x130] sm:$0xf]
      %v7485 = vld [vmem:[%s4 + $0x134] sm:$0xf]
      %v7486 = vld [vmem:[%s4 + $0x138] sm:$0xf]
      %v7487 = vld [vmem:[%s4 + $0x13c] sm:$0xf]
      %v7488 = vld [vmem:[%s4 + $0x140] sm:$0xf]
      %v7489 = vld [vmem:[%s4 + $0x144] sm:$0xf]
      %v7490 = vld [vmem:[%s4 + $0x148] sm:$0xf]
      %v7491 = vld [vmem:[%s4 + $0x14c] sm:$0xf]
      %v7492 = vld [vmem:[%s4 + $0x150] sm:$0xf]
      %v7493 = vld [vmem:[%s4 + $0x154] sm:$0xf]
      %v7494 = vld [vmem:[%s4 + $0x158] sm:$0xf]
      %v7495 = vld [vmem:[%s4 + $0x15c] sm:$0xf]
      %v7496 = vld [vmem:[%s4 + $0x160] sm:$0xf]
      %v7497 = vld [vmem:[%s4 + $0x164] sm:$0xf]
      %v7498 = vld [vmem:[%s4 + $0x168] sm:$0xf]
      %v7499 = vld [vmem:[%s4 + $0x16c] sm:$0xf]
      %v7500 = vld [vmem:[%s4 + $0x170] sm:$0xf]
      %v7501 = vld [vmem:[%s4 + $0x174] sm:$0xf]
      %v7502 = vld [vmem:[%s4 + $0x178] sm:$0xf]
      %v7503 = vld [vmem:[%s4 + $0x17c] sm:$0xf]
      %v7552 = vunpack.c.l.b16 %v7456
      %v7553 = vunpack.c.l.b16 %v7457
      %v7554 = vunpack.c.l.b16 %v7458
      %v7555 = vunpack.c.l.b16 %v7459
      %v7556 = vunpack.c.l.b16 %v7460
      %v7557 = vunpack.c.l.b16 %v7461
      %v7558 = vunpack.c.l.b16 %v7462
      %v7559 = vunpack.c.l.b16 %v7463
      %v7560 = vunpack.c.l.b16 %v7464
      %v7561 = vunpack.c.l.b16 %v7465
      %v7562 = vunpack.c.l.b16 %v7466
      %v7563 = vunpack.c.l.b16 %v7467
      %v7564 = vunpack.c.l.b16 %v7468
      %v7565 = vunpack.c.l.b16 %v7469
      %v7566 = vunpack.c.l.b16 %v7470
      %v7567 = vunpack.c.l.b16 %v7471
      %v7568 = vunpack.c.l.b16 %v7472
      %v7569 = vunpack.c.l.b16 %v7473
      %v7570 = vunpack.c.l.b16 %v7474
      %v7571 = vunpack.c.l.b16 %v7475
      %v7572 = vunpack.c.l.b16 %v7476
      %v7573 = vunpack.c.l.b16 %v7477
      %v7574 = vunpack.c.l.b16 %v7478
      %v7575 = vunpack.c.l.b16 %v7479
      %v7576 = vunpack.c.l.b16 %v7480
      %v7577 = vunpack.c.l.b16 %v7481
      %v7578 = vunpack.c.l.b16 %v7482
      %v7579 = vunpack.c.l.b16 %v7483
      %v7580 = vunpack.c.l.b16 %v7484
      %v7581 = vunpack.c.l.b16 %v7485
      %v7582 = vunpack.c.l.b16 %v7486
      %v7583 = vunpack.c.l.b16 %v7487
      %v7584 = vunpack.c.l.b16 %v7488
      %v7585 = vunpack.c.l.b16 %v7489
      %v7586 = vunpack.c.l.b16 %v7490
      %v7587 = vunpack.c.l.b16 %v7491
      %v7588 = vunpack.c.l.b16 %v7492
      %v7589 = vunpack.c.l.b16 %v7493
      %v7590 = vunpack.c.l.b16 %v7494
      %v7591 = vunpack.c.l.b16 %v7495
      %v7592 = vunpack.c.l.b16 %v7496
      %v7593 = vunpack.c.l.b16 %v7497
      %v7594 = vunpack.c.l.b16 %v7498
      %v7595 = vunpack.c.l.b16 %v7499
      %v7596 = vunpack.c.l.b16 %v7500
      %v7597 = vunpack.c.l.b16 %v7501
      %v7598 = vunpack.c.l.b16 %v7502
      %v7599 = vunpack.c.l.b16 %v7503
      %v7600 = vpack.c.b16 %v7553, %v7552
      %v7601 = vpack.c.b16 %v7555, %v7554
      %v7602 = vpack.c.b16 %v7557, %v7556
      %v7603 = vpack.c.b16 %v7559, %v7558
      %v7604 = vpack.c.b16 %v7561, %v7560
      %v7605 = vpack.c.b16 %v7563, %v7562
      %v7606 = vpack.c.b16 %v7565, %v7564
      %v7607 = vpack.c.b16 %v7567, %v7566
      %v7608 = vpack.c.b16 %v7569, %v7568
      %v7609 = vpack.c.b16 %v7571, %v7570
      %v7610 = vpack.c.b16 %v7573, %v7572
      %v7611 = vpack.c.b16 %v7575, %v7574
      %v7612 = vpack.c.b16 %v7577, %v7576
      %v7613 = vpack.c.b16 %v7579, %v7578
      %v7614 = vpack.c.b16 %v7581, %v7580
      %v7615 = vpack.c.b16 %v7583, %v7582
      %v7616 = vpack.c.b16 %v7585, %v7584
      %v7617 = vpack.c.b16 %v7587, %v7586
      %v7618 = vpack.c.b16 %v7589, %v7588
      %v7619 = vpack.c.b16 %v7591, %v7590
      %v7620 = vpack.c.b16 %v7593, %v7592
      %v7621 = vpack.c.b16 %v7595, %v7594
      %v7622 = vpack.c.b16 %v7597, %v7596
      %v7623 = vpack.c.b16 %v7599, %v7598
      %7648 = vmatprep.subr.bf16.mxu0 0
      %7649 = vmatpush1.bf16.msra.mxu0 %v7607
      %7650 = vmatprep.subr.bf16.mxu0 0
      %7651 = vmatpush1.bf16.msra.mxu0 %v7606
      %7652 = vmatprep.subr.bf16.mxu0 0
      %7653 = vmatpush1.bf16.msra.mxu0 %v7605
      %7654 = vmatprep.subr.bf16.mxu0 0
      %7655 = vmatpush1.bf16.msra.mxu0 %v7604
      %7656 = vmatprep.subr.bf16.mxu0 0
      %7657 = vmatpush1.bf16.msra.mxu0 %v7603
      %7658 = vmatprep.subr.bf16.mxu0 0
      %7659 = vmatpush1.bf16.msra.mxu0 %v7602
      %7660 = vmatprep.subr.bf16.mxu0 0
      %7661 = vmatpush1.bf16.msra.mxu0 %v7601
      %7662 = vmatprep.subr.bf16.mxu0 0
      %7663 = vmatpush1.bf16.msra.mxu0 %v7600
      %7664 = vmatprep.subr.bf16.mxu0 0
      %7665 = vmatpush2.bf16.msra.mxu0 %v7615
      %7666 = vmatprep.subr.bf16.mxu0 0
      %7667 = vmatpush2.bf16.msra.mxu0 %v7614
      %7668 = vmatprep.subr.bf16.mxu0 0
      %7669 = vmatpush2.bf16.msra.mxu0 %v7613
      %7670 = vmatprep.subr.bf16.mxu0 0
      %7671 = vmatpush2.bf16.msra.mxu0 %v7612
      %7672 = vmatprep.subr.bf16.mxu0 0
      %7673 = vmatpush2.bf16.msra.mxu0 %v7611
      %7674 = vmatprep.subr.bf16.mxu0 0
      %7675 = vmatpush2.bf16.msra.mxu0 %v7610
      %7676 = vmatprep.subr.bf16.mxu0 0
      %7677 = vmatpush2.bf16.msra.mxu0 %v7609
      %7678 = vmatprep.subr.bf16.mxu0 0
      %7679 = vmatpush2.bf16.msra.mxu0 %v7608
      %7680 = vmatprep.mubr.bf16.mxu0 %v7360
      %7681 = vmatmul.mubr.bf16.gmra.mxu0 %v7296
      %v7682 = vpop.f32.mrf.mxu0
      %v7683 = vadd.f32 0.0, %v7682
      %v7684 = vpop.f32.mrf.mxu0
      %v7685 = vpop.f32.mrf.mxu0
      %v7686 = vadd.f32 0.0, %v7685
      %v7687 = vpop.f32.mrf.mxu0
      %7688 = vmatprep.mubr.bf16.mxu0 %v7361
      %7689 = vmatmul.mubr.bf16.gmra.mxu0 %v7297
      %v7690 = vpop.f32.mrf.mxu0
      %v7691 = vadd.f32 0.0, %v7690
      %v7692 = vpop.f32.mrf.mxu0
      %v7693 = vpop.f32.mrf.mxu0
      %v7694 = vadd.f32 0.0, %v7693
      %v7695 = vpop.f32.mrf.mxu0
      %7696 = vmatprep.mubr.bf16.mxu0 %v7362
      %7697 = vmatmul.mubr.bf16.gmra.mxu0 %v7298
      %v7698 = vpop.f32.mrf.mxu0
      %v7699 = vadd.f32 0.0, %v7698
      %v7700 = vpop.f32.mrf.mxu0
      %v7701 = vpop.f32.mrf.mxu0
      %v7702 = vadd.f32 0.0, %v7701
      %v7703 = vpop.f32.mrf.mxu0
      %7704 = vmatprep.mubr.bf16.mxu0 %v7363
      %7705 = vmatmul.mubr.bf16.gmra.mxu0 %v7299
      %v7706 = vpop.f32.mrf.mxu0
      %v7707 = vadd.f32 0.0, %v7706
      %v7708 = vpop.f32.mrf.mxu0
      %v7709 = vpop.f32.mrf.mxu0
      %v7710 = vadd.f32 0.0, %v7709
      %v7711 = vpop.f32.mrf.mxu0
      %7712 = vmatprep.mubr.bf16.mxu0 %v7364
      %7713 = vmatmul.mubr.bf16.gmra.mxu0 %v7300
      %v7714 = vpop.f32.mrf.mxu0
      %v7715 = vadd.f32 0.0, %v7714
      %v7716 = vpop.f32.mrf.mxu0
      %v7717 = vpop.f32.mrf.mxu0
      %v7718 = vadd.f32 0.0, %v7717
      %v7719 = vpop.f32.mrf.mxu0
      %7720 = vmatprep.mubr.bf16.mxu0 %v7365
      %7721 = vmatmul.mubr.bf16.gmra.mxu0 %v7301
      %v7722 = vpop.f32.mrf.mxu0
      %v7723 = vadd.f32 0.0, %v7722
      %v7724 = vpop.f32.mrf.mxu0
      %v7725 = vpop.f32.mrf.mxu0
      %v7726 = vadd.f32 0.0, %v7725
      %v7727 = vpop.f32.mrf.mxu0
      %7728 = vmatprep.mubr.bf16.mxu0 %v7366
      %7729 = vmatmul.mubr.bf16.gmra.mxu0 %v7302
      %v7730 = vpop.f32.mrf.mxu0
      %v7731 = vadd.f32 0.0, %v7730
      %v7732 = vpop.f32.mrf.mxu0
      %v7733 = vpop.f32.mrf.mxu0
      %v7734 = vadd.f32 0.0, %v7733
      %v7735 = vpop.f32.mrf.mxu0
      %7736 = vmatprep.mubr.bf16.mxu0 %v7367
      %7737 = vmatmul.mubr.bf16.gmra.mxu0 %v7303
      %v7738 = vpop.f32.mrf.mxu0
      %v7739 = vadd.f32 0.0, %v7738
      %v7740 = vpop.f32.mrf.mxu0
      %v7741 = vpop.f32.mrf.mxu0
      %v7742 = vadd.f32 0.0, %v7741
      %v7743 = vpop.f32.mrf.mxu0
      %7744 = vmatprep.mubr.bf16.mxu0 %v7368
      %7745 = vmatmul.mubr.bf16.gmra.mxu0 %v7304
      %v7746 = vpop.f32.mrf.mxu0
      %v7747 = vadd.f32 0.0, %v7746
      %v7748 = vpop.f32.mrf.mxu0
      %v7749 = vpop.f32.mrf.mxu0
      %v7750 = vadd.f32 0.0, %v7749
      %v7751 = vpop.f32.mrf.mxu0
      %7752 = vmatprep.mubr.bf16.mxu0 %v7369
      %7753 = vmatmul.mubr.bf16.gmra.mxu0 %v7305
      %v7754 = vpop.f32.mrf.mxu0
      %v7755 = vadd.f32 0.0, %v7754
      %v7756 = vpop.f32.mrf.mxu0
      %v7757 = vpop.f32.mrf.mxu0
      %v7758 = vadd.f32 0.0, %v7757
      %v7759 = vpop.f32.mrf.mxu0
      %7760 = vmatprep.mubr.bf16.mxu0 %v7370
      %7761 = vmatmul.mubr.bf16.gmra.mxu0 %v7306
      %v7762 = vpop.f32.mrf.mxu0
      %v7763 = vadd.f32 0.0, %v7762
      %v7764 = vpop.f32.mrf.mxu0
      %v7765 = vpop.f32.mrf.mxu0
      %v7766 = vadd.f32 0.0, %v7765
      %v7767 = vpop.f32.mrf.mxu0
      %7768 = vmatprep.mubr.bf16.mxu0 %v7371
      %7769 = vmatmul.mubr.bf16.gmra.mxu0 %v7307
      %v7770 = vpop.f32.mrf.mxu0
      %v7771 = vadd.f32 0.0, %v7770
      %v7772 = vpop.f32.mrf.mxu0
      %v7773 = vpop.f32.mrf.mxu0
      %v7774 = vadd.f32 0.0, %v7773
      %v7775 = vpop.f32.mrf.mxu0
      %7776 = vmatprep.mubr.bf16.mxu0 %v7372
      %7777 = vmatmul.mubr.bf16.gmra.mxu0 %v7308
      %v7778 = vpop.f32.mrf.mxu0
      %v7779 = vadd.f32 0.0, %v7778
      %v7780 = vpop.f32.mrf.mxu0
      %v7781 = vpop.f32.mrf.mxu0
      %v7782 = vadd.f32 0.0, %v7781
      %v7783 = vpop.f32.mrf.mxu0
      %7784 = vmatprep.mubr.bf16.mxu0 %v7373
      %7785 = vmatmul.mubr.bf16.gmra.mxu0 %v7309
      %v7786 = vpop.f32.mrf.mxu0
      %v7787 = vadd.f32 0.0, %v7786
      %v7788 = vpop.f32.mrf.mxu0
      %v7789 = vpop.f32.mrf.mxu0
      %v7790 = vadd.f32 0.0, %v7789
      %v7791 = vpop.f32.mrf.mxu0
      %7792 = vmatprep.mubr.bf16.mxu0 %v7374
      %7793 = vmatmul.mubr.bf16.gmra.mxu0 %v7310
      %v7794 = vpop.f32.mrf.mxu0
      %v7795 = vadd.f32 0.0, %v7794
      %v7796 = vpop.f32.mrf.mxu0
      %v7797 = vpop.f32.mrf.mxu0
      %v7798 = vadd.f32 0.0, %v7797
      %v7799 = vpop.f32.mrf.mxu0
      %7800 = vmatprep.mubr.bf16.mxu0 %v7375
      %7801 = vmatmul.mubr.bf16.gmra.mxu0 %v7311
      %v7802 = vpop.f32.mrf.mxu0
      %v7803 = vadd.f32 0.0, %v7802
      %v7804 = vpop.f32.mrf.mxu0
      %v7805 = vpop.f32.mrf.mxu0
      %v7806 = vadd.f32 0.0, %v7805
      %v7807 = vpop.f32.mrf.mxu0
      %7808 = vdwg.mxu0
      %7809 = vmatprep.subr.bf16.mxu0 0
      %7810 = vmatpush1.bf16.msra.mxu0 %v7623
      %7811 = vmatprep.subr.bf16.mxu0 0
      %7812 = vmatpush1.bf16.msra.mxu0 %v7622
      %7813 = vmatprep.subr.bf16.mxu0 0
      %7814 = vmatpush1.bf16.msra.mxu0 %v7621
      %7815 = vmatprep.subr.bf16.mxu0 0
      %7816 = vmatpush1.bf16.msra.mxu0 %v7620
      %7817 = vmatprep.subr.bf16.mxu0 0
      %7818 = vmatpush1.bf16.msra.mxu0 %v7619
      %7819 = vmatprep.subr.bf16.mxu0 0
      %7820 = vmatpush1.bf16.msra.mxu0 %v7618
      %7821 = vmatprep.subr.bf16.mxu0 0
      %7822 = vmatpush1.bf16.msra.mxu0 %v7617
      %7823 = vmatprep.subr.bf16.mxu0 0
      %7824 = vmatpush1.bf16.msra.mxu0 %v7616
      %7825 = vmatprep.subr.bf16.mxu0 0
      %7826 = vmatpush2.bf16.msra.mxu0 0
      %7827 = vmatprep.subr.bf16.mxu0 0
      %7828 = vmatpush2.bf16.msra.mxu0 0
      %7829 = vmatprep.subr.bf16.mxu0 0
      %7830 = vmatpush2.bf16.msra.mxu0 0
      %7831 = vmatprep.subr.bf16.mxu0 0
      %7832 = vmatpush2.bf16.msra.mxu0 0
      %7833 = vmatprep.subr.bf16.mxu0 0
      %7834 = vmatpush2.bf16.msra.mxu0 0
      %7835 = vmatprep.subr.bf16.mxu0 0
      %7836 = vmatpush2.bf16.msra.mxu0 0
      %7837 = vmatprep.subr.bf16.mxu0 0
      %7838 = vmatpush2.bf16.msra.mxu0 0
      %7839 = vmatprep.subr.bf16.mxu0 0
      %7840 = vmatpush2.bf16.msra.mxu0 0
      %7841 = vmatprep.mubr.bf16.mxu0 0
      %7842 = vmatmul.mubr.bf16.gmra.mxu0 %v7424
      %v7843 = vpop.f32.mrf.mxu0
      %v7844 = vadd.f32 %v7683, %v7843
      %v7845 = vpop.f32.mrf.mxu0
      %v7846 = vpop.f32.mrf.mxu0
      %v7847 = vadd.f32 %v7686, %v7846
      %v7848 = vpop.f32.mrf.mxu0
      %7849 = vmatprep.mubr.bf16.mxu0 0
      %7850 = vmatmul.mubr.bf16.gmra.mxu0 %v7425
      %v7851 = vpop.f32.mrf.mxu0
      %v7852 = vadd.f32 %v7691, %v7851
      %v7853 = vpop.f32.mrf.mxu0
      %v7854 = vpop.f32.mrf.mxu0
      %v7855 = vadd.f32 %v7694, %v7854
      %v7856 = vpop.f32.mrf.mxu0
      %7857 = vmatprep.mubr.bf16.mxu0 0
      %7858 = vmatmul.mubr.bf16.gmra.mxu0 %v7426
      %v7859 = vpop.f32.mrf.mxu0
      %v7860 = vadd.f32 %v7699, %v7859
      %v7861 = vpop.f32.mrf.mxu0
      %v7862 = vpop.f32.mrf.mxu0
      %v7863 = vadd.f32 %v7702, %v7862
      %v7864 = vpop.f32.mrf.mxu0
      %7865 = vmatprep.mubr.bf16.mxu0 0
      %7866 = vmatmul.mubr.bf16.gmra.mxu0 %v7427
      %v7867 = vpop.f32.mrf.mxu0
      %v7868 = vadd.f32 %v7707, %v7867
      %v7869 = vpop.f32.mrf.mxu0
      %v7870 = vpop.f32.mrf.mxu0
      %v7871 = vadd.f32 %v7710, %v7870
      %v7872 = vpop.f32.mrf.mxu0
      %7873 = vmatprep.mubr.bf16.mxu0 0
      %7874 = vmatmul.mubr.bf16.gmra.mxu0 %v7428
      %v7875 = vpop.f32.mrf.mxu0
      %v7876 = vadd.f32 %v7715, %v7875
      %v7877 = vpop.f32.mrf.mxu0
      %v7878 = vpop.f32.mrf.mxu0
      %v7879 = vadd.f32 %v7718, %v7878
      %v7880 = vpop.f32.mrf.mxu0
      %7881 = vmatprep.mubr.bf16.mxu0 0
      %7882 = vmatmul.mubr.bf16.gmra.mxu0 %v7429
      %v7883 = vpop.f32.mrf.mxu0
      %v7884 = vadd.f32 %v7723, %v7883
      %v7885 = vpop.f32.mrf.mxu0
      %v7886 = vpop.f32.mrf.mxu0
      %v7887 = vadd.f32 %v7726, %v7886
      %v7888 = vpop.f32.mrf.mxu0
      %7889 = vmatprep.mubr.bf16.mxu0 0
      %7890 = vmatmul.mubr.bf16.gmra.mxu0 %v7430
      %v7891 = vpop.f32.mrf.mxu0
      %v7892 = vadd.f32 %v7731, %v7891
      %v7893 = vpop.f32.mrf.mxu0
      %v7894 = vpop.f32.mrf.mxu0
      %v7895 = vadd.f32 %v7734, %v7894
      %v7896 = vpop.f32.mrf.mxu0
      %7897 = vmatprep.mubr.bf16.mxu0 0
      %7898 = vmatmul.mubr.bf16.gmra.mxu0 %v7431
      %v7899 = vpop.f32.mrf.mxu0
      %v7900 = vadd.f32 %v7739, %v7899
      %v7901 = vpop.f32.mrf.mxu0
      %v7902 = vpop.f32.mrf.mxu0
      %v7903 = vadd.f32 %v7742, %v7902
      %v7904 = vpop.f32.mrf.mxu0
      %7905 = vmatprep.mubr.bf16.mxu0 0
      %7906 = vmatmul.mubr.bf16.gmra.mxu0 %v7432
      %v7907 = vpop.f32.mrf.mxu0
      %v7908 = vadd.f32 %v7747, %v7907
      %v7909 = vpop.f32.mrf.mxu0
      %v7910 = vpop.f32.mrf.mxu0
      %v7911 = vadd.f32 %v7750, %v7910
      %v7912 = vpop.f32.mrf.mxu0
      %7913 = vmatprep.mubr.bf16.mxu0 0
      %7914 = vmatmul.mubr.bf16.gmra.mxu0 %v7433
      %v7915 = vpop.f32.mrf.mxu0
      %v7916 = vadd.f32 %v7755, %v7915
      %v7917 = vpop.f32.mrf.mxu0
      %v7918 = vpop.f32.mrf.mxu0
      %v7919 = vadd.f32 %v7758, %v7918
      %v7920 = vpop.f32.mrf.mxu0
      %7921 = vmatprep.mubr.bf16.mxu0 0
      %7922 = vmatmul.mubr.bf16.gmra.mxu0 %v7434
      %v7923 = vpop.f32.mrf.mxu0
      %v7924 = vadd.f32 %v7763, %v7923
      %v7925 = vpop.f32.mrf.mxu0
      %v7926 = vpop.f32.mrf.mxu0
      %v7927 = vadd.f32 %v7766, %v7926
      %v7928 = vpop.f32.mrf.mxu0
      %7929 = vmatprep.mubr.bf16.mxu0 0
      %7930 = vmatmul.mubr.bf16.gmra.mxu0 %v7435
      %v7931 = vpop.f32.mrf.mxu0
      %v7932 = vadd.f32 %v7771, %v7931
      %v7933 = vpop.f32.mrf.mxu0
      %v7934 = vpop.f32.mrf.mxu0
      %v7935 = vadd.f32 %v7774, %v7934
      %v7936 = vpop.f32.mrf.mxu0
      %7937 = vmatprep.mubr.bf16.mxu0 0
      %7938 = vmatmul.mubr.bf16.gmra.mxu0 %v7436
      %v7939 = vpop.f32.mrf.mxu0
      %v7940 = vadd.f32 %v7779, %v7939
      %v7941 = vpop.f32.mrf.mxu0
      %v7942 = vpop.f32.mrf.mxu0
      %v7943 = vadd.f32 %v7782, %v7942
      %v7944 = vpop.f32.mrf.mxu0
      %7945 = vmatprep.mubr.bf16.mxu0 0
      %7946 = vmatmul.mubr.bf16.gmra.mxu0 %v7437
      %v7947 = vpop.f32.mrf.mxu0
      %v7948 = vadd.f32 %v7787, %v7947
      %v7949 = vpop.f32.mrf.mxu0
      %v7950 = vpop.f32.mrf.mxu0
      %v7951 = vadd.f32 %v7790, %v7950
      %v7952 = vpop.f32.mrf.mxu0
      %7953 = vmatprep.mubr.bf16.mxu0 0
      %7954 = vmatmul.mubr.bf16.gmra.mxu0 %v7438
      %v7955 = vpop.f32.mrf.mxu0
      %v7956 = vadd.f32 %v7795, %v7955
      %v7957 = vpop.f32.mrf.mxu0
      %v7958 = vpop.f32.mrf.mxu0
      %v7959 = vadd.f32 %v7798, %v7958
      %v7960 = vpop.f32.mrf.mxu0
      %7961 = vmatprep.mubr.bf16.mxu0 0
      %7962 = vmatmul.mubr.bf16.gmra.mxu0 %v7439
      %v7963 = vpop.f32.mrf.mxu0
      %v7964 = vadd.f32 %v7803, %v7963
      %v7965 = vpop.f32.mrf.mxu0
      %v7966 = vpop.f32.mrf.mxu0
      %v7967 = vadd.f32 %v7806, %v7966
      %v7968 = vpop.f32.mrf.mxu0
      %7969 = vdwg.mxu0
      %v8018 = vunpack.c.l.b16 %v6592
      %v8019 = vunpack.c.l.b16 %v6593
      %v8020 = vunpack.c.l.b16 %v6594
      %v8021 = vunpack.c.l.b16 %v6595
      %v8022 = vunpack.c.l.b16 %v6596
      %v8023 = vunpack.c.l.b16 %v6597
      %v8024 = vunpack.c.l.b16 %v6598
      %v8025 = vunpack.c.l.b16 %v6599
      %v8026 = vunpack.c.l.b16 %v6600
      %v8027 = vunpack.c.l.b16 %v6601
      %v8028 = vunpack.c.l.b16 %v6602
      %v8029 = vunpack.c.l.b16 %v6603
      %v8030 = vunpack.c.l.b16 %v6604
      %v8031 = vunpack.c.l.b16 %v6605
      %v8032 = vunpack.c.l.b16 %v6606
      %v8033 = vunpack.c.l.b16 %v6607
      %v8034 = vunpack.c.l.b16 %v6608
      %v8035 = vunpack.c.l.b16 %v6609
      %v8036 = vunpack.c.l.b16 %v6610
      %v8037 = vunpack.c.l.b16 %v6611
      %v8038 = vunpack.c.l.b16 %v6612
      %v8039 = vunpack.c.l.b16 %v6613
      %v8040 = vunpack.c.l.b16 %v6614
      %v8041 = vunpack.c.l.b16 %v6615
      %v8042 = vunpack.c.l.b16 %v6616
      %v8043 = vunpack.c.l.b16 %v6617
      %v8044 = vunpack.c.l.b16 %v6618
      %v8045 = vunpack.c.l.b16 %v6619
      %v8046 = vunpack.c.l.b16 %v6620
      %v8047 = vunpack.c.l.b16 %v6621
      %v8048 = vunpack.c.l.b16 %v6622
      %v8049 = vunpack.c.l.b16 %v6623
      %v8050 = vunpack.c.l.b16 %v6624
      %v8051 = vunpack.c.l.b16 %v6625
      %v8052 = vunpack.c.l.b16 %v6626
      %v8053 = vunpack.c.l.b16 %v6627
      %v8054 = vunpack.c.l.b16 %v6628
      %v8055 = vunpack.c.l.b16 %v6629
      %v8056 = vunpack.c.l.b16 %v6630
      %v8057 = vunpack.c.l.b16 %v6631
      %v8058 = vunpack.c.l.b16 %v6632
      %v8059 = vunpack.c.l.b16 %v6633
      %v8060 = vunpack.c.l.b16 %v6634
      %v8061 = vunpack.c.l.b16 %v6635
      %v8062 = vunpack.c.l.b16 %v6636
      %v8063 = vunpack.c.l.b16 %v6637
      %v8064 = vunpack.c.l.b16 %v6638
      %v8065 = vunpack.c.l.b16 %v6639
      %v8066 = vpack.c.b16 %v8019, %v8018
      %v8067 = vpack.c.b16 %v8021, %v8020
      %v8068 = vpack.c.b16 %v8023, %v8022
      %v8069 = vpack.c.b16 %v8025, %v8024
      %v8070 = vpack.c.b16 %v8027, %v8026
      %v8071 = vpack.c.b16 %v8029, %v8028
      %v8072 = vpack.c.b16 %v8031, %v8030
      %v8073 = vpack.c.b16 %v8033, %v8032
      %v8074 = vpack.c.b16 %v8035, %v8034
      %v8075 = vpack.c.b16 %v8037, %v8036
      %v8076 = vpack.c.b16 %v8039, %v8038
      %v8077 = vpack.c.b16 %v8041, %v8040
      %v8078 = vpack.c.b16 %v8043, %v8042
      %v8079 = vpack.c.b16 %v8045, %v8044
      %v8080 = vpack.c.b16 %v8047, %v8046
      %v8081 = vpack.c.b16 %v8049, %v8048
      %v8082 = vpack.c.b16 %v8051, %v8050
      %v8083 = vpack.c.b16 %v8053, %v8052
      %v8084 = vpack.c.b16 %v8055, %v8054
      %v8085 = vpack.c.b16 %v8057, %v8056
      %v8086 = vpack.c.b16 %v8059, %v8058
      %v8087 = vpack.c.b16 %v8061, %v8060
      %v8088 = vpack.c.b16 %v8063, %v8062
      %v8089 = vpack.c.b16 %v8065, %v8064
      %8114 = vmatprep.subr.bf16.mxu0 0
      %8115 = vmatpush1.bf16.msra.mxu0 %v8073
      %8116 = vmatprep.subr.bf16.mxu0 0
      %8117 = vmatpush1.bf16.msra.mxu0 %v8072
      %8118 = vmatprep.subr.bf16.mxu0 0
      %8119 = vmatpush1.bf16.msra.mxu0 %v8071
      %8120 = vmatprep.subr.bf16.mxu0 0
      %8121 = vmatpush1.bf16.msra.mxu0 %v8070
      %8122 = vmatprep.subr.bf16.mxu0 0
      %8123 = vmatpush1.bf16.msra.mxu0 %v8069
      %8124 = vmatprep.subr.bf16.mxu0 0
      %8125 = vmatpush1.bf16.msra.mxu0 %v8068
      %8126 = vmatprep.subr.bf16.mxu0 0
      %8127 = vmatpush1.bf16.msra.mxu0 %v8067
      %8128 = vmatprep.subr.bf16.mxu0 0
      %8129 = vmatpush1.bf16.msra.mxu0 %v8066
      %8130 = vmatprep.subr.bf16.mxu0 0
      %8131 = vmatpush2.bf16.msra.mxu0 %v8081
      %8132 = vmatprep.subr.bf16.mxu0 0
      %8133 = vmatpush2.bf16.msra.mxu0 %v8080
      %8134 = vmatprep.subr.bf16.mxu0 0
      %8135 = vmatpush2.bf16.msra.mxu0 %v8079
      %8136 = vmatprep.subr.bf16.mxu0 0
      %8137 = vmatpush2.bf16.msra.mxu0 %v8078
      %8138 = vmatprep.subr.bf16.mxu0 0
      %8139 = vmatpush2.bf16.msra.mxu0 %v8077
      %8140 = vmatprep.subr.bf16.mxu0 0
      %8141 = vmatpush2.bf16.msra.mxu0 %v8076
      %8142 = vmatprep.subr.bf16.mxu0 0
      %8143 = vmatpush2.bf16.msra.mxu0 %v8075
      %8144 = vmatprep.subr.bf16.mxu0 0
      %8145 = vmatpush2.bf16.msra.mxu0 %v8074
      %8146 = vmatprep.mubr.bf16.mxu0 %v6496
      %8147 = vmatmul.mubr.bf16.gmra.mxu0 %v6432
      %v8148 = vpop.f32.mrf.mxu0
      %v8149 = vadd.f32 %v7844, %v8148
      %v8150 = vpop.f32.mrf.mxu0
      %v8151 = vpop.f32.mrf.mxu0
      %v8152 = vadd.f32 %v7847, %v8151
      %v8153 = vpop.f32.mrf.mxu0
      %8154 = vmatprep.mubr.bf16.mxu0 %v6497
      %8155 = vmatmul.mubr.bf16.gmra.mxu0 %v6433
      %v8156 = vpop.f32.mrf.mxu0
      %v8157 = vadd.f32 %v7852, %v8156
      %v8158 = vpop.f32.mrf.mxu0
      %v8159 = vpop.f32.mrf.mxu0
      %v8160 = vadd.f32 %v7855, %v8159
      %v8161 = vpop.f32.mrf.mxu0
      %8162 = vmatprep.mubr.bf16.mxu0 %v6498
      %8163 = vmatmul.mubr.bf16.gmra.mxu0 %v6434
      %v8164 = vpop.f32.mrf.mxu0
      %v8165 = vadd.f32 %v7860, %v8164
      %v8166 = vpop.f32.mrf.mxu0
      %v8167 = vpop.f32.mrf.mxu0
      %v8168 = vadd.f32 %v7863, %v8167
      %v8169 = vpop.f32.mrf.mxu0
      %8170 = vmatprep.mubr.bf16.mxu0 %v6499
      %8171 = vmatmul.mubr.bf16.gmra.mxu0 %v6435
      %v8172 = vpop.f32.mrf.mxu0
      %v8173 = vadd.f32 %v7868, %v8172
      %v8174 = vpop.f32.mrf.mxu0
      %v8175 = vpop.f32.mrf.mxu0
      %v8176 = vadd.f32 %v7871, %v8175
      %v8177 = vpop.f32.mrf.mxu0
      %8178 = vmatprep.mubr.bf16.mxu0 %v6500
      %8179 = vmatmul.mubr.bf16.gmra.mxu0 %v6436
      %v8180 = vpop.f32.mrf.mxu0
      %v8181 = vadd.f32 %v7876, %v8180
      %v8182 = vpop.f32.mrf.mxu0
      %v8183 = vpop.f32.mrf.mxu0
      %v8184 = vadd.f32 %v7879, %v8183
      %v8185 = vpop.f32.mrf.mxu0
      %8186 = vmatprep.mubr.bf16.mxu0 %v6501
      %8187 = vmatmul.mubr.bf16.gmra.mxu0 %v6437
      %v8188 = vpop.f32.mrf.mxu0
      %v8189 = vadd.f32 %v7884, %v8188
      %v8190 = vpop.f32.mrf.mxu0
      %v8191 = vpop.f32.mrf.mxu0
      %v8192 = vadd.f32 %v7887, %v8191
      %v8193 = vpop.f32.mrf.mxu0
      %8194 = vmatprep.mubr.bf16.mxu0 %v6502
      %8195 = vmatmul.mubr.bf16.gmra.mxu0 %v6438
      %v8196 = vpop.f32.mrf.mxu0
      %v8197 = vadd.f32 %v7892, %v8196
      %v8198 = vpop.f32.mrf.mxu0
      %v8199 = vpop.f32.mrf.mxu0
      %v8200 = vadd.f32 %v7895, %v8199
      %v8201 = vpop.f32.mrf.mxu0
      %8202 = vmatprep.mubr.bf16.mxu0 %v6503
      %8203 = vmatmul.mubr.bf16.gmra.mxu0 %v6439
      %v8204 = vpop.f32.mrf.mxu0
      %v8205 = vadd.f32 %v7900, %v8204
      %v8206 = vpop.f32.mrf.mxu0
      %v8207 = vpop.f32.mrf.mxu0
      %v8208 = vadd.f32 %v7903, %v8207
      %v8209 = vpop.f32.mrf.mxu0
      %8210 = vmatprep.mubr.bf16.mxu0 %v6504
      %8211 = vmatmul.mubr.bf16.gmra.mxu0 %v6440
      %v8212 = vpop.f32.mrf.mxu0
      %v8213 = vadd.f32 %v7908, %v8212
      %v8214 = vpop.f32.mrf.mxu0
      %v8215 = vpop.f32.mrf.mxu0
      %v8216 = vadd.f32 %v7911, %v8215
      %v8217 = vpop.f32.mrf.mxu0
      %8218 = vmatprep.mubr.bf16.mxu0 %v6505
      %8219 = vmatmul.mubr.bf16.gmra.mxu0 %v6441
      %v8220 = vpop.f32.mrf.mxu0
      %v8221 = vadd.f32 %v7916, %v8220
      %v8222 = vpop.f32.mrf.mxu0
      %v8223 = vpop.f32.mrf.mxu0
      %v8224 = vadd.f32 %v7919, %v8223
      %v8225 = vpop.f32.mrf.mxu0
      %8226 = vmatprep.mubr.bf16.mxu0 %v6506
      %8227 = vmatmul.mubr.bf16.gmra.mxu0 %v6442
      %v8228 = vpop.f32.mrf.mxu0
      %v8229 = vadd.f32 %v7924, %v8228
      %v8230 = vpop.f32.mrf.mxu0
      %v8231 = vpop.f32.mrf.mxu0
      %v8232 = vadd.f32 %v7927, %v8231
      %v8233 = vpop.f32.mrf.mxu0
      %8234 = vmatprep.mubr.bf16.mxu0 %v6507
      %8235 = vmatmul.mubr.bf16.gmra.mxu0 %v6443
      %v8236 = vpop.f32.mrf.mxu0
      %v8237 = vadd.f32 %v7932, %v8236
      %v8238 = vpop.f32.mrf.mxu0
      %v8239 = vpop.f32.mrf.mxu0
      %v8240 = vadd.f32 %v7935, %v8239
      %v8241 = vpop.f32.mrf.mxu0
      %8242 = vmatprep.mubr.bf16.mxu0 %v6508
      %8243 = vmatmul.mubr.bf16.gmra.mxu0 %v6444
      %v8244 = vpop.f32.mrf.mxu0
      %v8245 = vadd.f32 %v7940, %v8244
      %v8246 = vpop.f32.mrf.mxu0
      %v8247 = vpop.f32.mrf.mxu0
      %v8248 = vadd.f32 %v7943, %v8247
      %v8249 = vpop.f32.mrf.mxu0
      %8250 = vmatprep.mubr.bf16.mxu0 %v6509
      %8251 = vmatmul.mubr.bf16.gmra.mxu0 %v6445
      %v8252 = vpop.f32.mrf.mxu0
      %v8253 = vadd.f32 %v7948, %v8252
      %v8254 = vpop.f32.mrf.mxu0
      %v8255 = vpop.f32.mrf.mxu0
      %v8256 = vadd.f32 %v7951, %v8255
      %v8257 = vpop.f32.mrf.mxu0
      %8258 = vmatprep.mubr.bf16.mxu0 %v6510
      %8259 = vmatmul.mubr.bf16.gmra.mxu0 %v6446
      %v8260 = vpop.f32.mrf.mxu0
      %v8261 = vadd.f32 %v7956, %v8260
      %v8262 = vpop.f32.mrf.mxu0
      %v8263 = vpop.f32.mrf.mxu0
      %v8264 = vadd.f32 %v7959, %v8263
      %v8265 = vpop.f32.mrf.mxu0
      %8266 = vmatprep.mubr.bf16.mxu0 %v6511
      %8267 = vmatmul.mubr.bf16.gmra.mxu0 %v6447
      %v8268 = vpop.f32.mrf.mxu0
      %v8269 = vadd.f32 %v7964, %v8268
      %v8270 = vpop.f32.mrf.mxu0
      %v8271 = vpop.f32.mrf.mxu0
      %v8272 = vadd.f32 %v7967, %v8271
      %v8273 = vpop.f32.mrf.mxu0
      %8274 = vdwg.mxu0
      %8275 = vmatprep.subr.bf16.mxu0 0
      %8276 = vmatpush1.bf16.msra.mxu0 %v8089
      %8277 = vmatprep.subr.bf16.mxu0 0
      %8278 = vmatpush1.bf16.msra.mxu0 %v8088
      %8279 = vmatprep.subr.bf16.mxu0 0
      %8280 = vmatpush1.bf16.msra.mxu0 %v8087
      %8281 = vmatprep.subr.bf16.mxu0 0
      %8282 = vmatpush1.bf16.msra.mxu0 %v8086
      %8283 = vmatprep.subr.bf16.mxu0 0
      %8284 = vmatpush1.bf16.msra.mxu0 %v8085
      %8285 = vmatprep.subr.bf16.mxu0 0
      %8286 = vmatpush1.bf16.msra.mxu0 %v8084
      %8287 = vmatprep.subr.bf16.mxu0 0
      %8288 = vmatpush1.bf16.msra.mxu0 %v8083
      %8289 = vmatprep.subr.bf16.mxu0 0
      %8290 = vmatpush1.bf16.msra.mxu0 %v8082
      %8291 = vmatprep.subr.bf16.mxu0 0
      %8292 = vmatpush2.bf16.msra.mxu0 0
      %8293 = vmatprep.subr.bf16.mxu0 0
      %8294 = vmatpush2.bf16.msra.mxu0 0
      %8295 = vmatprep.subr.bf16.mxu0 0
      %8296 = vmatpush2.bf16.msra.mxu0 0
      %8297 = vmatprep.subr.bf16.mxu0 0
      %8298 = vmatpush2.bf16.msra.mxu0 0
      %8299 = vmatprep.subr.bf16.mxu0 0
      %8300 = vmatpush2.bf16.msra.mxu0 0
      %8301 = vmatprep.subr.bf16.mxu0 0
      %8302 = vmatpush2.bf16.msra.mxu0 0
      %8303 = vmatprep.subr.bf16.mxu0 0
      %8304 = vmatpush2.bf16.msra.mxu0 0
      %8305 = vmatprep.subr.bf16.mxu0 0
      %8306 = vmatpush2.bf16.msra.mxu0 0
      %8307 = vmatprep.mubr.bf16.mxu0 0
      %8308 = vmatmul.mubr.bf16.gmra.mxu0 %v6560
      %v8309 = vpop.f32.mrf.mxu0
      %v8310 = vadd.f32 %v8149, %v8309
      %v8311 = vpop.f32.mrf.mxu0
      %v8312 = vpop.f32.mrf.mxu0
      %v8313 = vadd.f32 %v8152, %v8312
      %v8314 = vpop.f32.mrf.mxu0
      %8315 = vmatprep.mubr.bf16.mxu0 0
      %8316 = vmatmul.mubr.bf16.gmra.mxu0 %v6561
      %v8317 = vpop.f32.mrf.mxu0
      %v8318 = vadd.f32 %v8157, %v8317
      %v8319 = vpop.f32.mrf.mxu0
      %v8320 = vpop.f32.mrf.mxu0
      %v8321 = vadd.f32 %v8160, %v8320
      %v8322 = vpop.f32.mrf.mxu0
      %8323 = vmatprep.mubr.bf16.mxu0 0
      %8324 = vmatmul.mubr.bf16.gmra.mxu0 %v6562
      %v8325 = vpop.f32.mrf.mxu0
      %v8326 = vadd.f32 %v8165, %v8325
      %v8327 = vpop.f32.mrf.mxu0
      %v8328 = vpop.f32.mrf.mxu0
      %v8329 = vadd.f32 %v8168, %v8328
      %v8330 = vpop.f32.mrf.mxu0
      %8331 = vmatprep.mubr.bf16.mxu0 0
      %8332 = vmatmul.mubr.bf16.gmra.mxu0 %v6563
      %v8333 = vpop.f32.mrf.mxu0
      %v8334 = vadd.f32 %v8173, %v8333
      %v8335 = vpop.f32.mrf.mxu0
      %v8336 = vpop.f32.mrf.mxu0
      %v8337 = vadd.f32 %v8176, %v8336
      %v8338 = vpop.f32.mrf.mxu0
      %8339 = vmatprep.mubr.bf16.mxu0 0
      %8340 = vmatmul.mubr.bf16.gmra.mxu0 %v6564
      %v8341 = vpop.f32.mrf.mxu0
      %v8342 = vadd.f32 %v8181, %v8341
      %v8343 = vpop.f32.mrf.mxu0
      %v8344 = vpop.f32.mrf.mxu0
      %v8345 = vadd.f32 %v8184, %v8344
      %v8346 = vpop.f32.mrf.mxu0
      %8347 = vmatprep.mubr.bf16.mxu0 0
      %8348 = vmatmul.mubr.bf16.gmra.mxu0 %v6565
      %v8349 = vpop.f32.mrf.mxu0
      %v8350 = vadd.f32 %v8189, %v8349
      %v8351 = vpop.f32.mrf.mxu0
      %v8352 = vpop.f32.mrf.mxu0
      %v8353 = vadd.f32 %v8192, %v8352
      %v8354 = vpop.f32.mrf.mxu0
      %8355 = vmatprep.mubr.bf16.mxu0 0
      %8356 = vmatmul.mubr.bf16.gmra.mxu0 %v6566
      %v8357 = vpop.f32.mrf.mxu0
      %v8358 = vadd.f32 %v8197, %v8357
      %v8359 = vpop.f32.mrf.mxu0
      %v8360 = vpop.f32.mrf.mxu0
      %v8361 = vadd.f32 %v8200, %v8360
      %v8362 = vpop.f32.mrf.mxu0
      %8363 = vmatprep.mubr.bf16.mxu0 0
      %8364 = vmatmul.mubr.bf16.gmra.mxu0 %v6567
      %v8365 = vpop.f32.mrf.mxu0
      %v8366 = vadd.f32 %v8205, %v8365
      %v8367 = vpop.f32.mrf.mxu0
      %v8368 = vpop.f32.mrf.mxu0
      %v8369 = vadd.f32 %v8208, %v8368
      %v8370 = vpop.f32.mrf.mxu0
      %8371 = vmatprep.mubr.bf16.mxu0 0
      %8372 = vmatmul.mubr.bf16.gmra.mxu0 %v6568
      %v8373 = vpop.f32.mrf.mxu0
      %v8374 = vadd.f32 %v8213, %v8373
      %v8375 = vpop.f32.mrf.mxu0
      %v8376 = vpop.f32.mrf.mxu0
      %v8377 = vadd.f32 %v8216, %v8376
      %v8378 = vpop.f32.mrf.mxu0
      %8379 = vmatprep.mubr.bf16.mxu0 0
      %8380 = vmatmul.mubr.bf16.gmra.mxu0 %v6569
      %v8381 = vpop.f32.mrf.mxu0
      %v8382 = vadd.f32 %v8221, %v8381
      %v8383 = vpop.f32.mrf.mxu0
      %v8384 = vpop.f32.mrf.mxu0
      %v8385 = vadd.f32 %v8224, %v8384
      %v8386 = vpop.f32.mrf.mxu0
      %8387 = vmatprep.mubr.bf16.mxu0 0
      %8388 = vmatmul.mubr.bf16.gmra.mxu0 %v6570
      %v8389 = vpop.f32.mrf.mxu0
      %v8390 = vadd.f32 %v8229, %v8389
      %v8391 = vpop.f32.mrf.mxu0
      %v8392 = vpop.f32.mrf.mxu0
      %v8393 = vadd.f32 %v8232, %v8392
      %v8394 = vpop.f32.mrf.mxu0
      %8395 = vmatprep.mubr.bf16.mxu0 0
      %8396 = vmatmul.mubr.bf16.gmra.mxu0 %v6571
      %v8397 = vpop.f32.mrf.mxu0
      %v8398 = vadd.f32 %v8237, %v8397
      %v8399 = vpop.f32.mrf.mxu0
      %v8400 = vpop.f32.mrf.mxu0
      %v8401 = vadd.f32 %v8240, %v8400
      %v8402 = vpop.f32.mrf.mxu0
      %8403 = vmatprep.mubr.bf16.mxu0 0
      %8404 = vmatmul.mubr.bf16.gmra.mxu0 %v6572
      %v8405 = vpop.f32.mrf.mxu0
      %v8406 = vadd.f32 %v8245, %v8405
      %v8407 = vpop.f32.mrf.mxu0
      %v8408 = vpop.f32.mrf.mxu0
      %v8409 = vadd.f32 %v8248, %v8408
      %v8410 = vpop.f32.mrf.mxu0
      %8411 = vmatprep.mubr.bf16.mxu0 0
      %8412 = vmatmul.mubr.bf16.gmra.mxu0 %v6573
      %v8413 = vpop.f32.mrf.mxu0
      %v8414 = vadd.f32 %v8253, %v8413
      %v8415 = vpop.f32.mrf.mxu0
      %v8416 = vpop.f32.mrf.mxu0
      %v8417 = vadd.f32 %v8256, %v8416
      %v8418 = vpop.f32.mrf.mxu0
      %8419 = vmatprep.mubr.bf16.mxu0 0
      %8420 = vmatmul.mubr.bf16.gmra.mxu0 %v6574
      %v8421 = vpop.f32.mrf.mxu0
      %v8422 = vadd.f32 %v8261, %v8421
      %v8423 = vpop.f32.mrf.mxu0
      %v8424 = vpop.f32.mrf.mxu0
      %v8425 = vadd.f32 %v8264, %v8424
      %v8426 = vpop.f32.mrf.mxu0
      %8427 = vmatprep.mubr.bf16.mxu0 0
      %8428 = vmatmul.mubr.bf16.gmra.mxu0 %v6575
      %v8429 = vpop.f32.mrf.mxu0
      %v8430 = vadd.f32 %v8269, %v8429
      %v8431 = vpop.f32.mrf.mxu0
      %v8432 = vpop.f32.mrf.mxu0
      %v8433 = vadd.f32 %v8272, %v8432
      %v8434 = vpop.f32.mrf.mxu0
      %8435 = vdwg.mxu0
      %s8436 = scalar_lea.vmem [#allocation3], 24
      %v8437 = vld [vmem:[%s8436] sm:$0xf]
      %v8438 = vld [vmem:[%s8436 + $0x4] sm:$0xf]
      %v8439 = vld [vmem:[%s8436 + $0xc] sm:$0xf]
      %v8440 = vld [vmem:[%s8436 + $0x10] sm:$0xf]
      %v8441 = vld [vmem:[%s8436 + $0x18] sm:$0xf]
      %v8442 = vld [vmem:[%s8436 + $0x1c] sm:$0xf]
      %v8443 = vld [vmem:[%s8436 + $0x24] sm:$0xf]
      %v8444 = vld [vmem:[%s8436 + $0x28] sm:$0xf]
      %v8445 = vld [vmem:[%s8436 + $0x30] sm:$0xf]
      %v8446 = vld [vmem:[%s8436 + $0x34] sm:$0xf]
      %v8447 = vld [vmem:[%s8436 + $0x3c] sm:$0xf]
      %v8448 = vld [vmem:[%s8436 + $0x40] sm:$0xf]
      %v8449 = vld [vmem:[%s8436 + $0x48] sm:$0xf]
      %v8450 = vld [vmem:[%s8436 + $0x4c] sm:$0xf]
      %v8451 = vld [vmem:[%s8436 + $0x54] sm:$0xf]
      %v8452 = vld [vmem:[%s8436 + $0x58] sm:$0xf]
      %v8453 = vld [vmem:[%s8436 + $0x60] sm:$0xf]
      %v8454 = vld [vmem:[%s8436 + $0x64] sm:$0xf]
      %v8455 = vld [vmem:[%s8436 + $0x6c] sm:$0xf]
      %v8456 = vld [vmem:[%s8436 + $0x70] sm:$0xf]
      %v8457 = vld [vmem:[%s8436 + $0x78] sm:$0xf]
      %v8458 = vld [vmem:[%s8436 + $0x7c] sm:$0xf]
      %v8459 = vld [vmem:[%s8436 + $0x84] sm:$0xf]
      %v8460 = vld [vmem:[%s8436 + $0x88] sm:$0xf]
      %v8461 = vld [vmem:[%s8436 + $0x90] sm:$0xf]
      %v8462 = vld [vmem:[%s8436 + $0x94] sm:$0xf]
      %v8463 = vld [vmem:[%s8436 + $0x9c] sm:$0xf]
      %v8464 = vld [vmem:[%s8436 + $0xa0] sm:$0xf]
      %v8465 = vld [vmem:[%s8436 + $0xa8] sm:$0xf]
      %v8466 = vld [vmem:[%s8436 + $0xac] sm:$0xf]
      %v8467 = vld [vmem:[%s8436 + $0xb4] sm:$0xf]
      %v8468 = vld [vmem:[%s8436 + $0xb8] sm:$0xf]
      %v8469 = vld [vmem:[%s8436 + $0x8] sm:$0x1]
      %v8470 = vld [vmem:[%s8436 + $0x14] sm:$0x1]
      %v8471 = vld [vmem:[%s8436 + $0x20] sm:$0x1]
      %v8472 = vld [vmem:[%s8436 + $0x2c] sm:$0x1]
      %v8473 = vld [vmem:[%s8436 + $0x38] sm:$0x1]
      %v8474 = vld [vmem:[%s8436 + $0x44] sm:$0x1]
      %v8475 = vld [vmem:[%s8436 + $0x50] sm:$0x1]
      %v8476 = vld [vmem:[%s8436 + $0x5c] sm:$0x1]
      %v8477 = vld [vmem:[%s8436 + $0x68] sm:$0x1]
      %v8478 = vld [vmem:[%s8436 + $0x74] sm:$0x1]
      %v8479 = vld [vmem:[%s8436 + $0x80] sm:$0x1]
      %v8480 = vld [vmem:[%s8436 + $0x8c] sm:$0x1]
      %v8481 = vld [vmem:[%s8436 + $0x98] sm:$0x1]
      %v8482 = vld [vmem:[%s8436 + $0xa4] sm:$0x1]
      %v8483 = vld [vmem:[%s8436 + $0xb0] sm:$0x1]
      %v8484 = vld [vmem:[%s8436 + $0xbc] sm:$0x1]
      %v8486 = vshrl.u32 %v8437, 16
      %v8488 = vrot.slane %v8486, 4
      %v8489 = vshll.u32 %v8437, 16
      %v8491 = vrot.slane %v8489, 5
      %v8492 = vor.u32 %v8488, %v8491
      %v8493 = vrot.slane %v8492, 4
      %v8495 = vshll.u32 %v8438, 16
      %v8497 = vrot.slane %v8495, 5
      %v8498 = vsel %vm1156, %v8493, %v8497
      %v8499 = vshrl.u32 %v8438, 16
      %v8501 = vrot.slane %v8499, 4
      %v8502 = vor.u32 %v8501, %v8497
      %v8503 = vrot.slane %v8502, 4
      %v8505 = vshll.u32 %v8469, 16
      %v8507 = vrot.slane %v8505, 5
      %v8508 = vsel %vm1156, %v8503, %v8507
      %v8510 = vshrl.u32 %v8439, 16
      %v8512 = vrot.slane %v8510, 4
      %v8513 = vshll.u32 %v8439, 16
      %v8515 = vrot.slane %v8513, 5
      %v8516 = vor.u32 %v8512, %v8515
      %v8517 = vrot.slane %v8516, 4
      %v8519 = vshll.u32 %v8440, 16
      %v8521 = vrot.slane %v8519, 5
      %v8522 = vsel %vm1156, %v8517, %v8521
      %v8523 = vshrl.u32 %v8440, 16
      %v8525 = vrot.slane %v8523, 4
      %v8526 = vor.u32 %v8525, %v8521
      %v8527 = vrot.slane %v8526, 4
      %v8529 = vshll.u32 %v8470, 16
      %v8531 = vrot.slane %v8529, 5
      %v8532 = vsel %vm1156, %v8527, %v8531
      %v8534 = vshrl.u32 %v8441, 16
      %v8536 = vrot.slane %v8534, 4
      %v8537 = vshll.u32 %v8441, 16
      %v8539 = vrot.slane %v8537, 5
      %v8540 = vor.u32 %v8536, %v8539
      %v8541 = vrot.slane %v8540, 4
      %v8543 = vshll.u32 %v8442, 16
      %v8545 = vrot.slane %v8543, 5
      %v8546 = vsel %vm1156, %v8541, %v8545
      %v8547 = vshrl.u32 %v8442, 16
      %v8549 = vrot.slane %v8547, 4
      %v8550 = vor.u32 %v8549, %v8545
      %v8551 = vrot.slane %v8550, 4
      %v8553 = vshll.u32 %v8471, 16
      %v8555 = vrot.slane %v8553, 5
      %v8556 = vsel %vm1156, %v8551, %v8555
      %v8558 = vshrl.u32 %v8443, 16
      %v8560 = vrot.slane %v8558, 4
      %v8561 = vshll.u32 %v8443, 16
      %v8563 = vrot.slane %v8561, 5
      %v8564 = vor.u32 %v8560, %v8563
      %v8565 = vrot.slane %v8564, 4
      %v8567 = vshll.u32 %v8444, 16
      %v8569 = vrot.slane %v8567, 5
      %v8570 = vsel %vm1156, %v8565, %v8569
      %v8571 = vshrl.u32 %v8444, 16
      %v8573 = vrot.slane %v8571, 4
      %v8574 = vor.u32 %v8573, %v8569
      %v8575 = vrot.slane %v8574, 4
      %v8577 = vshll.u32 %v8472, 16
      %v8579 = vrot.slane %v8577, 5
      %v8580 = vsel %vm1156, %v8575, %v8579
      %v8582 = vshrl.u32 %v8445, 16
      %v8584 = vrot.slane %v8582, 4
      %v8585 = vshll.u32 %v8445, 16
      %v8587 = vrot.slane %v8585, 5
      %v8588 = vor.u32 %v8584, %v8587
      %v8589 = vrot.slane %v8588, 4
      %v8591 = vshll.u32 %v8446, 16
      %v8593 = vrot.slane %v8591, 5
      %v8594 = vsel %vm1156, %v8589, %v8593
      %v8595 = vshrl.u32 %v8446, 16
      %v8597 = vrot.slane %v8595, 4
      %v8598 = vor.u32 %v8597, %v8593
      %v8599 = vrot.slane %v8598, 4
      %v8601 = vshll.u32 %v8473, 16
      %v8603 = vrot.slane %v8601, 5
      %v8604 = vsel %vm1156, %v8599, %v8603
      %v8606 = vshrl.u32 %v8447, 16
      %v8608 = vrot.slane %v8606, 4
      %v8609 = vshll.u32 %v8447, 16
      %v8611 = vrot.slane %v8609, 5
      %v8612 = vor.u32 %v8608, %v8611
      %v8613 = vrot.slane %v8612, 4
      %v8615 = vshll.u32 %v8448, 16
      %v8617 = vrot.slane %v8615, 5
      %v8618 = vsel %vm1156, %v8613, %v8617
      %v8619 = vshrl.u32 %v8448, 16
      %v8621 = vrot.slane %v8619, 4
      %v8622 = vor.u32 %v8621, %v8617
      %v8623 = vrot.slane %v8622, 4
      %v8625 = vshll.u32 %v8474, 16
      %v8627 = vrot.slane %v8625, 5
      %v8628 = vsel %vm1156, %v8623, %v8627
      %v8630 = vshrl.u32 %v8449, 16
      %v8632 = vrot.slane %v8630, 4
      %v8633 = vshll.u32 %v8449, 16
      %v8635 = vrot.slane %v8633, 5
      %v8636 = vor.u32 %v8632, %v8635
      %v8637 = vrot.slane %v8636, 4
      %v8639 = vshll.u32 %v8450, 16
      %v8641 = vrot.slane %v8639, 5
      %v8642 = vsel %vm1156, %v8637, %v8641
      %v8643 = vshrl.u32 %v8450, 16
      %v8645 = vrot.slane %v8643, 4
      %v8646 = vor.u32 %v8645, %v8641
      %v8647 = vrot.slane %v8646, 4
      %v8649 = vshll.u32 %v8475, 16
      %v8651 = vrot.slane %v8649, 5
      %v8652 = vsel %vm1156, %v8647, %v8651
      %v8654 = vshrl.u32 %v8451, 16
      %v8656 = vrot.slane %v8654, 4
      %v8657 = vshll.u32 %v8451, 16
      %v8659 = vrot.slane %v8657, 5
      %v8660 = vor.u32 %v8656, %v8659
      %v8661 = vrot.slane %v8660, 4
      %v8663 = vshll.u32 %v8452, 16
      %v8665 = vrot.slane %v8663, 5
      %v8666 = vsel %vm1156, %v8661, %v8665
      %v8667 = vshrl.u32 %v8452, 16
      %v8669 = vrot.slane %v8667, 4
      %v8670 = vor.u32 %v8669, %v8665
      %v8671 = vrot.slane %v8670, 4
      %v8673 = vshll.u32 %v8476, 16
      %v8675 = vrot.slane %v8673, 5
      %v8676 = vsel %vm1156, %v8671, %v8675
      %v8678 = vshrl.u32 %v8453, 16
      %v8680 = vrot.slane %v8678, 4
      %v8681 = vshll.u32 %v8453, 16
      %v8683 = vrot.slane %v8681, 5
      %v8684 = vor.u32 %v8680, %v8683
      %v8685 = vrot.slane %v8684, 4
      %v8687 = vshll.u32 %v8454, 16
      %v8689 = vrot.slane %v8687, 5
      %v8690 = vsel %vm1156, %v8685, %v8689
      %v8691 = vshrl.u32 %v8454, 16
      %v8693 = vrot.slane %v8691, 4
      %v8694 = vor.u32 %v8693, %v8689
      %v8695 = vrot.slane %v8694, 4
      %v8697 = vshll.u32 %v8477, 16
      %v8699 = vrot.slane %v8697, 5
      %v8700 = vsel %vm1156, %v8695, %v8699
      %v8702 = vshrl.u32 %v8455, 16
      %v8704 = vrot.slane %v8702, 4
      %v8705 = vshll.u32 %v8455, 16
      %v8707 = vrot.slane %v8705, 5
      %v8708 = vor.u32 %v8704, %v8707
      %v8709 = vrot.slane %v8708, 4
      %v8711 = vshll.u32 %v8456, 16
      %v8713 = vrot.slane %v8711, 5
      %v8714 = vsel %vm1156, %v8709, %v8713
      %v8715 = vshrl.u32 %v8456, 16
      %v8717 = vrot.slane %v8715, 4
      %v8718 = vor.u32 %v8717, %v8713
      %v8719 = vrot.slane %v8718, 4
      %v8721 = vshll.u32 %v8478, 16
      %v8723 = vrot.slane %v8721, 5
      %v8724 = vsel %vm1156, %v8719, %v8723
      %v8726 = vshrl.u32 %v8457, 16
      %v8728 = vrot.slane %v8726, 4
      %v8729 = vshll.u32 %v8457, 16
      %v8731 = vrot.slane %v8729, 5
      %v8732 = vor.u32 %v8728, %v8731
      %v8733 = vrot.slane %v8732, 4
      %v8735 = vshll.u32 %v8458, 16
      %v8737 = vrot.slane %v8735, 5
      %v8738 = vsel %vm1156, %v8733, %v8737
      %v8739 = vshrl.u32 %v8458, 16
      %v8741 = vrot.slane %v8739, 4
      %v8742 = vor.u32 %v8741, %v8737
      %v8743 = vrot.slane %v8742, 4
      %v8745 = vshll.u32 %v8479, 16
      %v8747 = vrot.slane %v8745, 5
      %v8748 = vsel %vm1156, %v8743, %v8747
      %v8750 = vshrl.u32 %v8459, 16
      %v8752 = vrot.slane %v8750, 4
      %v8753 = vshll.u32 %v8459, 16
      %v8755 = vrot.slane %v8753, 5
      %v8756 = vor.u32 %v8752, %v8755
      %v8757 = vrot.slane %v8756, 4
      %v8759 = vshll.u32 %v8460, 16
      %v8761 = vrot.slane %v8759, 5
      %v8762 = vsel %vm1156, %v8757, %v8761
      %v8763 = vshrl.u32 %v8460, 16
      %v8765 = vrot.slane %v8763, 4
      %v8766 = vor.u32 %v8765, %v8761
      %v8767 = vrot.slane %v8766, 4
      %v8769 = vshll.u32 %v8480, 16
      %v8771 = vrot.slane %v8769, 5
      %v8772 = vsel %vm1156, %v8767, %v8771
      %v8774 = vshrl.u32 %v8461, 16
      %v8776 = vrot.slane %v8774, 4
      %v8777 = vshll.u32 %v8461, 16
      %v8779 = vrot.slane %v8777, 5
      %v8780 = vor.u32 %v8776, %v8779
      %v8781 = vrot.slane %v8780, 4
      %v8783 = vshll.u32 %v8462, 16
      %v8785 = vrot.slane %v8783, 5
      %v8786 = vsel %vm1156, %v8781, %v8785
      %v8787 = vshrl.u32 %v8462, 16
      %v8789 = vrot.slane %v8787, 4
      %v8790 = vor.u32 %v8789, %v8785
      %v8791 = vrot.slane %v8790, 4
      %v8793 = vshll.u32 %v8481, 16
      %v8795 = vrot.slane %v8793, 5
      %v8796 = vsel %vm1156, %v8791, %v8795
      %v8798 = vshrl.u32 %v8463, 16
      %v8800 = vrot.slane %v8798, 4
      %v8801 = vshll.u32 %v8463, 16
      %v8803 = vrot.slane %v8801, 5
      %v8804 = vor.u32 %v8800, %v8803
      %v8805 = vrot.slane %v8804, 4
      %v8807 = vshll.u32 %v8464, 16
      %v8809 = vrot.slane %v8807, 5
      %v8810 = vsel %vm1156, %v8805, %v8809
      %v8811 = vshrl.u32 %v8464, 16
      %v8813 = vrot.slane %v8811, 4
      %v8814 = vor.u32 %v8813, %v8809
      %v8815 = vrot.slane %v8814, 4
      %v8817 = vshll.u32 %v8482, 16
      %v8819 = vrot.slane %v8817, 5
      %v8820 = vsel %vm1156, %v8815, %v8819
      %v8822 = vshrl.u32 %v8465, 16
      %v8824 = vrot.slane %v8822, 4
      %v8825 = vshll.u32 %v8465, 16
      %v8827 = vrot.slane %v8825, 5
      %v8828 = vor.u32 %v8824, %v8827
      %v8829 = vrot.slane %v8828, 4
      %v8831 = vshll.u32 %v8466, 16
      %v8833 = vrot.slane %v8831, 5
      %v8834 = vsel %vm1156, %v8829, %v8833
      %v8835 = vshrl.u32 %v8466, 16
      %v8837 = vrot.slane %v8835, 4
      %v8838 = vor.u32 %v8837, %v8833
      %v8839 = vrot.slane %v8838, 4
      %v8841 = vshll.u32 %v8483, 16
      %v8843 = vrot.slane %v8841, 5
      %v8844 = vsel %vm1156, %v8839, %v8843
      %v8846 = vshrl.u32 %v8467, 16
      %v8848 = vrot.slane %v8846, 4
      %v8849 = vshll.u32 %v8467, 16
      %v8851 = vrot.slane %v8849, 5
      %v8852 = vor.u32 %v8848, %v8851
      %v8853 = vrot.slane %v8852, 4
      %v8855 = vshll.u32 %v8468, 16
      %v8857 = vrot.slane %v8855, 5
      %v8858 = vsel %vm1156, %v8853, %v8857
      %v8859 = vshrl.u32 %v8468, 16
      %v8861 = vrot.slane %v8859, 4
      %v8862 = vor.u32 %v8861, %v8857
      %v8863 = vrot.slane %v8862, 4
      %v8865 = vshll.u32 %v8484, 16
      %v8867 = vrot.slane %v8865, 5
      %v8868 = vsel %vm1156, %v8863, %v8867
      %v8869 = vld [vmem:[%s8436] sm:$0xe]
      %v8870 = vld [vmem:[%s8436 + $0xc] sm:$0xe]
      %v8871 = vld [vmem:[%s8436 + $0x18] sm:$0xe]
      %v8872 = vld [vmem:[%s8436 + $0x24] sm:$0xe]
      %v8873 = vld [vmem:[%s8436 + $0x30] sm:$0xe]
      %v8874 = vld [vmem:[%s8436 + $0x3c] sm:$0xe]
      %v8875 = vld [vmem:[%s8436 + $0x48] sm:$0xe]
      %v8876 = vld [vmem:[%s8436 + $0x54] sm:$0xe]
      %v8877 = vld [vmem:[%s8436 + $0x60] sm:$0xe]
      %v8878 = vld [vmem:[%s8436 + $0x6c] sm:$0xe]
      %v8879 = vld [vmem:[%s8436 + $0x78] sm:$0xe]
      %v8880 = vld [vmem:[%s8436 + $0x84] sm:$0xe]
      %v8881 = vld [vmem:[%s8436 + $0x90] sm:$0xe]
      %v8882 = vld [vmem:[%s8436 + $0x9c] sm:$0xe]
      %v8883 = vld [vmem:[%s8436 + $0xa8] sm:$0xe]
      %v8884 = vld [vmem:[%s8436 + $0xb4] sm:$0xe]
      %v8933 = vrot.slane %v8869, 5
      %v8934 = vrot.slane %v8933, 4
      %v8935 = vrot.slane %v8438, 5
      %v8936 = vsel %vm1607, %v8934, %v8935
      %v8937 = vrot.slane %v8935, 4
      %v8938 = vrot.slane %v8469, 5
      %v8939 = vsel %vm1607, %v8937, %v8938
      %v8940 = vrot.slane %v8870, 5
      %v8941 = vrot.slane %v8940, 4
      %v8942 = vrot.slane %v8440, 5
      %v8943 = vsel %vm1607, %v8941, %v8942
      %v8944 = vrot.slane %v8942, 4
      %v8945 = vrot.slane %v8470, 5
      %v8946 = vsel %vm1607, %v8944, %v8945
      %v8947 = vrot.slane %v8871, 5
      %v8948 = vrot.slane %v8947, 4
      %v8949 = vrot.slane %v8442, 5
      %v8950 = vsel %vm1607, %v8948, %v8949
      %v8951 = vrot.slane %v8949, 4
      %v8952 = vrot.slane %v8471, 5
      %v8953 = vsel %vm1607, %v8951, %v8952
      %v8954 = vrot.slane %v8872, 5
      %v8955 = vrot.slane %v8954, 4
      %v8956 = vrot.slane %v8444, 5
      %v8957 = vsel %vm1607, %v8955, %v8956
      %v8958 = vrot.slane %v8956, 4
      %v8959 = vrot.slane %v8472, 5
      %v8960 = vsel %vm1607, %v8958, %v8959
      %v8961 = vrot.slane %v8873, 5
      %v8962 = vrot.slane %v8961, 4
      %v8963 = vrot.slane %v8446, 5
      %v8964 = vsel %vm1607, %v8962, %v8963
      %v8965 = vrot.slane %v8963, 4
      %v8966 = vrot.slane %v8473, 5
      %v8967 = vsel %vm1607, %v8965, %v8966
      %v8968 = vrot.slane %v8874, 5
      %v8969 = vrot.slane %v8968, 4
      %v8970 = vrot.slane %v8448, 5
      %v8971 = vsel %vm1607, %v8969, %v8970
      %v8972 = vrot.slane %v8970, 4
      %v8973 = vrot.slane %v8474, 5
      %v8974 = vsel %vm1607, %v8972, %v8973
      %v8975 = vrot.slane %v8875, 5
      %v8976 = vrot.slane %v8975, 4
      %v8977 = vrot.slane %v8450, 5
      %v8978 = vsel %vm1607, %v8976, %v8977
      %v8979 = vrot.slane %v8977, 4
      %v8980 = vrot.slane %v8475, 5
      %v8981 = vsel %vm1607, %v8979, %v8980
      %v8982 = vrot.slane %v8876, 5
      %v8983 = vrot.slane %v8982, 4
      %v8984 = vrot.slane %v8452, 5
      %v8985 = vsel %vm1607, %v8983, %v8984
      %v8986 = vrot.slane %v8984, 4
      %v8987 = vrot.slane %v8476, 5
      %v8988 = vsel %vm1607, %v8986, %v8987
      %v8989 = vrot.slane %v8877, 5
      %v8990 = vrot.slane %v8989, 4
      %v8991 = vrot.slane %v8454, 5
      %v8992 = vsel %vm1607, %v8990, %v8991
      %v8993 = vrot.slane %v8991, 4
      %v8994 = vrot.slane %v8477, 5
      %v8995 = vsel %vm1607, %v8993, %v8994
      %v8996 = vrot.slane %v8878, 5
      %v8997 = vrot.slane %v8996, 4
      %v8998 = vrot.slane %v8456, 5
      %v8999 = vsel %vm1607, %v8997, %v8998
      %v9000 = vrot.slane %v8998, 4
      %v9001 = vrot.slane %v8478, 5
      %v9002 = vsel %vm1607, %v9000, %v9001
      %v9003 = vrot.slane %v8879, 5
      %v9004 = vrot.slane %v9003, 4
      %v9005 = vrot.slane %v8458, 5
      %v9006 = vsel %vm1607, %v9004, %v9005
      %v9007 = vrot.slane %v9005, 4
      %v9008 = vrot.slane %v8479, 5
      %v9009 = vsel %vm1607, %v9007, %v9008
      %v9010 = vrot.slane %v8880, 5
      %v9011 = vrot.slane %v9010, 4
      %v9012 = vrot.slane %v8460, 5
      %v9013 = vsel %vm1607, %v9011, %v9012
      %v9014 = vrot.slane %v9012, 4
      %v9015 = vrot.slane %v8480, 5
      %v9016 = vsel %vm1607, %v9014, %v9015
      %v9017 = vrot.slane %v8881, 5
      %v9018 = vrot.slane %v9017, 4
      %v9019 = vrot.slane %v8462, 5
      %v9020 = vsel %vm1607, %v9018, %v9019
      %v9021 = vrot.slane %v9019, 4
      %v9022 = vrot.slane %v8481, 5
      %v9023 = vsel %vm1607, %v9021, %v9022
      %v9024 = vrot.slane %v8882, 5
      %v9025 = vrot.slane %v9024, 4
      %v9026 = vrot.slane %v8464, 5
      %v9027 = vsel %vm1607, %v9025, %v9026
      %v9028 = vrot.slane %v9026, 4
      %v9029 = vrot.slane %v8482, 5
      %v9030 = vsel %vm1607, %v9028, %v9029
      %v9031 = vrot.slane %v8883, 5
      %v9032 = vrot.slane %v9031, 4
      %v9033 = vrot.slane %v8466, 5
      %v9034 = vsel %vm1607, %v9032, %v9033
      %v9035 = vrot.slane %v9033, 4
      %v9036 = vrot.slane %v8483, 5
      %v9037 = vsel %vm1607, %v9035, %v9036
      %v9038 = vrot.slane %v8884, 5
      %v9039 = vrot.slane %v9038, 4
      %v9040 = vrot.slane %v8468, 5
      %v9041 = vsel %vm1607, %v9039, %v9040
      %v9042 = vrot.slane %v9040, 4
      %v9043 = vrot.slane %v8484, 5
      %v9044 = vsel %vm1607, %v9042, %v9043
      %v9061 = vunpack.c.l.b16 %v8437
      %v9062 = vunpack.c.l.b16 %v8438
      %v9063 = vunpack.c.l.b16 %v8439
      %v9064 = vunpack.c.l.b16 %v8440
      %v9065 = vunpack.c.l.b16 %v8441
      %v9066 = vunpack.c.l.b16 %v8442
      %v9067 = vunpack.c.l.b16 %v8443
      %v9068 = vunpack.c.l.b16 %v8444
      %v9069 = vunpack.c.l.b16 %v8445
      %v9070 = vunpack.c.l.b16 %v8446
      %v9071 = vunpack.c.l.b16 %v8447
      %v9072 = vunpack.c.l.b16 %v8448
      %v9073 = vunpack.c.l.b16 %v8449
      %v9074 = vunpack.c.l.b16 %v8450
      %v9075 = vunpack.c.l.b16 %v8451
      %v9076 = vunpack.c.l.b16 %v8452
      %v9077 = vunpack.c.l.b16 %v8453
      %v9078 = vunpack.c.l.b16 %v8454
      %v9079 = vunpack.c.l.b16 %v8455
      %v9080 = vunpack.c.l.b16 %v8456
      %v9081 = vunpack.c.l.b16 %v8457
      %v9082 = vunpack.c.l.b16 %v8458
      %v9083 = vunpack.c.l.b16 %v8459
      %v9084 = vunpack.c.l.b16 %v8460
      %v9085 = vunpack.c.l.b16 %v8461
      %v9086 = vunpack.c.l.b16 %v8462
      %v9087 = vunpack.c.l.b16 %v8463
      %v9088 = vunpack.c.l.b16 %v8464
      %v9089 = vunpack.c.l.b16 %v8465
      %v9090 = vunpack.c.l.b16 %v8466
      %v9091 = vunpack.c.l.b16 %v8467
      %v9092 = vunpack.c.l.b16 %v8468
      %v9093 = vpack.c.b16 %v9062, %v9061
      %v9094 = vpack.c.b16 %v9064, %v9063
      %v9095 = vpack.c.b16 %v9066, %v9065
      %v9096 = vpack.c.b16 %v9068, %v9067
      %v9097 = vpack.c.b16 %v9070, %v9069
      %v9098 = vpack.c.b16 %v9072, %v9071
      %v9099 = vpack.c.b16 %v9074, %v9073
      %v9100 = vpack.c.b16 %v9076, %v9075
      %v9101 = vpack.c.b16 %v9078, %v9077
      %v9102 = vpack.c.b16 %v9080, %v9079
      %v9103 = vpack.c.b16 %v9082, %v9081
      %v9104 = vpack.c.b16 %v9084, %v9083
      %v9105 = vpack.c.b16 %v9086, %v9085
      %v9106 = vpack.c.b16 %v9088, %v9087
      %v9107 = vpack.c.b16 %v9090, %v9089
      %v9108 = vpack.c.b16 %v9092, %v9091
      %v9125 = vunpack.c.l.b16 %v8498
      %v9126 = vunpack.c.l.b16 %v8508
      %v9127 = vunpack.c.l.b16 %v8522
      %v9128 = vunpack.c.l.b16 %v8532
      %v9129 = vunpack.c.l.b16 %v8546
      %v9130 = vunpack.c.l.b16 %v8556
      %v9131 = vunpack.c.l.b16 %v8570
      %v9132 = vunpack.c.l.b16 %v8580
      %v9133 = vunpack.c.l.b16 %v8594
      %v9134 = vunpack.c.l.b16 %v8604
      %v9135 = vunpack.c.l.b16 %v8618
      %v9136 = vunpack.c.l.b16 %v8628
      %v9137 = vunpack.c.l.b16 %v8642
      %v9138 = vunpack.c.l.b16 %v8652
      %v9139 = vunpack.c.l.b16 %v8666
      %v9140 = vunpack.c.l.b16 %v8676
      %v9141 = vunpack.c.l.b16 %v8690
      %v9142 = vunpack.c.l.b16 %v8700
      %v9143 = vunpack.c.l.b16 %v8714
      %v9144 = vunpack.c.l.b16 %v8724
      %v9145 = vunpack.c.l.b16 %v8738
      %v9146 = vunpack.c.l.b16 %v8748
      %v9147 = vunpack.c.l.b16 %v8762
      %v9148 = vunpack.c.l.b16 %v8772
      %v9149 = vunpack.c.l.b16 %v8786
      %v9150 = vunpack.c.l.b16 %v8796
      %v9151 = vunpack.c.l.b16 %v8810
      %v9152 = vunpack.c.l.b16 %v8820
      %v9153 = vunpack.c.l.b16 %v8834
      %v9154 = vunpack.c.l.b16 %v8844
      %v9155 = vunpack.c.l.b16 %v8858
      %v9156 = vunpack.c.l.b16 %v8868
      %v9157 = vpack.c.b16 %v9126, %v9125
      %v9158 = vpack.c.b16 %v9128, %v9127
      %v9159 = vpack.c.b16 %v9130, %v9129
      %v9160 = vpack.c.b16 %v9132, %v9131
      %v9161 = vpack.c.b16 %v9134, %v9133
      %v9162 = vpack.c.b16 %v9136, %v9135
      %v9163 = vpack.c.b16 %v9138, %v9137
      %v9164 = vpack.c.b16 %v9140, %v9139
      %v9165 = vpack.c.b16 %v9142, %v9141
      %v9166 = vpack.c.b16 %v9144, %v9143
      %v9167 = vpack.c.b16 %v9146, %v9145
      %v9168 = vpack.c.b16 %v9148, %v9147
      %v9169 = vpack.c.b16 %v9150, %v9149
      %v9170 = vpack.c.b16 %v9152, %v9151
      %v9171 = vpack.c.b16 %v9154, %v9153
      %v9172 = vpack.c.b16 %v9156, %v9155
      %v9189 = vunpack.c.l.b16 %v8936
      %v9190 = vunpack.c.l.b16 %v8939
      %v9191 = vunpack.c.l.b16 %v8943
      %v9192 = vunpack.c.l.b16 %v8946
      %v9193 = vunpack.c.l.b16 %v8950
      %v9194 = vunpack.c.l.b16 %v8953
      %v9195 = vunpack.c.l.b16 %v8957
      %v9196 = vunpack.c.l.b16 %v8960
      %v9197 = vunpack.c.l.b16 %v8964
      %v9198 = vunpack.c.l.b16 %v8967
      %v9199 = vunpack.c.l.b16 %v8971
      %v9200 = vunpack.c.l.b16 %v8974
      %v9201 = vunpack.c.l.b16 %v8978
      %v9202 = vunpack.c.l.b16 %v8981
      %v9203 = vunpack.c.l.b16 %v8985
      %v9204 = vunpack.c.l.b16 %v8988
      %v9205 = vunpack.c.l.b16 %v8992
      %v9206 = vunpack.c.l.b16 %v8995
      %v9207 = vunpack.c.l.b16 %v8999
      %v9208 = vunpack.c.l.b16 %v9002
      %v9209 = vunpack.c.l.b16 %v9006
      %v9210 = vunpack.c.l.b16 %v9009
      %v9211 = vunpack.c.l.b16 %v9013
      %v9212 = vunpack.c.l.b16 %v9016
      %v9213 = vunpack.c.l.b16 %v9020
      %v9214 = vunpack.c.l.b16 %v9023
      %v9215 = vunpack.c.l.b16 %v9027
      %v9216 = vunpack.c.l.b16 %v9030
      %v9217 = vunpack.c.l.b16 %v9034
      %v9218 = vunpack.c.l.b16 %v9037
      %v9219 = vunpack.c.l.b16 %v9041
      %v9220 = vunpack.c.l.b16 %v9044
      %v9221 = vpack.c.b16 %v9190, %v9189
      %v9222 = vpack.c.b16 %v9192, %v9191
      %v9223 = vpack.c.b16 %v9194, %v9193
      %v9224 = vpack.c.b16 %v9196, %v9195
      %v9225 = vpack.c.b16 %v9198, %v9197
      %v9226 = vpack.c.b16 %v9200, %v9199
      %v9227 = vpack.c.b16 %v9202, %v9201
      %v9228 = vpack.c.b16 %v9204, %v9203
      %v9229 = vpack.c.b16 %v9206, %v9205
      %v9230 = vpack.c.b16 %v9208, %v9207
      %v9231 = vpack.c.b16 %v9210, %v9209
      %v9232 = vpack.c.b16 %v9212, %v9211
      %v9233 = vpack.c.b16 %v9214, %v9213
      %v9234 = vpack.c.b16 %v9216, %v9215
      %v9235 = vpack.c.b16 %v9218, %v9217
      %v9236 = vpack.c.b16 %v9220, %v9219
      %v9253 = vld [vmem:[%s4 + $0x180] sm:$0xf]
      %v9254 = vld [vmem:[%s4 + $0x184] sm:$0xf]
      %v9255 = vld [vmem:[%s4 + $0x188] sm:$0xf]
      %v9256 = vld [vmem:[%s4 + $0x18c] sm:$0xf]
      %v9257 = vld [vmem:[%s4 + $0x190] sm:$0xf]
      %v9258 = vld [vmem:[%s4 + $0x194] sm:$0xf]
      %v9259 = vld [vmem:[%s4 + $0x198] sm:$0xf]
      %v9260 = vld [vmem:[%s4 + $0x19c] sm:$0xf]
      %v9261 = vld [vmem:[%s4 + $0x1a0] sm:$0xf]
      %v9262 = vld [vmem:[%s4 + $0x1a4] sm:$0xf]
      %v9263 = vld [vmem:[%s4 + $0x1a8] sm:$0xf]
      %v9264 = vld [vmem:[%s4 + $0x1ac] sm:$0xf]
      %v9265 = vld [vmem:[%s4 + $0x1b0] sm:$0xf]
      %v9266 = vld [vmem:[%s4 + $0x1b4] sm:$0xf]
      %v9267 = vld [vmem:[%s4 + $0x1b8] sm:$0xf]
      %v9268 = vld [vmem:[%s4 + $0x1bc] sm:$0xf]
      %v9269 = vld [vmem:[%s4 + $0x1c0] sm:$0xf]
      %v9270 = vld [vmem:[%s4 + $0x1c4] sm:$0xf]
      %v9271 = vld [vmem:[%s4 + $0x1c8] sm:$0xf]
      %v9272 = vld [vmem:[%s4 + $0x1cc] sm:$0xf]
      %v9273 = vld [vmem:[%s4 + $0x1d0] sm:$0xf]
      %v9274 = vld [vmem:[%s4 + $0x1d4] sm:$0xf]
      %v9275 = vld [vmem:[%s4 + $0x1d8] sm:$0xf]
      %v9276 = vld [vmem:[%s4 + $0x1dc] sm:$0xf]
      %v9277 = vld [vmem:[%s4 + $0x1e0] sm:$0xf]
      %v9278 = vld [vmem:[%s4 + $0x1e4] sm:$0xf]
      %v9279 = vld [vmem:[%s4 + $0x1e8] sm:$0xf]
      %v9280 = vld [vmem:[%s4 + $0x1ec] sm:$0xf]
      %v9281 = vld [vmem:[%s4 + $0x1f0] sm:$0xf]
      %v9282 = vld [vmem:[%s4 + $0x1f4] sm:$0xf]
      %v9283 = vld [vmem:[%s4 + $0x1f8] sm:$0xf]
      %v9284 = vld [vmem:[%s4 + $0x1fc] sm:$0xf]
      %v9285 = vld [vmem:[%s4 + $0x200] sm:$0xf]
      %v9286 = vld [vmem:[%s4 + $0x204] sm:$0xf]
      %v9287 = vld [vmem:[%s4 + $0x208] sm:$0xf]
      %v9288 = vld [vmem:[%s4 + $0x20c] sm:$0xf]
      %v9289 = vld [vmem:[%s4 + $0x210] sm:$0xf]
      %v9290 = vld [vmem:[%s4 + $0x214] sm:$0xf]
      %v9291 = vld [vmem:[%s4 + $0x218] sm:$0xf]
      %v9292 = vld [vmem:[%s4 + $0x21c] sm:$0xf]
      %v9293 = vld [vmem:[%s4 + $0x220] sm:$0xf]
      %v9294 = vld [vmem:[%s4 + $0x224] sm:$0xf]
      %v9295 = vld [vmem:[%s4 + $0x228] sm:$0xf]
      %v9296 = vld [vmem:[%s4 + $0x22c] sm:$0xf]
      %v9297 = vld [vmem:[%s4 + $0x230] sm:$0xf]
      %v9298 = vld [vmem:[%s4 + $0x234] sm:$0xf]
      %v9299 = vld [vmem:[%s4 + $0x238] sm:$0xf]
      %v9300 = vld [vmem:[%s4 + $0x23c] sm:$0xf]
      %v9349 = vunpack.c.l.b16 %v9253
      %v9350 = vunpack.c.l.b16 %v9254
      %v9351 = vunpack.c.l.b16 %v9255
      %v9352 = vunpack.c.l.b16 %v9256
      %v9353 = vunpack.c.l.b16 %v9257
      %v9354 = vunpack.c.l.b16 %v9258
      %v9355 = vunpack.c.l.b16 %v9259
      %v9356 = vunpack.c.l.b16 %v9260
      %v9357 = vunpack.c.l.b16 %v9261
      %v9358 = vunpack.c.l.b16 %v9262
      %v9359 = vunpack.c.l.b16 %v9263
      %v9360 = vunpack.c.l.b16 %v9264
      %v9361 = vunpack.c.l.b16 %v9265
      %v9362 = vunpack.c.l.b16 %v9266
      %v9363 = vunpack.c.l.b16 %v9267
      %v9364 = vunpack.c.l.b16 %v9268
      %v9365 = vunpack.c.l.b16 %v9269
      %v9366 = vunpack.c.l.b16 %v9270
      %v9367 = vunpack.c.l.b16 %v9271
      %v9368 = vunpack.c.l.b16 %v9272
      %v9369 = vunpack.c.l.b16 %v9273
      %v9370 = vunpack.c.l.b16 %v9274
      %v9371 = vunpack.c.l.b16 %v9275
      %v9372 = vunpack.c.l.b16 %v9276
      %v9373 = vunpack.c.l.b16 %v9277
      %v9374 = vunpack.c.l.b16 %v9278
      %v9375 = vunpack.c.l.b16 %v9279
      %v9376 = vunpack.c.l.b16 %v9280
      %v9377 = vunpack.c.l.b16 %v9281
      %v9378 = vunpack.c.l.b16 %v9282
      %v9379 = vunpack.c.l.b16 %v9283
      %v9380 = vunpack.c.l.b16 %v9284
      %v9381 = vunpack.c.l.b16 %v9285
      %v9382 = vunpack.c.l.b16 %v9286
      %v9383 = vunpack.c.l.b16 %v9287
      %v9384 = vunpack.c.l.b16 %v9288
      %v9385 = vunpack.c.l.b16 %v9289
      %v9386 = vunpack.c.l.b16 %v9290
      %v9387 = vunpack.c.l.b16 %v9291
      %v9388 = vunpack.c.l.b16 %v9292
      %v9389 = vunpack.c.l.b16 %v9293
      %v9390 = vunpack.c.l.b16 %v9294
      %v9391 = vunpack.c.l.b16 %v9295
      %v9392 = vunpack.c.l.b16 %v9296
      %v9393 = vunpack.c.l.b16 %v9297
      %v9394 = vunpack.c.l.b16 %v9298
      %v9395 = vunpack.c.l.b16 %v9299
      %v9396 = vunpack.c.l.b16 %v9300
      %v9397 = vpack.c.b16 %v9350, %v9349
      %v9398 = vpack.c.b16 %v9352, %v9351
      %v9399 = vpack.c.b16 %v9354, %v9353
      %v9400 = vpack.c.b16 %v9356, %v9355
      %v9401 = vpack.c.b16 %v9358, %v9357
      %v9402 = vpack.c.b16 %v9360, %v9359
      %v9403 = vpack.c.b16 %v9362, %v9361
      %v9404 = vpack.c.b16 %v9364, %v9363
      %v9405 = vpack.c.b16 %v9366, %v9365
      %v9406 = vpack.c.b16 %v9368, %v9367
      %v9407 = vpack.c.b16 %v9370, %v9369
      %v9408 = vpack.c.b16 %v9372, %v9371
      %v9409 = vpack.c.b16 %v9374, %v9373
      %v9410 = vpack.c.b16 %v9376, %v9375
      %v9411 = vpack.c.b16 %v9378, %v9377
      %v9412 = vpack.c.b16 %v9380, %v9379
      %v9413 = vpack.c.b16 %v9382, %v9381
      %v9414 = vpack.c.b16 %v9384, %v9383
      %v9415 = vpack.c.b16 %v9386, %v9385
      %v9416 = vpack.c.b16 %v9388, %v9387
      %v9417 = vpack.c.b16 %v9390, %v9389
      %v9418 = vpack.c.b16 %v9392, %v9391
      %v9419 = vpack.c.b16 %v9394, %v9393
      %v9420 = vpack.c.b16 %v9396, %v9395
      %9445 = vmatprep.subr.bf16.mxu0 0
      %9446 = vmatpush1.bf16.msra.mxu0 %v9404
      %9447 = vmatprep.subr.bf16.mxu0 0
      %9448 = vmatpush1.bf16.msra.mxu0 %v9403
      %9449 = vmatprep.subr.bf16.mxu0 0
      %9450 = vmatpush1.bf16.msra.mxu0 %v9402
      %9451 = vmatprep.subr.bf16.mxu0 0
      %9452 = vmatpush1.bf16.msra.mxu0 %v9401
      %9453 = vmatprep.subr.bf16.mxu0 0
      %9454 = vmatpush1.bf16.msra.mxu0 %v9400
      %9455 = vmatprep.subr.bf16.mxu0 0
      %9456 = vmatpush1.bf16.msra.mxu0 %v9399
      %9457 = vmatprep.subr.bf16.mxu0 0
      %9458 = vmatpush1.bf16.msra.mxu0 %v9398
      %9459 = vmatprep.subr.bf16.mxu0 0
      %9460 = vmatpush1.bf16.msra.mxu0 %v9397
      %9461 = vmatprep.subr.bf16.mxu0 0
      %9462 = vmatpush2.bf16.msra.mxu0 %v9412
      %9463 = vmatprep.subr.bf16.mxu0 0
      %9464 = vmatpush2.bf16.msra.mxu0 %v9411
      %9465 = vmatprep.subr.bf16.mxu0 0
      %9466 = vmatpush2.bf16.msra.mxu0 %v9410
      %9467 = vmatprep.subr.bf16.mxu0 0
      %9468 = vmatpush2.bf16.msra.mxu0 %v9409
      %9469 = vmatprep.subr.bf16.mxu0 0
      %9470 = vmatpush2.bf16.msra.mxu0 %v9408
      %9471 = vmatprep.subr.bf16.mxu0 0
      %9472 = vmatpush2.bf16.msra.mxu0 %v9407
      %9473 = vmatprep.subr.bf16.mxu0 0
      %9474 = vmatpush2.bf16.msra.mxu0 %v9406
      %9475 = vmatprep.subr.bf16.mxu0 0
      %9476 = vmatpush2.bf16.msra.mxu0 %v9405
      %9477 = vmatprep.mubr.bf16.mxu0 %v9157
      %9478 = vmatmul.mubr.bf16.gmra.mxu0 %v9093
      %v9479 = vpop.f32.mrf.mxu0
      %v9480 = vadd.f32 0.0, %v9479
      %v9481 = vpop.f32.mrf.mxu0
      %v9482 = vpop.f32.mrf.mxu0
      %v9483 = vadd.f32 0.0, %v9482
      %v9484 = vpop.f32.mrf.mxu0
      %9485 = vmatprep.mubr.bf16.mxu0 %v9158
      %9486 = vmatmul.mubr.bf16.gmra.mxu0 %v9094
      %v9487 = vpop.f32.mrf.mxu0
      %v9488 = vadd.f32 0.0, %v9487
      %v9489 = vpop.f32.mrf.mxu0
      %v9490 = vpop.f32.mrf.mxu0
      %v9491 = vadd.f32 0.0, %v9490
      %v9492 = vpop.f32.mrf.mxu0
      %9493 = vmatprep.mubr.bf16.mxu0 %v9159
      %9494 = vmatmul.mubr.bf16.gmra.mxu0 %v9095
      %v9495 = vpop.f32.mrf.mxu0
      %v9496 = vadd.f32 0.0, %v9495
      %v9497 = vpop.f32.mrf.mxu0
      %v9498 = vpop.f32.mrf.mxu0
      %v9499 = vadd.f32 0.0, %v9498
      %v9500 = vpop.f32.mrf.mxu0
      %9501 = vmatprep.mubr.bf16.mxu0 %v9160
      %9502 = vmatmul.mubr.bf16.gmra.mxu0 %v9096
      %v9503 = vpop.f32.mrf.mxu0
      %v9504 = vadd.f32 0.0, %v9503
      %v9505 = vpop.f32.mrf.mxu0
      %v9506 = vpop.f32.mrf.mxu0
      %v9507 = vadd.f32 0.0, %v9506
      %v9508 = vpop.f32.mrf.mxu0
      %9509 = vmatprep.mubr.bf16.mxu0 %v9161
      %9510 = vmatmul.mubr.bf16.gmra.mxu0 %v9097
      %v9511 = vpop.f32.mrf.mxu0
      %v9512 = vadd.f32 0.0, %v9511
      %v9513 = vpop.f32.mrf.mxu0
      %v9514 = vpop.f32.mrf.mxu0
      %v9515 = vadd.f32 0.0, %v9514
      %v9516 = vpop.f32.mrf.mxu0
      %9517 = vmatprep.mubr.bf16.mxu0 %v9162
      %9518 = vmatmul.mubr.bf16.gmra.mxu0 %v9098
      %v9519 = vpop.f32.mrf.mxu0
      %v9520 = vadd.f32 0.0, %v9519
      %v9521 = vpop.f32.mrf.mxu0
      %v9522 = vpop.f32.mrf.mxu0
      %v9523 = vadd.f32 0.0, %v9522
      %v9524 = vpop.f32.mrf.mxu0
      %9525 = vmatprep.mubr.bf16.mxu0 %v9163
      %9526 = vmatmul.mubr.bf16.gmra.mxu0 %v9099
      %v9527 = vpop.f32.mrf.mxu0
      %v9528 = vadd.f32 0.0, %v9527
      %v9529 = vpop.f32.mrf.mxu0
      %v9530 = vpop.f32.mrf.mxu0
      %v9531 = vadd.f32 0.0, %v9530
      %v9532 = vpop.f32.mrf.mxu0
      %9533 = vmatprep.mubr.bf16.mxu0 %v9164
      %9534 = vmatmul.mubr.bf16.gmra.mxu0 %v9100
      %v9535 = vpop.f32.mrf.mxu0
      %v9536 = vadd.f32 0.0, %v9535
      %v9537 = vpop.f32.mrf.mxu0
      %v9538 = vpop.f32.mrf.mxu0
      %v9539 = vadd.f32 0.0, %v9538
      %v9540 = vpop.f32.mrf.mxu0
      %9541 = vmatprep.mubr.bf16.mxu0 %v9165
      %9542 = vmatmul.mubr.bf16.gmra.mxu0 %v9101
      %v9543 = vpop.f32.mrf.mxu0
      %v9544 = vadd.f32 0.0, %v9543
      %v9545 = vpop.f32.mrf.mxu0
      %v9546 = vpop.f32.mrf.mxu0
      %v9547 = vadd.f32 0.0, %v9546
      %v9548 = vpop.f32.mrf.mxu0
      %9549 = vmatprep.mubr.bf16.mxu0 %v9166
      %9550 = vmatmul.mubr.bf16.gmra.mxu0 %v9102
      %v9551 = vpop.f32.mrf.mxu0
      %v9552 = vadd.f32 0.0, %v9551
      %v9553 = vpop.f32.mrf.mxu0
      %v9554 = vpop.f32.mrf.mxu0
      %v9555 = vadd.f32 0.0, %v9554
      %v9556 = vpop.f32.mrf.mxu0
      %9557 = vmatprep.mubr.bf16.mxu0 %v9167
      %9558 = vmatmul.mubr.bf16.gmra.mxu0 %v9103
      %v9559 = vpop.f32.mrf.mxu0
      %v9560 = vadd.f32 0.0, %v9559
      %v9561 = vpop.f32.mrf.mxu0
      %v9562 = vpop.f32.mrf.mxu0
      %v9563 = vadd.f32 0.0, %v9562
      %v9564 = vpop.f32.mrf.mxu0
      %9565 = vmatprep.mubr.bf16.mxu0 %v9168
      %9566 = vmatmul.mubr.bf16.gmra.mxu0 %v9104
      %v9567 = vpop.f32.mrf.mxu0
      %v9568 = vadd.f32 0.0, %v9567
      %v9569 = vpop.f32.mrf.mxu0
      %v9570 = vpop.f32.mrf.mxu0
      %v9571 = vadd.f32 0.0, %v9570
      %v9572 = vpop.f32.mrf.mxu0
      %9573 = vmatprep.mubr.bf16.mxu0 %v9169
      %9574 = vmatmul.mubr.bf16.gmra.mxu0 %v9105
      %v9575 = vpop.f32.mrf.mxu0
      %v9576 = vadd.f32 0.0, %v9575
      %v9577 = vpop.f32.mrf.mxu0
      %v9578 = vpop.f32.mrf.mxu0
      %v9579 = vadd.f32 0.0, %v9578
      %v9580 = vpop.f32.mrf.mxu0
      %9581 = vmatprep.mubr.bf16.mxu0 %v9170
      %9582 = vmatmul.mubr.bf16.gmra.mxu0 %v9106
      %v9583 = vpop.f32.mrf.mxu0
      %v9584 = vadd.f32 0.0, %v9583
      %v9585 = vpop.f32.mrf.mxu0
      %v9586 = vpop.f32.mrf.mxu0
      %v9587 = vadd.f32 0.0, %v9586
      %v9588 = vpop.f32.mrf.mxu0
      %9589 = vmatprep.mubr.bf16.mxu0 %v9171
      %9590 = vmatmul.mubr.bf16.gmra.mxu0 %v9107
      %v9591 = vpop.f32.mrf.mxu0
      %v9592 = vadd.f32 0.0, %v9591
      %v9593 = vpop.f32.mrf.mxu0
      %v9594 = vpop.f32.mrf.mxu0
      %v9595 = vadd.f32 0.0, %v9594
      %v9596 = vpop.f32.mrf.mxu0
      %9597 = vmatprep.mubr.bf16.mxu0 %v9172
      %9598 = vmatmul.mubr.bf16.gmra.mxu0 %v9108
      %v9599 = vpop.f32.mrf.mxu0
      %v9600 = vadd.f32 0.0, %v9599
      %v9601 = vpop.f32.mrf.mxu0
      %v9602 = vpop.f32.mrf.mxu0
      %v9603 = vadd.f32 0.0, %v9602
      %v9604 = vpop.f32.mrf.mxu0
      %9605 = vdwg.mxu0
      %9606 = vmatprep.subr.bf16.mxu0 0
      %9607 = vmatpush1.bf16.msra.mxu0 %v9420
      %9608 = vmatprep.subr.bf16.mxu0 0
      %9609 = vmatpush1.bf16.msra.mxu0 %v9419
      %9610 = vmatprep.subr.bf16.mxu0 0
      %9611 = vmatpush1.bf16.msra.mxu0 %v9418
      %9612 = vmatprep.subr.bf16.mxu0 0
      %9613 = vmatpush1.bf16.msra.mxu0 %v9417
      %9614 = vmatprep.subr.bf16.mxu0 0
      %9615 = vmatpush1.bf16.msra.mxu0 %v9416
      %9616 = vmatprep.subr.bf16.mxu0 0
      %9617 = vmatpush1.bf16.msra.mxu0 %v9415
      %9618 = vmatprep.subr.bf16.mxu0 0
      %9619 = vmatpush1.bf16.msra.mxu0 %v9414
      %9620 = vmatprep.subr.bf16.mxu0 0
      %9621 = vmatpush1.bf16.msra.mxu0 %v9413
      %9622 = vmatprep.subr.bf16.mxu0 0
      %9623 = vmatpush2.bf16.msra.mxu0 0
      %9624 = vmatprep.subr.bf16.mxu0 0
      %9625 = vmatpush2.bf16.msra.mxu0 0
      %9626 = vmatprep.subr.bf16.mxu0 0
      %9627 = vmatpush2.bf16.msra.mxu0 0
      %9628 = vmatprep.subr.bf16.mxu0 0
      %9629 = vmatpush2.bf16.msra.mxu0 0
      %9630 = vmatprep.subr.bf16.mxu0 0
      %9631 = vmatpush2.bf16.msra.mxu0 0
      %9632 = vmatprep.subr.bf16.mxu0 0
      %9633 = vmatpush2.bf16.msra.mxu0 0
      %9634 = vmatprep.subr.bf16.mxu0 0
      %9635 = vmatpush2.bf16.msra.mxu0 0
      %9636 = vmatprep.subr.bf16.mxu0 0
      %9637 = vmatpush2.bf16.msra.mxu0 0
      %9638 = vmatprep.mubr.bf16.mxu0 0
      %9639 = vmatmul.mubr.bf16.gmra.mxu0 %v9221
      %v9640 = vpop.f32.mrf.mxu0
      %v9641 = vadd.f32 %v9480, %v9640
      %v9642 = vpop.f32.mrf.mxu0
      %v9643 = vpop.f32.mrf.mxu0
      %v9644 = vadd.f32 %v9483, %v9643
      %v9645 = vpop.f32.mrf.mxu0
      %9646 = vmatprep.mubr.bf16.mxu0 0
      %9647 = vmatmul.mubr.bf16.gmra.mxu0 %v9222
      %v9648 = vpop.f32.mrf.mxu0
      %v9649 = vadd.f32 %v9488, %v9648
      %v9650 = vpop.f32.mrf.mxu0
      %v9651 = vpop.f32.mrf.mxu0
      %v9652 = vadd.f32 %v9491, %v9651
      %v9653 = vpop.f32.mrf.mxu0
      %9654 = vmatprep.mubr.bf16.mxu0 0
      %9655 = vmatmul.mubr.bf16.gmra.mxu0 %v9223
      %v9656 = vpop.f32.mrf.mxu0
      %v9657 = vadd.f32 %v9496, %v9656
      %v9658 = vpop.f32.mrf.mxu0
      %v9659 = vpop.f32.mrf.mxu0
      %v9660 = vadd.f32 %v9499, %v9659
      %v9661 = vpop.f32.mrf.mxu0
      %9662 = vmatprep.mubr.bf16.mxu0 0
      %9663 = vmatmul.mubr.bf16.gmra.mxu0 %v9224
      %v9664 = vpop.f32.mrf.mxu0
      %v9665 = vadd.f32 %v9504, %v9664
      %v9666 = vpop.f32.mrf.mxu0
      %v9667 = vpop.f32.mrf.mxu0
      %v9668 = vadd.f32 %v9507, %v9667
      %v9669 = vpop.f32.mrf.mxu0
      %9670 = vmatprep.mubr.bf16.mxu0 0
      %9671 = vmatmul.mubr.bf16.gmra.mxu0 %v9225
      %v9672 = vpop.f32.mrf.mxu0
      %v9673 = vadd.f32 %v9512, %v9672
      %v9674 = vpop.f32.mrf.mxu0
      %v9675 = vpop.f32.mrf.mxu0
      %v9676 = vadd.f32 %v9515, %v9675
      %v9677 = vpop.f32.mrf.mxu0
      %9678 = vmatprep.mubr.bf16.mxu0 0
      %9679 = vmatmul.mubr.bf16.gmra.mxu0 %v9226
      %v9680 = vpop.f32.mrf.mxu0
      %v9681 = vadd.f32 %v9520, %v9680
      %v9682 = vpop.f32.mrf.mxu0
      %v9683 = vpop.f32.mrf.mxu0
      %v9684 = vadd.f32 %v9523, %v9683
      %v9685 = vpop.f32.mrf.mxu0
      %9686 = vmatprep.mubr.bf16.mxu0 0
      %9687 = vmatmul.mubr.bf16.gmra.mxu0 %v9227
      %v9688 = vpop.f32.mrf.mxu0
      %v9689 = vadd.f32 %v9528, %v9688
      %v9690 = vpop.f32.mrf.mxu0
      %v9691 = vpop.f32.mrf.mxu0
      %v9692 = vadd.f32 %v9531, %v9691
      %v9693 = vpop.f32.mrf.mxu0
      %9694 = vmatprep.mubr.bf16.mxu0 0
      %9695 = vmatmul.mubr.bf16.gmra.mxu0 %v9228
      %v9696 = vpop.f32.mrf.mxu0
      %v9697 = vadd.f32 %v9536, %v9696
      %v9698 = vpop.f32.mrf.mxu0
      %v9699 = vpop.f32.mrf.mxu0
      %v9700 = vadd.f32 %v9539, %v9699
      %v9701 = vpop.f32.mrf.mxu0
      %9702 = vmatprep.mubr.bf16.mxu0 0
      %9703 = vmatmul.mubr.bf16.gmra.mxu0 %v9229
      %v9704 = vpop.f32.mrf.mxu0
      %v9705 = vadd.f32 %v9544, %v9704
      %v9706 = vpop.f32.mrf.mxu0
      %v9707 = vpop.f32.mrf.mxu0
      %v9708 = vadd.f32 %v9547, %v9707
      %v9709 = vpop.f32.mrf.mxu0
      %9710 = vmatprep.mubr.bf16.mxu0 0
      %9711 = vmatmul.mubr.bf16.gmra.mxu0 %v9230
      %v9712 = vpop.f32.mrf.mxu0
      %v9713 = vadd.f32 %v9552, %v9712
      %v9714 = vpop.f32.mrf.mxu0
      %v9715 = vpop.f32.mrf.mxu0
      %v9716 = vadd.f32 %v9555, %v9715
      %v9717 = vpop.f32.mrf.mxu0
      %9718 = vmatprep.mubr.bf16.mxu0 0
      %9719 = vmatmul.mubr.bf16.gmra.mxu0 %v9231
      %v9720 = vpop.f32.mrf.mxu0
      %v9721 = vadd.f32 %v9560, %v9720
      %v9722 = vpop.f32.mrf.mxu0
      %v9723 = vpop.f32.mrf.mxu0
      %v9724 = vadd.f32 %v9563, %v9723
      %v9725 = vpop.f32.mrf.mxu0
      %9726 = vmatprep.mubr.bf16.mxu0 0
      %9727 = vmatmul.mubr.bf16.gmra.mxu0 %v9232
      %v9728 = vpop.f32.mrf.mxu0
      %v9729 = vadd.f32 %v9568, %v9728
      %v9730 = vpop.f32.mrf.mxu0
      %v9731 = vpop.f32.mrf.mxu0
      %v9732 = vadd.f32 %v9571, %v9731
      %v9733 = vpop.f32.mrf.mxu0
      %9734 = vmatprep.mubr.bf16.mxu0 0
      %9735 = vmatmul.mubr.bf16.gmra.mxu0 %v9233
      %v9736 = vpop.f32.mrf.mxu0
      %v9737 = vadd.f32 %v9576, %v9736
      %v9738 = vpop.f32.mrf.mxu0
      %v9739 = vpop.f32.mrf.mxu0
      %v9740 = vadd.f32 %v9579, %v9739
      %v9741 = vpop.f32.mrf.mxu0
      %9742 = vmatprep.mubr.bf16.mxu0 0
      %9743 = vmatmul.mubr.bf16.gmra.mxu0 %v9234
      %v9744 = vpop.f32.mrf.mxu0
      %v9745 = vadd.f32 %v9584, %v9744
      %v9746 = vpop.f32.mrf.mxu0
      %v9747 = vpop.f32.mrf.mxu0
      %v9748 = vadd.f32 %v9587, %v9747
      %v9749 = vpop.f32.mrf.mxu0
      %9750 = vmatprep.mubr.bf16.mxu0 0
      %9751 = vmatmul.mubr.bf16.gmra.mxu0 %v9235
      %v9752 = vpop.f32.mrf.mxu0
      %v9753 = vadd.f32 %v9592, %v9752
      %v9754 = vpop.f32.mrf.mxu0
      %v9755 = vpop.f32.mrf.mxu0
      %v9756 = vadd.f32 %v9595, %v9755
      %v9757 = vpop.f32.mrf.mxu0
      %9758 = vmatprep.mubr.bf16.mxu0 0
      %9759 = vmatmul.mubr.bf16.gmra.mxu0 %v9236
      %v9760 = vpop.f32.mrf.mxu0
      %v9761 = vadd.f32 %v9600, %v9760
      %v9762 = vpop.f32.mrf.mxu0
      %v9763 = vpop.f32.mrf.mxu0
      %v9764 = vadd.f32 %v9603, %v9763
      %v9765 = vpop.f32.mrf.mxu0
      %9766 = vdwg.mxu0
      %v9767 = vadd.f32 %v8310, %v9641
      %v9768 = vadd.f32 %v8313, %v9644
      %v9769 = vadd.f32 %v8318, %v9649
      %v9770 = vadd.f32 %v8321, %v9652
      %v9771 = vadd.f32 %v8326, %v9657
      %v9772 = vadd.f32 %v8329, %v9660
      %v9773 = vadd.f32 %v8334, %v9665
      %v9774 = vadd.f32 %v8337, %v9668
      %v9775 = vadd.f32 %v8342, %v9673
      %v9776 = vadd.f32 %v8345, %v9676
      %v9777 = vadd.f32 %v8350, %v9681
      %v9778 = vadd.f32 %v8353, %v9684
      %v9779 = vadd.f32 %v8358, %v9689
      %v9780 = vadd.f32 %v8361, %v9692
      %v9781 = vadd.f32 %v8366, %v9697
      %v9782 = vadd.f32 %v8369, %v9700
      %v9783 = vadd.f32 %v8374, %v9705
      %v9784 = vadd.f32 %v8377, %v9708
      %v9785 = vadd.f32 %v8382, %v9713
      %v9786 = vadd.f32 %v8385, %v9716
      %v9787 = vadd.f32 %v8390, %v9721
      %v9788 = vadd.f32 %v8393, %v9724
      %v9789 = vadd.f32 %v8398, %v9729
      %v9790 = vadd.f32 %v8401, %v9732
      %v9791 = vadd.f32 %v8406, %v9737
      %v9792 = vadd.f32 %v8409, %v9740
      %v9793 = vadd.f32 %v8414, %v9745
      %v9794 = vadd.f32 %v8417, %v9748
      %v9795 = vadd.f32 %v8422, %v9753
      %v9796 = vadd.f32 %v8425, %v9756
      %v9797 = vadd.f32 %v8430, %v9761
      %v9798 = vadd.f32 %v8433, %v9764
      %v9800 = vlaneseq
      %v9801 = vshrl.u32 %v9800, 7
      %v9802 = vsub.s32 0, %v9801
      %v9803 = vrot.slane %v5774, %v9802
      %v9805 = vmul.f32 %v9767, %v9803
      %v9806 = vmul.f32 %v9768, %v9803
      %v9807 = vmul.f32 %v9769, %v9803
      %v9808 = vmul.f32 %v9770, %v9803
      %v9809 = vmul.f32 %v9771, %v9803
      %v9810 = vmul.f32 %v9772, %v9803
      %v9811 = vmul.f32 %v9773, %v9803
      %v9812 = vmul.f32 %v9774, %v9803
      %v9813 = vmul.f32 %v9775, %v9803
      %v9814 = vmul.f32 %v9776, %v9803
      %v9815 = vmul.f32 %v9777, %v9803
      %v9816 = vmul.f32 %v9778, %v9803
      %v9817 = vmul.f32 %v9779, %v9803
      %v9818 = vmul.f32 %v9780, %v9803
      %v9819 = vmul.f32 %v9781, %v9803
      %v9820 = vmul.f32 %v9782, %v9803
      %v9821 = vmul.f32 %v9783, %v9803
      %v9822 = vmul.f32 %v9784, %v9803
      %v9823 = vmul.f32 %v9785, %v9803
      %v9824 = vmul.f32 %v9786, %v9803
      %v9825 = vmul.f32 %v9787, %v9803
      %v9826 = vmul.f32 %v9788, %v9803
      %v9827 = vmul.f32 %v9789, %v9803
      %v9828 = vmul.f32 %v9790, %v9803
      %v9829 = vmul.f32 %v9791, %v9803
      %v9830 = vmul.f32 %v9792, %v9803
      %v9831 = vmul.f32 %v9793, %v9803
      %v9832 = vmul.f32 %v9794, %v9803
      %v9833 = vmul.f32 %v9795, %v9803
      %v9834 = vmul.f32 %v9796, %v9803
      %v9835 = vmul.f32 %v9797, %v9803
      %v9836 = vmul.f32 %v9798, %v9803
      %v9838 = vlaneseq
      %v9839 = vshrl.u32 %v9838, 7
      %v9840 = vsub.s32 0, %v9839
      %v9841 = vrot.slane %v5775, %v9840
      %v9843 = vadd.f32 %v9805, %v9841
      %v9844 = vadd.f32 %v9806, %v9841
      %v9845 = vadd.f32 %v9807, %v9841
      %v9846 = vadd.f32 %v9808, %v9841
      %v9847 = vadd.f32 %v9809, %v9841
      %v9848 = vadd.f32 %v9810, %v9841
      %v9849 = vadd.f32 %v9811, %v9841
      %v9850 = vadd.f32 %v9812, %v9841
      %v9851 = vadd.f32 %v9813, %v9841
      %v9852 = vadd.f32 %v9814, %v9841
      %v9853 = vadd.f32 %v9815, %v9841
      %v9854 = vadd.f32 %v9816, %v9841
      %v9855 = vadd.f32 %v9817, %v9841
      %v9856 = vadd.f32 %v9818, %v9841
      %v9857 = vadd.f32 %v9819, %v9841
      %v9858 = vadd.f32 %v9820, %v9841
      %v9859 = vadd.f32 %v9821, %v9841
      %v9860 = vadd.f32 %v9822, %v9841
      %v9861 = vadd.f32 %v9823, %v9841
      %v9862 = vadd.f32 %v9824, %v9841
      %v9863 = vadd.f32 %v9825, %v9841
      %v9864 = vadd.f32 %v9826, %v9841
      %v9865 = vadd.f32 %v9827, %v9841
      %v9866 = vadd.f32 %v9828, %v9841
      %v9867 = vadd.f32 %v9829, %v9841
      %v9868 = vadd.f32 %v9830, %v9841
      %v9869 = vadd.f32 %v9831, %v9841
      %v9870 = vadd.f32 %v9832, %v9841
      %v9871 = vadd.f32 %v9833, %v9841
      %v9872 = vadd.f32 %v9834, %v9841
      %v9873 = vadd.f32 %v9835, %v9841
      %v9874 = vadd.f32 %v9836, %v9841
      %v9875 = vmax.f32 %v9843, 0.0
      %v9876 = vmax.f32 %v9844, 0.0
      %v9877 = vmax.f32 %v9845, 0.0
      %v9878 = vmax.f32 %v9846, 0.0
      %v9879 = vmax.f32 %v9847, 0.0
      %v9880 = vmax.f32 %v9848, 0.0
      %v9881 = vmax.f32 %v9849, 0.0
      %v9882 = vmax.f32 %v9850, 0.0
      %v9883 = vmax.f32 %v9851, 0.0
      %v9884 = vmax.f32 %v9852, 0.0
      %v9885 = vmax.f32 %v9853, 0.0
      %v9886 = vmax.f32 %v9854, 0.0
      %v9887 = vmax.f32 %v9855, 0.0
      %v9888 = vmax.f32 %v9856, 0.0
      %v9889 = vmax.f32 %v9857, 0.0
      %v9890 = vmax.f32 %v9858, 0.0
      %v9891 = vmax.f32 %v9859, 0.0
      %v9892 = vmax.f32 %v9860, 0.0
      %v9893 = vmax.f32 %v9861, 0.0
      %v9894 = vmax.f32 %v9862, 0.0
      %v9895 = vmax.f32 %v9863, 0.0
      %v9896 = vmax.f32 %v9864, 0.0
      %v9897 = vmax.f32 %v9865, 0.0
      %v9898 = vmax.f32 %v9866, 0.0
      %v9899 = vmax.f32 %v9867, 0.0
      %v9900 = vmax.f32 %v9868, 0.0
      %v9901 = vmax.f32 %v9869, 0.0
      %v9902 = vmax.f32 %v9870, 0.0
      %v9903 = vmax.f32 %v9871, 0.0
      %v9904 = vmax.f32 %v9872, 0.0
      %v9905 = vmax.f32 %v9873, 0.0
      %v9906 = vmax.f32 %v9874, 0.0
      %v9907 = vpack.c.bf16 %v9876, %v9875
      %v9908 = vpack.c.bf16 %v9878, %v9877
      %v9909 = vpack.c.bf16 %v9880, %v9879
      %v9910 = vpack.c.bf16 %v9882, %v9881
      %v9911 = vpack.c.bf16 %v9884, %v9883
      %v9912 = vpack.c.bf16 %v9886, %v9885
      %v9913 = vpack.c.bf16 %v9888, %v9887
      %v9914 = vpack.c.bf16 %v9890, %v9889
      %v9915 = vpack.c.bf16 %v9892, %v9891
      %v9916 = vpack.c.bf16 %v9894, %v9893
      %v9917 = vpack.c.bf16 %v9896, %v9895
      %v9918 = vpack.c.bf16 %v9898, %v9897
      %v9919 = vpack.c.bf16 %v9900, %v9899
      %v9920 = vpack.c.bf16 %v9902, %v9901
      %v9921 = vpack.c.bf16 %v9904, %v9903
      %v9922 = vpack.c.bf16 %v9906, %v9905
      %v9939 = vunpack.c.l.b16 %v9907
      %v9940 = vunpack.c.h.b16 %v9907
      %v9941 = vunpack.c.l.b16 %v9908
      %v9942 = vunpack.c.h.b16 %v9908
      %v9943 = vunpack.c.l.b16 %v9909
      %v9944 = vunpack.c.h.b16 %v9909
      %v9945 = vunpack.c.l.b16 %v9910
      %v9946 = vunpack.c.h.b16 %v9910
      %v9947 = vunpack.c.l.b16 %v9911
      %v9948 = vunpack.c.h.b16 %v9911
      %v9949 = vunpack.c.l.b16 %v9912
      %v9950 = vunpack.c.h.b16 %v9912
      %v9951 = vunpack.c.l.b16 %v9913
      %v9952 = vunpack.c.h.b16 %v9913
      %v9953 = vunpack.c.l.b16 %v9914
      %v9954 = vunpack.c.h.b16 %v9914
      %v9955 = vunpack.c.l.b16 %v9915
      %v9956 = vunpack.c.h.b16 %v9915
      %v9957 = vunpack.c.l.b16 %v9916
      %v9958 = vunpack.c.h.b16 %v9916
      %v9959 = vunpack.c.l.b16 %v9917
      %v9960 = vunpack.c.h.b16 %v9917
      %v9961 = vunpack.c.l.b16 %v9918
      %v9962 = vunpack.c.h.b16 %v9918
      %v9963 = vunpack.c.l.b16 %v9919
      %v9964 = vunpack.c.h.b16 %v9919
      %v9965 = vunpack.c.l.b16 %v9920
      %v9966 = vunpack.c.h.b16 %v9920
      %v9967 = vunpack.c.l.b16 %v9921
      %v9968 = vunpack.c.h.b16 %v9921
      %v9969 = vunpack.c.l.b16 %v9922
      %v9970 = vunpack.c.h.b16 %v9922
      %v9971 = vpack.c.b16 %v9939, %v9939
      %v9972 = vpack.c.b16 %v9940, %v9940
      %v9973 = vpack.c.b16 %v9941, %v9941
      %v9974 = vpack.c.b16 %v9942, %v9942
      %v9975 = vpack.c.b16 %v9943, %v9943
      %v9976 = vpack.c.b16 %v9944, %v9944
      %v9977 = vpack.c.b16 %v9945, %v9945
      %v9978 = vpack.c.b16 %v9946, %v9946
      %v9979 = vpack.c.b16 %v9947, %v9947
      %v9980 = vpack.c.b16 %v9948, %v9948
      %v9981 = vpack.c.b16 %v9949, %v9949
      %v9982 = vpack.c.b16 %v9950, %v9950
      %v9983 = vpack.c.b16 %v9951, %v9951
      %v9984 = vpack.c.b16 %v9952, %v9952
      %v9985 = vpack.c.b16 %v9953, %v9953
      %v9986 = vpack.c.b16 %v9954, %v9954
      %v9987 = vpack.c.b16 %v9955, %v9955
      %v9988 = vpack.c.b16 %v9956, %v9956
      %v9989 = vpack.c.b16 %v9957, %v9957
      %v9990 = vpack.c.b16 %v9958, %v9958
      %v9991 = vpack.c.b16 %v9959, %v9959
      %v9992 = vpack.c.b16 %v9960, %v9960
      %v9993 = vpack.c.b16 %v9961, %v9961
      %v9994 = vpack.c.b16 %v9962, %v9962
      %v9995 = vpack.c.b16 %v9963, %v9963
      %v9996 = vpack.c.b16 %v9964, %v9964
      %v9997 = vpack.c.b16 %v9965, %v9965
      %v9998 = vpack.c.b16 %v9966, %v9966
      %v9999 = vpack.c.b16 %v9967, %v9967
      %v10000 = vpack.c.b16 %v9968, %v9968
      %v10001 = vpack.c.b16 %v9969, %v9969
      %v10002 = vpack.c.b16 %v9970, %v9970
      %vm10035 = vcmask 60416
      %10036 = vst.msk [vmem:[%s278] sm:$0xf] %vm10035, %v9971
      %10037 = vst.msk [vmem:[%s278 + $0x4] sm:$0xf] %vm10035, %v9972
      %10038 = vst.msk [vmem:[%s278 + $0x8] sm:$0xf] %vm10035, %v9973
      %10039 = vst.msk [vmem:[%s278 + $0xc] sm:$0xf] %vm10035, %v9974
      %10040 = vst.msk [vmem:[%s278 + $0x10] sm:$0xf] %vm10035, %v9975
      %10041 = vst.msk [vmem:[%s278 + $0x14] sm:$0xf] %vm10035, %v9976
      %10042 = vst.msk [vmem:[%s278 + $0x18] sm:$0xf] %vm10035, %v9977
      %10043 = vst.msk [vmem:[%s278 + $0x1c] sm:$0xf] %vm10035, %v9978
      %10044 = vst.msk [vmem:[%s278 + $0x20] sm:$0xf] %vm10035, %v9979
      %10045 = vst.msk [vmem:[%s278 + $0x24] sm:$0xf] %vm10035, %v9980
      %10046 = vst.msk [vmem:[%s278 + $0x28] sm:$0xf] %vm10035, %v9981
      %10047 = vst.msk [vmem:[%s278 + $0x2c] sm:$0xf] %vm10035, %v9982
      %10048 = vst.msk [vmem:[%s278 + $0x30] sm:$0xf] %vm10035, %v9983
      %10049 = vst.msk [vmem:[%s278 + $0x34] sm:$0xf] %vm10035, %v9984
      %10050 = vst.msk [vmem:[%s278 + $0x38] sm:$0xf] %vm10035, %v9985
      %10051 = vst.msk [vmem:[%s278 + $0x3c] sm:$0xf] %vm10035, %v9986
      %10052 = vst.msk [vmem:[%s278 + $0x40] sm:$0xf] %vm10035, %v9987
      %10053 = vst.msk [vmem:[%s278 + $0x44] sm:$0xf] %vm10035, %v9988
      %10054 = vst.msk [vmem:[%s278 + $0x48] sm:$0xf] %vm10035, %v9989
      %10055 = vst.msk [vmem:[%s278 + $0x4c] sm:$0xf] %vm10035, %v9990
      %10056 = vst.msk [vmem:[%s278 + $0x50] sm:$0xf] %vm10035, %v9991
      %10057 = vst.msk [vmem:[%s278 + $0x54] sm:$0xf] %vm10035, %v9992
      %10058 = vst.msk [vmem:[%s278 + $0x58] sm:$0xf] %vm10035, %v9993
      %10059 = vst.msk [vmem:[%s278 + $0x5c] sm:$0xf] %vm10035, %v9994
      %10060 = vst.msk [vmem:[%s278 + $0x60] sm:$0xf] %vm10035, %v9995
      %10061 = vst.msk [vmem:[%s278 + $0x64] sm:$0xf] %vm10035, %v9996
      %10062 = vst.msk [vmem:[%s278 + $0x68] sm:$0xf] %vm10035, %v9997
      %10063 = vst.msk [vmem:[%s278 + $0x6c] sm:$0xf] %vm10035, %v9998
      %10064 = vst.msk [vmem:[%s278 + $0x70] sm:$0xf] %vm10035, %v9999
      %10065 = vst.msk [vmem:[%s278 + $0x74] sm:$0xf] %vm10035, %v10000
      %10066 = vst.msk [vmem:[%s278 + $0x78] sm:$0xf] %vm10035, %v10001
      %10067 = vst.msk [vmem:[%s278 + $0x7c] sm:$0xf] %vm10035, %v10002
      %p10068 = scmp.lt.s32.totalorder %s18, 1
      %s10069 = scalar_select %p10068, %s18, 1
      %s10070 = smul.addr %s10069, 32
      %s10071 = smul.addr %s10070, 4
      %s10072 = scalar_lea.vmem %s7, %s10071
      // Predicated region
      $region49: #{tpu_custom_call.1} parent=47 // pred_check
        %p10073 = pneg %p188
      $region50: #{tpu_custom_call.1} parent=47 // pred_check_branch
        %10075 = sbr.rel (%p10073) target = $region52
      $region51: #{tpu_custom_call.1} parent=47 // pred_region
        _
      $region52: #{tpu_custom_call.1} parent=47 // pred_fallthru
        _
    $region48: #{tpu_custom_call.1} parent=5 // pred_fallthru
      _
    %p10076 = scmp.le.s32.totalorder 2, %s13
    // Predicated region
    $region53: #{tpu_custom_call.1} parent=5 // pred_check
      %p10077 = pneg %p10076
    $region54: #{tpu_custom_call.1} parent=5 // pred_check_branch
      %10079 = sbr.rel (%p10077) target = $region56
    $region55: #{tpu_custom_call.1} parent=5 // pred_region
      %s10080 = ssub.s32 %s13, 2
      // Predicated region
      $region57: #{tpu_custom_call.1} parent=55 // pred_check
        %p10081 = pneg %p194
      $region58: #{tpu_custom_call.1} parent=55 // pred_check_branch
        %10083 = sbr.rel (%p10081) target = $region60
      $region59: #{tpu_custom_call.1} parent=55 // pred_region
        %p10084 = scmp.lt.s32.totalorder %s19, 1
        %s10085 = scalar_select %p10084, %s19, 1
        %s10086 = smul.addr %s10085, 32
        %s10087 = smul.addr %s10086, 4
        %s10088 = scalar_lea.vmem %s7, %s10087
      $region60: #{tpu_custom_call.1} parent=55 // pred_fallthru
        _
    $region56: #{tpu_custom_call.1} parent=5 // pred_fallthru
      _
  $region6: #{tpu_custom_call.1} parent=0 // loop_footer
    %s17 = sadd.s32 1, %s13
  $region7: #{tpu_custom_call.1} parent=0 // loop_footer_branch
    %12 = sbr.rel target = $region3
  $region8: #{tpu_custom_call.1} parent=0 // loop_exit
    _

</llo_original>
